<compile_context>
chip_gen: v6e
topology: v6e:2x2x1
jax: 0.10.0
libtpu: 0.0.40
codegen_flags: <defaults>
</compile_context>

<pallas_src>
import functools

import jax
import jax.numpy as jnp
import numpy as np
from jax import lax
from jax.experimental import pallas as pl
from jax.experimental.pallas import tpu as pltpu


# ---------------------------------------------------------------------------
# DigitCapsules dynamic routing: Pallas TPU kernel
# ---------------------------------------------------------------------------
def _digit_caps_kernel(xT_ref, wT_ref, out_ref, *, routing_iters):
    # xT_ref : (TB, ID, IC)        batch tile of primary capsules, transposed
    # wT_ref : (ID, NC, CD, IC)    routing weights, transposed (lane axis = IC)
    # out_ref: (TB, 1, NC*CD + NC) packed: [capsules | per-class lengths]
    tb, input_dim, ic = xT_ref.shape
    _, nc, cd, _ = wT_ref.shape
    nccd = nc * cd

    xT = xT_ref[...]
    wT = wT_ref[...]
    if xT.dtype != jnp.float32:        # no-op for f32 inputs
        xT = xT.astype(jnp.float32)
    if wT.dtype != jnp.float32:
        wT = wT.astype(jnp.float32)

    # u_hat[t, n, d, i] = sum_k x[t, i, k] * W[i, n, d, k]
    # Unrolled FMA accumulation over the tiny contraction axis ID=8; the large
    # IC axis stays on the 128-lane axis the whole time (lane-dense VPU work).
    u_hat = xT[:, 0][:, None, None, :] * wT[0][None, :, :, :]
    for k in range(1, input_dim):
        u_hat = u_hat + xT[:, k][:, None, None, :] * wT[k][None, :, :, :]
    # u_hat: (TB, NC, CD, IC)

    b = None          # routing logits; allocated lazily (zero at iteration 0)
    v = None
    for it in range(routing_iters):
        if it == 0:
            # b == 0  =>  softmax over classes is exactly 1/NC.  Skip the whole
            # max/exp/sum/reciprocal round and the c*u_hat multiply.
            s = jnp.sum(u_hat, axis=-1) * (1.0 / nc)           # (TB, NC, CD)
        else:
            # c_ij = softmax(b_ij) over classes (small NC sublane axis).
            b_max = jnp.max(b, axis=1, keepdims=True)           # (TB, 1, IC)
            e = jnp.exp(b - b_max)                               # EUP
            c = e * (1.0 / jnp.sum(e, axis=1, keepdims=True))    # hoisted recip
            # s_j = sum_i c_ij * u_hat   (lane reduce over IC -> XLU slot).
            # TODO(synk): at very large IC on v7x, chunk this multiply+reduce
            # with lax.fori_loop(unroll=True) to guarantee fusion of the
            # u_hat-sized product into the reduction.
            s = jnp.sum(c[:, :, None, :] * u_hat, axis=-1)       # (TB, NC, CD)

        # squash -- exact reference epsilon handling:
        #   v = ||s||^2 / (1 + ||s||^2) * s / (||s|| + 1e-8)
        s_sq = jnp.sum(s * s, axis=-1, keepdims=True)            # (TB, NC, 1)
        s_norm = jnp.sqrt(s_sq)
        v = s * (s_sq / ((1.0 + s_sq) * (s_norm + 1e-8)))        # (TB, NC, CD)

        # b_ij += <u_hat, v_j>.  Unrolled over CD as lane-broadcast FMAs so the
        # update stays lane-dense in IC (no relayout of v, no (TB,NC,CD,IC)
        # transient).  The update of the final iteration is dead; skip it.
        if it + 1 < routing_iters:
            upd = u_hat[:, :, 0, :] * v[:, :, 0][:, :, None]     # (TB, NC, IC)
            for d in range(1, cd):
                upd = upd + u_hat[:, :, d, :] * v[:, :, d][:, :, None]
            b = upd if b is None else b + upd

    lengths = jnp.sqrt(jnp.sum(v * v, axis=-1))                  # (TB, NC)
    out_ref[:, :, 0:nccd] = v.reshape(tb, 1, nccd).astype(out_ref.dtype)
    out_ref[:, :, nccd:nccd + nc] = lengths.reshape(tb, 1, nc).astype(out_ref.dtype)


def _num_tensorcores():
    """TensorCores one pallas_call 'parallel' grid axis can shard across."""
    try:
        kind = jax.devices()[0].device_kind.lower()
    except Exception:
        return 1
    if any(t in kind for t in ("lite", "v5e", "v6e", "v6 ", "v2", "v3")):
        return 1
    if any(t in kind for t in ("v4", "v5p", "v7", "7x")):
        return 2
    return 1


def prepare_digit_caps_weights(W):
    """One-time weight relayout: (IC, NC, CD, ID) -> (ID, NC, CD, IC).

    Done once at parameter-init / load time so the per-call path never pays a
    parameter-sized transpose (at real size, ~3 MiB HBM read + write per call).
    """
    return jnp.transpose(W, (3, 1, 2, 0))


def digit_capsules(x, wT, routing_iters=3, batch_block=None, num_cores=None,
                   vmem_budget_bytes=40 << 20):
    """Dynamic-routing digit capsules.

    x : (B, IC, ID) primary-capsule vectors.
    wT: (ID, NC, CD, IC) routing weights, pre-transposed via
        prepare_digit_caps_weights (PyTorch parameter is (1, IC, NC, CD, ID)).
    Returns (v, lengths): (B, NC, CD) output capsules and (B, NC) lengths.
    """
    assert routing_iters >= 1
    B, IC, ID = x.shape
    ID2, NC, CD, IC2 = wT.shape
    assert IC == IC2 and ID == ID2
    NCCD = NC * CD
    OUTW = NCCD + NC
    F32 = 4

    if num_cores is None:
        num_cores = _num_tensorcores()

    # Per-batch-element VMEM working set: u_hat + ~3x transients, double-
    # buffered xT tile, double-buffered packed output.
    per_batch_bytes = (4 * NC * CD * IC + 2 * ID * IC + 2 * OUTW) * F32
    max_tb = max(1, int(vmem_budget_bytes // per_batch_bytes))
    if batch_block is None:
        if num_cores <= 1:
            # v5e / v6e: a single grid step -- the "parallel" axis cannot shard
            # on 1 TC and every extra step costs ~0.35us fixed overhead.
            batch_block = B
        else:
            # v7x (2 TCs): two equal steps for perfect core load balance.
            batch_block = pl.cdiv(B, num_cores)
        batch_block = max(1, min(batch_block, max_tb))
    num_blocks = pl.cdiv(B, batch_block)
    Bp = num_blocks * batch_block

    # Per-call x relayout (small: B*ID*IC*4 bytes) so IC is the 128-lane axis.
    xT = jnp.transpose(x, (0, 2, 1))                       # (B, ID, IC)
    if Bp != B:
        xT = jnp.pad(xT, ((0, Bp - B), (0, 0), (0, 0)))

    # W: constant index map -> resident in VMEM, never re-DMA'd per grid step;
    # Buffered(1) so the never-refetched block does not pay a 2-deep buffer.
    w_index_map = lambda g: (0, 0, 0, 0)
    try:
        w_spec = pl.BlockSpec((ID, NC, CD, IC), w_index_map,
                              pipeline_mode=pl.Buffered(1))
    except (TypeError, AttributeError):
        w_spec = pl.BlockSpec((ID, NC, CD, IC), w_index_map)

    # VMEM budget: only raise the scoped limit when the estimate needs it
    # (v7x has 64 MiB physical; default scoped limit is 32 MiB).
    est_vmem = (ID * NC * CD * IC * F32                    # resident W
                + 2 * batch_block * ID * IC * F32          # double-buffered xT
                + 2 * batch_block * OUTW * F32             # double-buffered out
                + 4 * batch_block * NC * CD * IC * F32)    # u_hat + transients
    cp_kwargs = dict(dimension_semantics=("parallel",))
    if est_vmem > (24 << 20):
        cp_kwargs["vmem_limit_bytes"] = int(min(est_vmem + (8 << 20), 60 << 20))

    kernel = functools.partial(_digit_caps_kernel, routing_iters=routing_iters)
    out = pl.pallas_call(
        kernel,
        out_shape=jax.ShapeDtypeStruct((Bp, 1, OUTW), x.dtype),
        grid=(num_blocks,),
        in_specs=[
            pl.BlockSpec((batch_block, ID, IC), lambda g: (g, 0, 0)),
            w_spec,
        ],
        out_specs=pl.BlockSpec((batch_block, 1, OUTW), lambda g: (g, 0, 0)),
        compiler_params=pltpu.CompilerParams(**cp_kwargs),
    )(xT, wT)

    v = out[:B, 0, :NCCD].reshape(B, NC, CD)
    lengths = out[:B, 0, NCCD:]
    return v, lengths


def digit_capsules_ref(x, W, routing_iters=3):
    """Pure-JAX mirror of the PyTorch DigitCapsules forward (correctness check).

    Uses an explicit broadcast-multiply-sum for u_hat so the reference stays in
    exact f32 regardless of the XLA matmul precision default.
    """
    B, IC, ID = x.shape
    _, NC, CD, _ = W.shape
    u_hat = jnp.sum(x[:, :, None, None, :] * W[None], axis=-1)   # (B, IC, NC, CD)
    b_ij = jnp.zeros((B, IC, NC, 1), jnp.float32)
    v_j = None
    for _ in range(routing_iters):
        c_ij = jax.nn.softmax(b_ij, axis=2)
        s_j = jnp.sum(c_ij * u_hat, axis=1, keepdims=True)       # (B, 1, NC, CD)
        s_norm = jnp.sqrt(jnp.sum(s_j * s_j, axis=-1, keepdims=True))
        v_j = s_norm ** 2 / (1.0 + s_norm ** 2) * (s_j / (s_norm + 1e-8))
        b_ij = b_ij + jnp.sum(u_hat * v_j, axis=-1, keepdims=True)
    return v_j[:, 0]                                             # (B, NC, CD)


# ---------------------------------------------------------------------------
# Rest of HR_SEMobileCapsNet (inference mode), plain JAX.
# TODO(synk): the FeatureExtractor conv/BN/ReLU/Dropout/SE stack and the
# PrimaryCapsules conv run as plain JAX (XLA) ops -- dropout is identity and
# BatchNorm uses running stats at inference -- rather than hand-written Pallas.
# ---------------------------------------------------------------------------
def _conv2d(x, w, b=None, stride=1, padding=1):
    out = lax.conv_general_dilated(
        x, w, window_strides=(stride, stride),
        padding=((padding, padding), (padding, padding)),
        dimension_numbers=("NCHW", "OIHW", "NCHW"))
    if b is not None:
        out = out + b[None, :, None, None]
    return out


def _batchnorm(x, bn, eps=1e-5):
    gamma, beta, mean, var = bn
    scale = gamma * lax.rsqrt(var + eps)
    return x * scale[None, :, None, None] + (beta - mean * scale)[None, :, None, None]


def _se_block(x, se):
    (w1, b1), (w2, b2) = se
    y = jnp.mean(x, axis=(2, 3))                      # adaptive_avg_pool2d(x, 1)
    y = jax.nn.relu(y @ w1.T + b1)
    y = jax.nn.sigmoid(y @ w2.T + b2)
    return x * y[:, :, None, None]


def _squash(s, eps=1e-8):
    s_norm = jnp.sqrt(jnp.sum(s * s, axis=-1, keepdims=True))
    return s_norm ** 2 / (1.0 + s_norm ** 2) * (s / (s_norm + eps))


def feature_extractor(params, x):
    for layer, stride in (("l1", 1), ("l2", 2), ("l3", 2)):
        p = params[layer]
        x = _conv2d(x, p["conv_w"], stride=stride)
        x = _batchnorm(x, p["bn"])
        x = jax.nn.relu(x)
        # Dropout(p=0.3) is identity at inference.
        x = _se_block(x, p["se"])
    return x


def primary_capsules(params, x, num_capsules=8, capsule_dim=8):
    B = x.shape[0]
    u = _conv2d(x, params["prim"]["w"], params["prim"]["b"], stride=2)
    hw = u.shape[2] * u.shape[3]
    u = u.reshape(B, num_capsules, capsule_dim, hw)
    u = jnp.transpose(u, (0, 1, 3, 2)).reshape(B, num_capsules * hw, capsule_dim)
    return _squash(u)


def hr_se_mobile_capsnet(params, x, routing_iters=3):
    feats = feature_extractor(params, x)
    prim = primary_capsules(params, feats)
    _, lengths = digit_capsules(prim, params["digit_W_T"], routing_iters=routing_iters)
    return lengths                                     # torch.norm(v, dim=-1)


def init_params(key, num_classes=3, input_hw=32):
    def nrm(k, shape, scale):
        return scale * jax.random.normal(k, shape, jnp.float32)

    keys = iter(jax.random.split(key, 16))

    def conv_layer(cin, cout, reduction=16):
        hidden = max(1, cout // reduction)
        return {
            "conv_w": nrm(next(keys), (cout, cin, 3, 3), 0.3),
            # BatchNorm eval params: (gamma, beta, running_mean, running_var)
            "bn": (jnp.ones(cout), jnp.zeros(cout), jnp.zeros(cout), jnp.ones(cout)),
            "se": ((nrm(next(keys), (hidden, cout), 0.3), jnp.zeros(hidden)),
                   (nrm(next(keys), (cout, hidden), 0.3), jnp.zeros(cout))),
        }

    params = {
        "l1": conv_layer(1, 16),
        "l2": conv_layer(16, 32),
        "l3": conv_layer(32, 64),
        "prim": {"w": nrm(next(keys), (64, 64, 3, 3), 0.3),
                 "b": nrm(next(keys), (64,), 0.3)},
    }
    ic = 8 * (input_hw // 8) ** 2       # primary capsules per image
    # nn.Parameter(0.01 * randn(1, input_capsules, num_classes, 16, 8))
    params["digit_W"] = nrm(next(keys), (1, ic, num_classes, 16, 8), 0.01)
    # Pre-transposed routing weights (ID, NC, CD, IC): the kernel-side layout is
    # materialized once here, not on every forward call.
    params["digit_W_T"] = prepare_digit_caps_weights(params["digit_W"][0])
    return params


if __name__ == "__main__":
    NUM_CLASSES = 3
    ROUTING_ITERS = 3

    key = jax.random.PRNGKey(0)
    k_params, k_x = jax.random.split(key)

    # Small input consistent with the module: 1-channel 32x32 image ->
    # 8x8 feature map -> 4x4 primary-capsule grid -> IC = 8*4*4 = 128 capsules.
    params = init_params(k_params, num_classes=NUM_CLASSES, input_hw=32)
    x = jax.random.normal(k_x, (4, 1, 32, 32), jnp.float32)

    feats = feature_extractor(params, x)                  # (4, 64, 8, 8)
    prim = primary_capsules(params, feats)                # (4, 128, 8)
    W = params["digit_W"][0]                              # (128, 3, 16, 8)
    wT = params["digit_W_T"]                              # (8, 3, 16, 128)

    caps, lengths = digit_capsules(prim, wT, routing_iters=ROUTING_ITERS)
    caps = jax.block_until_ready(caps)
    lengths = jax.block_until_ready(lengths)
    assert caps.shape == (4, NUM_CLASSES, 16)
    assert lengths.shape == (4, NUM_CLASSES)

    # Kernel vs. pure-JAX reference of the routing stage.
    ref_caps = digit_capsules_ref(prim, W, routing_iters=ROUTING_ITERS)
    ref_lengths = jnp.sqrt(jnp.sum(ref_caps * ref_caps, axis=-1))
    assert np.allclose(np.asarray(caps), np.asarray(ref_caps), atol=1e-5, rtol=1e-5)
    assert np.allclose(np.asarray(lengths), np.asarray(ref_lengths), atol=1e-5, rtol=1e-5)

    # Full-model forward (feature extractor -> primary caps -> routing -> norm).
    model_out = jax.block_until_ready(hr_se_mobile_capsnet(params, x, ROUTING_ITERS))
    assert model_out.shape == (4, NUM_CLASSES)
    assert np.allclose(np.asarray(model_out), np.asarray(lengths), atol=1e-5, rtol=1e-5)

    print("KERNEL_OK")
</pallas_src>

<mosaic_0001>
module attributes {stable_mosaic.version = 11 : i64} {
  func.func @_digit_caps_kernel(%arg0: i32, %arg1: memref<4x8x128xf32, #tpu.memory_space<vmem>>, %arg2: memref<8x3x16x128xf32, #tpu.memory_space<vmem>>, %arg3: memref<4x1x51xf32, #tpu.memory_space<vmem>>) attributes {dimension_semantics = [#tpu.dimension_semantics<parallel>], iteration_bounds = array<i64: 1>, scalar_prefetch = 0 : i64, scratch_operands = 0 : i64, tpu.core_type = #tpu.core_type<tc>, window_params = [{transform_indices = @transform_0, window_bounds = array<i64: 4, 8, 128>}, {pipeline_mode = #tpu.pipeline_mode<synchronous>, transform_indices = @transform_1, window_bounds = array<i64: 8, 3, 16, 128>}, {transform_indices = @transform_2, window_bounds = array<i64: 4, 1, 51>}]} {
    %c0 = arith.constant 0 : index
    %c0_0 = arith.constant 0 : index
    %c0_1 = arith.constant 0 : index
    %0 = vector.load %arg1[%c0, %c0_0, %c0_1] : memref<4x8x128xf32, #tpu.memory_space<vmem>>, vector<4x8x128xf32>
    %c0_2 = arith.constant 0 : index
    %c0_3 = arith.constant 0 : index
    %c0_4 = arith.constant 0 : index
    %c0_5 = arith.constant 0 : index
    %1 = vector.load %arg2[%c0_2, %c0_3, %c0_4, %c0_5] : memref<8x3x16x128xf32, #tpu.memory_space<vmem>>, vector<8x3x16x128xf32>
    %2 = vector.extract_strided_slice %0 {offsets = [0, 0, 0], sizes = [4, 1, 128], strides = [1, 1, 1]} : vector<4x8x128xf32> to vector<4x1x128xf32>
    %3 = vector.shape_cast %2 : vector<4x1x128xf32> to vector<4x128xf32>
    %4 = vector.shape_cast %3 : vector<4x128xf32> to vector<4x1x1x128xf32>
    %5 = vector.extract_strided_slice %1 {offsets = [0, 0, 0, 0], sizes = [1, 3, 16, 128], strides = [1, 1, 1, 1]} : vector<8x3x16x128xf32> to vector<1x3x16x128xf32>
    %6 = vector.shape_cast %5 : vector<1x3x16x128xf32> to vector<3x16x128xf32>
    %7 = vector.shape_cast %6 : vector<3x16x128xf32> to vector<1x3x16x128xf32>
    %8 = vector.broadcast %4 : vector<4x1x1x128xf32> to vector<4x3x16x128xf32>
    %9 = vector.broadcast %7 : vector<1x3x16x128xf32> to vector<4x3x16x128xf32>
    %10 = arith.mulf %8, %9 : vector<4x3x16x128xf32>
    %11 = vector.extract_strided_slice %0 {offsets = [0, 1, 0], sizes = [4, 1, 128], strides = [1, 1, 1]} : vector<4x8x128xf32> to vector<4x1x128xf32>
    %12 = vector.shape_cast %11 : vector<4x1x128xf32> to vector<4x128xf32>
    %13 = vector.shape_cast %12 : vector<4x128xf32> to vector<4x1x1x128xf32>
    %14 = vector.extract_strided_slice %1 {offsets = [1, 0, 0, 0], sizes = [1, 3, 16, 128], strides = [1, 1, 1, 1]} : vector<8x3x16x128xf32> to vector<1x3x16x128xf32>
    %15 = vector.shape_cast %14 : vector<1x3x16x128xf32> to vector<3x16x128xf32>
    %16 = vector.shape_cast %15 : vector<3x16x128xf32> to vector<1x3x16x128xf32>
    %17 = vector.broadcast %13 : vector<4x1x1x128xf32> to vector<4x3x16x128xf32>
    %18 = vector.broadcast %16 : vector<1x3x16x128xf32> to vector<4x3x16x128xf32>
    %19 = arith.mulf %17, %18 : vector<4x3x16x128xf32>
    %20 = arith.addf %10, %19 : vector<4x3x16x128xf32>
    %21 = vector.extract_strided_slice %0 {offsets = [0, 2, 0], sizes = [4, 1, 128], strides = [1, 1, 1]} : vector<4x8x128xf32> to vector<4x1x128xf32>
    %22 = vector.shape_cast %21 : vector<4x1x128xf32> to vector<4x128xf32>
    %23 = vector.shape_cast %22 : vector<4x128xf32> to vector<4x1x1x128xf32>
    %24 = vector.extract_strided_slice %1 {offsets = [2, 0, 0, 0], sizes = [1, 3, 16, 128], strides = [1, 1, 1, 1]} : vector<8x3x16x128xf32> to vector<1x3x16x128xf32>
    %25 = vector.shape_cast %24 : vector<1x3x16x128xf32> to vector<3x16x128xf32>
    %26 = vector.shape_cast %25 : vector<3x16x128xf32> to vector<1x3x16x128xf32>
    %27 = vector.broadcast %23 : vector<4x1x1x128xf32> to vector<4x3x16x128xf32>
    %28 = vector.broadcast %26 : vector<1x3x16x128xf32> to vector<4x3x16x128xf32>
    %29 = arith.mulf %27, %28 : vector<4x3x16x128xf32>
    %30 = arith.addf %20, %29 : vector<4x3x16x128xf32>
    %31 = vector.extract_strided_slice %0 {offsets = [0, 3, 0], sizes = [4, 1, 128], strides = [1, 1, 1]} : vector<4x8x128xf32> to vector<4x1x128xf32>
    %32 = vector.shape_cast %31 : vector<4x1x128xf32> to vector<4x128xf32>
    %33 = vector.shape_cast %32 : vector<4x128xf32> to vector<4x1x1x128xf32>
    %34 = vector.extract_strided_slice %1 {offsets = [3, 0, 0, 0], sizes = [1, 3, 16, 128], strides = [1, 1, 1, 1]} : vector<8x3x16x128xf32> to vector<1x3x16x128xf32>
    %35 = vector.shape_cast %34 : vector<1x3x16x128xf32> to vector<3x16x128xf32>
    %36 = vector.shape_cast %35 : vector<3x16x128xf32> to vector<1x3x16x128xf32>
    %37 = vector.broadcast %33 : vector<4x1x1x128xf32> to vector<4x3x16x128xf32>
    %38 = vector.broadcast %36 : vector<1x3x16x128xf32> to vector<4x3x16x128xf32>
    %39 = arith.mulf %37, %38 : vector<4x3x16x128xf32>
    %40 = arith.addf %30, %39 : vector<4x3x16x128xf32>
    %41 = vector.extract_strided_slice %0 {offsets = [0, 4, 0], sizes = [4, 1, 128], strides = [1, 1, 1]} : vector<4x8x128xf32> to vector<4x1x128xf32>
    %42 = vector.shape_cast %41 : vector<4x1x128xf32> to vector<4x128xf32>
    %43 = vector.shape_cast %42 : vector<4x128xf32> to vector<4x1x1x128xf32>
    %44 = vector.extract_strided_slice %1 {offsets = [4, 0, 0, 0], sizes = [1, 3, 16, 128], strides = [1, 1, 1, 1]} : vector<8x3x16x128xf32> to vector<1x3x16x128xf32>
    %45 = vector.shape_cast %44 : vector<1x3x16x128xf32> to vector<3x16x128xf32>
    %46 = vector.shape_cast %45 : vector<3x16x128xf32> to vector<1x3x16x128xf32>
    %47 = vector.broadcast %43 : vector<4x1x1x128xf32> to vector<4x3x16x128xf32>
    %48 = vector.broadcast %46 : vector<1x3x16x128xf32> to vector<4x3x16x128xf32>
    %49 = arith.mulf %47, %48 : vector<4x3x16x128xf32>
    %50 = arith.addf %40, %49 : vector<4x3x16x128xf32>
    %51 = vector.extract_strided_slice %0 {offsets = [0, 5, 0], sizes = [4, 1, 128], strides = [1, 1, 1]} : vector<4x8x128xf32> to vector<4x1x128xf32>
    %52 = vector.shape_cast %51 : vector<4x1x128xf32> to vector<4x128xf32>
    %53 = vector.shape_cast %52 : vector<4x128xf32> to vector<4x1x1x128xf32>
    %54 = vector.extract_strided_slice %1 {offsets = [5, 0, 0, 0], sizes = [1, 3, 16, 128], strides = [1, 1, 1, 1]} : vector<8x3x16x128xf32> to vector<1x3x16x128xf32>
    %55 = vector.shape_cast %54 : vector<1x3x16x128xf32> to vector<3x16x128xf32>
    %56 = vector.shape_cast %55 : vector<3x16x128xf32> to vector<1x3x16x128xf32>
    %57 = vector.broadcast %53 : vector<4x1x1x128xf32> to vector<4x3x16x128xf32>
    %58 = vector.broadcast %56 : vector<1x3x16x128xf32> to vector<4x3x16x128xf32>
    %59 = arith.mulf %57, %58 : vector<4x3x16x128xf32>
    %60 = arith.addf %50, %59 : vector<4x3x16x128xf32>
    %61 = vector.extract_strided_slice %0 {offsets = [0, 6, 0], sizes = [4, 1, 128], strides = [1, 1, 1]} : vector<4x8x128xf32> to vector<4x1x128xf32>
    %62 = vector.shape_cast %61 : vector<4x1x128xf32> to vector<4x128xf32>
    %63 = vector.shape_cast %62 : vector<4x128xf32> to vector<4x1x1x128xf32>
    %64 = vector.extract_strided_slice %1 {offsets = [6, 0, 0, 0], sizes = [1, 3, 16, 128], strides = [1, 1, 1, 1]} : vector<8x3x16x128xf32> to vector<1x3x16x128xf32>
    %65 = vector.shape_cast %64 : vector<1x3x16x128xf32> to vector<3x16x128xf32>
    %66 = vector.shape_cast %65 : vector<3x16x128xf32> to vector<1x3x16x128xf32>
    %67 = vector.broadcast %63 : vector<4x1x1x128xf32> to vector<4x3x16x128xf32>
    %68 = vector.broadcast %66 : vector<1x3x16x128xf32> to vector<4x3x16x128xf32>
    %69 = arith.mulf %67, %68 : vector<4x3x16x128xf32>
    %70 = arith.addf %60, %69 : vector<4x3x16x128xf32>
    %71 = vector.extract_strided_slice %0 {offsets = [0, 7, 0], sizes = [4, 1, 128], strides = [1, 1, 1]} : vector<4x8x128xf32> to vector<4x1x128xf32>
    %72 = vector.shape_cast %71 : vector<4x1x128xf32> to vector<4x128xf32>
    %73 = vector.shape_cast %72 : vector<4x128xf32> to vector<4x1x1x128xf32>
    %74 = vector.extract_strided_slice %1 {offsets = [7, 0, 0, 0], sizes = [1, 3, 16, 128], strides = [1, 1, 1, 1]} : vector<8x3x16x128xf32> to vector<1x3x16x128xf32>
    %75 = vector.shape_cast %74 : vector<1x3x16x128xf32> to vector<3x16x128xf32>
    %76 = vector.shape_cast %75 : vector<3x16x128xf32> to vector<1x3x16x128xf32>
    %77 = vector.broadcast %73 : vector<4x1x1x128xf32> to vector<4x3x16x128xf32>
    %78 = vector.broadcast %76 : vector<1x3x16x128xf32> to vector<4x3x16x128xf32>
    %79 = arith.mulf %77, %78 : vector<4x3x16x128xf32>
    %80 = arith.addf %70, %79 : vector<4x3x16x128xf32>
    %cst = arith.constant dense<0.000000e+00> : vector<4x3x16xf32>
    %81 = vector.multi_reduction <add>, %80, %cst [3] : vector<4x3x16x128xf32> to vector<4x3x16xf32>
    %cst_6 = arith.constant 0.333333343 : f32
    %82 = vector.broadcast %cst_6 : f32 to vector<4x3x16xf32>
    %83 = arith.mulf %81, %82 : vector<4x3x16xf32>
    %84 = arith.mulf %83, %83 : vector<4x3x16xf32>
    %cst_7 = arith.constant dense<0.000000e+00> : vector<4x3xf32>
    %85 = vector.multi_reduction <add>, %84, %cst_7 [2] : vector<4x3x16xf32> to vector<4x3xf32>
    %86 = vector.shape_cast %85 : vector<4x3xf32> to vector<4x3x1xf32>
    %87 = math.sqrt %86 : vector<4x3x1xf32>
    %cst_8 = arith.constant 1.000000e+00 : f32
    %88 = vector.broadcast %cst_8 : f32 to vector<4x3x1xf32>
    %89 = arith.addf %88, %86 : vector<4x3x1xf32>
    %cst_9 = arith.constant 9.99999993E-9 : f32
    %90 = vector.broadcast %cst_9 : f32 to vector<4x3x1xf32>
    %91 = arith.addf %87, %90 : vector<4x3x1xf32>
    %92 = arith.mulf %89, %91 : vector<4x3x1xf32>
    %93 = arith.divf %86, %92 : vector<4x3x1xf32>
    %94 = vector.broadcast %93 : vector<4x3x1xf32> to vector<4x3x16xf32>
    %95 = arith.mulf %83, %94 : vector<4x3x16xf32>
    %96 = vector.extract_strided_slice %80 {offsets = [0, 0, 0, 0], sizes = [4, 3, 1, 128], strides = [1, 1, 1, 1]} : vector<4x3x16x128xf32> to vector<4x3x1x128xf32>
    %97 = vector.shape_cast %96 : vector<4x3x1x128xf32> to vector<4x3x128xf32>
    %98 = vector.extract_strided_slice %95 {offsets = [0, 0, 0], sizes = [4, 3, 1], strides = [1, 1, 1]} : vector<4x3x16xf32> to vector<4x3x1xf32>
    %99 = vector.shape_cast %98 : vector<4x3x1xf32> to vector<4x3xf32>
    %100 = vector.shape_cast %99 : vector<4x3xf32> to vector<4x3x1xf32>
    %101 = vector.broadcast %100 : vector<4x3x1xf32> to vector<4x3x128xf32>
    %102 = arith.mulf %97, %101 : vector<4x3x128xf32>
    %103 = vector.extract_strided_slice %80 {offsets = [0, 0, 1, 0], sizes = [4, 3, 1, 128], strides = [1, 1, 1, 1]} : vector<4x3x16x128xf32> to vector<4x3x1x128xf32>
    %104 = vector.shape_cast %103 : vector<4x3x1x128xf32> to vector<4x3x128xf32>
    %105 = vector.extract_strided_slice %95 {offsets = [0, 0, 1], sizes = [4, 3, 1], strides = [1, 1, 1]} : vector<4x3x16xf32> to vector<4x3x1xf32>
    %106 = vector.shape_cast %105 : vector<4x3x1xf32> to vector<4x3xf32>
    %107 = vector.shape_cast %106 : vector<4x3xf32> to vector<4x3x1xf32>
    %108 = vector.broadcast %107 : vector<4x3x1xf32> to vector<4x3x128xf32>
    %109 = arith.mulf %104, %108 : vector<4x3x128xf32>
    %110 = arith.addf %102, %109 : vector<4x3x128xf32>
    %111 = vector.extract_strided_slice %80 {offsets = [0, 0, 2, 0], sizes = [4, 3, 1, 128], strides = [1, 1, 1, 1]} : vector<4x3x16x128xf32> to vector<4x3x1x128xf32>
    %112 = vector.shape_cast %111 : vector<4x3x1x128xf32> to vector<4x3x128xf32>
    %113 = vector.extract_strided_slice %95 {offsets = [0, 0, 2], sizes = [4, 3, 1], strides = [1, 1, 1]} : vector<4x3x16xf32> to vector<4x3x1xf32>
    %114 = vector.shape_cast %113 : vector<4x3x1xf32> to vector<4x3xf32>
    %115 = vector.shape_cast %114 : vector<4x3xf32> to vector<4x3x1xf32>
    %116 = vector.broadcast %115 : vector<4x3x1xf32> to vector<4x3x128xf32>
    %117 = arith.mulf %112, %116 : vector<4x3x128xf32>
    %118 = arith.addf %110, %117 : vector<4x3x128xf32>
    %119 = vector.extract_strided_slice %80 {offsets = [0, 0, 3, 0], sizes = [4, 3, 1, 128], strides = [1, 1, 1, 1]} : vector<4x3x16x128xf32> to vector<4x3x1x128xf32>
    %120 = vector.shape_cast %119 : vector<4x3x1x128xf32> to vector<4x3x128xf32>
    %121 = vector.extract_strided_slice %95 {offsets = [0, 0, 3], sizes = [4, 3, 1], strides = [1, 1, 1]} : vector<4x3x16xf32> to vector<4x3x1xf32>
    %122 = vector.shape_cast %121 : vector<4x3x1xf32> to vector<4x3xf32>
    %123 = vector.shape_cast %122 : vector<4x3xf32> to vector<4x3x1xf32>
    %124 = vector.broadcast %123 : vector<4x3x1xf32> to vector<4x3x128xf32>
    %125 = arith.mulf %120, %124 : vector<4x3x128xf32>
    %126 = arith.addf %118, %125 : vector<4x3x128xf32>
    %127 = vector.extract_strided_slice %80 {offsets = [0, 0, 4, 0], sizes = [4, 3, 1, 128], strides = [1, 1, 1, 1]} : vector<4x3x16x128xf32> to vector<4x3x1x128xf32>
    %128 = vector.shape_cast %127 : vector<4x3x1x128xf32> to vector<4x3x128xf32>
    %129 = vector.extract_strided_slice %95 {offsets = [0, 0, 4], sizes = [4, 3, 1], strides = [1, 1, 1]} : vector<4x3x16xf32> to vector<4x3x1xf32>
    %130 = vector.shape_cast %129 : vector<4x3x1xf32> to vector<4x3xf32>
    %131 = vector.shape_cast %130 : vector<4x3xf32> to vector<4x3x1xf32>
    %132 = vector.broadcast %131 : vector<4x3x1xf32> to vector<4x3x128xf32>
    %133 = arith.mulf %128, %132 : vector<4x3x128xf32>
    %134 = arith.addf %126, %133 : vector<4x3x128xf32>
    %135 = vector.extract_strided_slice %80 {offsets = [0, 0, 5, 0], sizes = [4, 3, 1, 128], strides = [1, 1, 1, 1]} : vector<4x3x16x128xf32> to vector<4x3x1x128xf32>
    %136 = vector.shape_cast %135 : vector<4x3x1x128xf32> to vector<4x3x128xf32>
    %137 = vector.extract_strided_slice %95 {offsets = [0, 0, 5], sizes = [4, 3, 1], strides = [1, 1, 1]} : vector<4x3x16xf32> to vector<4x3x1xf32>
    %138 = vector.shape_cast %137 : vector<4x3x1xf32> to vector<4x3xf32>
    %139 = vector.shape_cast %138 : vector<4x3xf32> to vector<4x3x1xf32>
    %140 = vector.broadcast %139 : vector<4x3x1xf32> to vector<4x3x128xf32>
    %141 = arith.mulf %136, %140 : vector<4x3x128xf32>
    %142 = arith.addf %134, %141 : vector<4x3x128xf32>
    %143 = vector.extract_strided_slice %80 {offsets = [0, 0, 6, 0], sizes = [4, 3, 1, 128], strides = [1, 1, 1, 1]} : vector<4x3x16x128xf32> to vector<4x3x1x128xf32>
    %144 = vector.shape_cast %143 : vector<4x3x1x128xf32> to vector<4x3x128xf32>
    %145 = vector.extract_strided_slice %95 {offsets = [0, 0, 6], sizes = [4, 3, 1], strides = [1, 1, 1]} : vector<4x3x16xf32> to vector<4x3x1xf32>
    %146 = vector.shape_cast %145 : vector<4x3x1xf32> to vector<4x3xf32>
    %147 = vector.shape_cast %146 : vector<4x3xf32> to vector<4x3x1xf32>
    %148 = vector.broadcast %147 : vector<4x3x1xf32> to vector<4x3x128xf32>
    %149 = arith.mulf %144, %148 : vector<4x3x128xf32>
    %150 = arith.addf %142, %149 : vector<4x3x128xf32>
    %151 = vector.extract_strided_slice %80 {offsets = [0, 0, 7, 0], sizes = [4, 3, 1, 128], strides = [1, 1, 1, 1]} : vector<4x3x16x128xf32> to vector<4x3x1x128xf32>
    %152 = vector.shape_cast %151 : vector<4x3x1x128xf32> to vector<4x3x128xf32>
    %153 = vector.extract_strided_slice %95 {offsets = [0, 0, 7], sizes = [4, 3, 1], strides = [1, 1, 1]} : vector<4x3x16xf32> to vector<4x3x1xf32>
    %154 = vector.shape_cast %153 : vector<4x3x1xf32> to vector<4x3xf32>
    %155 = vector.shape_cast %154 : vector<4x3xf32> to vector<4x3x1xf32>
    %156 = vector.broadcast %155 : vector<4x3x1xf32> to vector<4x3x128xf32>
    %157 = arith.mulf %152, %156 : vector<4x3x128xf32>
    %158 = arith.addf %150, %157 : vector<4x3x128xf32>
    %159 = vector.extract_strided_slice %80 {offsets = [0, 0, 8, 0], sizes = [4, 3, 1, 128], strides = [1, 1, 1, 1]} : vector<4x3x16x128xf32> to vector<4x3x1x128xf32>
    %160 = vector.shape_cast %159 : vector<4x3x1x128xf32> to vector<4x3x128xf32>
    %161 = vector.extract_strided_slice %95 {offsets = [0, 0, 8], sizes = [4, 3, 1], strides = [1, 1, 1]} : vector<4x3x16xf32> to vector<4x3x1xf32>
    %162 = vector.shape_cast %161 : vector<4x3x1xf32> to vector<4x3xf32>
    %163 = vector.shape_cast %162 : vector<4x3xf32> to vector<4x3x1xf32>
    %164 = vector.broadcast %163 : vector<4x3x1xf32> to vector<4x3x128xf32>
    %165 = arith.mulf %160, %164 : vector<4x3x128xf32>
    %166 = arith.addf %158, %165 : vector<4x3x128xf32>
    %167 = vector.extract_strided_slice %80 {offsets = [0, 0, 9, 0], sizes = [4, 3, 1, 128], strides = [1, 1, 1, 1]} : vector<4x3x16x128xf32> to vector<4x3x1x128xf32>
    %168 = vector.shape_cast %167 : vector<4x3x1x128xf32> to vector<4x3x128xf32>
    %169 = vector.extract_strided_slice %95 {offsets = [0, 0, 9], sizes = [4, 3, 1], strides = [1, 1, 1]} : vector<4x3x16xf32> to vector<4x3x1xf32>
    %170 = vector.shape_cast %169 : vector<4x3x1xf32> to vector<4x3xf32>
    %171 = vector.shape_cast %170 : vector<4x3xf32> to vector<4x3x1xf32>
    %172 = vector.broadcast %171 : vector<4x3x1xf32> to vector<4x3x128xf32>
    %173 = arith.mulf %168, %172 : vector<4x3x128xf32>
    %174 = arith.addf %166, %173 : vector<4x3x128xf32>
    %175 = vector.extract_strided_slice %80 {offsets = [0, 0, 10, 0], sizes = [4, 3, 1, 128], strides = [1, 1, 1, 1]} : vector<4x3x16x128xf32> to vector<4x3x1x128xf32>
    %176 = vector.shape_cast %175 : vector<4x3x1x128xf32> to vector<4x3x128xf32>
    %177 = vector.extract_strided_slice %95 {offsets = [0, 0, 10], sizes = [4, 3, 1], strides = [1, 1, 1]} : vector<4x3x16xf32> to vector<4x3x1xf32>
    %178 = vector.shape_cast %177 : vector<4x3x1xf32> to vector<4x3xf32>
    %179 = vector.shape_cast %178 : vector<4x3xf32> to vector<4x3x1xf32>
    %180 = vector.broadcast %179 : vector<4x3x1xf32> to vector<4x3x128xf32>
    %181 = arith.mulf %176, %180 : vector<4x3x128xf32>
    %182 = arith.addf %174, %181 : vector<4x3x128xf32>
    %183 = vector.extract_strided_slice %80 {offsets = [0, 0, 11, 0], sizes = [4, 3, 1, 128], strides = [1, 1, 1, 1]} : vector<4x3x16x128xf32> to vector<4x3x1x128xf32>
    %184 = vector.shape_cast %183 : vector<4x3x1x128xf32> to vector<4x3x128xf32>
    %185 = vector.extract_strided_slice %95 {offsets = [0, 0, 11], sizes = [4, 3, 1], strides = [1, 1, 1]} : vector<4x3x16xf32> to vector<4x3x1xf32>
    %186 = vector.shape_cast %185 : vector<4x3x1xf32> to vector<4x3xf32>
    %187 = vector.shape_cast %186 : vector<4x3xf32> to vector<4x3x1xf32>
    %188 = vector.broadcast %187 : vector<4x3x1xf32> to vector<4x3x128xf32>
    %189 = arith.mulf %184, %188 : vector<4x3x128xf32>
    %190 = arith.addf %182, %189 : vector<4x3x128xf32>
    %191 = vector.extract_strided_slice %80 {offsets = [0, 0, 12, 0], sizes = [4, 3, 1, 128], strides = [1, 1, 1, 1]} : vector<4x3x16x128xf32> to vector<4x3x1x128xf32>
    %192 = vector.shape_cast %191 : vector<4x3x1x128xf32> to vector<4x3x128xf32>
    %193 = vector.extract_strided_slice %95 {offsets = [0, 0, 12], sizes = [4, 3, 1], strides = [1, 1, 1]} : vector<4x3x16xf32> to vector<4x3x1xf32>
    %194 = vector.shape_cast %193 : vector<4x3x1xf32> to vector<4x3xf32>
    %195 = vector.shape_cast %194 : vector<4x3xf32> to vector<4x3x1xf32>
    %196 = vector.broadcast %195 : vector<4x3x1xf32> to vector<4x3x128xf32>
    %197 = arith.mulf %192, %196 : vector<4x3x128xf32>
    %198 = arith.addf %190, %197 : vector<4x3x128xf32>
    %199 = vector.extract_strided_slice %80 {offsets = [0, 0, 13, 0], sizes = [4, 3, 1, 128], strides = [1, 1, 1, 1]} : vector<4x3x16x128xf32> to vector<4x3x1x128xf32>
    %200 = vector.shape_cast %199 : vector<4x3x1x128xf32> to vector<4x3x128xf32>
    %201 = vector.extract_strided_slice %95 {offsets = [0, 0, 13], sizes = [4, 3, 1], strides = [1, 1, 1]} : vector<4x3x16xf32> to vector<4x3x1xf32>
    %202 = vector.shape_cast %201 : vector<4x3x1xf32> to vector<4x3xf32>
    %203 = vector.shape_cast %202 : vector<4x3xf32> to vector<4x3x1xf32>
    %204 = vector.broadcast %203 : vector<4x3x1xf32> to vector<4x3x128xf32>
    %205 = arith.mulf %200, %204 : vector<4x3x128xf32>
    %206 = arith.addf %198, %205 : vector<4x3x128xf32>
    %207 = vector.extract_strided_slice %80 {offsets = [0, 0, 14, 0], sizes = [4, 3, 1, 128], strides = [1, 1, 1, 1]} : vector<4x3x16x128xf32> to vector<4x3x1x128xf32>
    %208 = vector.shape_cast %207 : vector<4x3x1x128xf32> to vector<4x3x128xf32>
    %209 = vector.extract_strided_slice %95 {offsets = [0, 0, 14], sizes = [4, 3, 1], strides = [1, 1, 1]} : vector<4x3x16xf32> to vector<4x3x1xf32>
    %210 = vector.shape_cast %209 : vector<4x3x1xf32> to vector<4x3xf32>
    %211 = vector.shape_cast %210 : vector<4x3xf32> to vector<4x3x1xf32>
    %212 = vector.broadcast %211 : vector<4x3x1xf32> to vector<4x3x128xf32>
    %213 = arith.mulf %208, %212 : vector<4x3x128xf32>
    %214 = arith.addf %206, %213 : vector<4x3x128xf32>
    %215 = vector.extract_strided_slice %80 {offsets = [0, 0, 15, 0], sizes = [4, 3, 1, 128], strides = [1, 1, 1, 1]} : vector<4x3x16x128xf32> to vector<4x3x1x128xf32>
    %216 = vector.shape_cast %215 : vector<4x3x1x128xf32> to vector<4x3x128xf32>
    %217 = vector.extract_strided_slice %95 {offsets = [0, 0, 15], sizes = [4, 3, 1], strides = [1, 1, 1]} : vector<4x3x16xf32> to vector<4x3x1xf32>
    %218 = vector.shape_cast %217 : vector<4x3x1xf32> to vector<4x3xf32>
    %219 = vector.shape_cast %218 : vector<4x3xf32> to vector<4x3x1xf32>
    %220 = vector.broadcast %219 : vector<4x3x1xf32> to vector<4x3x128xf32>
    %221 = arith.mulf %216, %220 : vector<4x3x128xf32>
    %222 = arith.addf %214, %221 : vector<4x3x128xf32>
    %cst_10 = arith.constant dense<0xFF800000> : vector<4x128xf32>
    %223 = vector.multi_reduction <maximumf>, %222, %cst_10 [1] : vector<4x3x128xf32> to vector<4x128xf32>
    %224 = vector.shape_cast %223 : vector<4x128xf32> to vector<4x1x128xf32>
    %225 = vector.broadcast %224 : vector<4x1x128xf32> to vector<4x3x128xf32>
    %226 = arith.subf %222, %225 : vector<4x3x128xf32>
    %227 = math.exp %226 : vector<4x3x128xf32>
    %cst_11 = arith.constant dense<0.000000e+00> : vector<4x128xf32>
    %228 = vector.multi_reduction <add>, %227, %cst_11 [1] : vector<4x3x128xf32> to vector<4x128xf32>
    %229 = vector.shape_cast %228 : vector<4x128xf32> to vector<4x1x128xf32>
    %cst_12 = arith.constant 1.000000e+00 : f32
    %230 = vector.broadcast %cst_12 : f32 to vector<4x1x128xf32>
    %231 = arith.divf %230, %229 : vector<4x1x128xf32>
    %232 = vector.broadcast %231 : vector<4x1x128xf32> to vector<4x3x128xf32>
    %233 = arith.mulf %227, %232 : vector<4x3x128xf32>
    %234 = vector.shape_cast %233 : vector<4x3x128xf32> to vector<4x3x1x128xf32>
    %235 = vector.broadcast %234 : vector<4x3x1x128xf32> to vector<4x3x16x128xf32>
    %236 = arith.mulf %235, %80 : vector<4x3x16x128xf32>
    %cst_13 = arith.constant dense<0.000000e+00> : vector<4x3x16xf32>
    %237 = vector.multi_reduction <add>, %236, %cst_13 [3] : vector<4x3x16x128xf32> to vector<4x3x16xf32>
    %238 = arith.mulf %237, %237 : vector<4x3x16xf32>
    %cst_14 = arith.constant dense<0.000000e+00> : vector<4x3xf32>
    %239 = vector.multi_reduction <add>, %238, %cst_14 [2] : vector<4x3x16xf32> to vector<4x3xf32>
    %240 = vector.shape_cast %239 : vector<4x3xf32> to vector<4x3x1xf32>
    %241 = math.sqrt %240 : vector<4x3x1xf32>
    %cst_15 = arith.constant 1.000000e+00 : f32
    %242 = vector.broadcast %cst_15 : f32 to vector<4x3x1xf32>
    %243 = arith.addf %242, %240 : vector<4x3x1xf32>
    %cst_16 = arith.constant 9.99999993E-9 : f32
    %244 = vector.broadcast %cst_16 : f32 to vector<4x3x1xf32>
    %245 = arith.addf %241, %244 : vector<4x3x1xf32>
    %246 = arith.mulf %243, %245 : vector<4x3x1xf32>
    %247 = arith.divf %240, %246 : vector<4x3x1xf32>
    %248 = vector.broadcast %247 : vector<4x3x1xf32> to vector<4x3x16xf32>
    %249 = arith.mulf %237, %248 : vector<4x3x16xf32>
    %250 = vector.extract_strided_slice %80 {offsets = [0, 0, 0, 0], sizes = [4, 3, 1, 128], strides = [1, 1, 1, 1]} : vector<4x3x16x128xf32> to vector<4x3x1x128xf32>
    %251 = vector.shape_cast %250 : vector<4x3x1x128xf32> to vector<4x3x128xf32>
    %252 = vector.extract_strided_slice %249 {offsets = [0, 0, 0], sizes = [4, 3, 1], strides = [1, 1, 1]} : vector<4x3x16xf32> to vector<4x3x1xf32>
    %253 = vector.shape_cast %252 : vector<4x3x1xf32> to vector<4x3xf32>
    %254 = vector.shape_cast %253 : vector<4x3xf32> to vector<4x3x1xf32>
    %255 = vector.broadcast %254 : vector<4x3x1xf32> to vector<4x3x128xf32>
    %256 = arith.mulf %251, %255 : vector<4x3x128xf32>
    %257 = vector.extract_strided_slice %80 {offsets = [0, 0, 1, 0], sizes = [4, 3, 1, 128], strides = [1, 1, 1, 1]} : vector<4x3x16x128xf32> to vector<4x3x1x128xf32>
    %258 = vector.shape_cast %257 : vector<4x3x1x128xf32> to vector<4x3x128xf32>
    %259 = vector.extract_strided_slice %249 {offsets = [0, 0, 1], sizes = [4, 3, 1], strides = [1, 1, 1]} : vector<4x3x16xf32> to vector<4x3x1xf32>
    %260 = vector.shape_cast %259 : vector<4x3x1xf32> to vector<4x3xf32>
    %261 = vector.shape_cast %260 : vector<4x3xf32> to vector<4x3x1xf32>
    %262 = vector.broadcast %261 : vector<4x3x1xf32> to vector<4x3x128xf32>
    %263 = arith.mulf %258, %262 : vector<4x3x128xf32>
    %264 = arith.addf %256, %263 : vector<4x3x128xf32>
    %265 = vector.extract_strided_slice %80 {offsets = [0, 0, 2, 0], sizes = [4, 3, 1, 128], strides = [1, 1, 1, 1]} : vector<4x3x16x128xf32> to vector<4x3x1x128xf32>
    %266 = vector.shape_cast %265 : vector<4x3x1x128xf32> to vector<4x3x128xf32>
    %267 = vector.extract_strided_slice %249 {offsets = [0, 0, 2], sizes = [4, 3, 1], strides = [1, 1, 1]} : vector<4x3x16xf32> to vector<4x3x1xf32>
    %268 = vector.shape_cast %267 : vector<4x3x1xf32> to vector<4x3xf32>
    %269 = vector.shape_cast %268 : vector<4x3xf32> to vector<4x3x1xf32>
    %270 = vector.broadcast %269 : vector<4x3x1xf32> to vector<4x3x128xf32>
    %271 = arith.mulf %266, %270 : vector<4x3x128xf32>
    %272 = arith.addf %264, %271 : vector<4x3x128xf32>
    %273 = vector.extract_strided_slice %80 {offsets = [0, 0, 3, 0], sizes = [4, 3, 1, 128], strides = [1, 1, 1, 1]} : vector<4x3x16x128xf32> to vector<4x3x1x128xf32>
    %274 = vector.shape_cast %273 : vector<4x3x1x128xf32> to vector<4x3x128xf32>
    %275 = vector.extract_strided_slice %249 {offsets = [0, 0, 3], sizes = [4, 3, 1], strides = [1, 1, 1]} : vector<4x3x16xf32> to vector<4x3x1xf32>
    %276 = vector.shape_cast %275 : vector<4x3x1xf32> to vector<4x3xf32>
    %277 = vector.shape_cast %276 : vector<4x3xf32> to vector<4x3x1xf32>
    %278 = vector.broadcast %277 : vector<4x3x1xf32> to vector<4x3x128xf32>
    %279 = arith.mulf %274, %278 : vector<4x3x128xf32>
    %280 = arith.addf %272, %279 : vector<4x3x128xf32>
    %281 = vector.extract_strided_slice %80 {offsets = [0, 0, 4, 0], sizes = [4, 3, 1, 128], strides = [1, 1, 1, 1]} : vector<4x3x16x128xf32> to vector<4x3x1x128xf32>
    %282 = vector.shape_cast %281 : vector<4x3x1x128xf32> to vector<4x3x128xf32>
    %283 = vector.extract_strided_slice %249 {offsets = [0, 0, 4], sizes = [4, 3, 1], strides = [1, 1, 1]} : vector<4x3x16xf32> to vector<4x3x1xf32>
    %284 = vector.shape_cast %283 : vector<4x3x1xf32> to vector<4x3xf32>
    %285 = vector.shape_cast %284 : vector<4x3xf32> to vector<4x3x1xf32>
    %286 = vector.broadcast %285 : vector<4x3x1xf32> to vector<4x3x128xf32>
    %287 = arith.mulf %282, %286 : vector<4x3x128xf32>
    %288 = arith.addf %280, %287 : vector<4x3x128xf32>
    %289 = vector.extract_strided_slice %80 {offsets = [0, 0, 5, 0], sizes = [4, 3, 1, 128], strides = [1, 1, 1, 1]} : vector<4x3x16x128xf32> to vector<4x3x1x128xf32>
    %290 = vector.shape_cast %289 : vector<4x3x1x128xf32> to vector<4x3x128xf32>
    %291 = vector.extract_strided_slice %249 {offsets = [0, 0, 5], sizes = [4, 3, 1], strides = [1, 1, 1]} : vector<4x3x16xf32> to vector<4x3x1xf32>
    %292 = vector.shape_cast %291 : vector<4x3x1xf32> to vector<4x3xf32>
    %293 = vector.shape_cast %292 : vector<4x3xf32> to vector<4x3x1xf32>
    %294 = vector.broadcast %293 : vector<4x3x1xf32> to vector<4x3x128xf32>
    %295 = arith.mulf %290, %294 : vector<4x3x128xf32>
    %296 = arith.addf %288, %295 : vector<4x3x128xf32>
    %297 = vector.extract_strided_slice %80 {offsets = [0, 0, 6, 0], sizes = [4, 3, 1, 128], strides = [1, 1, 1, 1]} : vector<4x3x16x128xf32> to vector<4x3x1x128xf32>
    %298 = vector.shape_cast %297 : vector<4x3x1x128xf32> to vector<4x3x128xf32>
    %299 = vector.extract_strided_slice %249 {offsets = [0, 0, 6], sizes = [4, 3, 1], strides = [1, 1, 1]} : vector<4x3x16xf32> to vector<4x3x1xf32>
    %300 = vector.shape_cast %299 : vector<4x3x1xf32> to vector<4x3xf32>
    %301 = vector.shape_cast %300 : vector<4x3xf32> to vector<4x3x1xf32>
    %302 = vector.broadcast %301 : vector<4x3x1xf32> to vector<4x3x128xf32>
    %303 = arith.mulf %298, %302 : vector<4x3x128xf32>
    %304 = arith.addf %296, %303 : vector<4x3x128xf32>
    %305 = vector.extract_strided_slice %80 {offsets = [0, 0, 7, 0], sizes = [4, 3, 1, 128], strides = [1, 1, 1, 1]} : vector<4x3x16x128xf32> to vector<4x3x1x128xf32>
    %306 = vector.shape_cast %305 : vector<4x3x1x128xf32> to vector<4x3x128xf32>
    %307 = vector.extract_strided_slice %249 {offsets = [0, 0, 7], sizes = [4, 3, 1], strides = [1, 1, 1]} : vector<4x3x16xf32> to vector<4x3x1xf32>
    %308 = vector.shape_cast %307 : vector<4x3x1xf32> to vector<4x3xf32>
    %309 = vector.shape_cast %308 : vector<4x3xf32> to vector<4x3x1xf32>
    %310 = vector.broadcast %309 : vector<4x3x1xf32> to vector<4x3x128xf32>
    %311 = arith.mulf %306, %310 : vector<4x3x128xf32>
    %312 = arith.addf %304, %311 : vector<4x3x128xf32>
    %313 = vector.extract_strided_slice %80 {offsets = [0, 0, 8, 0], sizes = [4, 3, 1, 128], strides = [1, 1, 1, 1]} : vector<4x3x16x128xf32> to vector<4x3x1x128xf32>
    %314 = vector.shape_cast %313 : vector<4x3x1x128xf32> to vector<4x3x128xf32>
    %315 = vector.extract_strided_slice %249 {offsets = [0, 0, 8], sizes = [4, 3, 1], strides = [1, 1, 1]} : vector<4x3x16xf32> to vector<4x3x1xf32>
    %316 = vector.shape_cast %315 : vector<4x3x1xf32> to vector<4x3xf32>
    %317 = vector.shape_cast %316 : vector<4x3xf32> to vector<4x3x1xf32>
    %318 = vector.broadcast %317 : vector<4x3x1xf32> to vector<4x3x128xf32>
    %319 = arith.mulf %314, %318 : vector<4x3x128xf32>
    %320 = arith.addf %312, %319 : vector<4x3x128xf32>
    %321 = vector.extract_strided_slice %80 {offsets = [0, 0, 9, 0], sizes = [4, 3, 1, 128], strides = [1, 1, 1, 1]} : vector<4x3x16x128xf32> to vector<4x3x1x128xf32>
    %322 = vector.shape_cast %321 : vector<4x3x1x128xf32> to vector<4x3x128xf32>
    %323 = vector.extract_strided_slice %249 {offsets = [0, 0, 9], sizes = [4, 3, 1], strides = [1, 1, 1]} : vector<4x3x16xf32> to vector<4x3x1xf32>
    %324 = vector.shape_cast %323 : vector<4x3x1xf32> to vector<4x3xf32>
    %325 = vector.shape_cast %324 : vector<4x3xf32> to vector<4x3x1xf32>
    %326 = vector.broadcast %325 : vector<4x3x1xf32> to vector<4x3x128xf32>
    %327 = arith.mulf %322, %326 : vector<4x3x128xf32>
    %328 = arith.addf %320, %327 : vector<4x3x128xf32>
    %329 = vector.extract_strided_slice %80 {offsets = [0, 0, 10, 0], sizes = [4, 3, 1, 128], strides = [1, 1, 1, 1]} : vector<4x3x16x128xf32> to vector<4x3x1x128xf32>
    %330 = vector.shape_cast %329 : vector<4x3x1x128xf32> to vector<4x3x128xf32>
    %331 = vector.extract_strided_slice %249 {offsets = [0, 0, 10], sizes = [4, 3, 1], strides = [1, 1, 1]} : vector<4x3x16xf32> to vector<4x3x1xf32>
    %332 = vector.shape_cast %331 : vector<4x3x1xf32> to vector<4x3xf32>
    %333 = vector.shape_cast %332 : vector<4x3xf32> to vector<4x3x1xf32>
    %334 = vector.broadcast %333 : vector<4x3x1xf32> to vector<4x3x128xf32>
    %335 = arith.mulf %330, %334 : vector<4x3x128xf32>
    %336 = arith.addf %328, %335 : vector<4x3x128xf32>
    %337 = vector.extract_strided_slice %80 {offsets = [0, 0, 11, 0], sizes = [4, 3, 1, 128], strides = [1, 1, 1, 1]} : vector<4x3x16x128xf32> to vector<4x3x1x128xf32>
    %338 = vector.shape_cast %337 : vector<4x3x1x128xf32> to vector<4x3x128xf32>
    %339 = vector.extract_strided_slice %249 {offsets = [0, 0, 11], sizes = [4, 3, 1], strides = [1, 1, 1]} : vector<4x3x16xf32> to vector<4x3x1xf32>
    %340 = vector.shape_cast %339 : vector<4x3x1xf32> to vector<4x3xf32>
    %341 = vector.shape_cast %340 : vector<4x3xf32> to vector<4x3x1xf32>
    %342 = vector.broadcast %341 : vector<4x3x1xf32> to vector<4x3x128xf32>
    %343 = arith.mulf %338, %342 : vector<4x3x128xf32>
    %344 = arith.addf %336, %343 : vector<4x3x128xf32>
    %345 = vector.extract_strided_slice %80 {offsets = [0, 0, 12, 0], sizes = [4, 3, 1, 128], strides = [1, 1, 1, 1]} : vector<4x3x16x128xf32> to vector<4x3x1x128xf32>
    %346 = vector.shape_cast %345 : vector<4x3x1x128xf32> to vector<4x3x128xf32>
    %347 = vector.extract_strided_slice %249 {offsets = [0, 0, 12], sizes = [4, 3, 1], strides = [1, 1, 1]} : vector<4x3x16xf32> to vector<4x3x1xf32>
    %348 = vector.shape_cast %347 : vector<4x3x1xf32> to vector<4x3xf32>
    %349 = vector.shape_cast %348 : vector<4x3xf32> to vector<4x3x1xf32>
    %350 = vector.broadcast %349 : vector<4x3x1xf32> to vector<4x3x128xf32>
    %351 = arith.mulf %346, %350 : vector<4x3x128xf32>
    %352 = arith.addf %344, %351 : vector<4x3x128xf32>
    %353 = vector.extract_strided_slice %80 {offsets = [0, 0, 13, 0], sizes = [4, 3, 1, 128], strides = [1, 1, 1, 1]} : vector<4x3x16x128xf32> to vector<4x3x1x128xf32>
    %354 = vector.shape_cast %353 : vector<4x3x1x128xf32> to vector<4x3x128xf32>
    %355 = vector.extract_strided_slice %249 {offsets = [0, 0, 13], sizes = [4, 3, 1], strides = [1, 1, 1]} : vector<4x3x16xf32> to vector<4x3x1xf32>
    %356 = vector.shape_cast %355 : vector<4x3x1xf32> to vector<4x3xf32>
    %357 = vector.shape_cast %356 : vector<4x3xf32> to vector<4x3x1xf32>
    %358 = vector.broadcast %357 : vector<4x3x1xf32> to vector<4x3x128xf32>
    %359 = arith.mulf %354, %358 : vector<4x3x128xf32>
    %360 = arith.addf %352, %359 : vector<4x3x128xf32>
    %361 = vector.extract_strided_slice %80 {offsets = [0, 0, 14, 0], sizes = [4, 3, 1, 128], strides = [1, 1, 1, 1]} : vector<4x3x16x128xf32> to vector<4x3x1x128xf32>
    %362 = vector.shape_cast %361 : vector<4x3x1x128xf32> to vector<4x3x128xf32>
    %363 = vector.extract_strided_slice %249 {offsets = [0, 0, 14], sizes = [4, 3, 1], strides = [1, 1, 1]} : vector<4x3x16xf32> to vector<4x3x1xf32>
    %364 = vector.shape_cast %363 : vector<4x3x1xf32> to vector<4x3xf32>
    %365 = vector.shape_cast %364 : vector<4x3xf32> to vector<4x3x1xf32>
    %366 = vector.broadcast %365 : vector<4x3x1xf32> to vector<4x3x128xf32>
    %367 = arith.mulf %362, %366 : vector<4x3x128xf32>
    %368 = arith.addf %360, %367 : vector<4x3x128xf32>
    %369 = vector.extract_strided_slice %80 {offsets = [0, 0, 15, 0], sizes = [4, 3, 1, 128], strides = [1, 1, 1, 1]} : vector<4x3x16x128xf32> to vector<4x3x1x128xf32>
    %370 = vector.shape_cast %369 : vector<4x3x1x128xf32> to vector<4x3x128xf32>
    %371 = vector.extract_strided_slice %249 {offsets = [0, 0, 15], sizes = [4, 3, 1], strides = [1, 1, 1]} : vector<4x3x16xf32> to vector<4x3x1xf32>
    %372 = vector.shape_cast %371 : vector<4x3x1xf32> to vector<4x3xf32>
    %373 = vector.shape_cast %372 : vector<4x3xf32> to vector<4x3x1xf32>
    %374 = vector.broadcast %373 : vector<4x3x1xf32> to vector<4x3x128xf32>
    %375 = arith.mulf %370, %374 : vector<4x3x128xf32>
    %376 = arith.addf %368, %375 : vector<4x3x128xf32>
    %377 = arith.addf %222, %376 : vector<4x3x128xf32>
    %cst_17 = arith.constant dense<0xFF800000> : vector<4x128xf32>
    %378 = vector.multi_reduction <maximumf>, %377, %cst_17 [1] : vector<4x3x128xf32> to vector<4x128xf32>
    %379 = vector.shape_cast %378 : vector<4x128xf32> to vector<4x1x128xf32>
    %380 = vector.broadcast %379 : vector<4x1x128xf32> to vector<4x3x128xf32>
    %381 = arith.subf %377, %380 : vector<4x3x128xf32>
    %382 = math.exp %381 : vector<4x3x128xf32>
    %cst_18 = arith.constant dense<0.000000e+00> : vector<4x128xf32>
    %383 = vector.multi_reduction <add>, %382, %cst_18 [1] : vector<4x3x128xf32> to vector<4x128xf32>
    %384 = vector.shape_cast %383 : vector<4x128xf32> to vector<4x1x128xf32>
    %cst_19 = arith.constant 1.000000e+00 : f32
    %385 = vector.broadcast %cst_19 : f32 to vector<4x1x128xf32>
    %386 = arith.divf %385, %384 : vector<4x1x128xf32>
    %387 = vector.broadcast %386 : vector<4x1x128xf32> to vector<4x3x128xf32>
    %388 = arith.mulf %382, %387 : vector<4x3x128xf32>
    %389 = vector.shape_cast %388 : vector<4x3x128xf32> to vector<4x3x1x128xf32>
    %390 = vector.broadcast %389 : vector<4x3x1x128xf32> to vector<4x3x16x128xf32>
    %391 = arith.mulf %390, %80 : vector<4x3x16x128xf32>
    %cst_20 = arith.constant dense<0.000000e+00> : vector<4x3x16xf32>
    %392 = vector.multi_reduction <add>, %391, %cst_20 [3] : vector<4x3x16x128xf32> to vector<4x3x16xf32>
    %393 = arith.mulf %392, %392 : vector<4x3x16xf32>
    %cst_21 = arith.constant dense<0.000000e+00> : vector<4x3xf32>
    %394 = vector.multi_reduction <add>, %393, %cst_21 [2] : vector<4x3x16xf32> to vector<4x3xf32>
    %395 = vector.shape_cast %394 : vector<4x3xf32> to vector<4x3x1xf32>
    %396 = math.sqrt %395 : vector<4x3x1xf32>
    %cst_22 = arith.constant 1.000000e+00 : f32
    %397 = vector.broadcast %cst_22 : f32 to vector<4x3x1xf32>
    %398 = arith.addf %397, %395 : vector<4x3x1xf32>
    %cst_23 = arith.constant 9.99999993E-9 : f32
    %399 = vector.broadcast %cst_23 : f32 to vector<4x3x1xf32>
    %400 = arith.addf %396, %399 : vector<4x3x1xf32>
    %401 = arith.mulf %398, %400 : vector<4x3x1xf32>
    %402 = arith.divf %395, %401 : vector<4x3x1xf32>
    %403 = vector.broadcast %402 : vector<4x3x1xf32> to vector<4x3x16xf32>
    %404 = arith.mulf %392, %403 : vector<4x3x16xf32>
    %405 = arith.mulf %404, %404 : vector<4x3x16xf32>
    %cst_24 = arith.constant dense<0.000000e+00> : vector<4x3xf32>
    %406 = vector.multi_reduction <add>, %405, %cst_24 [2] : vector<4x3x16xf32> to vector<4x3xf32>
    %407 = math.sqrt %406 : vector<4x3xf32>
    %408 = vector.shape_cast %404 : vector<4x3x16xf32> to vector<4x1x48xf32>
    %c0_25 = arith.constant 0 : index
    %c0_26 = arith.constant 0 : index
    %c0_27 = arith.constant 0 : index
    %409 = vector.load %arg3[%c0_25, %c0_26, %c0_27] : memref<4x1x51xf32, #tpu.memory_space<vmem>>, vector<4x1x48xf32>
    tpu.vector_store %arg3[%c0_25, %c0_26, %c0_27], %408 {strides = array<i32>} : memref<4x1x51xf32, #tpu.memory_space<vmem>>, vector<4x1x48xf32>,
    %410 = vector.shape_cast %407 : vector<4x3xf32> to vector<4x1x3xf32>
    %c0_28 = arith.constant 0 : index
    %c0_29 = arith.constant 0 : index
    %c48 = arith.constant 48 : index
    %411 = vector.load %arg3[%c0_28, %c0_29, %c48] : memref<4x1x51xf32, #tpu.memory_space<vmem>>, vector<4x1x3xf32>
    tpu.vector_store %arg3[%c0_28, %c0_29, %c48], %410 {strides = array<i32>} : memref<4x1x51xf32, #tpu.memory_space<vmem>>, vector<4x1x3xf32>,
    return
  }
  func.func @transform_0(%arg0: i32) -> (i32, i32, i32) {
    %c0_i32 = arith.constant 0 : i32
    %c0_i32_0 = arith.constant 0 : i32
    %c0_i32_1 = arith.constant 0 : i32
    return %arg0, %c0_i32, %c0_i32_0 : i32, i32, i32
  }
  func.func @transform_1(%arg0: i32) -> (i32, i32, i32, i32) {
    %c0_i32 = arith.constant 0 : i32
    %c0_i32_0 = arith.constant 0 : i32
    %c0_i32_1 = arith.constant 0 : i32
    %c0_i32_2 = arith.constant 0 : i32
    %c0_i32_3 = arith.constant 0 : i32
    return %c0_i32, %c0_i32_0, %c0_i32_1, %c0_i32_2 : i32, i32, i32, i32
  }
  func.func @transform_2(%arg0: i32) -> (i32, i32, i32) {
    %c0_i32 = arith.constant 0 : i32
    %c0_i32_0 = arith.constant 0 : i32
    %c0_i32_1 = arith.constant 0 : i32
    return %arg0, %c0_i32, %c0_i32_0 : i32, i32, i32
  }
}

</mosaic_0001>

<llo_original>
// kernel: tpu_custom_call.1
$region0: #{tpu_custom_call.1}
  #allocation0 [shape = 'u32[]', space=smem, size = 0x4, offset = 0x4, fixed_abs, tag = 'smem constant byte address 0x4 - core index']
  #allocation1 [shape = 'u32[144,128]{1,0:T(1,128)}', space=vmem, size = 0x12000, scoped, tag = 'internal scratch']
  %s0 = inlined_call_operand.hbm [shape: f32[4,8,128], index: 0, kind: input, shape index: {}]
  %s1 = inlined_call_operand.hbm [shape: f32[8,3,16,128], index: 1, kind: input, shape index: {}]
  %s2 = inlined_call_operand.hbm [shape: f32[4,1,51], index: 2, kind: output, shape index: {}]
  %s3 = sld [smem:[#allocation0]]
  $region26: #{tpu_custom_call.1} parent=0
    _
  %s5 = ssub.s32 1, %s3
  %s6 = scalar_select 0, %s5, %s3
  $region1: #{tpu_custom_call.1} parent=0
    #allocation2 [shape = 'u8[16384]{0}', space=vmem, size = 0x4000, scoped, tag = 'input window, operand 0, single buffered']
    #allocation3 [shape = 's32[1]{0}', space=sflag, size = 0x4, scoped, tag = 'scoped memory for tpu_custom_call.1']
    #allocation4 [shape = 's32[1]{0}', space=sflag, size = 0x4, scoped, tag = 'scoped memory for tpu_custom_call.1']
    #allocation5 [shape = 'u8[196608]{0}', space=vmem, size = 0x30000, scoped, tag = 'input window, operand 1, single buffered']
    #allocation6 [shape = 's32[1]{0}', space=sflag, size = 0x4, scoped, tag = 'scoped memory for tpu_custom_call.1']
    #allocation7 [shape = 'u8[2048]{0}', space=vmem, size = 0x800, scoped, tag = 'output window, operand 0, single buffered']
    %7 = vsyncpa [#allocation3], 0
    %8 = vsyncpa [#allocation6], 0
    %9 = vsyncpa [#allocation4], 0
    // Predicated region
    $region2: #{tpu_custom_call.1} parent=1 // pred_check
      _
    $region3: #{tpu_custom_call.1} parent=1 // pred_check_branch
      %11 = sbr.rel (0) target = $region5
    $region4: #{tpu_custom_call.1} parent=1 // pred_region
      %s13 = ssub.s32 512, 512
      %14 = vsyncadd [#allocation3], %s13
      %s15 = sshll.u32 [#allocation2], 4
      %s16 = int_to_ptr.vmem [resolvable:$true] %s15
      %21 = dma.hbm_to_vmem [thread:$0]  %s0, 512, %s16, [#allocation3], 128, 128, 8
    $region5: #{tpu_custom_call.1} parent=1 // pred_fallthru
      _
    // Predicated region
    $region6: #{tpu_custom_call.1} parent=1 // pred_check
      _
    $region7: #{tpu_custom_call.1} parent=1 // pred_check_branch
      %23 = sbr.rel (0) target = $region9
    $region8: #{tpu_custom_call.1} parent=1 // pred_region
      %s25 = ssub.s32 6144, 6144
      %26 = vsyncadd [#allocation6], %s25
      %s27 = sshll.u32 [#allocation5], 4
      %s28 = int_to_ptr.vmem [resolvable:$true] %s27
      %33 = dma.hbm_to_vmem [thread:$0]  %s1, 6144, %s28, [#allocation6], 128, 128, 8
    $region9: #{tpu_custom_call.1} parent=1 // pred_fallthru
      _
    // Predicated region
    $region10: #{tpu_custom_call.1} parent=1 // pred_check
      _
    $region11: #{tpu_custom_call.1} parent=1 // pred_check_branch
      %35 = sbr.rel (0) target = $region13
    $region12: #{tpu_custom_call.1} parent=1 // pred_region
      %36 = dma.done [#allocation3], 512
    $region13: #{tpu_custom_call.1} parent=1 // pred_fallthru
      _
    // Predicated region
    $region14: #{tpu_custom_call.1} parent=1 // pred_check
      _
    $region15: #{tpu_custom_call.1} parent=1 // pred_check_branch
      %38 = sbr.rel (0) target = $region17
    $region16: #{tpu_custom_call.1} parent=1 // pred_region
      %39 = dma.done [#allocation6], 6144
    $region17: #{tpu_custom_call.1} parent=1 // pred_fallthru
      _
    %v40 = vld [vmem:[#allocation2] sm:$0xff]
    %v41 = vld [vmem:[#allocation2 + $0x8] sm:$0xff]
    %v42 = vld [vmem:[#allocation2 + $0x10] sm:$0xff]
    %v43 = vld [vmem:[#allocation2 + $0x18] sm:$0xff]
    %v44 = vld [vmem:[#allocation5] sm:$0xff]
    %v45 = vld [vmem:[#allocation5 + $0x8] sm:$0xff]
    %v46 = vld [vmem:[#allocation5 + $0x10] sm:$0xff]
    %v47 = vld [vmem:[#allocation5 + $0x18] sm:$0xff]
    %v48 = vld [vmem:[#allocation5 + $0x20] sm:$0xff]
    %v49 = vld [vmem:[#allocation5 + $0x28] sm:$0xff]
    %v50 = vld [vmem:[#allocation5 + $0x30] sm:$0xff]
    %v51 = vld [vmem:[#allocation5 + $0x38] sm:$0xff]
    %v52 = vld [vmem:[#allocation5 + $0x40] sm:$0xff]
    %v53 = vld [vmem:[#allocation5 + $0x48] sm:$0xff]
    %v54 = vld [vmem:[#allocation5 + $0x50] sm:$0xff]
    %v55 = vld [vmem:[#allocation5 + $0x58] sm:$0xff]
    %v56 = vld [vmem:[#allocation5 + $0x60] sm:$0xff]
    %v57 = vld [vmem:[#allocation5 + $0x68] sm:$0xff]
    %v58 = vld [vmem:[#allocation5 + $0x70] sm:$0xff]
    %v59 = vld [vmem:[#allocation5 + $0x78] sm:$0xff]
    %v60 = vld [vmem:[#allocation5 + $0x80] sm:$0xff]
    %v61 = vld [vmem:[#allocation5 + $0x88] sm:$0xff]
    %v62 = vld [vmem:[#allocation5 + $0x90] sm:$0xff]
    %v63 = vld [vmem:[#allocation5 + $0x98] sm:$0xff]
    %v64 = vld [vmem:[#allocation5 + $0xa0] sm:$0xff]
    %v65 = vld [vmem:[#allocation5 + $0xa8] sm:$0xff]
    %v66 = vld [vmem:[#allocation5 + $0xb0] sm:$0xff]
    %v67 = vld [vmem:[#allocation5 + $0xb8] sm:$0xff]
    %v68 = vld [vmem:[#allocation5 + $0xc0] sm:$0xff]
    %v69 = vld [vmem:[#allocation5 + $0xc8] sm:$0xff]
    %v70 = vld [vmem:[#allocation5 + $0xd0] sm:$0xff]
    %v71 = vld [vmem:[#allocation5 + $0xd8] sm:$0xff]
    %v72 = vld [vmem:[#allocation5 + $0xe0] sm:$0xff]
    %v73 = vld [vmem:[#allocation5 + $0xe8] sm:$0xff]
    %v74 = vld [vmem:[#allocation5 + $0xf0] sm:$0xff]
    %v75 = vld [vmem:[#allocation5 + $0xf8] sm:$0xff]
    %v76 = vld [vmem:[#allocation5 + $0x100] sm:$0xff]
    %v77 = vld [vmem:[#allocation5 + $0x108] sm:$0xff]
    %v78 = vld [vmem:[#allocation5 + $0x110] sm:$0xff]
    %v79 = vld [vmem:[#allocation5 + $0x118] sm:$0xff]
    %v80 = vld [vmem:[#allocation5 + $0x120] sm:$0xff]
    %v81 = vld [vmem:[#allocation5 + $0x128] sm:$0xff]
    %v82 = vld [vmem:[#allocation5 + $0x130] sm:$0xff]
    %v83 = vld [vmem:[#allocation5 + $0x138] sm:$0xff]
    %v84 = vld [vmem:[#allocation5 + $0x140] sm:$0xff]
    %v85 = vld [vmem:[#allocation5 + $0x148] sm:$0xff]
    %v86 = vld [vmem:[#allocation5 + $0x150] sm:$0xff]
    %v87 = vld [vmem:[#allocation5 + $0x158] sm:$0xff]
    %v88 = vld [vmem:[#allocation5 + $0x160] sm:$0xff]
    %v89 = vld [vmem:[#allocation5 + $0x168] sm:$0xff]
    %v90 = vld [vmem:[#allocation5 + $0x170] sm:$0xff]
    %v91 = vld [vmem:[#allocation5 + $0x178] sm:$0xff]
    %v92 = vlaneseq
    %v93 = vshrl.u32 %v92, 7
    %v94 = vsub.s32 0, %v93
    %v95 = vrot.slane %v40, %v94
    %v96 = vlaneseq
    %v97 = vshrl.u32 %v96, 7
    %v98 = vsub.s32 0, %v97
    %v99 = vrot.slane %v41, %v98
    %v100 = vlaneseq
    %v101 = vshrl.u32 %v100, 7
    %v102 = vsub.s32 0, %v101
    %v103 = vrot.slane %v42, %v102
    %v104 = vlaneseq
    %v105 = vshrl.u32 %v104, 7
    %v106 = vsub.s32 0, %v105
    %v107 = vrot.slane %v43, %v106
    %v108 = vmul.f32 %v95, %v44
    %v109 = vmul.f32 %v95, %v45
    %v110 = vmul.f32 %v95, %v46
    %v111 = vmul.f32 %v95, %v47
    %v112 = vmul.f32 %v95, %v48
    %v113 = vmul.f32 %v95, %v49
    %v114 = vmul.f32 %v99, %v44
    %v115 = vmul.f32 %v99, %v45
    %v116 = vmul.f32 %v99, %v46
    %v117 = vmul.f32 %v99, %v47
    %v118 = vmul.f32 %v99, %v48
    %v119 = vmul.f32 %v99, %v49
    %v120 = vmul.f32 %v103, %v44
    %v121 = vmul.f32 %v103, %v45
    %v122 = vmul.f32 %v103, %v46
    %v123 = vmul.f32 %v103, %v47
    %v124 = vmul.f32 %v103, %v48
    %v125 = vmul.f32 %v103, %v49
    %v126 = vmul.f32 %v107, %v44
    %v127 = vmul.f32 %v107, %v45
    %v128 = vmul.f32 %v107, %v46
    %v129 = vmul.f32 %v107, %v47
    %v130 = vmul.f32 %v107, %v48
    %v131 = vmul.f32 %v107, %v49
    %v132 = vlaneseq
    %v133 = vshrl.u32 %v132, 7
    %v134 = vsub.s32 1, %v133
    %v135 = vrot.slane %v40, %v134
    %v136 = vlaneseq
    %v137 = vshrl.u32 %v136, 7
    %v138 = vsub.s32 1, %v137
    %v139 = vrot.slane %v41, %v138
    %v140 = vlaneseq
    %v141 = vshrl.u32 %v140, 7
    %v142 = vsub.s32 1, %v141
    %v143 = vrot.slane %v42, %v142
    %v144 = vlaneseq
    %v145 = vshrl.u32 %v144, 7
    %v146 = vsub.s32 1, %v145
    %v147 = vrot.slane %v43, %v146
    %v148 = vmul.f32 %v135, %v50
    %v149 = vmul.f32 %v135, %v51
    %v150 = vmul.f32 %v135, %v52
    %v151 = vmul.f32 %v135, %v53
    %v152 = vmul.f32 %v135, %v54
    %v153 = vmul.f32 %v135, %v55
    %v154 = vmul.f32 %v139, %v50
    %v155 = vmul.f32 %v139, %v51
    %v156 = vmul.f32 %v139, %v52
    %v157 = vmul.f32 %v139, %v53
    %v158 = vmul.f32 %v139, %v54
    %v159 = vmul.f32 %v139, %v55
    %v160 = vmul.f32 %v143, %v50
    %v161 = vmul.f32 %v143, %v51
    %v162 = vmul.f32 %v143, %v52
    %v163 = vmul.f32 %v143, %v53
    %v164 = vmul.f32 %v143, %v54
    %v165 = vmul.f32 %v143, %v55
    %v166 = vmul.f32 %v147, %v50
    %v167 = vmul.f32 %v147, %v51
    %v168 = vmul.f32 %v147, %v52
    %v169 = vmul.f32 %v147, %v53
    %v170 = vmul.f32 %v147, %v54
    %v171 = vmul.f32 %v147, %v55
    %v172 = vadd.f32 %v108, %v148
    %v173 = vadd.f32 %v109, %v149
    %v174 = vadd.f32 %v110, %v150
    %v175 = vadd.f32 %v111, %v151
    %v176 = vadd.f32 %v112, %v152
    %v177 = vadd.f32 %v113, %v153
    %v178 = vadd.f32 %v114, %v154
    %v179 = vadd.f32 %v115, %v155
    %v180 = vadd.f32 %v116, %v156
    %v181 = vadd.f32 %v117, %v157
    %v182 = vadd.f32 %v118, %v158
    %v183 = vadd.f32 %v119, %v159
    %v184 = vadd.f32 %v120, %v160
    %v185 = vadd.f32 %v121, %v161
    %v186 = vadd.f32 %v122, %v162
    %v187 = vadd.f32 %v123, %v163
    %v188 = vadd.f32 %v124, %v164
    %v189 = vadd.f32 %v125, %v165
    %v190 = vadd.f32 %v126, %v166
    %v191 = vadd.f32 %v127, %v167
    %v192 = vadd.f32 %v128, %v168
    %v193 = vadd.f32 %v129, %v169
    %v194 = vadd.f32 %v130, %v170
    %v195 = vadd.f32 %v131, %v171
    %v196 = vlaneseq
    %v197 = vshrl.u32 %v196, 7
    %v198 = vsub.s32 2, %v197
    %v199 = vrot.slane %v40, %v198
    %v200 = vlaneseq
    %v201 = vshrl.u32 %v200, 7
    %v202 = vsub.s32 2, %v201
    %v203 = vrot.slane %v41, %v202
    %v204 = vlaneseq
    %v205 = vshrl.u32 %v204, 7
    %v206 = vsub.s32 2, %v205
    %v207 = vrot.slane %v42, %v206
    %v208 = vlaneseq
    %v209 = vshrl.u32 %v208, 7
    %v210 = vsub.s32 2, %v209
    %v211 = vrot.slane %v43, %v210
    %v212 = vmul.f32 %v199, %v56
    %v213 = vmul.f32 %v199, %v57
    %v214 = vmul.f32 %v199, %v58
    %v215 = vmul.f32 %v199, %v59
    %v216 = vmul.f32 %v199, %v60
    %v217 = vmul.f32 %v199, %v61
    %v218 = vmul.f32 %v203, %v56
    %v219 = vmul.f32 %v203, %v57
    %v220 = vmul.f32 %v203, %v58
    %v221 = vmul.f32 %v203, %v59
    %v222 = vmul.f32 %v203, %v60
    %v223 = vmul.f32 %v203, %v61
    %v224 = vmul.f32 %v207, %v56
    %v225 = vmul.f32 %v207, %v57
    %v226 = vmul.f32 %v207, %v58
    %v227 = vmul.f32 %v207, %v59
    %v228 = vmul.f32 %v207, %v60
    %v229 = vmul.f32 %v207, %v61
    %v230 = vmul.f32 %v211, %v56
    %v231 = vmul.f32 %v211, %v57
    %v232 = vmul.f32 %v211, %v58
    %v233 = vmul.f32 %v211, %v59
    %v234 = vmul.f32 %v211, %v60
    %v235 = vmul.f32 %v211, %v61
    %v236 = vadd.f32 %v172, %v212
    %v237 = vadd.f32 %v173, %v213
    %v238 = vadd.f32 %v174, %v214
    %v239 = vadd.f32 %v175, %v215
    %v240 = vadd.f32 %v176, %v216
    %v241 = vadd.f32 %v177, %v217
    %v242 = vadd.f32 %v178, %v218
    %v243 = vadd.f32 %v179, %v219
    %v244 = vadd.f32 %v180, %v220
    %v245 = vadd.f32 %v181, %v221
    %v246 = vadd.f32 %v182, %v222
    %v247 = vadd.f32 %v183, %v223
    %v248 = vadd.f32 %v184, %v224
    %v249 = vadd.f32 %v185, %v225
    %v250 = vadd.f32 %v186, %v226
    %v251 = vadd.f32 %v187, %v227
    %v252 = vadd.f32 %v188, %v228
    %v253 = vadd.f32 %v189, %v229
    %v254 = vadd.f32 %v190, %v230
    %v255 = vadd.f32 %v191, %v231
    %v256 = vadd.f32 %v192, %v232
    %v257 = vadd.f32 %v193, %v233
    %v258 = vadd.f32 %v194, %v234
    %v259 = vadd.f32 %v195, %v235
    %v260 = vlaneseq
    %v261 = vshrl.u32 %v260, 7
    %v262 = vsub.s32 3, %v261
    %v263 = vrot.slane %v40, %v262
    %v264 = vlaneseq
    %v265 = vshrl.u32 %v264, 7
    %v266 = vsub.s32 3, %v265
    %v267 = vrot.slane %v41, %v266
    %v268 = vlaneseq
    %v269 = vshrl.u32 %v268, 7
    %v270 = vsub.s32 3, %v269
    %v271 = vrot.slane %v42, %v270
    %v272 = vlaneseq
    %v273 = vshrl.u32 %v272, 7
    %v274 = vsub.s32 3, %v273
    %v275 = vrot.slane %v43, %v274
    %v276 = vmul.f32 %v263, %v62
    %v277 = vmul.f32 %v263, %v63
    %v278 = vmul.f32 %v263, %v64
    %v279 = vmul.f32 %v263, %v65
    %v280 = vmul.f32 %v263, %v66
    %v281 = vmul.f32 %v263, %v67
    %v282 = vmul.f32 %v267, %v62
    %v283 = vmul.f32 %v267, %v63
    %v284 = vmul.f32 %v267, %v64
    %v285 = vmul.f32 %v267, %v65
    %v286 = vmul.f32 %v267, %v66
    %v287 = vmul.f32 %v267, %v67
    %v288 = vmul.f32 %v271, %v62
    %v289 = vmul.f32 %v271, %v63
    %v290 = vmul.f32 %v271, %v64
    %v291 = vmul.f32 %v271, %v65
    %v292 = vmul.f32 %v271, %v66
    %v293 = vmul.f32 %v271, %v67
    %v294 = vmul.f32 %v275, %v62
    %v295 = vmul.f32 %v275, %v63
    %v296 = vmul.f32 %v275, %v64
    %v297 = vmul.f32 %v275, %v65
    %v298 = vmul.f32 %v275, %v66
    %v299 = vmul.f32 %v275, %v67
    %v300 = vadd.f32 %v236, %v276
    %v301 = vadd.f32 %v237, %v277
    %v302 = vadd.f32 %v238, %v278
    %v303 = vadd.f32 %v239, %v279
    %v304 = vadd.f32 %v240, %v280
    %v305 = vadd.f32 %v241, %v281
    %v306 = vadd.f32 %v242, %v282
    %v307 = vadd.f32 %v243, %v283
    %v308 = vadd.f32 %v244, %v284
    %v309 = vadd.f32 %v245, %v285
    %v310 = vadd.f32 %v246, %v286
    %v311 = vadd.f32 %v247, %v287
    %v312 = vadd.f32 %v248, %v288
    %v313 = vadd.f32 %v249, %v289
    %v314 = vadd.f32 %v250, %v290
    %v315 = vadd.f32 %v251, %v291
    %v316 = vadd.f32 %v252, %v292
    %v317 = vadd.f32 %v253, %v293
    %v318 = vadd.f32 %v254, %v294
    %v319 = vadd.f32 %v255, %v295
    %v320 = vadd.f32 %v256, %v296
    %v321 = vadd.f32 %v257, %v297
    %v322 = vadd.f32 %v258, %v298
    %v323 = vadd.f32 %v259, %v299
    %v324 = vlaneseq
    %v325 = vshrl.u32 %v324, 7
    %v326 = vsub.s32 4, %v325
    %v327 = vrot.slane %v40, %v326
    %v328 = vlaneseq
    %v329 = vshrl.u32 %v328, 7
    %v330 = vsub.s32 4, %v329
    %v331 = vrot.slane %v41, %v330
    %v332 = vlaneseq
    %v333 = vshrl.u32 %v332, 7
    %v334 = vsub.s32 4, %v333
    %v335 = vrot.slane %v42, %v334
    %v336 = vlaneseq
    %v337 = vshrl.u32 %v336, 7
    %v338 = vsub.s32 4, %v337
    %v339 = vrot.slane %v43, %v338
    %v340 = vmul.f32 %v327, %v68
    %v341 = vmul.f32 %v327, %v69
    %v342 = vmul.f32 %v327, %v70
    %v343 = vmul.f32 %v327, %v71
    %v344 = vmul.f32 %v327, %v72
    %v345 = vmul.f32 %v327, %v73
    %v346 = vmul.f32 %v331, %v68
    %v347 = vmul.f32 %v331, %v69
    %v348 = vmul.f32 %v331, %v70
    %v349 = vmul.f32 %v331, %v71
    %v350 = vmul.f32 %v331, %v72
    %v351 = vmul.f32 %v331, %v73
    %v352 = vmul.f32 %v335, %v68
    %v353 = vmul.f32 %v335, %v69
    %v354 = vmul.f32 %v335, %v70
    %v355 = vmul.f32 %v335, %v71
    %v356 = vmul.f32 %v335, %v72
    %v357 = vmul.f32 %v335, %v73
    %v358 = vmul.f32 %v339, %v68
    %v359 = vmul.f32 %v339, %v69
    %v360 = vmul.f32 %v339, %v70
    %v361 = vmul.f32 %v339, %v71
    %v362 = vmul.f32 %v339, %v72
    %v363 = vmul.f32 %v339, %v73
    %v364 = vadd.f32 %v300, %v340
    %v365 = vadd.f32 %v301, %v341
    %v366 = vadd.f32 %v302, %v342
    %v367 = vadd.f32 %v303, %v343
    %v368 = vadd.f32 %v304, %v344
    %v369 = vadd.f32 %v305, %v345
    %v370 = vadd.f32 %v306, %v346
    %v371 = vadd.f32 %v307, %v347
    %v372 = vadd.f32 %v308, %v348
    %v373 = vadd.f32 %v309, %v349
    %v374 = vadd.f32 %v310, %v350
    %v375 = vadd.f32 %v311, %v351
    %v376 = vadd.f32 %v312, %v352
    %v377 = vadd.f32 %v313, %v353
    %v378 = vadd.f32 %v314, %v354
    %v379 = vadd.f32 %v315, %v355
    %v380 = vadd.f32 %v316, %v356
    %v381 = vadd.f32 %v317, %v357
    %v382 = vadd.f32 %v318, %v358
    %v383 = vadd.f32 %v319, %v359
    %v384 = vadd.f32 %v320, %v360
    %v385 = vadd.f32 %v321, %v361
    %v386 = vadd.f32 %v322, %v362
    %v387 = vadd.f32 %v323, %v363
    %v388 = vlaneseq
    %v389 = vshrl.u32 %v388, 7
    %v390 = vsub.s32 5, %v389
    %v391 = vrot.slane %v40, %v390
    %v392 = vlaneseq
    %v393 = vshrl.u32 %v392, 7
    %v394 = vsub.s32 5, %v393
    %v395 = vrot.slane %v41, %v394
    %v396 = vlaneseq
    %v397 = vshrl.u32 %v396, 7
    %v398 = vsub.s32 5, %v397
    %v399 = vrot.slane %v42, %v398
    %v400 = vlaneseq
    %v401 = vshrl.u32 %v400, 7
    %v402 = vsub.s32 5, %v401
    %v403 = vrot.slane %v43, %v402
    %v404 = vmul.f32 %v391, %v74
    %v405 = vmul.f32 %v391, %v75
    %v406 = vmul.f32 %v391, %v76
    %v407 = vmul.f32 %v391, %v77
    %v408 = vmul.f32 %v391, %v78
    %v409 = vmul.f32 %v391, %v79
    %v410 = vmul.f32 %v395, %v74
    %v411 = vmul.f32 %v395, %v75
    %v412 = vmul.f32 %v395, %v76
    %v413 = vmul.f32 %v395, %v77
    %v414 = vmul.f32 %v395, %v78
    %v415 = vmul.f32 %v395, %v79
    %v416 = vmul.f32 %v399, %v74
    %v417 = vmul.f32 %v399, %v75
    %v418 = vmul.f32 %v399, %v76
    %v419 = vmul.f32 %v399, %v77
    %v420 = vmul.f32 %v399, %v78
    %v421 = vmul.f32 %v399, %v79
    %v422 = vmul.f32 %v403, %v74
    %v423 = vmul.f32 %v403, %v75
    %v424 = vmul.f32 %v403, %v76
    %v425 = vmul.f32 %v403, %v77
    %v426 = vmul.f32 %v403, %v78
    %v427 = vmul.f32 %v403, %v79
    %v428 = vadd.f32 %v364, %v404
    %v429 = vadd.f32 %v365, %v405
    %v430 = vadd.f32 %v366, %v406
    %v431 = vadd.f32 %v367, %v407
    %v432 = vadd.f32 %v368, %v408
    %v433 = vadd.f32 %v369, %v409
    %v434 = vadd.f32 %v370, %v410
    %v435 = vadd.f32 %v371, %v411
    %v436 = vadd.f32 %v372, %v412
    %v437 = vadd.f32 %v373, %v413
    %v438 = vadd.f32 %v374, %v414
    %v439 = vadd.f32 %v375, %v415
    %v440 = vadd.f32 %v376, %v416
    %v441 = vadd.f32 %v377, %v417
    %v442 = vadd.f32 %v378, %v418
    %v443 = vadd.f32 %v379, %v419
    %v444 = vadd.f32 %v380, %v420
    %v445 = vadd.f32 %v381, %v421
    %v446 = vadd.f32 %v382, %v422
    %v447 = vadd.f32 %v383, %v423
    %v448 = vadd.f32 %v384, %v424
    %v449 = vadd.f32 %v385, %v425
    %v450 = vadd.f32 %v386, %v426
    %v451 = vadd.f32 %v387, %v427
    %v452 = vlaneseq
    %v453 = vshrl.u32 %v452, 7
    %v454 = vsub.s32 6, %v453
    %v455 = vrot.slane %v40, %v454
    %v456 = vlaneseq
    %v457 = vshrl.u32 %v456, 7
    %v458 = vsub.s32 6, %v457
    %v459 = vrot.slane %v41, %v458
    %v460 = vlaneseq
    %v461 = vshrl.u32 %v460, 7
    %v462 = vsub.s32 6, %v461
    %v463 = vrot.slane %v42, %v462
    %v464 = vlaneseq
    %v465 = vshrl.u32 %v464, 7
    %v466 = vsub.s32 6, %v465
    %v467 = vrot.slane %v43, %v466
    %v468 = vmul.f32 %v455, %v80
    %v469 = vmul.f32 %v455, %v81
    %v470 = vmul.f32 %v455, %v82
    %v471 = vmul.f32 %v455, %v83
    %v472 = vmul.f32 %v455, %v84
    %v473 = vmul.f32 %v455, %v85
    %v474 = vmul.f32 %v459, %v80
    %v475 = vmul.f32 %v459, %v81
    %v476 = vmul.f32 %v459, %v82
    %v477 = vmul.f32 %v459, %v83
    %v478 = vmul.f32 %v459, %v84
    %v479 = vmul.f32 %v459, %v85
    %v480 = vmul.f32 %v463, %v80
    %v481 = vmul.f32 %v463, %v81
    %v482 = vmul.f32 %v463, %v82
    %v483 = vmul.f32 %v463, %v83
    %v484 = vmul.f32 %v463, %v84
    %v485 = vmul.f32 %v463, %v85
    %v486 = vmul.f32 %v467, %v80
    %v487 = vmul.f32 %v467, %v81
    %v488 = vmul.f32 %v467, %v82
    %v489 = vmul.f32 %v467, %v83
    %v490 = vmul.f32 %v467, %v84
    %v491 = vmul.f32 %v467, %v85
    %v492 = vadd.f32 %v428, %v468
    %v493 = vadd.f32 %v429, %v469
    %v494 = vadd.f32 %v430, %v470
    %v495 = vadd.f32 %v431, %v471
    %v496 = vadd.f32 %v432, %v472
    %v497 = vadd.f32 %v433, %v473
    %v498 = vadd.f32 %v434, %v474
    %v499 = vadd.f32 %v435, %v475
    %v500 = vadd.f32 %v436, %v476
    %v501 = vadd.f32 %v437, %v477
    %v502 = vadd.f32 %v438, %v478
    %v503 = vadd.f32 %v439, %v479
    %v504 = vadd.f32 %v440, %v480
    %v505 = vadd.f32 %v441, %v481
    %v506 = vadd.f32 %v442, %v482
    %v507 = vadd.f32 %v443, %v483
    %v508 = vadd.f32 %v444, %v484
    %v509 = vadd.f32 %v445, %v485
    %v510 = vadd.f32 %v446, %v486
    %v511 = vadd.f32 %v447, %v487
    %v512 = vadd.f32 %v448, %v488
    %v513 = vadd.f32 %v449, %v489
    %v514 = vadd.f32 %v450, %v490
    %v515 = vadd.f32 %v451, %v491
    %v516 = vlaneseq
    %v517 = vshrl.u32 %v516, 7
    %v518 = vsub.s32 7, %v517
    %v519 = vrot.slane %v40, %v518
    %v520 = vlaneseq
    %v521 = vshrl.u32 %v520, 7
    %v522 = vsub.s32 7, %v521
    %v523 = vrot.slane %v41, %v522
    %v524 = vlaneseq
    %v525 = vshrl.u32 %v524, 7
    %v526 = vsub.s32 7, %v525
    %v527 = vrot.slane %v42, %v526
    %v528 = vlaneseq
    %v529 = vshrl.u32 %v528, 7
    %v530 = vsub.s32 7, %v529
    %v531 = vrot.slane %v43, %v530
    %v532 = vmul.f32 %v519, %v86
    %v533 = vmul.f32 %v519, %v87
    %v534 = vmul.f32 %v519, %v88
    %v535 = vmul.f32 %v519, %v89
    %v536 = vmul.f32 %v519, %v90
    %v537 = vmul.f32 %v519, %v91
    %v538 = vmul.f32 %v523, %v86
    %v539 = vmul.f32 %v523, %v87
    %v540 = vmul.f32 %v523, %v88
    %v541 = vmul.f32 %v523, %v89
    %v542 = vmul.f32 %v523, %v90
    %v543 = vmul.f32 %v523, %v91
    %v544 = vmul.f32 %v527, %v86
    %v545 = vmul.f32 %v527, %v87
    %v546 = vmul.f32 %v527, %v88
    %v547 = vmul.f32 %v527, %v89
    %v548 = vmul.f32 %v527, %v90
    %v549 = vmul.f32 %v527, %v91
    %v550 = vmul.f32 %v531, %v86
    %v551 = vmul.f32 %v531, %v87
    %v552 = vmul.f32 %v531, %v88
    %v553 = vmul.f32 %v531, %v89
    %v554 = vmul.f32 %v531, %v90
    %v555 = vmul.f32 %v531, %v91
    %v556 = vadd.f32 %v492, %v532
    %v557 = vadd.f32 %v493, %v533
    %v558 = vadd.f32 %v494, %v534
    %v559 = vadd.f32 %v495, %v535
    %v560 = vadd.f32 %v496, %v536
    %v561 = vadd.f32 %v497, %v537
    %v562 = vadd.f32 %v498, %v538
    %v563 = vadd.f32 %v499, %v539
    %v564 = vadd.f32 %v500, %v540
    %v565 = vadd.f32 %v501, %v541
    %v566 = vadd.f32 %v502, %v542
    %v567 = vadd.f32 %v503, %v543
    %v568 = vadd.f32 %v504, %v544
    %v569 = vadd.f32 %v505, %v545
    %v570 = vadd.f32 %v506, %v546
    %v571 = vadd.f32 %v507, %v547
    %v572 = vadd.f32 %v508, %v548
    %v573 = vadd.f32 %v509, %v549
    %v574 = vadd.f32 %v510, %v550
    %v575 = vadd.f32 %v511, %v551
    %v576 = vadd.f32 %v512, %v552
    %v577 = vadd.f32 %v513, %v553
    %v578 = vadd.f32 %v514, %v554
    %v579 = vadd.f32 %v515, %v555
    %580 = vadd.xlane.f32.xlu0 %v556
    %v581 = vpop.xlane.xlu0 %580
    %582 = vadd.xlane.f32.xlu0 %v557
    %v583 = vpop.xlane.xlu0 %582
    %584 = vadd.xlane.f32.xlu0 %v558
    %v585 = vpop.xlane.xlu0 %584
    %586 = vadd.xlane.f32.xlu0 %v559
    %v587 = vpop.xlane.xlu0 %586
    %588 = vadd.xlane.f32.xlu0 %v560
    %v589 = vpop.xlane.xlu0 %588
    %590 = vadd.xlane.f32.xlu0 %v561
    %v591 = vpop.xlane.xlu0 %590
    %592 = vadd.xlane.f32.xlu0 %v562
    %v593 = vpop.xlane.xlu0 %592
    %594 = vadd.xlane.f32.xlu0 %v563
    %v595 = vpop.xlane.xlu0 %594
    %596 = vadd.xlane.f32.xlu0 %v564
    %v597 = vpop.xlane.xlu0 %596
    %598 = vadd.xlane.f32.xlu0 %v565
    %v599 = vpop.xlane.xlu0 %598
    %600 = vadd.xlane.f32.xlu0 %v566
    %v601 = vpop.xlane.xlu0 %600
    %602 = vadd.xlane.f32.xlu0 %v567
    %v603 = vpop.xlane.xlu0 %602
    %604 = vadd.xlane.f32.xlu0 %v568
    %v605 = vpop.xlane.xlu0 %604
    %606 = vadd.xlane.f32.xlu0 %v569
    %v607 = vpop.xlane.xlu0 %606
    %608 = vadd.xlane.f32.xlu0 %v570
    %v609 = vpop.xlane.xlu0 %608
    %610 = vadd.xlane.f32.xlu0 %v571
    %v611 = vpop.xlane.xlu0 %610
    %612 = vadd.xlane.f32.xlu0 %v572
    %v613 = vpop.xlane.xlu0 %612
    %614 = vadd.xlane.f32.xlu0 %v573
    %v615 = vpop.xlane.xlu0 %614
    %616 = vadd.xlane.f32.xlu0 %v574
    %v617 = vpop.xlane.xlu0 %616
    %618 = vadd.xlane.f32.xlu0 %v575
    %v619 = vpop.xlane.xlu0 %618
    %620 = vadd.xlane.f32.xlu0 %v576
    %v621 = vpop.xlane.xlu0 %620
    %622 = vadd.xlane.f32.xlu0 %v577
    %v623 = vpop.xlane.xlu0 %622
    %624 = vadd.xlane.f32.xlu0 %v578
    %v625 = vpop.xlane.xlu0 %624
    %626 = vadd.xlane.f32.xlu0 %v579
    %v627 = vpop.xlane.xlu0 %626
    %v628 = vmul.f32 %v581, 0.33333334
    %v629 = vmul.f32 %v583, 0.33333334
    %v630 = vmul.f32 %v585, 0.33333334
    %v631 = vmul.f32 %v587, 0.33333334
    %v632 = vmul.f32 %v589, 0.33333334
    %v633 = vmul.f32 %v591, 0.33333334
    %v634 = vmul.f32 %v593, 0.33333334
    %v635 = vmul.f32 %v595, 0.33333334
    %v636 = vmul.f32 %v597, 0.33333334
    %v637 = vmul.f32 %v599, 0.33333334
    %v638 = vmul.f32 %v601, 0.33333334
    %v639 = vmul.f32 %v603, 0.33333334
    %v640 = vmul.f32 %v605, 0.33333334
    %v641 = vmul.f32 %v607, 0.33333334
    %v642 = vmul.f32 %v609, 0.33333334
    %v643 = vmul.f32 %v611, 0.33333334
    %v644 = vmul.f32 %v613, 0.33333334
    %v645 = vmul.f32 %v615, 0.33333334
    %v646 = vmul.f32 %v617, 0.33333334
    %v647 = vmul.f32 %v619, 0.33333334
    %v648 = vmul.f32 %v621, 0.33333334
    %v649 = vmul.f32 %v623, 0.33333334
    %v650 = vmul.f32 %v625, 0.33333334
    %v651 = vmul.f32 %v627, 0.33333334
    %v652 = vmul.f32 %v628, %v628
    %v653 = vmul.f32 %v629, %v629
    %v654 = vmul.f32 %v630, %v630
    %v655 = vmul.f32 %v631, %v631
    %v656 = vmul.f32 %v632, %v632
    %v657 = vmul.f32 %v633, %v633
    %v658 = vmul.f32 %v634, %v634
    %v659 = vmul.f32 %v635, %v635
    %v660 = vmul.f32 %v636, %v636
    %v661 = vmul.f32 %v637, %v637
    %v662 = vmul.f32 %v638, %v638
    %v663 = vmul.f32 %v639, %v639
    %v664 = vmul.f32 %v640, %v640
    %v665 = vmul.f32 %v641, %v641
    %v666 = vmul.f32 %v642, %v642
    %v667 = vmul.f32 %v643, %v643
    %v668 = vmul.f32 %v644, %v644
    %v669 = vmul.f32 %v645, %v645
    %v670 = vmul.f32 %v646, %v646
    %v671 = vmul.f32 %v647, %v647
    %v672 = vmul.f32 %v648, %v648
    %v673 = vmul.f32 %v649, %v649
    %v674 = vmul.f32 %v650, %v650
    %v675 = vmul.f32 %v651, %v651
    %v700 = vlaneseq
    %v701 = vand.u32 %v700, 127
    %v702 = vlaneseq
    %v703 = vshrl.u32 %v702, 7
    %v704 = vsub.s32 %v701, %v703
    %v705 = vrot.slane %v652, %v704
    %v706 = vadd.s32 %v701, 4294967288
    %v707 = vlaneseq
    %v708 = vshrl.u32 %v707, 7
    %v709 = vsub.s32 %v706, %v708
    %v710 = vrot.slane %v653, %v709
    %vm711 = vcmask 130112
    %v712 = vsel %vm711, %v710, %v705
    %v713 = vlaneseq
    %v714 = vshrl.u32 %v713, 7
    %v715 = vsub.s32 %v701, %v714
    %v716 = vrot.slane %v654, %v715
    %v717 = vlaneseq
    %v718 = vshrl.u32 %v717, 7
    %v719 = vsub.s32 %v706, %v718
    %v720 = vrot.slane %v655, %v719
    %v721 = vsel %vm711, %v720, %v716
    %v722 = vlaneseq
    %v723 = vshrl.u32 %v722, 7
    %v724 = vsub.s32 %v701, %v723
    %v725 = vrot.slane %v656, %v724
    %v726 = vlaneseq
    %v727 = vshrl.u32 %v726, 7
    %v728 = vsub.s32 %v706, %v727
    %v729 = vrot.slane %v657, %v728
    %v730 = vsel %vm711, %v729, %v725
    %v731 = vlaneseq
    %v732 = vshrl.u32 %v731, 7
    %v733 = vsub.s32 %v701, %v732
    %v734 = vrot.slane %v658, %v733
    %v735 = vlaneseq
    %v736 = vshrl.u32 %v735, 7
    %v737 = vsub.s32 %v706, %v736
    %v738 = vrot.slane %v659, %v737
    %v739 = vsel %vm711, %v738, %v734
    %v740 = vlaneseq
    %v741 = vshrl.u32 %v740, 7
    %v742 = vsub.s32 %v701, %v741
    %v743 = vrot.slane %v660, %v742
    %v744 = vlaneseq
    %v745 = vshrl.u32 %v744, 7
    %v746 = vsub.s32 %v706, %v745
    %v747 = vrot.slane %v661, %v746
    %v748 = vsel %vm711, %v747, %v743
    %v749 = vlaneseq
    %v750 = vshrl.u32 %v749, 7
    %v751 = vsub.s32 %v701, %v750
    %v752 = vrot.slane %v662, %v751
    %v753 = vlaneseq
    %v754 = vshrl.u32 %v753, 7
    %v755 = vsub.s32 %v706, %v754
    %v756 = vrot.slane %v663, %v755
    %v757 = vsel %vm711, %v756, %v752
    %v758 = vlaneseq
    %v759 = vshrl.u32 %v758, 7
    %v760 = vsub.s32 %v701, %v759
    %v761 = vrot.slane %v664, %v760
    %v762 = vlaneseq
    %v763 = vshrl.u32 %v762, 7
    %v764 = vsub.s32 %v706, %v763
    %v765 = vrot.slane %v665, %v764
    %v766 = vsel %vm711, %v765, %v761
    %v767 = vlaneseq
    %v768 = vshrl.u32 %v767, 7
    %v769 = vsub.s32 %v701, %v768
    %v770 = vrot.slane %v666, %v769
    %v771 = vlaneseq
    %v772 = vshrl.u32 %v771, 7
    %v773 = vsub.s32 %v706, %v772
    %v774 = vrot.slane %v667, %v773
    %v775 = vsel %vm711, %v774, %v770
    %v776 = vlaneseq
    %v777 = vshrl.u32 %v776, 7
    %v778 = vsub.s32 %v701, %v777
    %v779 = vrot.slane %v668, %v778
    %v780 = vlaneseq
    %v781 = vshrl.u32 %v780, 7
    %v782 = vsub.s32 %v706, %v781
    %v783 = vrot.slane %v669, %v782
    %v784 = vsel %vm711, %v783, %v779
    %v785 = vlaneseq
    %v786 = vshrl.u32 %v785, 7
    %v787 = vsub.s32 %v701, %v786
    %v788 = vrot.slane %v670, %v787
    %v789 = vlaneseq
    %v790 = vshrl.u32 %v789, 7
    %v791 = vsub.s32 %v706, %v790
    %v792 = vrot.slane %v671, %v791
    %v793 = vsel %vm711, %v792, %v788
    %v794 = vlaneseq
    %v795 = vshrl.u32 %v794, 7
    %v796 = vsub.s32 %v701, %v795
    %v797 = vrot.slane %v672, %v796
    %v798 = vlaneseq
    %v799 = vshrl.u32 %v798, 7
    %v800 = vsub.s32 %v706, %v799
    %v801 = vrot.slane %v673, %v800
    %v802 = vsel %vm711, %v801, %v797
    %v803 = vlaneseq
    %v804 = vshrl.u32 %v803, 7
    %v805 = vsub.s32 %v701, %v804
    %v806 = vrot.slane %v674, %v805
    %v807 = vlaneseq
    %v808 = vshrl.u32 %v807, 7
    %v809 = vsub.s32 %v706, %v808
    %v810 = vrot.slane %v675, %v809
    %v811 = vsel %vm711, %v810, %v806
    %vm812 = vcmask 1041409
    %v813 = vsel %vm812, %v721, %v712
    %vm814 = vcmask 1042434
    %v815 = vsel %vm814, %v730, %v813
    %v816 = vsel %vm812, %v748, %v739
    %v817 = vsel %vm814, %v757, %v816
    %v818 = vsel %vm812, %v775, %v766
    %v819 = vsel %vm814, %v784, %v818
    %v820 = vsel %vm812, %v802, %v793
    %v821 = vsel %vm814, %v811, %v820
    %vm826 = vcmask 124928
    %v827 = vsel %vm826, %v815, 0.0
    %828 = vadd.xlane.f32.xlu0 %v827
    %v829 = vpop.xlane.xlu0 %828
    %v830 = vsel %vm826, %v817, 0.0
    %831 = vadd.xlane.f32.xlu0 %v830
    %v832 = vpop.xlane.xlu0 %831
    %v833 = vsel %vm826, %v819, 0.0
    %834 = vadd.xlane.f32.xlu0 %v833
    %v835 = vpop.xlane.xlu0 %834
    %v836 = vsel %vm826, %v821, 0.0
    %837 = vadd.xlane.f32.xlu0 %v836
    %v838 = vpop.xlane.xlu0 %837
    %v839 = vrsqrt.pop %v829
    %v840 = vmul.f32 %v829, %v839
    %vm841 = vcmp.eq.f32.partialorder %v829, inf
    %v842 = vsel %vm841, %v829, %v840
    %vm843 = vcmp.eq.f32.partialorder %v829, 0.0
    %v844 = vand.u32 %v829, 2147483648
    %v845 = vsel %vm843, %v844, %v842
    %v846 = vrsqrt.pop %v832
    %v847 = vmul.f32 %v832, %v846
    %vm848 = vcmp.eq.f32.partialorder %v832, inf
    %v849 = vsel %vm848, %v832, %v847
    %vm850 = vcmp.eq.f32.partialorder %v832, 0.0
    %v851 = vand.u32 %v832, 2147483648
    %v852 = vsel %vm850, %v851, %v849
    %v853 = vrsqrt.pop %v835
    %v854 = vmul.f32 %v835, %v853
    %vm855 = vcmp.eq.f32.partialorder %v835, inf
    %v856 = vsel %vm855, %v835, %v854
    %vm857 = vcmp.eq.f32.partialorder %v835, 0.0
    %v858 = vand.u32 %v835, 2147483648
    %v859 = vsel %vm857, %v858, %v856
    %v860 = vrsqrt.pop %v838
    %v861 = vmul.f32 %v838, %v860
    %vm862 = vcmp.eq.f32.partialorder %v838, inf
    %v863 = vsel %vm862, %v838, %v861
    %vm864 = vcmp.eq.f32.partialorder %v838, 0.0
    %v865 = vand.u32 %v838, 2147483648
    %v866 = vsel %vm864, %v865, %v863
    %v867 = vadd.f32 %v829, 1.0
    %v868 = vadd.f32 %v832, 1.0
    %v869 = vadd.f32 %v835, 1.0
    %v870 = vadd.f32 %v838, 1.0
    %v871 = vadd.f32 %v845, 1e-08
    %v872 = vadd.f32 %v852, 1e-08
    %v873 = vadd.f32 %v859, 1e-08
    %v874 = vadd.f32 %v866, 1e-08
    %v875 = vmul.f32 %v867, %v871
    %v876 = vmul.f32 %v868, %v872
    %v877 = vmul.f32 %v869, %v873
    %v878 = vmul.f32 %v870, %v874
    %v879 = vrcp.pop %v875
    %v880 = vmul.f32 %v829, %v879
    %v881 = vrcp.pop %v876
    %v882 = vmul.f32 %v832, %v881
    %v883 = vrcp.pop %v877
    %v884 = vmul.f32 %v835, %v883
    %v885 = vrcp.pop %v878
    %v886 = vmul.f32 %v838, %v885
    %v891 = vlaneseq
    %v892 = vshrl.u32 %v891, 7
    %v893 = vsub.s32 0, %v892
    %v894 = vrot.slane %v880, %v893
    %v895 = vlaneseq
    %v896 = vshrl.u32 %v895, 7
    %v897 = vsub.s32 1, %v896
    %v898 = vrot.slane %v880, %v897
    %v899 = vlaneseq
    %v900 = vshrl.u32 %v899, 7
    %v901 = vsub.s32 2, %v900
    %v902 = vrot.slane %v880, %v901
    %v903 = vlaneseq
    %v904 = vshrl.u32 %v903, 7
    %v905 = vsub.s32 0, %v904
    %v906 = vrot.slane %v882, %v905
    %v907 = vlaneseq
    %v908 = vshrl.u32 %v907, 7
    %v909 = vsub.s32 1, %v908
    %v910 = vrot.slane %v882, %v909
    %v911 = vlaneseq
    %v912 = vshrl.u32 %v911, 7
    %v913 = vsub.s32 2, %v912
    %v914 = vrot.slane %v882, %v913
    %v915 = vlaneseq
    %v916 = vshrl.u32 %v915, 7
    %v917 = vsub.s32 0, %v916
    %v918 = vrot.slane %v884, %v917
    %v919 = vlaneseq
    %v920 = vshrl.u32 %v919, 7
    %v921 = vsub.s32 1, %v920
    %v922 = vrot.slane %v884, %v921
    %v923 = vlaneseq
    %v924 = vshrl.u32 %v923, 7
    %v925 = vsub.s32 2, %v924
    %v926 = vrot.slane %v884, %v925
    %v927 = vlaneseq
    %v928 = vshrl.u32 %v927, 7
    %v929 = vsub.s32 0, %v928
    %v930 = vrot.slane %v886, %v929
    %v931 = vlaneseq
    %v932 = vshrl.u32 %v931, 7
    %v933 = vsub.s32 1, %v932
    %v934 = vrot.slane %v886, %v933
    %v935 = vlaneseq
    %v936 = vshrl.u32 %v935, 7
    %v937 = vsub.s32 2, %v936
    %v938 = vrot.slane %v886, %v937
    %v951 = vmul.f32 %v628, %v894
    %v952 = vmul.f32 %v629, %v894
    %v953 = vmul.f32 %v630, %v898
    %v954 = vmul.f32 %v631, %v898
    %v955 = vmul.f32 %v632, %v902
    %v956 = vmul.f32 %v633, %v902
    %v957 = vmul.f32 %v634, %v906
    %v958 = vmul.f32 %v635, %v906
    %v959 = vmul.f32 %v636, %v910
    %v960 = vmul.f32 %v637, %v910
    %v961 = vmul.f32 %v638, %v914
    %v962 = vmul.f32 %v639, %v914
    %v963 = vmul.f32 %v640, %v918
    %v964 = vmul.f32 %v641, %v918
    %v965 = vmul.f32 %v642, %v922
    %v966 = vmul.f32 %v643, %v922
    %v967 = vmul.f32 %v644, %v926
    %v968 = vmul.f32 %v645, %v926
    %v969 = vmul.f32 %v646, %v930
    %v970 = vmul.f32 %v647, %v930
    %v971 = vmul.f32 %v648, %v934
    %v972 = vmul.f32 %v649, %v934
    %v973 = vmul.f32 %v650, %v938
    %v974 = vmul.f32 %v651, %v938
    %v975 = vlaneseq
    %v976 = vshrl.u32 %v975, 7
    %v977 = vsub.s32 0, %v976
    %v978 = vrot.slane %v951, %v977
    %v979 = vlaneseq
    %v980 = vshrl.u32 %v979, 7
    %v981 = vsub.s32 0, %v980
    %v982 = vrot.slane %v953, %v981
    %v983 = vlaneseq
    %v984 = vshrl.u32 %v983, 7
    %v985 = vsub.s32 0, %v984
    %v986 = vrot.slane %v955, %v985
    %v987 = vlaneseq
    %v988 = vshrl.u32 %v987, 7
    %v989 = vsub.s32 0, %v988
    %v990 = vrot.slane %v957, %v989
    %v991 = vlaneseq
    %v992 = vshrl.u32 %v991, 7
    %v993 = vsub.s32 0, %v992
    %v994 = vrot.slane %v959, %v993
    %v995 = vlaneseq
    %v996 = vshrl.u32 %v995, 7
    %v997 = vsub.s32 0, %v996
    %v998 = vrot.slane %v961, %v997
    %v999 = vlaneseq
    %v1000 = vshrl.u32 %v999, 7
    %v1001 = vsub.s32 0, %v1000
    %v1002 = vrot.slane %v963, %v1001
    %v1003 = vlaneseq
    %v1004 = vshrl.u32 %v1003, 7
    %v1005 = vsub.s32 0, %v1004
    %v1006 = vrot.slane %v965, %v1005
    %v1007 = vlaneseq
    %v1008 = vshrl.u32 %v1007, 7
    %v1009 = vsub.s32 0, %v1008
    %v1010 = vrot.slane %v967, %v1009
    %v1011 = vlaneseq
    %v1012 = vshrl.u32 %v1011, 7
    %v1013 = vsub.s32 0, %v1012
    %v1014 = vrot.slane %v969, %v1013
    %v1015 = vlaneseq
    %v1016 = vshrl.u32 %v1015, 7
    %v1017 = vsub.s32 0, %v1016
    %v1018 = vrot.slane %v971, %v1017
    %v1019 = vlaneseq
    %v1020 = vshrl.u32 %v1019, 7
    %v1021 = vsub.s32 0, %v1020
    %v1022 = vrot.slane %v973, %v1021
    %1035 = vset.pattern.permute.xlu0 0
    %1036 = vperm.xlu0 %1035, %v978
    %v1037 = vpop.permute.xlu0 %1036
    %1038 = vset.pattern.permute.xlu0 0
    %1039 = vperm.xlu0 %1038, %v982
    %v1040 = vpop.permute.xlu0 %1039
    %1041 = vset.pattern.permute.xlu0 0
    %1042 = vperm.xlu0 %1041, %v986
    %v1043 = vpop.permute.xlu0 %1042
    %1044 = vset.pattern.permute.xlu0 0
    %1045 = vperm.xlu0 %1044, %v990
    %v1046 = vpop.permute.xlu0 %1045
    %1047 = vset.pattern.permute.xlu0 0
    %1048 = vperm.xlu0 %1047, %v994
    %v1049 = vpop.permute.xlu0 %1048
    %1050 = vset.pattern.permute.xlu0 0
    %1051 = vperm.xlu0 %1050, %v998
    %v1052 = vpop.permute.xlu0 %1051
    %1053 = vset.pattern.permute.xlu0 0
    %1054 = vperm.xlu0 %1053, %v1002
    %v1055 = vpop.permute.xlu0 %1054
    %1056 = vset.pattern.permute.xlu0 0
    %1057 = vperm.xlu0 %1056, %v1006
    %v1058 = vpop.permute.xlu0 %1057
    %1059 = vset.pattern.permute.xlu0 0
    %1060 = vperm.xlu0 %1059, %v1010
    %v1061 = vpop.permute.xlu0 %1060
    %1062 = vset.pattern.permute.xlu0 0
    %1063 = vperm.xlu0 %1062, %v1014
    %v1064 = vpop.permute.xlu0 %1063
    %1065 = vset.pattern.permute.xlu0 0
    %1066 = vperm.xlu0 %1065, %v1018
    %v1067 = vpop.permute.xlu0 %1066
    %1068 = vset.pattern.permute.xlu0 0
    %1069 = vperm.xlu0 %1068, %v1022
    %v1070 = vpop.permute.xlu0 %1069
    %v1083 = vmul.f32 %v556, %v1037
    %v1084 = vmul.f32 %v558, %v1040
    %v1085 = vmul.f32 %v560, %v1043
    %v1086 = vmul.f32 %v562, %v1046
    %v1087 = vmul.f32 %v564, %v1049
    %v1088 = vmul.f32 %v566, %v1052
    %v1089 = vmul.f32 %v568, %v1055
    %v1090 = vmul.f32 %v570, %v1058
    %v1091 = vmul.f32 %v572, %v1061
    %v1092 = vmul.f32 %v574, %v1064
    %v1093 = vmul.f32 %v576, %v1067
    %v1094 = vmul.f32 %v578, %v1070
    %v1095 = vlaneseq
    %v1096 = vshrl.u32 %v1095, 7
    %v1097 = vsub.s32 1, %v1096
    %v1098 = vrot.slane %v951, %v1097
    %v1099 = vlaneseq
    %v1100 = vshrl.u32 %v1099, 7
    %v1101 = vsub.s32 1, %v1100
    %v1102 = vrot.slane %v953, %v1101
    %v1103 = vlaneseq
    %v1104 = vshrl.u32 %v1103, 7
    %v1105 = vsub.s32 1, %v1104
    %v1106 = vrot.slane %v955, %v1105
    %v1107 = vlaneseq
    %v1108 = vshrl.u32 %v1107, 7
    %v1109 = vsub.s32 1, %v1108
    %v1110 = vrot.slane %v957, %v1109
    %v1111 = vlaneseq
    %v1112 = vshrl.u32 %v1111, 7
    %v1113 = vsub.s32 1, %v1112
    %v1114 = vrot.slane %v959, %v1113
    %v1115 = vlaneseq
    %v1116 = vshrl.u32 %v1115, 7
    %v1117 = vsub.s32 1, %v1116
    %v1118 = vrot.slane %v961, %v1117
    %v1119 = vlaneseq
    %v1120 = vshrl.u32 %v1119, 7
    %v1121 = vsub.s32 1, %v1120
    %v1122 = vrot.slane %v963, %v1121
    %v1123 = vlaneseq
    %v1124 = vshrl.u32 %v1123, 7
    %v1125 = vsub.s32 1, %v1124
    %v1126 = vrot.slane %v965, %v1125
    %v1127 = vlaneseq
    %v1128 = vshrl.u32 %v1127, 7
    %v1129 = vsub.s32 1, %v1128
    %v1130 = vrot.slane %v967, %v1129
    %v1131 = vlaneseq
    %v1132 = vshrl.u32 %v1131, 7
    %v1133 = vsub.s32 1, %v1132
    %v1134 = vrot.slane %v969, %v1133
    %v1135 = vlaneseq
    %v1136 = vshrl.u32 %v1135, 7
    %v1137 = vsub.s32 1, %v1136
    %v1138 = vrot.slane %v971, %v1137
    %v1139 = vlaneseq
    %v1140 = vshrl.u32 %v1139, 7
    %v1141 = vsub.s32 1, %v1140
    %v1142 = vrot.slane %v973, %v1141
    %1155 = vset.pattern.permute.xlu0 0
    %1156 = vperm.xlu0 %1155, %v1098
    %v1157 = vpop.permute.xlu0 %1156
    %1158 = vset.pattern.permute.xlu0 0
    %1159 = vperm.xlu0 %1158, %v1102
    %v1160 = vpop.permute.xlu0 %1159
    %1161 = vset.pattern.permute.xlu0 0
    %1162 = vperm.xlu0 %1161, %v1106
    %v1163 = vpop.permute.xlu0 %1162
    %1164 = vset.pattern.permute.xlu0 0
    %1165 = vperm.xlu0 %1164, %v1110
    %v1166 = vpop.permute.xlu0 %1165
    %1167 = vset.pattern.permute.xlu0 0
    %1168 = vperm.xlu0 %1167, %v1114
    %v1169 = vpop.permute.xlu0 %1168
    %1170 = vset.pattern.permute.xlu0 0
    %1171 = vperm.xlu0 %1170, %v1118
    %v1172 = vpop.permute.xlu0 %1171
    %1173 = vset.pattern.permute.xlu0 0
    %1174 = vperm.xlu0 %1173, %v1122
    %v1175 = vpop.permute.xlu0 %1174
    %1176 = vset.pattern.permute.xlu0 0
    %1177 = vperm.xlu0 %1176, %v1126
    %v1178 = vpop.permute.xlu0 %1177
    %1179 = vset.pattern.permute.xlu0 0
    %1180 = vperm.xlu0 %1179, %v1130
    %v1181 = vpop.permute.xlu0 %1180
    %1182 = vset.pattern.permute.xlu0 0
    %1183 = vperm.xlu0 %1182, %v1134
    %v1184 = vpop.permute.xlu0 %1183
    %1185 = vset.pattern.permute.xlu0 0
    %1186 = vperm.xlu0 %1185, %v1138
    %v1187 = vpop.permute.xlu0 %1186
    %1188 = vset.pattern.permute.xlu0 0
    %1189 = vperm.xlu0 %1188, %v1142
    %v1190 = vpop.permute.xlu0 %1189
    %v1203 = vmul.f32 %v556, %v1157
    %v1204 = vmul.f32 %v558, %v1160
    %v1205 = vmul.f32 %v560, %v1163
    %v1206 = vmul.f32 %v562, %v1166
    %v1207 = vmul.f32 %v564, %v1169
    %v1208 = vmul.f32 %v566, %v1172
    %v1209 = vmul.f32 %v568, %v1175
    %v1210 = vmul.f32 %v570, %v1178
    %v1211 = vmul.f32 %v572, %v1181
    %v1212 = vmul.f32 %v574, %v1184
    %v1213 = vmul.f32 %v576, %v1187
    %v1214 = vmul.f32 %v578, %v1190
    %v1227 = vrot.slane %v1203, 1
    %v1228 = vrot.slane %v1204, 1
    %v1229 = vrot.slane %v1205, 1
    %v1230 = vrot.slane %v1206, 1
    %v1231 = vrot.slane %v1207, 1
    %v1232 = vrot.slane %v1208, 1
    %v1233 = vrot.slane %v1209, 1
    %v1234 = vrot.slane %v1210, 1
    %v1235 = vrot.slane %v1211, 1
    %v1236 = vrot.slane %v1212, 1
    %v1237 = vrot.slane %v1213, 1
    %v1238 = vrot.slane %v1214, 1
    %v1251 = vadd.f32 %v1083, %v1227
    %v1252 = vadd.f32 %v1084, %v1228
    %v1253 = vadd.f32 %v1085, %v1229
    %v1254 = vadd.f32 %v1086, %v1230
    %v1255 = vadd.f32 %v1087, %v1231
    %v1256 = vadd.f32 %v1088, %v1232
    %v1257 = vadd.f32 %v1089, %v1233
    %v1258 = vadd.f32 %v1090, %v1234
    %v1259 = vadd.f32 %v1091, %v1235
    %v1260 = vadd.f32 %v1092, %v1236
    %v1261 = vadd.f32 %v1093, %v1237
    %v1262 = vadd.f32 %v1094, %v1238
    %v1263 = vlaneseq
    %v1264 = vshrl.u32 %v1263, 7
    %v1265 = vsub.s32 2, %v1264
    %v1266 = vrot.slane %v951, %v1265
    %v1267 = vlaneseq
    %v1268 = vshrl.u32 %v1267, 7
    %v1269 = vsub.s32 2, %v1268
    %v1270 = vrot.slane %v953, %v1269
    %v1271 = vlaneseq
    %v1272 = vshrl.u32 %v1271, 7
    %v1273 = vsub.s32 2, %v1272
    %v1274 = vrot.slane %v955, %v1273
    %v1275 = vlaneseq
    %v1276 = vshrl.u32 %v1275, 7
    %v1277 = vsub.s32 2, %v1276
    %v1278 = vrot.slane %v957, %v1277
    %v1279 = vlaneseq
    %v1280 = vshrl.u32 %v1279, 7
    %v1281 = vsub.s32 2, %v1280
    %v1282 = vrot.slane %v959, %v1281
    %v1283 = vlaneseq
    %v1284 = vshrl.u32 %v1283, 7
    %v1285 = vsub.s32 2, %v1284
    %v1286 = vrot.slane %v961, %v1285
    %v1287 = vlaneseq
    %v1288 = vshrl.u32 %v1287, 7
    %v1289 = vsub.s32 2, %v1288
    %v1290 = vrot.slane %v963, %v1289
    %v1291 = vlaneseq
    %v1292 = vshrl.u32 %v1291, 7
    %v1293 = vsub.s32 2, %v1292
    %v1294 = vrot.slane %v965, %v1293
    %v1295 = vlaneseq
    %v1296 = vshrl.u32 %v1295, 7
    %v1297 = vsub.s32 2, %v1296
    %v1298 = vrot.slane %v967, %v1297
    %v1299 = vlaneseq
    %v1300 = vshrl.u32 %v1299, 7
    %v1301 = vsub.s32 2, %v1300
    %v1302 = vrot.slane %v969, %v1301
    %v1303 = vlaneseq
    %v1304 = vshrl.u32 %v1303, 7
    %v1305 = vsub.s32 2, %v1304
    %v1306 = vrot.slane %v971, %v1305
    %v1307 = vlaneseq
    %v1308 = vshrl.u32 %v1307, 7
    %v1309 = vsub.s32 2, %v1308
    %v1310 = vrot.slane %v973, %v1309
    %1323 = vset.pattern.permute.xlu0 0
    %1324 = vperm.xlu0 %1323, %v1266
    %v1325 = vpop.permute.xlu0 %1324
    %1326 = vset.pattern.permute.xlu0 0
    %1327 = vperm.xlu0 %1326, %v1270
    %v1328 = vpop.permute.xlu0 %1327
    %1329 = vset.pattern.permute.xlu0 0
    %1330 = vperm.xlu0 %1329, %v1274
    %v1331 = vpop.permute.xlu0 %1330
    %1332 = vset.pattern.permute.xlu0 0
    %1333 = vperm.xlu0 %1332, %v1278
    %v1334 = vpop.permute.xlu0 %1333
    %1335 = vset.pattern.permute.xlu0 0
    %1336 = vperm.xlu0 %1335, %v1282
    %v1337 = vpop.permute.xlu0 %1336
    %1338 = vset.pattern.permute.xlu0 0
    %1339 = vperm.xlu0 %1338, %v1286
    %v1340 = vpop.permute.xlu0 %1339
    %1341 = vset.pattern.permute.xlu0 0
    %1342 = vperm.xlu0 %1341, %v1290
    %v1343 = vpop.permute.xlu0 %1342
    %1344 = vset.pattern.permute.xlu0 0
    %1345 = vperm.xlu0 %1344, %v1294
    %v1346 = vpop.permute.xlu0 %1345
    %1347 = vset.pattern.permute.xlu0 0
    %1348 = vperm.xlu0 %1347, %v1298
    %v1349 = vpop.permute.xlu0 %1348
    %1350 = vset.pattern.permute.xlu0 0
    %1351 = vperm.xlu0 %1350, %v1302
    %v1352 = vpop.permute.xlu0 %1351
    %1353 = vset.pattern.permute.xlu0 0
    %1354 = vperm.xlu0 %1353, %v1306
    %v1355 = vpop.permute.xlu0 %1354
    %1356 = vset.pattern.permute.xlu0 0
    %1357 = vperm.xlu0 %1356, %v1310
    %v1358 = vpop.permute.xlu0 %1357
    %v1371 = vmul.f32 %v556, %v1325
    %v1372 = vmul.f32 %v558, %v1328
    %v1373 = vmul.f32 %v560, %v1331
    %v1374 = vmul.f32 %v562, %v1334
    %v1375 = vmul.f32 %v564, %v1337
    %v1376 = vmul.f32 %v566, %v1340
    %v1377 = vmul.f32 %v568, %v1343
    %v1378 = vmul.f32 %v570, %v1346
    %v1379 = vmul.f32 %v572, %v1349
    %v1380 = vmul.f32 %v574, %v1352
    %v1381 = vmul.f32 %v576, %v1355
    %v1382 = vmul.f32 %v578, %v1358
    %v1395 = vrot.slane %v1371, 2
    %v1396 = vrot.slane %v1372, 2
    %v1397 = vrot.slane %v1373, 2
    %v1398 = vrot.slane %v1374, 2
    %v1399 = vrot.slane %v1375, 2
    %v1400 = vrot.slane %v1376, 2
    %v1401 = vrot.slane %v1377, 2
    %v1402 = vrot.slane %v1378, 2
    %v1403 = vrot.slane %v1379, 2
    %v1404 = vrot.slane %v1380, 2
    %v1405 = vrot.slane %v1381, 2
    %v1406 = vrot.slane %v1382, 2
    %v1419 = vadd.f32 %v1251, %v1395
    %v1420 = vadd.f32 %v1252, %v1396
    %v1421 = vadd.f32 %v1253, %v1397
    %v1422 = vadd.f32 %v1254, %v1398
    %v1423 = vadd.f32 %v1255, %v1399
    %v1424 = vadd.f32 %v1256, %v1400
    %v1425 = vadd.f32 %v1257, %v1401
    %v1426 = vadd.f32 %v1258, %v1402
    %v1427 = vadd.f32 %v1259, %v1403
    %v1428 = vadd.f32 %v1260, %v1404
    %v1429 = vadd.f32 %v1261, %v1405
    %v1430 = vadd.f32 %v1262, %v1406
    %v1431 = vlaneseq
    %v1432 = vshrl.u32 %v1431, 7
    %v1433 = vsub.s32 3, %v1432
    %v1434 = vrot.slane %v951, %v1433
    %v1435 = vlaneseq
    %v1436 = vshrl.u32 %v1435, 7
    %v1437 = vsub.s32 3, %v1436
    %v1438 = vrot.slane %v953, %v1437
    %v1439 = vlaneseq
    %v1440 = vshrl.u32 %v1439, 7
    %v1441 = vsub.s32 3, %v1440
    %v1442 = vrot.slane %v955, %v1441
    %v1443 = vlaneseq
    %v1444 = vshrl.u32 %v1443, 7
    %v1445 = vsub.s32 3, %v1444
    %v1446 = vrot.slane %v957, %v1445
    %v1447 = vlaneseq
    %v1448 = vshrl.u32 %v1447, 7
    %v1449 = vsub.s32 3, %v1448
    %v1450 = vrot.slane %v959, %v1449
    %v1451 = vlaneseq
    %v1452 = vshrl.u32 %v1451, 7
    %v1453 = vsub.s32 3, %v1452
    %v1454 = vrot.slane %v961, %v1453
    %v1455 = vlaneseq
    %v1456 = vshrl.u32 %v1455, 7
    %v1457 = vsub.s32 3, %v1456
    %v1458 = vrot.slane %v963, %v1457
    %v1459 = vlaneseq
    %v1460 = vshrl.u32 %v1459, 7
    %v1461 = vsub.s32 3, %v1460
    %v1462 = vrot.slane %v965, %v1461
    %v1463 = vlaneseq
    %v1464 = vshrl.u32 %v1463, 7
    %v1465 = vsub.s32 3, %v1464
    %v1466 = vrot.slane %v967, %v1465
    %v1467 = vlaneseq
    %v1468 = vshrl.u32 %v1467, 7
    %v1469 = vsub.s32 3, %v1468
    %v1470 = vrot.slane %v969, %v1469
    %v1471 = vlaneseq
    %v1472 = vshrl.u32 %v1471, 7
    %v1473 = vsub.s32 3, %v1472
    %v1474 = vrot.slane %v971, %v1473
    %v1475 = vlaneseq
    %v1476 = vshrl.u32 %v1475, 7
    %v1477 = vsub.s32 3, %v1476
    %v1478 = vrot.slane %v973, %v1477
    %1491 = vset.pattern.permute.xlu0 0
    %1492 = vperm.xlu0 %1491, %v1434
    %v1493 = vpop.permute.xlu0 %1492
    %1494 = vset.pattern.permute.xlu0 0
    %1495 = vperm.xlu0 %1494, %v1438
    %v1496 = vpop.permute.xlu0 %1495
    %1497 = vset.pattern.permute.xlu0 0
    %1498 = vperm.xlu0 %1497, %v1442
    %v1499 = vpop.permute.xlu0 %1498
    %1500 = vset.pattern.permute.xlu0 0
    %1501 = vperm.xlu0 %1500, %v1446
    %v1502 = vpop.permute.xlu0 %1501
    %1503 = vset.pattern.permute.xlu0 0
    %1504 = vperm.xlu0 %1503, %v1450
    %v1505 = vpop.permute.xlu0 %1504
    %1506 = vset.pattern.permute.xlu0 0
    %1507 = vperm.xlu0 %1506, %v1454
    %v1508 = vpop.permute.xlu0 %1507
    %1509 = vset.pattern.permute.xlu0 0
    %1510 = vperm.xlu0 %1509, %v1458
    %v1511 = vpop.permute.xlu0 %1510
    %1512 = vset.pattern.permute.xlu0 0
    %1513 = vperm.xlu0 %1512, %v1462
    %v1514 = vpop.permute.xlu0 %1513
    %1515 = vset.pattern.permute.xlu0 0
    %1516 = vperm.xlu0 %1515, %v1466
    %v1517 = vpop.permute.xlu0 %1516
    %1518 = vset.pattern.permute.xlu0 0
    %1519 = vperm.xlu0 %1518, %v1470
    %v1520 = vpop.permute.xlu0 %1519
    %1521 = vset.pattern.permute.xlu0 0
    %1522 = vperm.xlu0 %1521, %v1474
    %v1523 = vpop.permute.xlu0 %1522
    %1524 = vset.pattern.permute.xlu0 0
    %1525 = vperm.xlu0 %1524, %v1478
    %v1526 = vpop.permute.xlu0 %1525
    %v1539 = vmul.f32 %v556, %v1493
    %v1540 = vmul.f32 %v558, %v1496
    %v1541 = vmul.f32 %v560, %v1499
    %v1542 = vmul.f32 %v562, %v1502
    %v1543 = vmul.f32 %v564, %v1505
    %v1544 = vmul.f32 %v566, %v1508
    %v1545 = vmul.f32 %v568, %v1511
    %v1546 = vmul.f32 %v570, %v1514
    %v1547 = vmul.f32 %v572, %v1517
    %v1548 = vmul.f32 %v574, %v1520
    %v1549 = vmul.f32 %v576, %v1523
    %v1550 = vmul.f32 %v578, %v1526
    %v1563 = vrot.slane %v1539, 3
    %v1564 = vrot.slane %v1540, 3
    %v1565 = vrot.slane %v1541, 3
    %v1566 = vrot.slane %v1542, 3
    %v1567 = vrot.slane %v1543, 3
    %v1568 = vrot.slane %v1544, 3
    %v1569 = vrot.slane %v1545, 3
    %v1570 = vrot.slane %v1546, 3
    %v1571 = vrot.slane %v1547, 3
    %v1572 = vrot.slane %v1548, 3
    %v1573 = vrot.slane %v1549, 3
    %v1574 = vrot.slane %v1550, 3
    %v1587 = vadd.f32 %v1419, %v1563
    %v1588 = vadd.f32 %v1420, %v1564
    %v1589 = vadd.f32 %v1421, %v1565
    %v1590 = vadd.f32 %v1422, %v1566
    %v1591 = vadd.f32 %v1423, %v1567
    %v1592 = vadd.f32 %v1424, %v1568
    %v1593 = vadd.f32 %v1425, %v1569
    %v1594 = vadd.f32 %v1426, %v1570
    %v1595 = vadd.f32 %v1427, %v1571
    %v1596 = vadd.f32 %v1428, %v1572
    %v1597 = vadd.f32 %v1429, %v1573
    %v1598 = vadd.f32 %v1430, %v1574
    %v1599 = vlaneseq
    %v1600 = vshrl.u32 %v1599, 7
    %v1601 = vsub.s32 4, %v1600
    %v1602 = vrot.slane %v951, %v1601
    %v1603 = vlaneseq
    %v1604 = vshrl.u32 %v1603, 7
    %v1605 = vsub.s32 4, %v1604
    %v1606 = vrot.slane %v953, %v1605
    %v1607 = vlaneseq
    %v1608 = vshrl.u32 %v1607, 7
    %v1609 = vsub.s32 4, %v1608
    %v1610 = vrot.slane %v955, %v1609
    %v1611 = vlaneseq
    %v1612 = vshrl.u32 %v1611, 7
    %v1613 = vsub.s32 4, %v1612
    %v1614 = vrot.slane %v957, %v1613
    %v1615 = vlaneseq
    %v1616 = vshrl.u32 %v1615, 7
    %v1617 = vsub.s32 4, %v1616
    %v1618 = vrot.slane %v959, %v1617
    %v1619 = vlaneseq
    %v1620 = vshrl.u32 %v1619, 7
    %v1621 = vsub.s32 4, %v1620
    %v1622 = vrot.slane %v961, %v1621
    %v1623 = vlaneseq
    %v1624 = vshrl.u32 %v1623, 7
    %v1625 = vsub.s32 4, %v1624
    %v1626 = vrot.slane %v963, %v1625
    %v1627 = vlaneseq
    %v1628 = vshrl.u32 %v1627, 7
    %v1629 = vsub.s32 4, %v1628
    %v1630 = vrot.slane %v965, %v1629
    %v1631 = vlaneseq
    %v1632 = vshrl.u32 %v1631, 7
    %v1633 = vsub.s32 4, %v1632
    %v1634 = vrot.slane %v967, %v1633
    %v1635 = vlaneseq
    %v1636 = vshrl.u32 %v1635, 7
    %v1637 = vsub.s32 4, %v1636
    %v1638 = vrot.slane %v969, %v1637
    %v1639 = vlaneseq
    %v1640 = vshrl.u32 %v1639, 7
    %v1641 = vsub.s32 4, %v1640
    %v1642 = vrot.slane %v971, %v1641
    %v1643 = vlaneseq
    %v1644 = vshrl.u32 %v1643, 7
    %v1645 = vsub.s32 4, %v1644
    %v1646 = vrot.slane %v973, %v1645
    %1659 = vset.pattern.permute.xlu0 0
    %1660 = vperm.xlu0 %1659, %v1602
    %v1661 = vpop.permute.xlu0 %1660
    %1662 = vset.pattern.permute.xlu0 0
    %1663 = vperm.xlu0 %1662, %v1606
    %v1664 = vpop.permute.xlu0 %1663
    %1665 = vset.pattern.permute.xlu0 0
    %1666 = vperm.xlu0 %1665, %v1610
    %v1667 = vpop.permute.xlu0 %1666
    %1668 = vset.pattern.permute.xlu0 0
    %1669 = vperm.xlu0 %1668, %v1614
    %v1670 = vpop.permute.xlu0 %1669
    %1671 = vset.pattern.permute.xlu0 0
    %1672 = vperm.xlu0 %1671, %v1618
    %v1673 = vpop.permute.xlu0 %1672
    %1674 = vset.pattern.permute.xlu0 0
    %1675 = vperm.xlu0 %1674, %v1622
    %v1676 = vpop.permute.xlu0 %1675
    %1677 = vset.pattern.permute.xlu0 0
    %1678 = vperm.xlu0 %1677, %v1626
    %v1679 = vpop.permute.xlu0 %1678
    %1680 = vset.pattern.permute.xlu0 0
    %1681 = vperm.xlu0 %1680, %v1630
    %v1682 = vpop.permute.xlu0 %1681
    %1683 = vset.pattern.permute.xlu0 0
    %1684 = vperm.xlu0 %1683, %v1634
    %v1685 = vpop.permute.xlu0 %1684
    %1686 = vset.pattern.permute.xlu0 0
    %1687 = vperm.xlu0 %1686, %v1638
    %v1688 = vpop.permute.xlu0 %1687
    %1689 = vset.pattern.permute.xlu0 0
    %1690 = vperm.xlu0 %1689, %v1642
    %v1691 = vpop.permute.xlu0 %1690
    %1692 = vset.pattern.permute.xlu0 0
    %1693 = vperm.xlu0 %1692, %v1646
    %v1694 = vpop.permute.xlu0 %1693
    %v1707 = vmul.f32 %v556, %v1661
    %v1708 = vmul.f32 %v558, %v1664
    %v1709 = vmul.f32 %v560, %v1667
    %v1710 = vmul.f32 %v562, %v1670
    %v1711 = vmul.f32 %v564, %v1673
    %v1712 = vmul.f32 %v566, %v1676
    %v1713 = vmul.f32 %v568, %v1679
    %v1714 = vmul.f32 %v570, %v1682
    %v1715 = vmul.f32 %v572, %v1685
    %v1716 = vmul.f32 %v574, %v1688
    %v1717 = vmul.f32 %v576, %v1691
    %v1718 = vmul.f32 %v578, %v1694
    %v1731 = vrot.slane %v1707, 4
    %v1732 = vrot.slane %v1708, 4
    %v1733 = vrot.slane %v1709, 4
    %v1734 = vrot.slane %v1710, 4
    %v1735 = vrot.slane %v1711, 4
    %v1736 = vrot.slane %v1712, 4
    %v1737 = vrot.slane %v1713, 4
    %v1738 = vrot.slane %v1714, 4
    %v1739 = vrot.slane %v1715, 4
    %v1740 = vrot.slane %v1716, 4
    %v1741 = vrot.slane %v1717, 4
    %v1742 = vrot.slane %v1718, 4
    %v1755 = vadd.f32 %v1587, %v1731
    %v1756 = vadd.f32 %v1588, %v1732
    %v1757 = vadd.f32 %v1589, %v1733
    %v1758 = vadd.f32 %v1590, %v1734
    %v1759 = vadd.f32 %v1591, %v1735
    %v1760 = vadd.f32 %v1592, %v1736
    %v1761 = vadd.f32 %v1593, %v1737
    %v1762 = vadd.f32 %v1594, %v1738
    %v1763 = vadd.f32 %v1595, %v1739
    %v1764 = vadd.f32 %v1596, %v1740
    %v1765 = vadd.f32 %v1597, %v1741
    %v1766 = vadd.f32 %v1598, %v1742
    %v1767 = vlaneseq
    %v1768 = vshrl.u32 %v1767, 7
    %v1769 = vsub.s32 5, %v1768
    %v1770 = vrot.slane %v951, %v1769
    %v1771 = vlaneseq
    %v1772 = vshrl.u32 %v1771, 7
    %v1773 = vsub.s32 5, %v1772
    %v1774 = vrot.slane %v953, %v1773
    %v1775 = vlaneseq
    %v1776 = vshrl.u32 %v1775, 7
    %v1777 = vsub.s32 5, %v1776
    %v1778 = vrot.slane %v955, %v1777
    %v1779 = vlaneseq
    %v1780 = vshrl.u32 %v1779, 7
    %v1781 = vsub.s32 5, %v1780
    %v1782 = vrot.slane %v957, %v1781
    %v1783 = vlaneseq
    %v1784 = vshrl.u32 %v1783, 7
    %v1785 = vsub.s32 5, %v1784
    %v1786 = vrot.slane %v959, %v1785
    %v1787 = vlaneseq
    %v1788 = vshrl.u32 %v1787, 7
    %v1789 = vsub.s32 5, %v1788
    %v1790 = vrot.slane %v961, %v1789
    %v1791 = vlaneseq
    %v1792 = vshrl.u32 %v1791, 7
    %v1793 = vsub.s32 5, %v1792
    %v1794 = vrot.slane %v963, %v1793
    %v1795 = vlaneseq
    %v1796 = vshrl.u32 %v1795, 7
    %v1797 = vsub.s32 5, %v1796
    %v1798 = vrot.slane %v965, %v1797
    %v1799 = vlaneseq
    %v1800 = vshrl.u32 %v1799, 7
    %v1801 = vsub.s32 5, %v1800
    %v1802 = vrot.slane %v967, %v1801
    %v1803 = vlaneseq
    %v1804 = vshrl.u32 %v1803, 7
    %v1805 = vsub.s32 5, %v1804
    %v1806 = vrot.slane %v969, %v1805
    %v1807 = vlaneseq
    %v1808 = vshrl.u32 %v1807, 7
    %v1809 = vsub.s32 5, %v1808
    %v1810 = vrot.slane %v971, %v1809
    %v1811 = vlaneseq
    %v1812 = vshrl.u32 %v1811, 7
    %v1813 = vsub.s32 5, %v1812
    %v1814 = vrot.slane %v973, %v1813
    %1827 = vset.pattern.permute.xlu0 0
    %1828 = vperm.xlu0 %1827, %v1770
    %v1829 = vpop.permute.xlu0 %1828
    %1830 = vset.pattern.permute.xlu0 0
    %1831 = vperm.xlu0 %1830, %v1774
    %v1832 = vpop.permute.xlu0 %1831
    %1833 = vset.pattern.permute.xlu0 0
    %1834 = vperm.xlu0 %1833, %v1778
    %v1835 = vpop.permute.xlu0 %1834
    %1836 = vset.pattern.permute.xlu0 0
    %1837 = vperm.xlu0 %1836, %v1782
    %v1838 = vpop.permute.xlu0 %1837
    %1839 = vset.pattern.permute.xlu0 0
    %1840 = vperm.xlu0 %1839, %v1786
    %v1841 = vpop.permute.xlu0 %1840
    %1842 = vset.pattern.permute.xlu0 0
    %1843 = vperm.xlu0 %1842, %v1790
    %v1844 = vpop.permute.xlu0 %1843
    %1845 = vset.pattern.permute.xlu0 0
    %1846 = vperm.xlu0 %1845, %v1794
    %v1847 = vpop.permute.xlu0 %1846
    %1848 = vset.pattern.permute.xlu0 0
    %1849 = vperm.xlu0 %1848, %v1798
    %v1850 = vpop.permute.xlu0 %1849
    %1851 = vset.pattern.permute.xlu0 0
    %1852 = vperm.xlu0 %1851, %v1802
    %v1853 = vpop.permute.xlu0 %1852
    %1854 = vset.pattern.permute.xlu0 0
    %1855 = vperm.xlu0 %1854, %v1806
    %v1856 = vpop.permute.xlu0 %1855
    %1857 = vset.pattern.permute.xlu0 0
    %1858 = vperm.xlu0 %1857, %v1810
    %v1859 = vpop.permute.xlu0 %1858
    %1860 = vset.pattern.permute.xlu0 0
    %1861 = vperm.xlu0 %1860, %v1814
    %v1862 = vpop.permute.xlu0 %1861
    %v1875 = vmul.f32 %v556, %v1829
    %v1876 = vmul.f32 %v558, %v1832
    %v1877 = vmul.f32 %v560, %v1835
    %v1878 = vmul.f32 %v562, %v1838
    %v1879 = vmul.f32 %v564, %v1841
    %v1880 = vmul.f32 %v566, %v1844
    %v1881 = vmul.f32 %v568, %v1847
    %v1882 = vmul.f32 %v570, %v1850
    %v1883 = vmul.f32 %v572, %v1853
    %v1884 = vmul.f32 %v574, %v1856
    %v1885 = vmul.f32 %v576, %v1859
    %v1886 = vmul.f32 %v578, %v1862
    %v1899 = vrot.slane %v1875, 5
    %v1900 = vrot.slane %v1876, 5
    %v1901 = vrot.slane %v1877, 5
    %v1902 = vrot.slane %v1878, 5
    %v1903 = vrot.slane %v1879, 5
    %v1904 = vrot.slane %v1880, 5
    %v1905 = vrot.slane %v1881, 5
    %v1906 = vrot.slane %v1882, 5
    %v1907 = vrot.slane %v1883, 5
    %v1908 = vrot.slane %v1884, 5
    %v1909 = vrot.slane %v1885, 5
    %v1910 = vrot.slane %v1886, 5
    %v1923 = vadd.f32 %v1755, %v1899
    %v1924 = vadd.f32 %v1756, %v1900
    %v1925 = vadd.f32 %v1757, %v1901
    %v1926 = vadd.f32 %v1758, %v1902
    %v1927 = vadd.f32 %v1759, %v1903
    %v1928 = vadd.f32 %v1760, %v1904
    %v1929 = vadd.f32 %v1761, %v1905
    %v1930 = vadd.f32 %v1762, %v1906
    %v1931 = vadd.f32 %v1763, %v1907
    %v1932 = vadd.f32 %v1764, %v1908
    %v1933 = vadd.f32 %v1765, %v1909
    %v1934 = vadd.f32 %v1766, %v1910
    %v1935 = vlaneseq
    %v1936 = vshrl.u32 %v1935, 7
    %v1937 = vsub.s32 6, %v1936
    %v1938 = vrot.slane %v951, %v1937
    %v1939 = vlaneseq
    %v1940 = vshrl.u32 %v1939, 7
    %v1941 = vsub.s32 6, %v1940
    %v1942 = vrot.slane %v953, %v1941
    %v1943 = vlaneseq
    %v1944 = vshrl.u32 %v1943, 7
    %v1945 = vsub.s32 6, %v1944
    %v1946 = vrot.slane %v955, %v1945
    %v1947 = vlaneseq
    %v1948 = vshrl.u32 %v1947, 7
    %v1949 = vsub.s32 6, %v1948
    %v1950 = vrot.slane %v957, %v1949
    %v1951 = vlaneseq
    %v1952 = vshrl.u32 %v1951, 7
    %v1953 = vsub.s32 6, %v1952
    %v1954 = vrot.slane %v959, %v1953
    %v1955 = vlaneseq
    %v1956 = vshrl.u32 %v1955, 7
    %v1957 = vsub.s32 6, %v1956
    %v1958 = vrot.slane %v961, %v1957
    %v1959 = vlaneseq
    %v1960 = vshrl.u32 %v1959, 7
    %v1961 = vsub.s32 6, %v1960
    %v1962 = vrot.slane %v963, %v1961
    %v1963 = vlaneseq
    %v1964 = vshrl.u32 %v1963, 7
    %v1965 = vsub.s32 6, %v1964
    %v1966 = vrot.slane %v965, %v1965
    %v1967 = vlaneseq
    %v1968 = vshrl.u32 %v1967, 7
    %v1969 = vsub.s32 6, %v1968
    %v1970 = vrot.slane %v967, %v1969
    %v1971 = vlaneseq
    %v1972 = vshrl.u32 %v1971, 7
    %v1973 = vsub.s32 6, %v1972
    %v1974 = vrot.slane %v969, %v1973
    %v1975 = vlaneseq
    %v1976 = vshrl.u32 %v1975, 7
    %v1977 = vsub.s32 6, %v1976
    %v1978 = vrot.slane %v971, %v1977
    %v1979 = vlaneseq
    %v1980 = vshrl.u32 %v1979, 7
    %v1981 = vsub.s32 6, %v1980
    %v1982 = vrot.slane %v973, %v1981
    %1995 = vset.pattern.permute.xlu0 0
    %1996 = vperm.xlu0 %1995, %v1938
    %v1997 = vpop.permute.xlu0 %1996
    %1998 = vset.pattern.permute.xlu0 0
    %1999 = vperm.xlu0 %1998, %v1942
    %v2000 = vpop.permute.xlu0 %1999
    %2001 = vset.pattern.permute.xlu0 0
    %2002 = vperm.xlu0 %2001, %v1946
    %v2003 = vpop.permute.xlu0 %2002
    %2004 = vset.pattern.permute.xlu0 0
    %2005 = vperm.xlu0 %2004, %v1950
    %v2006 = vpop.permute.xlu0 %2005
    %2007 = vset.pattern.permute.xlu0 0
    %2008 = vperm.xlu0 %2007, %v1954
    %v2009 = vpop.permute.xlu0 %2008
    %2010 = vset.pattern.permute.xlu0 0
    %2011 = vperm.xlu0 %2010, %v1958
    %v2012 = vpop.permute.xlu0 %2011
    %2013 = vset.pattern.permute.xlu0 0
    %2014 = vperm.xlu0 %2013, %v1962
    %v2015 = vpop.permute.xlu0 %2014
    %2016 = vset.pattern.permute.xlu0 0
    %2017 = vperm.xlu0 %2016, %v1966
    %v2018 = vpop.permute.xlu0 %2017
    %2019 = vset.pattern.permute.xlu0 0
    %2020 = vperm.xlu0 %2019, %v1970
    %v2021 = vpop.permute.xlu0 %2020
    %2022 = vset.pattern.permute.xlu0 0
    %2023 = vperm.xlu0 %2022, %v1974
    %v2024 = vpop.permute.xlu0 %2023
    %2025 = vset.pattern.permute.xlu0 0
    %2026 = vperm.xlu0 %2025, %v1978
    %v2027 = vpop.permute.xlu0 %2026
    %2028 = vset.pattern.permute.xlu0 0
    %2029 = vperm.xlu0 %2028, %v1982
    %v2030 = vpop.permute.xlu0 %2029
    %v2043 = vmul.f32 %v556, %v1997
    %v2044 = vmul.f32 %v558, %v2000
    %v2045 = vmul.f32 %v560, %v2003
    %v2046 = vmul.f32 %v562, %v2006
    %v2047 = vmul.f32 %v564, %v2009
    %v2048 = vmul.f32 %v566, %v2012
    %v2049 = vmul.f32 %v568, %v2015
    %v2050 = vmul.f32 %v570, %v2018
    %v2051 = vmul.f32 %v572, %v2021
    %v2052 = vmul.f32 %v574, %v2024
    %v2053 = vmul.f32 %v576, %v2027
    %v2054 = vmul.f32 %v578, %v2030
    %v2067 = vrot.slane %v2043, 6
    %v2068 = vrot.slane %v2044, 6
    %v2069 = vrot.slane %v2045, 6
    %v2070 = vrot.slane %v2046, 6
    %v2071 = vrot.slane %v2047, 6
    %v2072 = vrot.slane %v2048, 6
    %v2073 = vrot.slane %v2049, 6
    %v2074 = vrot.slane %v2050, 6
    %v2075 = vrot.slane %v2051, 6
    %v2076 = vrot.slane %v2052, 6
    %v2077 = vrot.slane %v2053, 6
    %v2078 = vrot.slane %v2054, 6
    %v2091 = vadd.f32 %v1923, %v2067
    %v2092 = vadd.f32 %v1924, %v2068
    %v2093 = vadd.f32 %v1925, %v2069
    %v2094 = vadd.f32 %v1926, %v2070
    %v2095 = vadd.f32 %v1927, %v2071
    %v2096 = vadd.f32 %v1928, %v2072
    %v2097 = vadd.f32 %v1929, %v2073
    %v2098 = vadd.f32 %v1930, %v2074
    %v2099 = vadd.f32 %v1931, %v2075
    %v2100 = vadd.f32 %v1932, %v2076
    %v2101 = vadd.f32 %v1933, %v2077
    %v2102 = vadd.f32 %v1934, %v2078
    %v2103 = vlaneseq
    %v2104 = vshrl.u32 %v2103, 7
    %v2105 = vsub.s32 7, %v2104
    %v2106 = vrot.slane %v951, %v2105
    %v2107 = vlaneseq
    %v2108 = vshrl.u32 %v2107, 7
    %v2109 = vsub.s32 7, %v2108
    %v2110 = vrot.slane %v953, %v2109
    %v2111 = vlaneseq
    %v2112 = vshrl.u32 %v2111, 7
    %v2113 = vsub.s32 7, %v2112
    %v2114 = vrot.slane %v955, %v2113
    %v2115 = vlaneseq
    %v2116 = vshrl.u32 %v2115, 7
    %v2117 = vsub.s32 7, %v2116
    %v2118 = vrot.slane %v957, %v2117
    %v2119 = vlaneseq
    %v2120 = vshrl.u32 %v2119, 7
    %v2121 = vsub.s32 7, %v2120
    %v2122 = vrot.slane %v959, %v2121
    %v2123 = vlaneseq
    %v2124 = vshrl.u32 %v2123, 7
    %v2125 = vsub.s32 7, %v2124
    %v2126 = vrot.slane %v961, %v2125
    %v2127 = vlaneseq
    %v2128 = vshrl.u32 %v2127, 7
    %v2129 = vsub.s32 7, %v2128
    %v2130 = vrot.slane %v963, %v2129
    %v2131 = vlaneseq
    %v2132 = vshrl.u32 %v2131, 7
    %v2133 = vsub.s32 7, %v2132
    %v2134 = vrot.slane %v965, %v2133
    %v2135 = vlaneseq
    %v2136 = vshrl.u32 %v2135, 7
    %v2137 = vsub.s32 7, %v2136
    %v2138 = vrot.slane %v967, %v2137
    %v2139 = vlaneseq
    %v2140 = vshrl.u32 %v2139, 7
    %v2141 = vsub.s32 7, %v2140
    %v2142 = vrot.slane %v969, %v2141
    %v2143 = vlaneseq
    %v2144 = vshrl.u32 %v2143, 7
    %v2145 = vsub.s32 7, %v2144
    %v2146 = vrot.slane %v971, %v2145
    %v2147 = vlaneseq
    %v2148 = vshrl.u32 %v2147, 7
    %v2149 = vsub.s32 7, %v2148
    %v2150 = vrot.slane %v973, %v2149
    %2163 = vset.pattern.permute.xlu0 0
    %2164 = vperm.xlu0 %2163, %v2106
    %v2165 = vpop.permute.xlu0 %2164
    %2166 = vset.pattern.permute.xlu0 0
    %2167 = vperm.xlu0 %2166, %v2110
    %v2168 = vpop.permute.xlu0 %2167
    %2169 = vset.pattern.permute.xlu0 0
    %2170 = vperm.xlu0 %2169, %v2114
    %v2171 = vpop.permute.xlu0 %2170
    %2172 = vset.pattern.permute.xlu0 0
    %2173 = vperm.xlu0 %2172, %v2118
    %v2174 = vpop.permute.xlu0 %2173
    %2175 = vset.pattern.permute.xlu0 0
    %2176 = vperm.xlu0 %2175, %v2122
    %v2177 = vpop.permute.xlu0 %2176
    %2178 = vset.pattern.permute.xlu0 0
    %2179 = vperm.xlu0 %2178, %v2126
    %v2180 = vpop.permute.xlu0 %2179
    %2181 = vset.pattern.permute.xlu0 0
    %2182 = vperm.xlu0 %2181, %v2130
    %v2183 = vpop.permute.xlu0 %2182
    %2184 = vset.pattern.permute.xlu0 0
    %2185 = vperm.xlu0 %2184, %v2134
    %v2186 = vpop.permute.xlu0 %2185
    %2187 = vset.pattern.permute.xlu0 0
    %2188 = vperm.xlu0 %2187, %v2138
    %v2189 = vpop.permute.xlu0 %2188
    %2190 = vset.pattern.permute.xlu0 0
    %2191 = vperm.xlu0 %2190, %v2142
    %v2192 = vpop.permute.xlu0 %2191
    %2193 = vset.pattern.permute.xlu0 0
    %2194 = vperm.xlu0 %2193, %v2146
    %v2195 = vpop.permute.xlu0 %2194
    %2196 = vset.pattern.permute.xlu0 0
    %2197 = vperm.xlu0 %2196, %v2150
    %v2198 = vpop.permute.xlu0 %2197
    %v2211 = vmul.f32 %v556, %v2165
    %v2212 = vmul.f32 %v558, %v2168
    %v2213 = vmul.f32 %v560, %v2171
    %v2214 = vmul.f32 %v562, %v2174
    %v2215 = vmul.f32 %v564, %v2177
    %v2216 = vmul.f32 %v566, %v2180
    %v2217 = vmul.f32 %v568, %v2183
    %v2218 = vmul.f32 %v570, %v2186
    %v2219 = vmul.f32 %v572, %v2189
    %v2220 = vmul.f32 %v574, %v2192
    %v2221 = vmul.f32 %v576, %v2195
    %v2222 = vmul.f32 %v578, %v2198
    %v2235 = vrot.slane %v2211, 7
    %v2236 = vrot.slane %v2212, 7
    %v2237 = vrot.slane %v2213, 7
    %v2238 = vrot.slane %v2214, 7
    %v2239 = vrot.slane %v2215, 7
    %v2240 = vrot.slane %v2216, 7
    %v2241 = vrot.slane %v2217, 7
    %v2242 = vrot.slane %v2218, 7
    %v2243 = vrot.slane %v2219, 7
    %v2244 = vrot.slane %v2220, 7
    %v2245 = vrot.slane %v2221, 7
    %v2246 = vrot.slane %v2222, 7
    %v2259 = vadd.f32 %v2091, %v2235
    %v2260 = vadd.f32 %v2092, %v2236
    %v2261 = vadd.f32 %v2093, %v2237
    %v2262 = vadd.f32 %v2094, %v2238
    %v2263 = vadd.f32 %v2095, %v2239
    %v2264 = vadd.f32 %v2096, %v2240
    %v2265 = vadd.f32 %v2097, %v2241
    %v2266 = vadd.f32 %v2098, %v2242
    %v2267 = vadd.f32 %v2099, %v2243
    %v2268 = vadd.f32 %v2100, %v2244
    %v2269 = vadd.f32 %v2101, %v2245
    %v2270 = vadd.f32 %v2102, %v2246
    %v2271 = vlaneseq
    %v2272 = vshrl.u32 %v2271, 7
    %v2273 = vsub.s32 0, %v2272
    %v2274 = vrot.slane %v952, %v2273
    %v2275 = vlaneseq
    %v2276 = vshrl.u32 %v2275, 7
    %v2277 = vsub.s32 0, %v2276
    %v2278 = vrot.slane %v954, %v2277
    %v2279 = vlaneseq
    %v2280 = vshrl.u32 %v2279, 7
    %v2281 = vsub.s32 0, %v2280
    %v2282 = vrot.slane %v956, %v2281
    %v2283 = vlaneseq
    %v2284 = vshrl.u32 %v2283, 7
    %v2285 = vsub.s32 0, %v2284
    %v2286 = vrot.slane %v958, %v2285
    %v2287 = vlaneseq
    %v2288 = vshrl.u32 %v2287, 7
    %v2289 = vsub.s32 0, %v2288
    %v2290 = vrot.slane %v960, %v2289
    %v2291 = vlaneseq
    %v2292 = vshrl.u32 %v2291, 7
    %v2293 = vsub.s32 0, %v2292
    %v2294 = vrot.slane %v962, %v2293
    %v2295 = vlaneseq
    %v2296 = vshrl.u32 %v2295, 7
    %v2297 = vsub.s32 0, %v2296
    %v2298 = vrot.slane %v964, %v2297
    %v2299 = vlaneseq
    %v2300 = vshrl.u32 %v2299, 7
    %v2301 = vsub.s32 0, %v2300
    %v2302 = vrot.slane %v966, %v2301
    %v2303 = vlaneseq
    %v2304 = vshrl.u32 %v2303, 7
    %v2305 = vsub.s32 0, %v2304
    %v2306 = vrot.slane %v968, %v2305
    %v2307 = vlaneseq
    %v2308 = vshrl.u32 %v2307, 7
    %v2309 = vsub.s32 0, %v2308
    %v2310 = vrot.slane %v970, %v2309
    %v2311 = vlaneseq
    %v2312 = vshrl.u32 %v2311, 7
    %v2313 = vsub.s32 0, %v2312
    %v2314 = vrot.slane %v972, %v2313
    %v2315 = vlaneseq
    %v2316 = vshrl.u32 %v2315, 7
    %v2317 = vsub.s32 0, %v2316
    %v2318 = vrot.slane %v974, %v2317
    %2331 = vset.pattern.permute.xlu0 0
    %2332 = vperm.xlu0 %2331, %v2274
    %v2333 = vpop.permute.xlu0 %2332
    %2334 = vset.pattern.permute.xlu0 0
    %2335 = vperm.xlu0 %2334, %v2278
    %v2336 = vpop.permute.xlu0 %2335
    %2337 = vset.pattern.permute.xlu0 0
    %2338 = vperm.xlu0 %2337, %v2282
    %v2339 = vpop.permute.xlu0 %2338
    %2340 = vset.pattern.permute.xlu0 0
    %2341 = vperm.xlu0 %2340, %v2286
    %v2342 = vpop.permute.xlu0 %2341
    %2343 = vset.pattern.permute.xlu0 0
    %2344 = vperm.xlu0 %2343, %v2290
    %v2345 = vpop.permute.xlu0 %2344
    %2346 = vset.pattern.permute.xlu0 0
    %2347 = vperm.xlu0 %2346, %v2294
    %v2348 = vpop.permute.xlu0 %2347
    %2349 = vset.pattern.permute.xlu0 0
    %2350 = vperm.xlu0 %2349, %v2298
    %v2351 = vpop.permute.xlu0 %2350
    %2352 = vset.pattern.permute.xlu0 0
    %2353 = vperm.xlu0 %2352, %v2302
    %v2354 = vpop.permute.xlu0 %2353
    %2355 = vset.pattern.permute.xlu0 0
    %2356 = vperm.xlu0 %2355, %v2306
    %v2357 = vpop.permute.xlu0 %2356
    %2358 = vset.pattern.permute.xlu0 0
    %2359 = vperm.xlu0 %2358, %v2310
    %v2360 = vpop.permute.xlu0 %2359
    %2361 = vset.pattern.permute.xlu0 0
    %2362 = vperm.xlu0 %2361, %v2314
    %v2363 = vpop.permute.xlu0 %2362
    %2364 = vset.pattern.permute.xlu0 0
    %2365 = vperm.xlu0 %2364, %v2318
    %v2366 = vpop.permute.xlu0 %2365
    %v2379 = vmul.f32 %v557, %v2333
    %v2380 = vmul.f32 %v559, %v2336
    %v2381 = vmul.f32 %v561, %v2339
    %v2382 = vmul.f32 %v563, %v2342
    %v2383 = vmul.f32 %v565, %v2345
    %v2384 = vmul.f32 %v567, %v2348
    %v2385 = vmul.f32 %v569, %v2351
    %v2386 = vmul.f32 %v571, %v2354
    %v2387 = vmul.f32 %v573, %v2357
    %v2388 = vmul.f32 %v575, %v2360
    %v2389 = vmul.f32 %v577, %v2363
    %v2390 = vmul.f32 %v579, %v2366
    %v2391 = vadd.f32 %v2259, %v2379
    %v2392 = vadd.f32 %v2260, %v2380
    %v2393 = vadd.f32 %v2261, %v2381
    %v2394 = vadd.f32 %v2262, %v2382
    %v2395 = vadd.f32 %v2263, %v2383
    %v2396 = vadd.f32 %v2264, %v2384
    %v2397 = vadd.f32 %v2265, %v2385
    %v2398 = vadd.f32 %v2266, %v2386
    %v2399 = vadd.f32 %v2267, %v2387
    %v2400 = vadd.f32 %v2268, %v2388
    %v2401 = vadd.f32 %v2269, %v2389
    %v2402 = vadd.f32 %v2270, %v2390
    %v2403 = vlaneseq
    %v2404 = vshrl.u32 %v2403, 7
    %v2405 = vsub.s32 1, %v2404
    %v2406 = vrot.slane %v952, %v2405
    %v2407 = vlaneseq
    %v2408 = vshrl.u32 %v2407, 7
    %v2409 = vsub.s32 1, %v2408
    %v2410 = vrot.slane %v954, %v2409
    %v2411 = vlaneseq
    %v2412 = vshrl.u32 %v2411, 7
    %v2413 = vsub.s32 1, %v2412
    %v2414 = vrot.slane %v956, %v2413
    %v2415 = vlaneseq
    %v2416 = vshrl.u32 %v2415, 7
    %v2417 = vsub.s32 1, %v2416
    %v2418 = vrot.slane %v958, %v2417
    %v2419 = vlaneseq
    %v2420 = vshrl.u32 %v2419, 7
    %v2421 = vsub.s32 1, %v2420
    %v2422 = vrot.slane %v960, %v2421
    %v2423 = vlaneseq
    %v2424 = vshrl.u32 %v2423, 7
    %v2425 = vsub.s32 1, %v2424
    %v2426 = vrot.slane %v962, %v2425
    %v2427 = vlaneseq
    %v2428 = vshrl.u32 %v2427, 7
    %v2429 = vsub.s32 1, %v2428
    %v2430 = vrot.slane %v964, %v2429
    %v2431 = vlaneseq
    %v2432 = vshrl.u32 %v2431, 7
    %v2433 = vsub.s32 1, %v2432
    %v2434 = vrot.slane %v966, %v2433
    %v2435 = vlaneseq
    %v2436 = vshrl.u32 %v2435, 7
    %v2437 = vsub.s32 1, %v2436
    %v2438 = vrot.slane %v968, %v2437
    %v2439 = vlaneseq
    %v2440 = vshrl.u32 %v2439, 7
    %v2441 = vsub.s32 1, %v2440
    %v2442 = vrot.slane %v970, %v2441
    %v2443 = vlaneseq
    %v2444 = vshrl.u32 %v2443, 7
    %v2445 = vsub.s32 1, %v2444
    %v2446 = vrot.slane %v972, %v2445
    %v2447 = vlaneseq
    %v2448 = vshrl.u32 %v2447, 7
    %v2449 = vsub.s32 1, %v2448
    %v2450 = vrot.slane %v974, %v2449
    %2463 = vset.pattern.permute.xlu0 0
    %2464 = vperm.xlu0 %2463, %v2406
    %v2465 = vpop.permute.xlu0 %2464
    %2466 = vset.pattern.permute.xlu0 0
    %2467 = vperm.xlu0 %2466, %v2410
    %v2468 = vpop.permute.xlu0 %2467
    %2469 = vset.pattern.permute.xlu0 0
    %2470 = vperm.xlu0 %2469, %v2414
    %v2471 = vpop.permute.xlu0 %2470
    %2472 = vset.pattern.permute.xlu0 0
    %2473 = vperm.xlu0 %2472, %v2418
    %v2474 = vpop.permute.xlu0 %2473
    %2475 = vset.pattern.permute.xlu0 0
    %2476 = vperm.xlu0 %2475, %v2422
    %v2477 = vpop.permute.xlu0 %2476
    %2478 = vset.pattern.permute.xlu0 0
    %2479 = vperm.xlu0 %2478, %v2426
    %v2480 = vpop.permute.xlu0 %2479
    %2481 = vset.pattern.permute.xlu0 0
    %2482 = vperm.xlu0 %2481, %v2430
    %v2483 = vpop.permute.xlu0 %2482
    %2484 = vset.pattern.permute.xlu0 0
    %2485 = vperm.xlu0 %2484, %v2434
    %v2486 = vpop.permute.xlu0 %2485
    %2487 = vset.pattern.permute.xlu0 0
    %2488 = vperm.xlu0 %2487, %v2438
    %v2489 = vpop.permute.xlu0 %2488
    %2490 = vset.pattern.permute.xlu0 0
    %2491 = vperm.xlu0 %2490, %v2442
    %v2492 = vpop.permute.xlu0 %2491
    %2493 = vset.pattern.permute.xlu0 0
    %2494 = vperm.xlu0 %2493, %v2446
    %v2495 = vpop.permute.xlu0 %2494
    %2496 = vset.pattern.permute.xlu0 0
    %2497 = vperm.xlu0 %2496, %v2450
    %v2498 = vpop.permute.xlu0 %2497
    %v2511 = vmul.f32 %v557, %v2465
    %v2512 = vmul.f32 %v559, %v2468
    %v2513 = vmul.f32 %v561, %v2471
    %v2514 = vmul.f32 %v563, %v2474
    %v2515 = vmul.f32 %v565, %v2477
    %v2516 = vmul.f32 %v567, %v2480
    %v2517 = vmul.f32 %v569, %v2483
    %v2518 = vmul.f32 %v571, %v2486
    %v2519 = vmul.f32 %v573, %v2489
    %v2520 = vmul.f32 %v575, %v2492
    %v2521 = vmul.f32 %v577, %v2495
    %v2522 = vmul.f32 %v579, %v2498
    %v2535 = vrot.slane %v2511, 1
    %v2536 = vrot.slane %v2512, 1
    %v2537 = vrot.slane %v2513, 1
    %v2538 = vrot.slane %v2514, 1
    %v2539 = vrot.slane %v2515, 1
    %v2540 = vrot.slane %v2516, 1
    %v2541 = vrot.slane %v2517, 1
    %v2542 = vrot.slane %v2518, 1
    %v2543 = vrot.slane %v2519, 1
    %v2544 = vrot.slane %v2520, 1
    %v2545 = vrot.slane %v2521, 1
    %v2546 = vrot.slane %v2522, 1
    %v2559 = vadd.f32 %v2391, %v2535
    %v2560 = vadd.f32 %v2392, %v2536
    %v2561 = vadd.f32 %v2393, %v2537
    %v2562 = vadd.f32 %v2394, %v2538
    %v2563 = vadd.f32 %v2395, %v2539
    %v2564 = vadd.f32 %v2396, %v2540
    %v2565 = vadd.f32 %v2397, %v2541
    %v2566 = vadd.f32 %v2398, %v2542
    %v2567 = vadd.f32 %v2399, %v2543
    %v2568 = vadd.f32 %v2400, %v2544
    %v2569 = vadd.f32 %v2401, %v2545
    %v2570 = vadd.f32 %v2402, %v2546
    %v2571 = vlaneseq
    %v2572 = vshrl.u32 %v2571, 7
    %v2573 = vsub.s32 2, %v2572
    %v2574 = vrot.slane %v952, %v2573
    %v2575 = vlaneseq
    %v2576 = vshrl.u32 %v2575, 7
    %v2577 = vsub.s32 2, %v2576
    %v2578 = vrot.slane %v954, %v2577
    %v2579 = vlaneseq
    %v2580 = vshrl.u32 %v2579, 7
    %v2581 = vsub.s32 2, %v2580
    %v2582 = vrot.slane %v956, %v2581
    %v2583 = vlaneseq
    %v2584 = vshrl.u32 %v2583, 7
    %v2585 = vsub.s32 2, %v2584
    %v2586 = vrot.slane %v958, %v2585
    %v2587 = vlaneseq
    %v2588 = vshrl.u32 %v2587, 7
    %v2589 = vsub.s32 2, %v2588
    %v2590 = vrot.slane %v960, %v2589
    %v2591 = vlaneseq
    %v2592 = vshrl.u32 %v2591, 7
    %v2593 = vsub.s32 2, %v2592
    %v2594 = vrot.slane %v962, %v2593
    %v2595 = vlaneseq
    %v2596 = vshrl.u32 %v2595, 7
    %v2597 = vsub.s32 2, %v2596
    %v2598 = vrot.slane %v964, %v2597
    %v2599 = vlaneseq
    %v2600 = vshrl.u32 %v2599, 7
    %v2601 = vsub.s32 2, %v2600
    %v2602 = vrot.slane %v966, %v2601
    %v2603 = vlaneseq
    %v2604 = vshrl.u32 %v2603, 7
    %v2605 = vsub.s32 2, %v2604
    %v2606 = vrot.slane %v968, %v2605
    %v2607 = vlaneseq
    %v2608 = vshrl.u32 %v2607, 7
    %v2609 = vsub.s32 2, %v2608
    %v2610 = vrot.slane %v970, %v2609
    %v2611 = vlaneseq
    %v2612 = vshrl.u32 %v2611, 7
    %v2613 = vsub.s32 2, %v2612
    %v2614 = vrot.slane %v972, %v2613
    %v2615 = vlaneseq
    %v2616 = vshrl.u32 %v2615, 7
    %v2617 = vsub.s32 2, %v2616
    %v2618 = vrot.slane %v974, %v2617
    %2631 = vset.pattern.permute.xlu0 0
    %2632 = vperm.xlu0 %2631, %v2574
    %v2633 = vpop.permute.xlu0 %2632
    %2634 = vset.pattern.permute.xlu0 0
    %2635 = vperm.xlu0 %2634, %v2578
    %v2636 = vpop.permute.xlu0 %2635
    %2637 = vset.pattern.permute.xlu0 0
    %2638 = vperm.xlu0 %2637, %v2582
    %v2639 = vpop.permute.xlu0 %2638
    %2640 = vset.pattern.permute.xlu0 0
    %2641 = vperm.xlu0 %2640, %v2586
    %v2642 = vpop.permute.xlu0 %2641
    %2643 = vset.pattern.permute.xlu0 0
    %2644 = vperm.xlu0 %2643, %v2590
    %v2645 = vpop.permute.xlu0 %2644
    %2646 = vset.pattern.permute.xlu0 0
    %2647 = vperm.xlu0 %2646, %v2594
    %v2648 = vpop.permute.xlu0 %2647
    %2649 = vset.pattern.permute.xlu0 0
    %2650 = vperm.xlu0 %2649, %v2598
    %v2651 = vpop.permute.xlu0 %2650
    %2652 = vset.pattern.permute.xlu0 0
    %2653 = vperm.xlu0 %2652, %v2602
    %v2654 = vpop.permute.xlu0 %2653
    %2655 = vset.pattern.permute.xlu0 0
    %2656 = vperm.xlu0 %2655, %v2606
    %v2657 = vpop.permute.xlu0 %2656
    %2658 = vset.pattern.permute.xlu0 0
    %2659 = vperm.xlu0 %2658, %v2610
    %v2660 = vpop.permute.xlu0 %2659
    %2661 = vset.pattern.permute.xlu0 0
    %2662 = vperm.xlu0 %2661, %v2614
    %v2663 = vpop.permute.xlu0 %2662
    %2664 = vset.pattern.permute.xlu0 0
    %2665 = vperm.xlu0 %2664, %v2618
    %v2666 = vpop.permute.xlu0 %2665
    %v2679 = vmul.f32 %v557, %v2633
    %v2680 = vmul.f32 %v559, %v2636
    %v2681 = vmul.f32 %v561, %v2639
    %v2682 = vmul.f32 %v563, %v2642
    %v2683 = vmul.f32 %v565, %v2645
    %v2684 = vmul.f32 %v567, %v2648
    %v2685 = vmul.f32 %v569, %v2651
    %v2686 = vmul.f32 %v571, %v2654
    %v2687 = vmul.f32 %v573, %v2657
    %v2688 = vmul.f32 %v575, %v2660
    %v2689 = vmul.f32 %v577, %v2663
    %v2690 = vmul.f32 %v579, %v2666
    %v2703 = vrot.slane %v2679, 2
    %v2704 = vrot.slane %v2680, 2
    %v2705 = vrot.slane %v2681, 2
    %v2706 = vrot.slane %v2682, 2
    %v2707 = vrot.slane %v2683, 2
    %v2708 = vrot.slane %v2684, 2
    %v2709 = vrot.slane %v2685, 2
    %v2710 = vrot.slane %v2686, 2
    %v2711 = vrot.slane %v2687, 2
    %v2712 = vrot.slane %v2688, 2
    %v2713 = vrot.slane %v2689, 2
    %v2714 = vrot.slane %v2690, 2
    %v2727 = vadd.f32 %v2559, %v2703
    %v2728 = vadd.f32 %v2560, %v2704
    %v2729 = vadd.f32 %v2561, %v2705
    %v2730 = vadd.f32 %v2562, %v2706
    %v2731 = vadd.f32 %v2563, %v2707
    %v2732 = vadd.f32 %v2564, %v2708
    %v2733 = vadd.f32 %v2565, %v2709
    %v2734 = vadd.f32 %v2566, %v2710
    %v2735 = vadd.f32 %v2567, %v2711
    %v2736 = vadd.f32 %v2568, %v2712
    %v2737 = vadd.f32 %v2569, %v2713
    %v2738 = vadd.f32 %v2570, %v2714
    %v2739 = vlaneseq
    %v2740 = vshrl.u32 %v2739, 7
    %v2741 = vsub.s32 3, %v2740
    %v2742 = vrot.slane %v952, %v2741
    %v2743 = vlaneseq
    %v2744 = vshrl.u32 %v2743, 7
    %v2745 = vsub.s32 3, %v2744
    %v2746 = vrot.slane %v954, %v2745
    %v2747 = vlaneseq
    %v2748 = vshrl.u32 %v2747, 7
    %v2749 = vsub.s32 3, %v2748
    %v2750 = vrot.slane %v956, %v2749
    %v2751 = vlaneseq
    %v2752 = vshrl.u32 %v2751, 7
    %v2753 = vsub.s32 3, %v2752
    %v2754 = vrot.slane %v958, %v2753
    %v2755 = vlaneseq
    %v2756 = vshrl.u32 %v2755, 7
    %v2757 = vsub.s32 3, %v2756
    %v2758 = vrot.slane %v960, %v2757
    %v2759 = vlaneseq
    %v2760 = vshrl.u32 %v2759, 7
    %v2761 = vsub.s32 3, %v2760
    %v2762 = vrot.slane %v962, %v2761
    %v2763 = vlaneseq
    %v2764 = vshrl.u32 %v2763, 7
    %v2765 = vsub.s32 3, %v2764
    %v2766 = vrot.slane %v964, %v2765
    %v2767 = vlaneseq
    %v2768 = vshrl.u32 %v2767, 7
    %v2769 = vsub.s32 3, %v2768
    %v2770 = vrot.slane %v966, %v2769
    %v2771 = vlaneseq
    %v2772 = vshrl.u32 %v2771, 7
    %v2773 = vsub.s32 3, %v2772
    %v2774 = vrot.slane %v968, %v2773
    %v2775 = vlaneseq
    %v2776 = vshrl.u32 %v2775, 7
    %v2777 = vsub.s32 3, %v2776
    %v2778 = vrot.slane %v970, %v2777
    %v2779 = vlaneseq
    %v2780 = vshrl.u32 %v2779, 7
    %v2781 = vsub.s32 3, %v2780
    %v2782 = vrot.slane %v972, %v2781
    %v2783 = vlaneseq
    %v2784 = vshrl.u32 %v2783, 7
    %v2785 = vsub.s32 3, %v2784
    %v2786 = vrot.slane %v974, %v2785
    %2799 = vset.pattern.permute.xlu0 0
    %2800 = vperm.xlu0 %2799, %v2742
    %v2801 = vpop.permute.xlu0 %2800
    %2802 = vset.pattern.permute.xlu0 0
    %2803 = vperm.xlu0 %2802, %v2746
    %v2804 = vpop.permute.xlu0 %2803
    %2805 = vset.pattern.permute.xlu0 0
    %2806 = vperm.xlu0 %2805, %v2750
    %v2807 = vpop.permute.xlu0 %2806
    %2808 = vset.pattern.permute.xlu0 0
    %2809 = vperm.xlu0 %2808, %v2754
    %v2810 = vpop.permute.xlu0 %2809
    %2811 = vset.pattern.permute.xlu0 0
    %2812 = vperm.xlu0 %2811, %v2758
    %v2813 = vpop.permute.xlu0 %2812
    %2814 = vset.pattern.permute.xlu0 0
    %2815 = vperm.xlu0 %2814, %v2762
    %v2816 = vpop.permute.xlu0 %2815
    %2817 = vset.pattern.permute.xlu0 0
    %2818 = vperm.xlu0 %2817, %v2766
    %v2819 = vpop.permute.xlu0 %2818
    %2820 = vset.pattern.permute.xlu0 0
    %2821 = vperm.xlu0 %2820, %v2770
    %v2822 = vpop.permute.xlu0 %2821
    %2823 = vset.pattern.permute.xlu0 0
    %2824 = vperm.xlu0 %2823, %v2774
    %v2825 = vpop.permute.xlu0 %2824
    %2826 = vset.pattern.permute.xlu0 0
    %2827 = vperm.xlu0 %2826, %v2778
    %v2828 = vpop.permute.xlu0 %2827
    %2829 = vset.pattern.permute.xlu0 0
    %2830 = vperm.xlu0 %2829, %v2782
    %v2831 = vpop.permute.xlu0 %2830
    %2832 = vset.pattern.permute.xlu0 0
    %2833 = vperm.xlu0 %2832, %v2786
    %v2834 = vpop.permute.xlu0 %2833
    %v2847 = vmul.f32 %v557, %v2801
    %v2848 = vmul.f32 %v559, %v2804
    %v2849 = vmul.f32 %v561, %v2807
    %v2850 = vmul.f32 %v563, %v2810
    %v2851 = vmul.f32 %v565, %v2813
    %v2852 = vmul.f32 %v567, %v2816
    %v2853 = vmul.f32 %v569, %v2819
    %v2854 = vmul.f32 %v571, %v2822
    %v2855 = vmul.f32 %v573, %v2825
    %v2856 = vmul.f32 %v575, %v2828
    %v2857 = vmul.f32 %v577, %v2831
    %v2858 = vmul.f32 %v579, %v2834
    %v2871 = vrot.slane %v2847, 3
    %v2872 = vrot.slane %v2848, 3
    %v2873 = vrot.slane %v2849, 3
    %v2874 = vrot.slane %v2850, 3
    %v2875 = vrot.slane %v2851, 3
    %v2876 = vrot.slane %v2852, 3
    %v2877 = vrot.slane %v2853, 3
    %v2878 = vrot.slane %v2854, 3
    %v2879 = vrot.slane %v2855, 3
    %v2880 = vrot.slane %v2856, 3
    %v2881 = vrot.slane %v2857, 3
    %v2882 = vrot.slane %v2858, 3
    %v2895 = vadd.f32 %v2727, %v2871
    %v2896 = vadd.f32 %v2728, %v2872
    %v2897 = vadd.f32 %v2729, %v2873
    %v2898 = vadd.f32 %v2730, %v2874
    %v2899 = vadd.f32 %v2731, %v2875
    %v2900 = vadd.f32 %v2732, %v2876
    %v2901 = vadd.f32 %v2733, %v2877
    %v2902 = vadd.f32 %v2734, %v2878
    %v2903 = vadd.f32 %v2735, %v2879
    %v2904 = vadd.f32 %v2736, %v2880
    %v2905 = vadd.f32 %v2737, %v2881
    %v2906 = vadd.f32 %v2738, %v2882
    %v2907 = vlaneseq
    %v2908 = vshrl.u32 %v2907, 7
    %v2909 = vsub.s32 4, %v2908
    %v2910 = vrot.slane %v952, %v2909
    %v2911 = vlaneseq
    %v2912 = vshrl.u32 %v2911, 7
    %v2913 = vsub.s32 4, %v2912
    %v2914 = vrot.slane %v954, %v2913
    %v2915 = vlaneseq
    %v2916 = vshrl.u32 %v2915, 7
    %v2917 = vsub.s32 4, %v2916
    %v2918 = vrot.slane %v956, %v2917
    %v2919 = vlaneseq
    %v2920 = vshrl.u32 %v2919, 7
    %v2921 = vsub.s32 4, %v2920
    %v2922 = vrot.slane %v958, %v2921
    %v2923 = vlaneseq
    %v2924 = vshrl.u32 %v2923, 7
    %v2925 = vsub.s32 4, %v2924
    %v2926 = vrot.slane %v960, %v2925
    %v2927 = vlaneseq
    %v2928 = vshrl.u32 %v2927, 7
    %v2929 = vsub.s32 4, %v2928
    %v2930 = vrot.slane %v962, %v2929
    %v2931 = vlaneseq
    %v2932 = vshrl.u32 %v2931, 7
    %v2933 = vsub.s32 4, %v2932
    %v2934 = vrot.slane %v964, %v2933
    %v2935 = vlaneseq
    %v2936 = vshrl.u32 %v2935, 7
    %v2937 = vsub.s32 4, %v2936
    %v2938 = vrot.slane %v966, %v2937
    %v2939 = vlaneseq
    %v2940 = vshrl.u32 %v2939, 7
    %v2941 = vsub.s32 4, %v2940
    %v2942 = vrot.slane %v968, %v2941
    %v2943 = vlaneseq
    %v2944 = vshrl.u32 %v2943, 7
    %v2945 = vsub.s32 4, %v2944
    %v2946 = vrot.slane %v970, %v2945
    %v2947 = vlaneseq
    %v2948 = vshrl.u32 %v2947, 7
    %v2949 = vsub.s32 4, %v2948
    %v2950 = vrot.slane %v972, %v2949
    %v2951 = vlaneseq
    %v2952 = vshrl.u32 %v2951, 7
    %v2953 = vsub.s32 4, %v2952
    %v2954 = vrot.slane %v974, %v2953
    %2967 = vset.pattern.permute.xlu0 0
    %2968 = vperm.xlu0 %2967, %v2910
    %v2969 = vpop.permute.xlu0 %2968
    %2970 = vset.pattern.permute.xlu0 0
    %2971 = vperm.xlu0 %2970, %v2914
    %v2972 = vpop.permute.xlu0 %2971
    %2973 = vset.pattern.permute.xlu0 0
    %2974 = vperm.xlu0 %2973, %v2918
    %v2975 = vpop.permute.xlu0 %2974
    %2976 = vset.pattern.permute.xlu0 0
    %2977 = vperm.xlu0 %2976, %v2922
    %v2978 = vpop.permute.xlu0 %2977
    %2979 = vset.pattern.permute.xlu0 0
    %2980 = vperm.xlu0 %2979, %v2926
    %v2981 = vpop.permute.xlu0 %2980
    %2982 = vset.pattern.permute.xlu0 0
    %2983 = vperm.xlu0 %2982, %v2930
    %v2984 = vpop.permute.xlu0 %2983
    %2985 = vset.pattern.permute.xlu0 0
    %2986 = vperm.xlu0 %2985, %v2934
    %v2987 = vpop.permute.xlu0 %2986
    %2988 = vset.pattern.permute.xlu0 0
    %2989 = vperm.xlu0 %2988, %v2938
    %v2990 = vpop.permute.xlu0 %2989
    %2991 = vset.pattern.permute.xlu0 0
    %2992 = vperm.xlu0 %2991, %v2942
    %v2993 = vpop.permute.xlu0 %2992
    %2994 = vset.pattern.permute.xlu0 0
    %2995 = vperm.xlu0 %2994, %v2946
    %v2996 = vpop.permute.xlu0 %2995
    %2997 = vset.pattern.permute.xlu0 0
    %2998 = vperm.xlu0 %2997, %v2950
    %v2999 = vpop.permute.xlu0 %2998
    %3000 = vset.pattern.permute.xlu0 0
    %3001 = vperm.xlu0 %3000, %v2954
    %v3002 = vpop.permute.xlu0 %3001
    %v3015 = vmul.f32 %v557, %v2969
    %v3016 = vmul.f32 %v559, %v2972
    %v3017 = vmul.f32 %v561, %v2975
    %v3018 = vmul.f32 %v563, %v2978
    %v3019 = vmul.f32 %v565, %v2981
    %v3020 = vmul.f32 %v567, %v2984
    %v3021 = vmul.f32 %v569, %v2987
    %v3022 = vmul.f32 %v571, %v2990
    %v3023 = vmul.f32 %v573, %v2993
    %v3024 = vmul.f32 %v575, %v2996
    %v3025 = vmul.f32 %v577, %v2999
    %v3026 = vmul.f32 %v579, %v3002
    %v3039 = vrot.slane %v3015, 4
    %v3040 = vrot.slane %v3016, 4
    %v3041 = vrot.slane %v3017, 4
    %v3042 = vrot.slane %v3018, 4
    %v3043 = vrot.slane %v3019, 4
    %v3044 = vrot.slane %v3020, 4
    %v3045 = vrot.slane %v3021, 4
    %v3046 = vrot.slane %v3022, 4
    %v3047 = vrot.slane %v3023, 4
    %v3048 = vrot.slane %v3024, 4
    %v3049 = vrot.slane %v3025, 4
    %v3050 = vrot.slane %v3026, 4
    %v3063 = vadd.f32 %v2895, %v3039
    %v3064 = vadd.f32 %v2896, %v3040
    %v3065 = vadd.f32 %v2897, %v3041
    %v3066 = vadd.f32 %v2898, %v3042
    %v3067 = vadd.f32 %v2899, %v3043
    %v3068 = vadd.f32 %v2900, %v3044
    %v3069 = vadd.f32 %v2901, %v3045
    %v3070 = vadd.f32 %v2902, %v3046
    %v3071 = vadd.f32 %v2903, %v3047
    %v3072 = vadd.f32 %v2904, %v3048
    %v3073 = vadd.f32 %v2905, %v3049
    %v3074 = vadd.f32 %v2906, %v3050
    %v3075 = vlaneseq
    %v3076 = vshrl.u32 %v3075, 7
    %v3077 = vsub.s32 5, %v3076
    %v3078 = vrot.slane %v952, %v3077
    %v3079 = vlaneseq
    %v3080 = vshrl.u32 %v3079, 7
    %v3081 = vsub.s32 5, %v3080
    %v3082 = vrot.slane %v954, %v3081
    %v3083 = vlaneseq
    %v3084 = vshrl.u32 %v3083, 7
    %v3085 = vsub.s32 5, %v3084
    %v3086 = vrot.slane %v956, %v3085
    %v3087 = vlaneseq
    %v3088 = vshrl.u32 %v3087, 7
    %v3089 = vsub.s32 5, %v3088
    %v3090 = vrot.slane %v958, %v3089
    %v3091 = vlaneseq
    %v3092 = vshrl.u32 %v3091, 7
    %v3093 = vsub.s32 5, %v3092
    %v3094 = vrot.slane %v960, %v3093
    %v3095 = vlaneseq
    %v3096 = vshrl.u32 %v3095, 7
    %v3097 = vsub.s32 5, %v3096
    %v3098 = vrot.slane %v962, %v3097
    %v3099 = vlaneseq
    %v3100 = vshrl.u32 %v3099, 7
    %v3101 = vsub.s32 5, %v3100
    %v3102 = vrot.slane %v964, %v3101
    %v3103 = vlaneseq
    %v3104 = vshrl.u32 %v3103, 7
    %v3105 = vsub.s32 5, %v3104
    %v3106 = vrot.slane %v966, %v3105
    %v3107 = vlaneseq
    %v3108 = vshrl.u32 %v3107, 7
    %v3109 = vsub.s32 5, %v3108
    %v3110 = vrot.slane %v968, %v3109
    %v3111 = vlaneseq
    %v3112 = vshrl.u32 %v3111, 7
    %v3113 = vsub.s32 5, %v3112
    %v3114 = vrot.slane %v970, %v3113
    %v3115 = vlaneseq
    %v3116 = vshrl.u32 %v3115, 7
    %v3117 = vsub.s32 5, %v3116
    %v3118 = vrot.slane %v972, %v3117
    %v3119 = vlaneseq
    %v3120 = vshrl.u32 %v3119, 7
    %v3121 = vsub.s32 5, %v3120
    %v3122 = vrot.slane %v974, %v3121
    %3135 = vset.pattern.permute.xlu0 0
    %3136 = vperm.xlu0 %3135, %v3078
    %v3137 = vpop.permute.xlu0 %3136
    %3138 = vset.pattern.permute.xlu0 0
    %3139 = vperm.xlu0 %3138, %v3082
    %v3140 = vpop.permute.xlu0 %3139
    %3141 = vset.pattern.permute.xlu0 0
    %3142 = vperm.xlu0 %3141, %v3086
    %v3143 = vpop.permute.xlu0 %3142
    %3144 = vset.pattern.permute.xlu0 0
    %3145 = vperm.xlu0 %3144, %v3090
    %v3146 = vpop.permute.xlu0 %3145
    %3147 = vset.pattern.permute.xlu0 0
    %3148 = vperm.xlu0 %3147, %v3094
    %v3149 = vpop.permute.xlu0 %3148
    %3150 = vset.pattern.permute.xlu0 0
    %3151 = vperm.xlu0 %3150, %v3098
    %v3152 = vpop.permute.xlu0 %3151
    %3153 = vset.pattern.permute.xlu0 0
    %3154 = vperm.xlu0 %3153, %v3102
    %v3155 = vpop.permute.xlu0 %3154
    %3156 = vset.pattern.permute.xlu0 0
    %3157 = vperm.xlu0 %3156, %v3106
    %v3158 = vpop.permute.xlu0 %3157
    %3159 = vset.pattern.permute.xlu0 0
    %3160 = vperm.xlu0 %3159, %v3110
    %v3161 = vpop.permute.xlu0 %3160
    %3162 = vset.pattern.permute.xlu0 0
    %3163 = vperm.xlu0 %3162, %v3114
    %v3164 = vpop.permute.xlu0 %3163
    %3165 = vset.pattern.permute.xlu0 0
    %3166 = vperm.xlu0 %3165, %v3118
    %v3167 = vpop.permute.xlu0 %3166
    %3168 = vset.pattern.permute.xlu0 0
    %3169 = vperm.xlu0 %3168, %v3122
    %v3170 = vpop.permute.xlu0 %3169
    %v3183 = vmul.f32 %v557, %v3137
    %v3184 = vmul.f32 %v559, %v3140
    %v3185 = vmul.f32 %v561, %v3143
    %v3186 = vmul.f32 %v563, %v3146
    %v3187 = vmul.f32 %v565, %v3149
    %v3188 = vmul.f32 %v567, %v3152
    %v3189 = vmul.f32 %v569, %v3155
    %v3190 = vmul.f32 %v571, %v3158
    %v3191 = vmul.f32 %v573, %v3161
    %v3192 = vmul.f32 %v575, %v3164
    %v3193 = vmul.f32 %v577, %v3167
    %v3194 = vmul.f32 %v579, %v3170
    %v3207 = vrot.slane %v3183, 5
    %v3208 = vrot.slane %v3184, 5
    %v3209 = vrot.slane %v3185, 5
    %v3210 = vrot.slane %v3186, 5
    %v3211 = vrot.slane %v3187, 5
    %v3212 = vrot.slane %v3188, 5
    %v3213 = vrot.slane %v3189, 5
    %v3214 = vrot.slane %v3190, 5
    %v3215 = vrot.slane %v3191, 5
    %v3216 = vrot.slane %v3192, 5
    %v3217 = vrot.slane %v3193, 5
    %v3218 = vrot.slane %v3194, 5
    %v3231 = vadd.f32 %v3063, %v3207
    %v3232 = vadd.f32 %v3064, %v3208
    %v3233 = vadd.f32 %v3065, %v3209
    %v3234 = vadd.f32 %v3066, %v3210
    %v3235 = vadd.f32 %v3067, %v3211
    %v3236 = vadd.f32 %v3068, %v3212
    %v3237 = vadd.f32 %v3069, %v3213
    %v3238 = vadd.f32 %v3070, %v3214
    %v3239 = vadd.f32 %v3071, %v3215
    %v3240 = vadd.f32 %v3072, %v3216
    %v3241 = vadd.f32 %v3073, %v3217
    %v3242 = vadd.f32 %v3074, %v3218
    %v3243 = vlaneseq
    %v3244 = vshrl.u32 %v3243, 7
    %v3245 = vsub.s32 6, %v3244
    %v3246 = vrot.slane %v952, %v3245
    %v3247 = vlaneseq
    %v3248 = vshrl.u32 %v3247, 7
    %v3249 = vsub.s32 6, %v3248
    %v3250 = vrot.slane %v954, %v3249
    %v3251 = vlaneseq
    %v3252 = vshrl.u32 %v3251, 7
    %v3253 = vsub.s32 6, %v3252
    %v3254 = vrot.slane %v956, %v3253
    %v3255 = vlaneseq
    %v3256 = vshrl.u32 %v3255, 7
    %v3257 = vsub.s32 6, %v3256
    %v3258 = vrot.slane %v958, %v3257
    %v3259 = vlaneseq
    %v3260 = vshrl.u32 %v3259, 7
    %v3261 = vsub.s32 6, %v3260
    %v3262 = vrot.slane %v960, %v3261
    %v3263 = vlaneseq
    %v3264 = vshrl.u32 %v3263, 7
    %v3265 = vsub.s32 6, %v3264
    %v3266 = vrot.slane %v962, %v3265
    %v3267 = vlaneseq
    %v3268 = vshrl.u32 %v3267, 7
    %v3269 = vsub.s32 6, %v3268
    %v3270 = vrot.slane %v964, %v3269
    %v3271 = vlaneseq
    %v3272 = vshrl.u32 %v3271, 7
    %v3273 = vsub.s32 6, %v3272
    %v3274 = vrot.slane %v966, %v3273
    %v3275 = vlaneseq
    %v3276 = vshrl.u32 %v3275, 7
    %v3277 = vsub.s32 6, %v3276
    %v3278 = vrot.slane %v968, %v3277
    %v3279 = vlaneseq
    %v3280 = vshrl.u32 %v3279, 7
    %v3281 = vsub.s32 6, %v3280
    %v3282 = vrot.slane %v970, %v3281
    %v3283 = vlaneseq
    %v3284 = vshrl.u32 %v3283, 7
    %v3285 = vsub.s32 6, %v3284
    %v3286 = vrot.slane %v972, %v3285
    %v3287 = vlaneseq
    %v3288 = vshrl.u32 %v3287, 7
    %v3289 = vsub.s32 6, %v3288
    %v3290 = vrot.slane %v974, %v3289
    %3303 = vset.pattern.permute.xlu0 0
    %3304 = vperm.xlu0 %3303, %v3246
    %v3305 = vpop.permute.xlu0 %3304
    %3306 = vset.pattern.permute.xlu0 0
    %3307 = vperm.xlu0 %3306, %v3250
    %v3308 = vpop.permute.xlu0 %3307
    %3309 = vset.pattern.permute.xlu0 0
    %3310 = vperm.xlu0 %3309, %v3254
    %v3311 = vpop.permute.xlu0 %3310
    %3312 = vset.pattern.permute.xlu0 0
    %3313 = vperm.xlu0 %3312, %v3258
    %v3314 = vpop.permute.xlu0 %3313
    %3315 = vset.pattern.permute.xlu0 0
    %3316 = vperm.xlu0 %3315, %v3262
    %v3317 = vpop.permute.xlu0 %3316
    %3318 = vset.pattern.permute.xlu0 0
    %3319 = vperm.xlu0 %3318, %v3266
    %v3320 = vpop.permute.xlu0 %3319
    %3321 = vset.pattern.permute.xlu0 0
    %3322 = vperm.xlu0 %3321, %v3270
    %v3323 = vpop.permute.xlu0 %3322
    %3324 = vset.pattern.permute.xlu0 0
    %3325 = vperm.xlu0 %3324, %v3274
    %v3326 = vpop.permute.xlu0 %3325
    %3327 = vset.pattern.permute.xlu0 0
    %3328 = vperm.xlu0 %3327, %v3278
    %v3329 = vpop.permute.xlu0 %3328
    %3330 = vset.pattern.permute.xlu0 0
    %3331 = vperm.xlu0 %3330, %v3282
    %v3332 = vpop.permute.xlu0 %3331
    %3333 = vset.pattern.permute.xlu0 0
    %3334 = vperm.xlu0 %3333, %v3286
    %v3335 = vpop.permute.xlu0 %3334
    %3336 = vset.pattern.permute.xlu0 0
    %3337 = vperm.xlu0 %3336, %v3290
    %v3338 = vpop.permute.xlu0 %3337
    %v3351 = vmul.f32 %v557, %v3305
    %v3352 = vmul.f32 %v559, %v3308
    %v3353 = vmul.f32 %v561, %v3311
    %v3354 = vmul.f32 %v563, %v3314
    %v3355 = vmul.f32 %v565, %v3317
    %v3356 = vmul.f32 %v567, %v3320
    %v3357 = vmul.f32 %v569, %v3323
    %v3358 = vmul.f32 %v571, %v3326
    %v3359 = vmul.f32 %v573, %v3329
    %v3360 = vmul.f32 %v575, %v3332
    %v3361 = vmul.f32 %v577, %v3335
    %v3362 = vmul.f32 %v579, %v3338
    %v3375 = vrot.slane %v3351, 6
    %v3376 = vrot.slane %v3352, 6
    %v3377 = vrot.slane %v3353, 6
    %v3378 = vrot.slane %v3354, 6
    %v3379 = vrot.slane %v3355, 6
    %v3380 = vrot.slane %v3356, 6
    %v3381 = vrot.slane %v3357, 6
    %v3382 = vrot.slane %v3358, 6
    %v3383 = vrot.slane %v3359, 6
    %v3384 = vrot.slane %v3360, 6
    %v3385 = vrot.slane %v3361, 6
    %v3386 = vrot.slane %v3362, 6
    %v3399 = vadd.f32 %v3231, %v3375
    %v3400 = vadd.f32 %v3232, %v3376
    %v3401 = vadd.f32 %v3233, %v3377
    %v3402 = vadd.f32 %v3234, %v3378
    %v3403 = vadd.f32 %v3235, %v3379
    %v3404 = vadd.f32 %v3236, %v3380
    %v3405 = vadd.f32 %v3237, %v3381
    %v3406 = vadd.f32 %v3238, %v3382
    %v3407 = vadd.f32 %v3239, %v3383
    %v3408 = vadd.f32 %v3240, %v3384
    %v3409 = vadd.f32 %v3241, %v3385
    %v3410 = vadd.f32 %v3242, %v3386
    %v3411 = vlaneseq
    %v3412 = vshrl.u32 %v3411, 7
    %v3413 = vsub.s32 7, %v3412
    %v3414 = vrot.slane %v952, %v3413
    %v3415 = vlaneseq
    %v3416 = vshrl.u32 %v3415, 7
    %v3417 = vsub.s32 7, %v3416
    %v3418 = vrot.slane %v954, %v3417
    %v3419 = vlaneseq
    %v3420 = vshrl.u32 %v3419, 7
    %v3421 = vsub.s32 7, %v3420
    %v3422 = vrot.slane %v956, %v3421
    %v3423 = vlaneseq
    %v3424 = vshrl.u32 %v3423, 7
    %v3425 = vsub.s32 7, %v3424
    %v3426 = vrot.slane %v958, %v3425
    %v3427 = vlaneseq
    %v3428 = vshrl.u32 %v3427, 7
    %v3429 = vsub.s32 7, %v3428
    %v3430 = vrot.slane %v960, %v3429
    %v3431 = vlaneseq
    %v3432 = vshrl.u32 %v3431, 7
    %v3433 = vsub.s32 7, %v3432
    %v3434 = vrot.slane %v962, %v3433
    %v3435 = vlaneseq
    %v3436 = vshrl.u32 %v3435, 7
    %v3437 = vsub.s32 7, %v3436
    %v3438 = vrot.slane %v964, %v3437
    %v3439 = vlaneseq
    %v3440 = vshrl.u32 %v3439, 7
    %v3441 = vsub.s32 7, %v3440
    %v3442 = vrot.slane %v966, %v3441
    %v3443 = vlaneseq
    %v3444 = vshrl.u32 %v3443, 7
    %v3445 = vsub.s32 7, %v3444
    %v3446 = vrot.slane %v968, %v3445
    %v3447 = vlaneseq
    %v3448 = vshrl.u32 %v3447, 7
    %v3449 = vsub.s32 7, %v3448
    %v3450 = vrot.slane %v970, %v3449
    %v3451 = vlaneseq
    %v3452 = vshrl.u32 %v3451, 7
    %v3453 = vsub.s32 7, %v3452
    %v3454 = vrot.slane %v972, %v3453
    %v3455 = vlaneseq
    %v3456 = vshrl.u32 %v3455, 7
    %v3457 = vsub.s32 7, %v3456
    %v3458 = vrot.slane %v974, %v3457
    %3471 = vset.pattern.permute.xlu0 0
    %3472 = vperm.xlu0 %3471, %v3414
    %v3473 = vpop.permute.xlu0 %3472
    %3474 = vset.pattern.permute.xlu0 0
    %3475 = vperm.xlu0 %3474, %v3418
    %v3476 = vpop.permute.xlu0 %3475
    %3477 = vset.pattern.permute.xlu0 0
    %3478 = vperm.xlu0 %3477, %v3422
    %v3479 = vpop.permute.xlu0 %3478
    %3480 = vset.pattern.permute.xlu0 0
    %3481 = vperm.xlu0 %3480, %v3426
    %v3482 = vpop.permute.xlu0 %3481
    %3483 = vset.pattern.permute.xlu0 0
    %3484 = vperm.xlu0 %3483, %v3430
    %v3485 = vpop.permute.xlu0 %3484
    %3486 = vset.pattern.permute.xlu0 0
    %3487 = vperm.xlu0 %3486, %v3434
    %v3488 = vpop.permute.xlu0 %3487
    %3489 = vset.pattern.permute.xlu0 0
    %3490 = vperm.xlu0 %3489, %v3438
    %v3491 = vpop.permute.xlu0 %3490
    %3492 = vset.pattern.permute.xlu0 0
    %3493 = vperm.xlu0 %3492, %v3442
    %v3494 = vpop.permute.xlu0 %3493
    %3495 = vset.pattern.permute.xlu0 0
    %3496 = vperm.xlu0 %3495, %v3446
    %v3497 = vpop.permute.xlu0 %3496
    %3498 = vset.pattern.permute.xlu0 0
    %3499 = vperm.xlu0 %3498, %v3450
    %v3500 = vpop.permute.xlu0 %3499
    %3501 = vset.pattern.permute.xlu0 0
    %3502 = vperm.xlu0 %3501, %v3454
    %v3503 = vpop.permute.xlu0 %3502
    %3504 = vset.pattern.permute.xlu0 0
    %3505 = vperm.xlu0 %3504, %v3458
    %v3506 = vpop.permute.xlu0 %3505
    %v3519 = vmul.f32 %v557, %v3473
    %v3520 = vmul.f32 %v559, %v3476
    %v3521 = vmul.f32 %v561, %v3479
    %v3522 = vmul.f32 %v563, %v3482
    %v3523 = vmul.f32 %v565, %v3485
    %v3524 = vmul.f32 %v567, %v3488
    %v3525 = vmul.f32 %v569, %v3491
    %v3526 = vmul.f32 %v571, %v3494
    %v3527 = vmul.f32 %v573, %v3497
    %v3528 = vmul.f32 %v575, %v3500
    %v3529 = vmul.f32 %v577, %v3503
    %v3530 = vmul.f32 %v579, %v3506
    %v3543 = vrot.slane %v3519, 7
    %v3544 = vrot.slane %v3520, 7
    %v3545 = vrot.slane %v3521, 7
    %v3546 = vrot.slane %v3522, 7
    %v3547 = vrot.slane %v3523, 7
    %v3548 = vrot.slane %v3524, 7
    %v3549 = vrot.slane %v3525, 7
    %v3550 = vrot.slane %v3526, 7
    %v3551 = vrot.slane %v3527, 7
    %v3552 = vrot.slane %v3528, 7
    %v3553 = vrot.slane %v3529, 7
    %v3554 = vrot.slane %v3530, 7
    %v3567 = vadd.f32 %v3399, %v3543
    %v3568 = vadd.f32 %v3400, %v3544
    %v3569 = vadd.f32 %v3401, %v3545
    %v3570 = vadd.f32 %v3402, %v3546
    %v3571 = vadd.f32 %v3403, %v3547
    %v3572 = vadd.f32 %v3404, %v3548
    %v3573 = vadd.f32 %v3405, %v3549
    %v3574 = vadd.f32 %v3406, %v3550
    %v3575 = vadd.f32 %v3407, %v3551
    %v3576 = vadd.f32 %v3408, %v3552
    %v3577 = vadd.f32 %v3409, %v3553
    %v3578 = vadd.f32 %v3410, %v3554
    %vm3579 = vcmask 1040384
    %v3580 = vsel %vm3579, %v3567, -inf
    %v3581 = vsel %vm3579, %v3568, -inf
    %v3582 = vmax.f32 %v3580, %v3581
    %v3583 = vsel %vm3579, %v3569, -inf
    %v3584 = vmax.f32 %v3582, %v3583
    %v3585 = vsel %vm3579, %v3570, -inf
    %v3586 = vsel %vm3579, %v3571, -inf
    %v3587 = vmax.f32 %v3585, %v3586
    %v3588 = vsel %vm3579, %v3572, -inf
    %v3589 = vmax.f32 %v3587, %v3588
    %v3590 = vsel %vm3579, %v3573, -inf
    %v3591 = vsel %vm3579, %v3574, -inf
    %v3592 = vmax.f32 %v3590, %v3591
    %v3593 = vsel %vm3579, %v3575, -inf
    %v3594 = vmax.f32 %v3592, %v3593
    %v3595 = vsel %vm3579, %v3576, -inf
    %v3596 = vsel %vm3579, %v3577, -inf
    %v3597 = vmax.f32 %v3595, %v3596
    %v3598 = vsel %vm3579, %v3578, -inf
    %v3599 = vmax.f32 %v3597, %v3598
    %v3600 = vlaneseq
    %v3601 = vshrl.u32 %v3600, 7
    %v3602 = vsub.s32 0, %v3601
    %v3603 = vrot.slane %v3584, %v3602
    %v3604 = vlaneseq
    %v3605 = vshrl.u32 %v3604, 7
    %v3606 = vsub.s32 0, %v3605
    %v3607 = vrot.slane %v3589, %v3606
    %v3608 = vlaneseq
    %v3609 = vshrl.u32 %v3608, 7
    %v3610 = vsub.s32 0, %v3609
    %v3611 = vrot.slane %v3594, %v3610
    %v3612 = vlaneseq
    %v3613 = vshrl.u32 %v3612, 7
    %v3614 = vsub.s32 0, %v3613
    %v3615 = vrot.slane %v3599, %v3614
    %v3616 = vsub.f32 %v3567, %v3603
    %v3617 = vsub.f32 %v3568, %v3603
    %v3618 = vsub.f32 %v3569, %v3603
    %v3619 = vsub.f32 %v3570, %v3607
    %v3620 = vsub.f32 %v3571, %v3607
    %v3621 = vsub.f32 %v3572, %v3607
    %v3622 = vsub.f32 %v3573, %v3611
    %v3623 = vsub.f32 %v3574, %v3611
    %v3624 = vsub.f32 %v3575, %v3611
    %v3625 = vsub.f32 %v3576, %v3615
    %v3626 = vsub.f32 %v3577, %v3615
    %v3627 = vsub.f32 %v3578, %v3615
    %v3628 = vmul.f32 %v3616, 1.442695
    %v3629 = vpow.pop %v3628
    %v3630 = vmul.f32 %v3617, 1.442695
    %v3631 = vpow.pop %v3630
    %v3632 = vmul.f32 %v3618, 1.442695
    %v3633 = vpow.pop %v3632
    %v3634 = vmul.f32 %v3619, 1.442695
    %v3635 = vpow.pop %v3634
    %v3636 = vmul.f32 %v3620, 1.442695
    %v3637 = vpow.pop %v3636
    %v3638 = vmul.f32 %v3621, 1.442695
    %v3639 = vpow.pop %v3638
    %v3640 = vmul.f32 %v3622, 1.442695
    %v3641 = vpow.pop %v3640
    %v3642 = vmul.f32 %v3623, 1.442695
    %v3643 = vpow.pop %v3642
    %v3644 = vmul.f32 %v3624, 1.442695
    %v3645 = vpow.pop %v3644
    %v3646 = vmul.f32 %v3625, 1.442695
    %v3647 = vpow.pop %v3646
    %v3648 = vmul.f32 %v3626, 1.442695
    %v3649 = vpow.pop %v3648
    %v3650 = vmul.f32 %v3627, 1.442695
    %v3651 = vpow.pop %v3650
    %v3664 = vrot.slane %v3631, 7
    %v3665 = vsel %vm812, %v3664, %v3629
    %v3666 = vrot.slane %v3633, 6
    %v3667 = vsel %vm814, %v3666, %v3665
    %v3668 = vrot.slane %v3637, 7
    %v3669 = vsel %vm812, %v3668, %v3635
    %v3670 = vrot.slane %v3639, 6
    %v3671 = vsel %vm814, %v3670, %v3669
    %v3672 = vrot.slane %v3643, 7
    %v3673 = vsel %vm812, %v3672, %v3641
    %v3674 = vrot.slane %v3645, 6
    %v3675 = vsel %vm814, %v3674, %v3673
    %v3676 = vrot.slane %v3649, 7
    %v3677 = vsel %vm812, %v3676, %v3647
    %v3678 = vrot.slane %v3651, 6
    %v3679 = vsel %vm814, %v3678, %v3677
    %vm3684 = vcmask 1042432
    %v3685 = vsel %vm3684, %v3667, 0.0
    %v3686 = vrot.slane %v3685, 4
    %v3687 = vadd.f32 %v3685, %v3686
    %v3688 = vrot.slane %v3687, 2
    %v3689 = vadd.f32 %v3687, %v3688
    %v3690 = vrot.slane %v3689, 1
    %v3691 = vadd.f32 %v3689, %v3690
    %v3692 = vsel %vm3684, %v3671, 0.0
    %v3693 = vrot.slane %v3692, 4
    %v3694 = vadd.f32 %v3692, %v3693
    %v3695 = vrot.slane %v3694, 2
    %v3696 = vadd.f32 %v3694, %v3695
    %v3697 = vrot.slane %v3696, 1
    %v3698 = vadd.f32 %v3696, %v3697
    %v3699 = vsel %vm3684, %v3675, 0.0
    %v3700 = vrot.slane %v3699, 4
    %v3701 = vadd.f32 %v3699, %v3700
    %v3702 = vrot.slane %v3701, 2
    %v3703 = vadd.f32 %v3701, %v3702
    %v3704 = vrot.slane %v3703, 1
    %v3705 = vadd.f32 %v3703, %v3704
    %v3706 = vsel %vm3684, %v3679, 0.0
    %v3707 = vrot.slane %v3706, 4
    %v3708 = vadd.f32 %v3706, %v3707
    %v3709 = vrot.slane %v3708, 2
    %v3710 = vadd.f32 %v3708, %v3709
    %v3711 = vrot.slane %v3710, 1
    %v3712 = vadd.f32 %v3710, %v3711
    %v3713 = vrcp.pop %v3691
    %v3714 = vmul.f32 1.0, %v3713
    %v3715 = vrcp.pop %v3698
    %v3716 = vmul.f32 1.0, %v3715
    %v3717 = vrcp.pop %v3705
    %v3718 = vmul.f32 1.0, %v3717
    %v3719 = vrcp.pop %v3712
    %v3720 = vmul.f32 1.0, %v3719
    %v3721 = vlaneseq
    %v3722 = vshrl.u32 %v3721, 7
    %v3723 = vsub.s32 0, %v3722
    %v3724 = vrot.slane %v3714, %v3723
    %v3725 = vlaneseq
    %v3726 = vshrl.u32 %v3725, 7
    %v3727 = vsub.s32 0, %v3726
    %v3728 = vrot.slane %v3716, %v3727
    %v3729 = vlaneseq
    %v3730 = vshrl.u32 %v3729, 7
    %v3731 = vsub.s32 0, %v3730
    %v3732 = vrot.slane %v3718, %v3731
    %v3733 = vlaneseq
    %v3734 = vshrl.u32 %v3733, 7
    %v3735 = vsub.s32 0, %v3734
    %v3736 = vrot.slane %v3720, %v3735
    %v3737 = vmul.f32 %v3629, %v3724
    %v3738 = vmul.f32 %v3631, %v3724
    %v3739 = vmul.f32 %v3633, %v3724
    %v3740 = vmul.f32 %v3635, %v3728
    %v3741 = vmul.f32 %v3637, %v3728
    %v3742 = vmul.f32 %v3639, %v3728
    %v3743 = vmul.f32 %v3641, %v3732
    %v3744 = vmul.f32 %v3643, %v3732
    %v3745 = vmul.f32 %v3645, %v3732
    %v3746 = vmul.f32 %v3647, %v3736
    %v3747 = vmul.f32 %v3649, %v3736
    %v3748 = vmul.f32 %v3651, %v3736
    %v3749 = vlaneseq
    %v3750 = vshrl.u32 %v3749, 7
    %v3751 = vsub.s32 0, %v3750
    %v3752 = vrot.slane %v3737, %v3751
    %v3753 = vlaneseq
    %v3754 = vshrl.u32 %v3753, 7
    %v3755 = vsub.s32 0, %v3754
    %v3756 = vrot.slane %v3738, %v3755
    %v3757 = vlaneseq
    %v3758 = vshrl.u32 %v3757, 7
    %v3759 = vsub.s32 0, %v3758
    %v3760 = vrot.slane %v3739, %v3759
    %v3761 = vlaneseq
    %v3762 = vshrl.u32 %v3761, 7
    %v3763 = vsub.s32 0, %v3762
    %v3764 = vrot.slane %v3740, %v3763
    %v3765 = vlaneseq
    %v3766 = vshrl.u32 %v3765, 7
    %v3767 = vsub.s32 0, %v3766
    %v3768 = vrot.slane %v3741, %v3767
    %v3769 = vlaneseq
    %v3770 = vshrl.u32 %v3769, 7
    %v3771 = vsub.s32 0, %v3770
    %v3772 = vrot.slane %v3742, %v3771
    %v3773 = vlaneseq
    %v3774 = vshrl.u32 %v3773, 7
    %v3775 = vsub.s32 0, %v3774
    %v3776 = vrot.slane %v3743, %v3775
    %v3777 = vlaneseq
    %v3778 = vshrl.u32 %v3777, 7
    %v3779 = vsub.s32 0, %v3778
    %v3780 = vrot.slane %v3744, %v3779
    %v3781 = vlaneseq
    %v3782 = vshrl.u32 %v3781, 7
    %v3783 = vsub.s32 0, %v3782
    %v3784 = vrot.slane %v3745, %v3783
    %v3785 = vlaneseq
    %v3786 = vshrl.u32 %v3785, 7
    %v3787 = vsub.s32 0, %v3786
    %v3788 = vrot.slane %v3746, %v3787
    %v3789 = vlaneseq
    %v3790 = vshrl.u32 %v3789, 7
    %v3791 = vsub.s32 0, %v3790
    %v3792 = vrot.slane %v3747, %v3791
    %v3793 = vlaneseq
    %v3794 = vshrl.u32 %v3793, 7
    %v3795 = vsub.s32 0, %v3794
    %v3796 = vrot.slane %v3748, %v3795
    %v3797 = vmul.f32 %v3752, %v556
    %v3798 = vmul.f32 %v3752, %v557
    %v3799 = vmul.f32 %v3756, %v558
    %v3800 = vmul.f32 %v3756, %v559
    %v3801 = vmul.f32 %v3760, %v560
    %v3802 = vmul.f32 %v3760, %v561
    %v3803 = vmul.f32 %v3764, %v562
    %v3804 = vmul.f32 %v3764, %v563
    %v3805 = vmul.f32 %v3768, %v564
    %v3806 = vmul.f32 %v3768, %v565
    %v3807 = vmul.f32 %v3772, %v566
    %v3808 = vmul.f32 %v3772, %v567
    %v3809 = vmul.f32 %v3776, %v568
    %v3810 = vmul.f32 %v3776, %v569
    %v3811 = vmul.f32 %v3780, %v570
    %v3812 = vmul.f32 %v3780, %v571
    %v3813 = vmul.f32 %v3784, %v572
    %v3814 = vmul.f32 %v3784, %v573
    %v3815 = vmul.f32 %v3788, %v574
    %v3816 = vmul.f32 %v3788, %v575
    %v3817 = vmul.f32 %v3792, %v576
    %v3818 = vmul.f32 %v3792, %v577
    %v3819 = vmul.f32 %v3796, %v578
    %v3820 = vmul.f32 %v3796, %v579
    %3821 = vadd.xlane.f32.xlu0 %v3797
    %v3822 = vpop.xlane.xlu0 %3821
    %3823 = vadd.xlane.f32.xlu0 %v3798
    %v3824 = vpop.xlane.xlu0 %3823
    %3825 = vadd.xlane.f32.xlu0 %v3799
    %v3826 = vpop.xlane.xlu0 %3825
    %3827 = vadd.xlane.f32.xlu0 %v3800
    %v3828 = vpop.xlane.xlu0 %3827
    %3829 = vadd.xlane.f32.xlu0 %v3801
    %v3830 = vpop.xlane.xlu0 %3829
    %3831 = vadd.xlane.f32.xlu0 %v3802
    %v3832 = vpop.xlane.xlu0 %3831
    %3833 = vadd.xlane.f32.xlu0 %v3803
    %v3834 = vpop.xlane.xlu0 %3833
    %3835 = vadd.xlane.f32.xlu0 %v3804
    %v3836 = vpop.xlane.xlu0 %3835
    %3837 = vadd.xlane.f32.xlu0 %v3805
    %v3838 = vpop.xlane.xlu0 %3837
    %3839 = vadd.xlane.f32.xlu0 %v3806
    %v3840 = vpop.xlane.xlu0 %3839
    %3841 = vadd.xlane.f32.xlu0 %v3807
    %v3842 = vpop.xlane.xlu0 %3841
    %3843 = vadd.xlane.f32.xlu0 %v3808
    %v3844 = vpop.xlane.xlu0 %3843
    %3845 = vadd.xlane.f32.xlu0 %v3809
    %v3846 = vpop.xlane.xlu0 %3845
    %3847 = vadd.xlane.f32.xlu0 %v3810
    %v3848 = vpop.xlane.xlu0 %3847
    %3849 = vadd.xlane.f32.xlu0 %v3811
    %v3850 = vpop.xlane.xlu0 %3849
    %3851 = vadd.xlane.f32.xlu0 %v3812
    %v3852 = vpop.xlane.xlu0 %3851
    %3853 = vadd.xlane.f32.xlu0 %v3813
    %v3854 = vpop.xlane.xlu0 %3853
    %3855 = vadd.xlane.f32.xlu0 %v3814
    %v3856 = vpop.xlane.xlu0 %3855
    %3857 = vadd.xlane.f32.xlu0 %v3815
    %v3858 = vpop.xlane.xlu0 %3857
    %3859 = vadd.xlane.f32.xlu0 %v3816
    %v3860 = vpop.xlane.xlu0 %3859
    %3861 = vadd.xlane.f32.xlu0 %v3817
    %v3862 = vpop.xlane.xlu0 %3861
    %3863 = vadd.xlane.f32.xlu0 %v3818
    %v3864 = vpop.xlane.xlu0 %3863
    %3865 = vadd.xlane.f32.xlu0 %v3819
    %v3866 = vpop.xlane.xlu0 %3865
    %3867 = vadd.xlane.f32.xlu0 %v3820
    %v3868 = vpop.xlane.xlu0 %3867
    %v3869 = vmul.f32 %v3822, %v3822
    %v3870 = vmul.f32 %v3824, %v3824
    %v3871 = vmul.f32 %v3826, %v3826
    %v3872 = vmul.f32 %v3828, %v3828
    %v3873 = vmul.f32 %v3830, %v3830
    %v3874 = vmul.f32 %v3832, %v3832
    %v3875 = vmul.f32 %v3834, %v3834
    %v3876 = vmul.f32 %v3836, %v3836
    %v3877 = vmul.f32 %v3838, %v3838
    %v3878 = vmul.f32 %v3840, %v3840
    %v3879 = vmul.f32 %v3842, %v3842
    %v3880 = vmul.f32 %v3844, %v3844
    %v3881 = vmul.f32 %v3846, %v3846
    %v3882 = vmul.f32 %v3848, %v3848
    %v3883 = vmul.f32 %v3850, %v3850
    %v3884 = vmul.f32 %v3852, %v3852
    %v3885 = vmul.f32 %v3854, %v3854
    %v3886 = vmul.f32 %v3856, %v3856
    %v3887 = vmul.f32 %v3858, %v3858
    %v3888 = vmul.f32 %v3860, %v3860
    %v3889 = vmul.f32 %v3862, %v3862
    %v3890 = vmul.f32 %v3864, %v3864
    %v3891 = vmul.f32 %v3866, %v3866
    %v3892 = vmul.f32 %v3868, %v3868
    %v3917 = vlaneseq
    %v3918 = vshrl.u32 %v3917, 7
    %v3919 = vsub.s32 %v701, %v3918
    %v3920 = vrot.slane %v3869, %v3919
    %v3921 = vlaneseq
    %v3922 = vshrl.u32 %v3921, 7
    %v3923 = vsub.s32 %v706, %v3922
    %v3924 = vrot.slane %v3870, %v3923
    %v3925 = vsel %vm711, %v3924, %v3920
    %v3926 = vlaneseq
    %v3927 = vshrl.u32 %v3926, 7
    %v3928 = vsub.s32 %v701, %v3927
    %v3929 = vrot.slane %v3871, %v3928
    %v3930 = vlaneseq
    %v3931 = vshrl.u32 %v3930, 7
    %v3932 = vsub.s32 %v706, %v3931
    %v3933 = vrot.slane %v3872, %v3932
    %v3934 = vsel %vm711, %v3933, %v3929
    %v3935 = vlaneseq
    %v3936 = vshrl.u32 %v3935, 7
    %v3937 = vsub.s32 %v701, %v3936
    %v3938 = vrot.slane %v3873, %v3937
    %v3939 = vlaneseq
    %v3940 = vshrl.u32 %v3939, 7
    %v3941 = vsub.s32 %v706, %v3940
    %v3942 = vrot.slane %v3874, %v3941
    %v3943 = vsel %vm711, %v3942, %v3938
    %v3944 = vlaneseq
    %v3945 = vshrl.u32 %v3944, 7
    %v3946 = vsub.s32 %v701, %v3945
    %v3947 = vrot.slane %v3875, %v3946
    %v3948 = vlaneseq
    %v3949 = vshrl.u32 %v3948, 7
    %v3950 = vsub.s32 %v706, %v3949
    %v3951 = vrot.slane %v3876, %v3950
    %v3952 = vsel %vm711, %v3951, %v3947
    %v3953 = vlaneseq
    %v3954 = vshrl.u32 %v3953, 7
    %v3955 = vsub.s32 %v701, %v3954
    %v3956 = vrot.slane %v3877, %v3955
    %v3957 = vlaneseq
    %v3958 = vshrl.u32 %v3957, 7
    %v3959 = vsub.s32 %v706, %v3958
    %v3960 = vrot.slane %v3878, %v3959
    %v3961 = vsel %vm711, %v3960, %v3956
    %v3962 = vlaneseq
    %v3963 = vshrl.u32 %v3962, 7
    %v3964 = vsub.s32 %v701, %v3963
    %v3965 = vrot.slane %v3879, %v3964
    %v3966 = vlaneseq
    %v3967 = vshrl.u32 %v3966, 7
    %v3968 = vsub.s32 %v706, %v3967
    %v3969 = vrot.slane %v3880, %v3968
    %v3970 = vsel %vm711, %v3969, %v3965
    %v3971 = vlaneseq
    %v3972 = vshrl.u32 %v3971, 7
    %v3973 = vsub.s32 %v701, %v3972
    %v3974 = vrot.slane %v3881, %v3973
    %v3975 = vlaneseq
    %v3976 = vshrl.u32 %v3975, 7
    %v3977 = vsub.s32 %v706, %v3976
    %v3978 = vrot.slane %v3882, %v3977
    %v3979 = vsel %vm711, %v3978, %v3974
    %v3980 = vlaneseq
    %v3981 = vshrl.u32 %v3980, 7
    %v3982 = vsub.s32 %v701, %v3981
    %v3983 = vrot.slane %v3883, %v3982
    %v3984 = vlaneseq
    %v3985 = vshrl.u32 %v3984, 7
    %v3986 = vsub.s32 %v706, %v3985
    %v3987 = vrot.slane %v3884, %v3986
    %v3988 = vsel %vm711, %v3987, %v3983
    %v3989 = vlaneseq
    %v3990 = vshrl.u32 %v3989, 7
    %v3991 = vsub.s32 %v701, %v3990
    %v3992 = vrot.slane %v3885, %v3991
    %v3993 = vlaneseq
    %v3994 = vshrl.u32 %v3993, 7
    %v3995 = vsub.s32 %v706, %v3994
    %v3996 = vrot.slane %v3886, %v3995
    %v3997 = vsel %vm711, %v3996, %v3992
    %v3998 = vlaneseq
    %v3999 = vshrl.u32 %v3998, 7
    %v4000 = vsub.s32 %v701, %v3999
    %v4001 = vrot.slane %v3887, %v4000
    %v4002 = vlaneseq
    %v4003 = vshrl.u32 %v4002, 7
    %v4004 = vsub.s32 %v706, %v4003
    %v4005 = vrot.slane %v3888, %v4004
    %v4006 = vsel %vm711, %v4005, %v4001
    %v4007 = vlaneseq
    %v4008 = vshrl.u32 %v4007, 7
    %v4009 = vsub.s32 %v701, %v4008
    %v4010 = vrot.slane %v3889, %v4009
    %v4011 = vlaneseq
    %v4012 = vshrl.u32 %v4011, 7
    %v4013 = vsub.s32 %v706, %v4012
    %v4014 = vrot.slane %v3890, %v4013
    %v4015 = vsel %vm711, %v4014, %v4010
    %v4016 = vlaneseq
    %v4017 = vshrl.u32 %v4016, 7
    %v4018 = vsub.s32 %v701, %v4017
    %v4019 = vrot.slane %v3891, %v4018
    %v4020 = vlaneseq
    %v4021 = vshrl.u32 %v4020, 7
    %v4022 = vsub.s32 %v706, %v4021
    %v4023 = vrot.slane %v3892, %v4022
    %v4024 = vsel %vm711, %v4023, %v4019
    %v4025 = vsel %vm812, %v3934, %v3925
    %v4026 = vsel %vm814, %v3943, %v4025
    %v4027 = vsel %vm812, %v3961, %v3952
    %v4028 = vsel %vm814, %v3970, %v4027
    %v4029 = vsel %vm812, %v3988, %v3979
    %v4030 = vsel %vm814, %v3997, %v4029
    %v4031 = vsel %vm812, %v4015, %v4006
    %v4032 = vsel %vm814, %v4024, %v4031
    %v4037 = vsel %vm826, %v4026, 0.0
    %4038 = vadd.xlane.f32.xlu0 %v4037
    %v4039 = vpop.xlane.xlu0 %4038
    %v4040 = vsel %vm826, %v4028, 0.0
    %4041 = vadd.xlane.f32.xlu0 %v4040
    %v4042 = vpop.xlane.xlu0 %4041
    %v4043 = vsel %vm826, %v4030, 0.0
    %4044 = vadd.xlane.f32.xlu0 %v4043
    %v4045 = vpop.xlane.xlu0 %4044
    %v4046 = vsel %vm826, %v4032, 0.0
    %4047 = vadd.xlane.f32.xlu0 %v4046
    %v4048 = vpop.xlane.xlu0 %4047
    %v4049 = vrsqrt.pop %v4039
    %v4050 = vmul.f32 %v4039, %v4049
    %vm4051 = vcmp.eq.f32.partialorder %v4039, inf
    %v4052 = vsel %vm4051, %v4039, %v4050
    %vm4053 = vcmp.eq.f32.partialorder %v4039, 0.0
    %v4054 = vand.u32 %v4039, 2147483648
    %v4055 = vsel %vm4053, %v4054, %v4052
    %v4056 = vrsqrt.pop %v4042
    %v4057 = vmul.f32 %v4042, %v4056
    %vm4058 = vcmp.eq.f32.partialorder %v4042, inf
    %v4059 = vsel %vm4058, %v4042, %v4057
    %vm4060 = vcmp.eq.f32.partialorder %v4042, 0.0
    %v4061 = vand.u32 %v4042, 2147483648
    %v4062 = vsel %vm4060, %v4061, %v4059
    %v4063 = vrsqrt.pop %v4045
    %v4064 = vmul.f32 %v4045, %v4063
    %vm4065 = vcmp.eq.f32.partialorder %v4045, inf
    %v4066 = vsel %vm4065, %v4045, %v4064
    %vm4067 = vcmp.eq.f32.partialorder %v4045, 0.0
    %v4068 = vand.u32 %v4045, 2147483648
    %v4069 = vsel %vm4067, %v4068, %v4066
    %v4070 = vrsqrt.pop %v4048
    %v4071 = vmul.f32 %v4048, %v4070
    %vm4072 = vcmp.eq.f32.partialorder %v4048, inf
    %v4073 = vsel %vm4072, %v4048, %v4071
    %vm4074 = vcmp.eq.f32.partialorder %v4048, 0.0
    %v4075 = vand.u32 %v4048, 2147483648
    %v4076 = vsel %vm4074, %v4075, %v4073
    %v4077 = vadd.f32 %v4039, 1.0
    %v4078 = vadd.f32 %v4042, 1.0
    %v4079 = vadd.f32 %v4045, 1.0
    %v4080 = vadd.f32 %v4048, 1.0
    %v4081 = vadd.f32 %v4055, 1e-08
    %v4082 = vadd.f32 %v4062, 1e-08
    %v4083 = vadd.f32 %v4069, 1e-08
    %v4084 = vadd.f32 %v4076, 1e-08
    %v4085 = vmul.f32 %v4077, %v4081
    %v4086 = vmul.f32 %v4078, %v4082
    %v4087 = vmul.f32 %v4079, %v4083
    %v4088 = vmul.f32 %v4080, %v4084
    %v4089 = vrcp.pop %v4085
    %v4090 = vmul.f32 %v4039, %v4089
    %v4091 = vrcp.pop %v4086
    %v4092 = vmul.f32 %v4042, %v4091
    %v4093 = vrcp.pop %v4087
    %v4094 = vmul.f32 %v4045, %v4093
    %v4095 = vrcp.pop %v4088
    %v4096 = vmul.f32 %v4048, %v4095
    %v4101 = vlaneseq
    %v4102 = vshrl.u32 %v4101, 7
    %v4103 = vsub.s32 0, %v4102
    %v4104 = vrot.slane %v4090, %v4103
    %v4105 = vlaneseq
    %v4106 = vshrl.u32 %v4105, 7
    %v4107 = vsub.s32 1, %v4106
    %v4108 = vrot.slane %v4090, %v4107
    %v4109 = vlaneseq
    %v4110 = vshrl.u32 %v4109, 7
    %v4111 = vsub.s32 2, %v4110
    %v4112 = vrot.slane %v4090, %v4111
    %v4113 = vlaneseq
    %v4114 = vshrl.u32 %v4113, 7
    %v4115 = vsub.s32 0, %v4114
    %v4116 = vrot.slane %v4092, %v4115
    %v4117 = vlaneseq
    %v4118 = vshrl.u32 %v4117, 7
    %v4119 = vsub.s32 1, %v4118
    %v4120 = vrot.slane %v4092, %v4119
    %v4121 = vlaneseq
    %v4122 = vshrl.u32 %v4121, 7
    %v4123 = vsub.s32 2, %v4122
    %v4124 = vrot.slane %v4092, %v4123
    %v4125 = vlaneseq
    %v4126 = vshrl.u32 %v4125, 7
    %v4127 = vsub.s32 0, %v4126
    %v4128 = vrot.slane %v4094, %v4127
    %v4129 = vlaneseq
    %v4130 = vshrl.u32 %v4129, 7
    %v4131 = vsub.s32 1, %v4130
    %v4132 = vrot.slane %v4094, %v4131
    %v4133 = vlaneseq
    %v4134 = vshrl.u32 %v4133, 7
    %v4135 = vsub.s32 2, %v4134
    %v4136 = vrot.slane %v4094, %v4135
    %v4137 = vlaneseq
    %v4138 = vshrl.u32 %v4137, 7
    %v4139 = vsub.s32 0, %v4138
    %v4140 = vrot.slane %v4096, %v4139
    %v4141 = vlaneseq
    %v4142 = vshrl.u32 %v4141, 7
    %v4143 = vsub.s32 1, %v4142
    %v4144 = vrot.slane %v4096, %v4143
    %v4145 = vlaneseq
    %v4146 = vshrl.u32 %v4145, 7
    %v4147 = vsub.s32 2, %v4146
    %v4148 = vrot.slane %v4096, %v4147
    %v4161 = vmul.f32 %v3822, %v4104
    %v4162 = vmul.f32 %v3824, %v4104
    %v4163 = vmul.f32 %v3826, %v4108
    %v4164 = vmul.f32 %v3828, %v4108
    %v4165 = vmul.f32 %v3830, %v4112
    %v4166 = vmul.f32 %v3832, %v4112
    %v4167 = vmul.f32 %v3834, %v4116
    %v4168 = vmul.f32 %v3836, %v4116
    %v4169 = vmul.f32 %v3838, %v4120
    %v4170 = vmul.f32 %v3840, %v4120
    %v4171 = vmul.f32 %v3842, %v4124
    %v4172 = vmul.f32 %v3844, %v4124
    %v4173 = vmul.f32 %v3846, %v4128
    %v4174 = vmul.f32 %v3848, %v4128
    %v4175 = vmul.f32 %v3850, %v4132
    %v4176 = vmul.f32 %v3852, %v4132
    %v4177 = vmul.f32 %v3854, %v4136
    %v4178 = vmul.f32 %v3856, %v4136
    %v4179 = vmul.f32 %v3858, %v4140
    %v4180 = vmul.f32 %v3860, %v4140
    %v4181 = vmul.f32 %v3862, %v4144
    %v4182 = vmul.f32 %v3864, %v4144
    %v4183 = vmul.f32 %v3866, %v4148
    %v4184 = vmul.f32 %v3868, %v4148
    %v4185 = vlaneseq
    %v4186 = vshrl.u32 %v4185, 7
    %v4187 = vsub.s32 0, %v4186
    %v4188 = vrot.slane %v4161, %v4187
    %v4189 = vlaneseq
    %v4190 = vshrl.u32 %v4189, 7
    %v4191 = vsub.s32 0, %v4190
    %v4192 = vrot.slane %v4163, %v4191
    %v4193 = vlaneseq
    %v4194 = vshrl.u32 %v4193, 7
    %v4195 = vsub.s32 0, %v4194
    %v4196 = vrot.slane %v4165, %v4195
    %v4197 = vlaneseq
    %v4198 = vshrl.u32 %v4197, 7
    %v4199 = vsub.s32 0, %v4198
    %v4200 = vrot.slane %v4167, %v4199
    %v4201 = vlaneseq
    %v4202 = vshrl.u32 %v4201, 7
    %v4203 = vsub.s32 0, %v4202
    %v4204 = vrot.slane %v4169, %v4203
    %v4205 = vlaneseq
    %v4206 = vshrl.u32 %v4205, 7
    %v4207 = vsub.s32 0, %v4206
    %v4208 = vrot.slane %v4171, %v4207
    %v4209 = vlaneseq
    %v4210 = vshrl.u32 %v4209, 7
    %v4211 = vsub.s32 0, %v4210
    %v4212 = vrot.slane %v4173, %v4211
    %v4213 = vlaneseq
    %v4214 = vshrl.u32 %v4213, 7
    %v4215 = vsub.s32 0, %v4214
    %v4216 = vrot.slane %v4175, %v4215
    %v4217 = vlaneseq
    %v4218 = vshrl.u32 %v4217, 7
    %v4219 = vsub.s32 0, %v4218
    %v4220 = vrot.slane %v4177, %v4219
    %v4221 = vlaneseq
    %v4222 = vshrl.u32 %v4221, 7
    %v4223 = vsub.s32 0, %v4222
    %v4224 = vrot.slane %v4179, %v4223
    %v4225 = vlaneseq
    %v4226 = vshrl.u32 %v4225, 7
    %v4227 = vsub.s32 0, %v4226
    %v4228 = vrot.slane %v4181, %v4227
    %v4229 = vlaneseq
    %v4230 = vshrl.u32 %v4229, 7
    %v4231 = vsub.s32 0, %v4230
    %v4232 = vrot.slane %v4183, %v4231
    %4245 = vset.pattern.permute.xlu0 0
    %4246 = vperm.xlu0 %4245, %v4188
    %v4247 = vpop.permute.xlu0 %4246
    %4248 = vset.pattern.permute.xlu0 0
    %4249 = vperm.xlu0 %4248, %v4192
    %v4250 = vpop.permute.xlu0 %4249
    %4251 = vset.pattern.permute.xlu0 0
    %4252 = vperm.xlu0 %4251, %v4196
    %v4253 = vpop.permute.xlu0 %4252
    %4254 = vset.pattern.permute.xlu0 0
    %4255 = vperm.xlu0 %4254, %v4200
    %v4256 = vpop.permute.xlu0 %4255
    %4257 = vset.pattern.permute.xlu0 0
    %4258 = vperm.xlu0 %4257, %v4204
    %v4259 = vpop.permute.xlu0 %4258
    %4260 = vset.pattern.permute.xlu0 0
    %4261 = vperm.xlu0 %4260, %v4208
    %v4262 = vpop.permute.xlu0 %4261
    %4263 = vset.pattern.permute.xlu0 0
    %4264 = vperm.xlu0 %4263, %v4212
    %v4265 = vpop.permute.xlu0 %4264
    %4266 = vset.pattern.permute.xlu0 0
    %4267 = vperm.xlu0 %4266, %v4216
    %v4268 = vpop.permute.xlu0 %4267
    %4269 = vset.pattern.permute.xlu0 0
    %4270 = vperm.xlu0 %4269, %v4220
    %v4271 = vpop.permute.xlu0 %4270
    %4272 = vset.pattern.permute.xlu0 0
    %4273 = vperm.xlu0 %4272, %v4224
    %v4274 = vpop.permute.xlu0 %4273
    %4275 = vset.pattern.permute.xlu0 0
    %4276 = vperm.xlu0 %4275, %v4228
    %v4277 = vpop.permute.xlu0 %4276
    %4278 = vset.pattern.permute.xlu0 0
    %4279 = vperm.xlu0 %4278, %v4232
    %v4280 = vpop.permute.xlu0 %4279
    %v4293 = vmul.f32 %v556, %v4247
    %v4294 = vmul.f32 %v558, %v4250
    %v4295 = vmul.f32 %v560, %v4253
    %v4296 = vmul.f32 %v562, %v4256
    %v4297 = vmul.f32 %v564, %v4259
    %v4298 = vmul.f32 %v566, %v4262
    %v4299 = vmul.f32 %v568, %v4265
    %v4300 = vmul.f32 %v570, %v4268
    %v4301 = vmul.f32 %v572, %v4271
    %v4302 = vmul.f32 %v574, %v4274
    %v4303 = vmul.f32 %v576, %v4277
    %v4304 = vmul.f32 %v578, %v4280
    %v4305 = vlaneseq
    %v4306 = vshrl.u32 %v4305, 7
    %v4307 = vsub.s32 1, %v4306
    %v4308 = vrot.slane %v4161, %v4307
    %v4309 = vlaneseq
    %v4310 = vshrl.u32 %v4309, 7
    %v4311 = vsub.s32 1, %v4310
    %v4312 = vrot.slane %v4163, %v4311
    %v4313 = vlaneseq
    %v4314 = vshrl.u32 %v4313, 7
    %v4315 = vsub.s32 1, %v4314
    %v4316 = vrot.slane %v4165, %v4315
    %v4317 = vlaneseq
    %v4318 = vshrl.u32 %v4317, 7
    %v4319 = vsub.s32 1, %v4318
    %v4320 = vrot.slane %v4167, %v4319
    %v4321 = vlaneseq
    %v4322 = vshrl.u32 %v4321, 7
    %v4323 = vsub.s32 1, %v4322
    %v4324 = vrot.slane %v4169, %v4323
    %v4325 = vlaneseq
    %v4326 = vshrl.u32 %v4325, 7
    %v4327 = vsub.s32 1, %v4326
    %v4328 = vrot.slane %v4171, %v4327
    %v4329 = vlaneseq
    %v4330 = vshrl.u32 %v4329, 7
    %v4331 = vsub.s32 1, %v4330
    %v4332 = vrot.slane %v4173, %v4331
    %v4333 = vlaneseq
    %v4334 = vshrl.u32 %v4333, 7
    %v4335 = vsub.s32 1, %v4334
    %v4336 = vrot.slane %v4175, %v4335
    %v4337 = vlaneseq
    %v4338 = vshrl.u32 %v4337, 7
    %v4339 = vsub.s32 1, %v4338
    %v4340 = vrot.slane %v4177, %v4339
    %v4341 = vlaneseq
    %v4342 = vshrl.u32 %v4341, 7
    %v4343 = vsub.s32 1, %v4342
    %v4344 = vrot.slane %v4179, %v4343
    %v4345 = vlaneseq
    %v4346 = vshrl.u32 %v4345, 7
    %v4347 = vsub.s32 1, %v4346
    %v4348 = vrot.slane %v4181, %v4347
    %v4349 = vlaneseq
    %v4350 = vshrl.u32 %v4349, 7
    %v4351 = vsub.s32 1, %v4350
    %v4352 = vrot.slane %v4183, %v4351
    %4365 = vset.pattern.permute.xlu0 0
    %4366 = vperm.xlu0 %4365, %v4308
    %v4367 = vpop.permute.xlu0 %4366
    %4368 = vset.pattern.permute.xlu0 0
    %4369 = vperm.xlu0 %4368, %v4312
    %v4370 = vpop.permute.xlu0 %4369
    %4371 = vset.pattern.permute.xlu0 0
    %4372 = vperm.xlu0 %4371, %v4316
    %v4373 = vpop.permute.xlu0 %4372
    %4374 = vset.pattern.permute.xlu0 0
    %4375 = vperm.xlu0 %4374, %v4320
    %v4376 = vpop.permute.xlu0 %4375
    %4377 = vset.pattern.permute.xlu0 0
    %4378 = vperm.xlu0 %4377, %v4324
    %v4379 = vpop.permute.xlu0 %4378
    %4380 = vset.pattern.permute.xlu0 0
    %4381 = vperm.xlu0 %4380, %v4328
    %v4382 = vpop.permute.xlu0 %4381
    %4383 = vset.pattern.permute.xlu0 0
    %4384 = vperm.xlu0 %4383, %v4332
    %v4385 = vpop.permute.xlu0 %4384
    %4386 = vset.pattern.permute.xlu0 0
    %4387 = vperm.xlu0 %4386, %v4336
    %v4388 = vpop.permute.xlu0 %4387
    %4389 = vset.pattern.permute.xlu0 0
    %4390 = vperm.xlu0 %4389, %v4340
    %v4391 = vpop.permute.xlu0 %4390
    %4392 = vset.pattern.permute.xlu0 0
    %4393 = vperm.xlu0 %4392, %v4344
    %v4394 = vpop.permute.xlu0 %4393
    %4395 = vset.pattern.permute.xlu0 0
    %4396 = vperm.xlu0 %4395, %v4348
    %v4397 = vpop.permute.xlu0 %4396
    %4398 = vset.pattern.permute.xlu0 0
    %4399 = vperm.xlu0 %4398, %v4352
    %v4400 = vpop.permute.xlu0 %4399
    %v4413 = vmul.f32 %v556, %v4367
    %v4414 = vmul.f32 %v558, %v4370
    %v4415 = vmul.f32 %v560, %v4373
    %v4416 = vmul.f32 %v562, %v4376
    %v4417 = vmul.f32 %v564, %v4379
    %v4418 = vmul.f32 %v566, %v4382
    %v4419 = vmul.f32 %v568, %v4385
    %v4420 = vmul.f32 %v570, %v4388
    %v4421 = vmul.f32 %v572, %v4391
    %v4422 = vmul.f32 %v574, %v4394
    %v4423 = vmul.f32 %v576, %v4397
    %v4424 = vmul.f32 %v578, %v4400
    %v4437 = vrot.slane %v4413, 1
    %v4438 = vrot.slane %v4414, 1
    %v4439 = vrot.slane %v4415, 1
    %v4440 = vrot.slane %v4416, 1
    %v4441 = vrot.slane %v4417, 1
    %v4442 = vrot.slane %v4418, 1
    %v4443 = vrot.slane %v4419, 1
    %v4444 = vrot.slane %v4420, 1
    %v4445 = vrot.slane %v4421, 1
    %v4446 = vrot.slane %v4422, 1
    %v4447 = vrot.slane %v4423, 1
    %v4448 = vrot.slane %v4424, 1
    %v4461 = vadd.f32 %v4293, %v4437
    %v4462 = vadd.f32 %v4294, %v4438
    %v4463 = vadd.f32 %v4295, %v4439
    %v4464 = vadd.f32 %v4296, %v4440
    %v4465 = vadd.f32 %v4297, %v4441
    %v4466 = vadd.f32 %v4298, %v4442
    %v4467 = vadd.f32 %v4299, %v4443
    %v4468 = vadd.f32 %v4300, %v4444
    %v4469 = vadd.f32 %v4301, %v4445
    %v4470 = vadd.f32 %v4302, %v4446
    %v4471 = vadd.f32 %v4303, %v4447
    %v4472 = vadd.f32 %v4304, %v4448
    %v4473 = vlaneseq
    %v4474 = vshrl.u32 %v4473, 7
    %v4475 = vsub.s32 2, %v4474
    %v4476 = vrot.slane %v4161, %v4475
    %v4477 = vlaneseq
    %v4478 = vshrl.u32 %v4477, 7
    %v4479 = vsub.s32 2, %v4478
    %v4480 = vrot.slane %v4163, %v4479
    %v4481 = vlaneseq
    %v4482 = vshrl.u32 %v4481, 7
    %v4483 = vsub.s32 2, %v4482
    %v4484 = vrot.slane %v4165, %v4483
    %v4485 = vlaneseq
    %v4486 = vshrl.u32 %v4485, 7
    %v4487 = vsub.s32 2, %v4486
    %v4488 = vrot.slane %v4167, %v4487
    %v4489 = vlaneseq
    %v4490 = vshrl.u32 %v4489, 7
    %v4491 = vsub.s32 2, %v4490
    %v4492 = vrot.slane %v4169, %v4491
    %v4493 = vlaneseq
    %v4494 = vshrl.u32 %v4493, 7
    %v4495 = vsub.s32 2, %v4494
    %v4496 = vrot.slane %v4171, %v4495
    %v4497 = vlaneseq
    %v4498 = vshrl.u32 %v4497, 7
    %v4499 = vsub.s32 2, %v4498
    %v4500 = vrot.slane %v4173, %v4499
    %v4501 = vlaneseq
    %v4502 = vshrl.u32 %v4501, 7
    %v4503 = vsub.s32 2, %v4502
    %v4504 = vrot.slane %v4175, %v4503
    %v4505 = vlaneseq
    %v4506 = vshrl.u32 %v4505, 7
    %v4507 = vsub.s32 2, %v4506
    %v4508 = vrot.slane %v4177, %v4507
    %v4509 = vlaneseq
    %v4510 = vshrl.u32 %v4509, 7
    %v4511 = vsub.s32 2, %v4510
    %v4512 = vrot.slane %v4179, %v4511
    %v4513 = vlaneseq
    %v4514 = vshrl.u32 %v4513, 7
    %v4515 = vsub.s32 2, %v4514
    %v4516 = vrot.slane %v4181, %v4515
    %v4517 = vlaneseq
    %v4518 = vshrl.u32 %v4517, 7
    %v4519 = vsub.s32 2, %v4518
    %v4520 = vrot.slane %v4183, %v4519
    %4533 = vset.pattern.permute.xlu0 0
    %4534 = vperm.xlu0 %4533, %v4476
    %v4535 = vpop.permute.xlu0 %4534
    %4536 = vset.pattern.permute.xlu0 0
    %4537 = vperm.xlu0 %4536, %v4480
    %v4538 = vpop.permute.xlu0 %4537
    %4539 = vset.pattern.permute.xlu0 0
    %4540 = vperm.xlu0 %4539, %v4484
    %v4541 = vpop.permute.xlu0 %4540
    %4542 = vset.pattern.permute.xlu0 0
    %4543 = vperm.xlu0 %4542, %v4488
    %v4544 = vpop.permute.xlu0 %4543
    %4545 = vset.pattern.permute.xlu0 0
    %4546 = vperm.xlu0 %4545, %v4492
    %v4547 = vpop.permute.xlu0 %4546
    %4548 = vset.pattern.permute.xlu0 0
    %4549 = vperm.xlu0 %4548, %v4496
    %v4550 = vpop.permute.xlu0 %4549
    %4551 = vset.pattern.permute.xlu0 0
    %4552 = vperm.xlu0 %4551, %v4500
    %v4553 = vpop.permute.xlu0 %4552
    %4554 = vset.pattern.permute.xlu0 0
    %4555 = vperm.xlu0 %4554, %v4504
    %v4556 = vpop.permute.xlu0 %4555
    %4557 = vset.pattern.permute.xlu0 0
    %4558 = vperm.xlu0 %4557, %v4508
    %v4559 = vpop.permute.xlu0 %4558
    %4560 = vset.pattern.permute.xlu0 0
    %4561 = vperm.xlu0 %4560, %v4512
    %v4562 = vpop.permute.xlu0 %4561
    %4563 = vset.pattern.permute.xlu0 0
    %4564 = vperm.xlu0 %4563, %v4516
    %v4565 = vpop.permute.xlu0 %4564
    %4566 = vset.pattern.permute.xlu0 0
    %4567 = vperm.xlu0 %4566, %v4520
    %v4568 = vpop.permute.xlu0 %4567
    %v4581 = vmul.f32 %v556, %v4535
    %v4582 = vmul.f32 %v558, %v4538
    %v4583 = vmul.f32 %v560, %v4541
    %v4584 = vmul.f32 %v562, %v4544
    %v4585 = vmul.f32 %v564, %v4547
    %v4586 = vmul.f32 %v566, %v4550
    %v4587 = vmul.f32 %v568, %v4553
    %v4588 = vmul.f32 %v570, %v4556
    %v4589 = vmul.f32 %v572, %v4559
    %v4590 = vmul.f32 %v574, %v4562
    %v4591 = vmul.f32 %v576, %v4565
    %v4592 = vmul.f32 %v578, %v4568
    %v4605 = vrot.slane %v4581, 2
    %v4606 = vrot.slane %v4582, 2
    %v4607 = vrot.slane %v4583, 2
    %v4608 = vrot.slane %v4584, 2
    %v4609 = vrot.slane %v4585, 2
    %v4610 = vrot.slane %v4586, 2
    %v4611 = vrot.slane %v4587, 2
    %v4612 = vrot.slane %v4588, 2
    %v4613 = vrot.slane %v4589, 2
    %v4614 = vrot.slane %v4590, 2
    %v4615 = vrot.slane %v4591, 2
    %v4616 = vrot.slane %v4592, 2
    %v4629 = vadd.f32 %v4461, %v4605
    %v4630 = vadd.f32 %v4462, %v4606
    %v4631 = vadd.f32 %v4463, %v4607
    %v4632 = vadd.f32 %v4464, %v4608
    %v4633 = vadd.f32 %v4465, %v4609
    %v4634 = vadd.f32 %v4466, %v4610
    %v4635 = vadd.f32 %v4467, %v4611
    %v4636 = vadd.f32 %v4468, %v4612
    %v4637 = vadd.f32 %v4469, %v4613
    %v4638 = vadd.f32 %v4470, %v4614
    %v4639 = vadd.f32 %v4471, %v4615
    %v4640 = vadd.f32 %v4472, %v4616
    %v4641 = vlaneseq
    %v4642 = vshrl.u32 %v4641, 7
    %v4643 = vsub.s32 3, %v4642
    %v4644 = vrot.slane %v4161, %v4643
    %v4645 = vlaneseq
    %v4646 = vshrl.u32 %v4645, 7
    %v4647 = vsub.s32 3, %v4646
    %v4648 = vrot.slane %v4163, %v4647
    %v4649 = vlaneseq
    %v4650 = vshrl.u32 %v4649, 7
    %v4651 = vsub.s32 3, %v4650
    %v4652 = vrot.slane %v4165, %v4651
    %v4653 = vlaneseq
    %v4654 = vshrl.u32 %v4653, 7
    %v4655 = vsub.s32 3, %v4654
    %v4656 = vrot.slane %v4167, %v4655
    %v4657 = vlaneseq
    %v4658 = vshrl.u32 %v4657, 7
    %v4659 = vsub.s32 3, %v4658
    %v4660 = vrot.slane %v4169, %v4659
    %v4661 = vlaneseq
    %v4662 = vshrl.u32 %v4661, 7
    %v4663 = vsub.s32 3, %v4662
    %v4664 = vrot.slane %v4171, %v4663
    %v4665 = vlaneseq
    %v4666 = vshrl.u32 %v4665, 7
    %v4667 = vsub.s32 3, %v4666
    %v4668 = vrot.slane %v4173, %v4667
    %v4669 = vlaneseq
    %v4670 = vshrl.u32 %v4669, 7
    %v4671 = vsub.s32 3, %v4670
    %v4672 = vrot.slane %v4175, %v4671
    %v4673 = vlaneseq
    %v4674 = vshrl.u32 %v4673, 7
    %v4675 = vsub.s32 3, %v4674
    %v4676 = vrot.slane %v4177, %v4675
    %v4677 = vlaneseq
    %v4678 = vshrl.u32 %v4677, 7
    %v4679 = vsub.s32 3, %v4678
    %v4680 = vrot.slane %v4179, %v4679
    %v4681 = vlaneseq
    %v4682 = vshrl.u32 %v4681, 7
    %v4683 = vsub.s32 3, %v4682
    %v4684 = vrot.slane %v4181, %v4683
    %v4685 = vlaneseq
    %v4686 = vshrl.u32 %v4685, 7
    %v4687 = vsub.s32 3, %v4686
    %v4688 = vrot.slane %v4183, %v4687
    %4701 = vset.pattern.permute.xlu0 0
    %4702 = vperm.xlu0 %4701, %v4644
    %v4703 = vpop.permute.xlu0 %4702
    %4704 = vset.pattern.permute.xlu0 0
    %4705 = vperm.xlu0 %4704, %v4648
    %v4706 = vpop.permute.xlu0 %4705
    %4707 = vset.pattern.permute.xlu0 0
    %4708 = vperm.xlu0 %4707, %v4652
    %v4709 = vpop.permute.xlu0 %4708
    %4710 = vset.pattern.permute.xlu0 0
    %4711 = vperm.xlu0 %4710, %v4656
    %v4712 = vpop.permute.xlu0 %4711
    %4713 = vset.pattern.permute.xlu0 0
    %4714 = vperm.xlu0 %4713, %v4660
    %v4715 = vpop.permute.xlu0 %4714
    %4716 = vset.pattern.permute.xlu0 0
    %4717 = vperm.xlu0 %4716, %v4664
    %v4718 = vpop.permute.xlu0 %4717
    %4719 = vset.pattern.permute.xlu0 0
    %4720 = vperm.xlu0 %4719, %v4668
    %v4721 = vpop.permute.xlu0 %4720
    %4722 = vset.pattern.permute.xlu0 0
    %4723 = vperm.xlu0 %4722, %v4672
    %v4724 = vpop.permute.xlu0 %4723
    %4725 = vset.pattern.permute.xlu0 0
    %4726 = vperm.xlu0 %4725, %v4676
    %v4727 = vpop.permute.xlu0 %4726
    %4728 = vset.pattern.permute.xlu0 0
    %4729 = vperm.xlu0 %4728, %v4680
    %v4730 = vpop.permute.xlu0 %4729
    %4731 = vset.pattern.permute.xlu0 0
    %4732 = vperm.xlu0 %4731, %v4684
    %v4733 = vpop.permute.xlu0 %4732
    %4734 = vset.pattern.permute.xlu0 0
    %4735 = vperm.xlu0 %4734, %v4688
    %v4736 = vpop.permute.xlu0 %4735
    %v4749 = vmul.f32 %v556, %v4703
    %v4750 = vmul.f32 %v558, %v4706
    %v4751 = vmul.f32 %v560, %v4709
    %v4752 = vmul.f32 %v562, %v4712
    %v4753 = vmul.f32 %v564, %v4715
    %v4754 = vmul.f32 %v566, %v4718
    %v4755 = vmul.f32 %v568, %v4721
    %v4756 = vmul.f32 %v570, %v4724
    %v4757 = vmul.f32 %v572, %v4727
    %v4758 = vmul.f32 %v574, %v4730
    %v4759 = vmul.f32 %v576, %v4733
    %v4760 = vmul.f32 %v578, %v4736
    %v4773 = vrot.slane %v4749, 3
    %v4774 = vrot.slane %v4750, 3
    %v4775 = vrot.slane %v4751, 3
    %v4776 = vrot.slane %v4752, 3
    %v4777 = vrot.slane %v4753, 3
    %v4778 = vrot.slane %v4754, 3
    %v4779 = vrot.slane %v4755, 3
    %v4780 = vrot.slane %v4756, 3
    %v4781 = vrot.slane %v4757, 3
    %v4782 = vrot.slane %v4758, 3
    %v4783 = vrot.slane %v4759, 3
    %v4784 = vrot.slane %v4760, 3
    %v4797 = vadd.f32 %v4629, %v4773
    %v4798 = vadd.f32 %v4630, %v4774
    %v4799 = vadd.f32 %v4631, %v4775
    %v4800 = vadd.f32 %v4632, %v4776
    %v4801 = vadd.f32 %v4633, %v4777
    %v4802 = vadd.f32 %v4634, %v4778
    %v4803 = vadd.f32 %v4635, %v4779
    %v4804 = vadd.f32 %v4636, %v4780
    %v4805 = vadd.f32 %v4637, %v4781
    %v4806 = vadd.f32 %v4638, %v4782
    %v4807 = vadd.f32 %v4639, %v4783
    %v4808 = vadd.f32 %v4640, %v4784
    %v4809 = vlaneseq
    %v4810 = vshrl.u32 %v4809, 7
    %v4811 = vsub.s32 4, %v4810
    %v4812 = vrot.slane %v4161, %v4811
    %v4813 = vlaneseq
    %v4814 = vshrl.u32 %v4813, 7
    %v4815 = vsub.s32 4, %v4814
    %v4816 = vrot.slane %v4163, %v4815
    %v4817 = vlaneseq
    %v4818 = vshrl.u32 %v4817, 7
    %v4819 = vsub.s32 4, %v4818
    %v4820 = vrot.slane %v4165, %v4819
    %v4821 = vlaneseq
    %v4822 = vshrl.u32 %v4821, 7
    %v4823 = vsub.s32 4, %v4822
    %v4824 = vrot.slane %v4167, %v4823
    %v4825 = vlaneseq
    %v4826 = vshrl.u32 %v4825, 7
    %v4827 = vsub.s32 4, %v4826
    %v4828 = vrot.slane %v4169, %v4827
    %v4829 = vlaneseq
    %v4830 = vshrl.u32 %v4829, 7
    %v4831 = vsub.s32 4, %v4830
    %v4832 = vrot.slane %v4171, %v4831
    %v4833 = vlaneseq
    %v4834 = vshrl.u32 %v4833, 7
    %v4835 = vsub.s32 4, %v4834
    %v4836 = vrot.slane %v4173, %v4835
    %v4837 = vlaneseq
    %v4838 = vshrl.u32 %v4837, 7
    %v4839 = vsub.s32 4, %v4838
    %v4840 = vrot.slane %v4175, %v4839
    %v4841 = vlaneseq
    %v4842 = vshrl.u32 %v4841, 7
    %v4843 = vsub.s32 4, %v4842
    %v4844 = vrot.slane %v4177, %v4843
    %v4845 = vlaneseq
    %v4846 = vshrl.u32 %v4845, 7
    %v4847 = vsub.s32 4, %v4846
    %v4848 = vrot.slane %v4179, %v4847
    %v4849 = vlaneseq
    %v4850 = vshrl.u32 %v4849, 7
    %v4851 = vsub.s32 4, %v4850
    %v4852 = vrot.slane %v4181, %v4851
    %v4853 = vlaneseq
    %v4854 = vshrl.u32 %v4853, 7
    %v4855 = vsub.s32 4, %v4854
    %v4856 = vrot.slane %v4183, %v4855
    %4869 = vset.pattern.permute.xlu0 0
    %4870 = vperm.xlu0 %4869, %v4812
    %v4871 = vpop.permute.xlu0 %4870
    %4872 = vset.pattern.permute.xlu0 0
    %4873 = vperm.xlu0 %4872, %v4816
    %v4874 = vpop.permute.xlu0 %4873
    %4875 = vset.pattern.permute.xlu0 0
    %4876 = vperm.xlu0 %4875, %v4820
    %v4877 = vpop.permute.xlu0 %4876
    %4878 = vset.pattern.permute.xlu0 0
    %4879 = vperm.xlu0 %4878, %v4824
    %v4880 = vpop.permute.xlu0 %4879
    %4881 = vset.pattern.permute.xlu0 0
    %4882 = vperm.xlu0 %4881, %v4828
    %v4883 = vpop.permute.xlu0 %4882
    %4884 = vset.pattern.permute.xlu0 0
    %4885 = vperm.xlu0 %4884, %v4832
    %v4886 = vpop.permute.xlu0 %4885
    %4887 = vset.pattern.permute.xlu0 0
    %4888 = vperm.xlu0 %4887, %v4836
    %v4889 = vpop.permute.xlu0 %4888
    %4890 = vset.pattern.permute.xlu0 0
    %4891 = vperm.xlu0 %4890, %v4840
    %v4892 = vpop.permute.xlu0 %4891
    %4893 = vset.pattern.permute.xlu0 0
    %4894 = vperm.xlu0 %4893, %v4844
    %v4895 = vpop.permute.xlu0 %4894
    %4896 = vset.pattern.permute.xlu0 0
    %4897 = vperm.xlu0 %4896, %v4848
    %v4898 = vpop.permute.xlu0 %4897
    %4899 = vset.pattern.permute.xlu0 0
    %4900 = vperm.xlu0 %4899, %v4852
    %v4901 = vpop.permute.xlu0 %4900
    %4902 = vset.pattern.permute.xlu0 0
    %4903 = vperm.xlu0 %4902, %v4856
    %v4904 = vpop.permute.xlu0 %4903
    %v4917 = vmul.f32 %v556, %v4871
    %v4918 = vmul.f32 %v558, %v4874
    %v4919 = vmul.f32 %v560, %v4877
    %v4920 = vmul.f32 %v562, %v4880
    %v4921 = vmul.f32 %v564, %v4883
    %v4922 = vmul.f32 %v566, %v4886
    %v4923 = vmul.f32 %v568, %v4889
    %v4924 = vmul.f32 %v570, %v4892
    %v4925 = vmul.f32 %v572, %v4895
    %v4926 = vmul.f32 %v574, %v4898
    %v4927 = vmul.f32 %v576, %v4901
    %v4928 = vmul.f32 %v578, %v4904
    %v4941 = vrot.slane %v4917, 4
    %v4942 = vrot.slane %v4918, 4
    %v4943 = vrot.slane %v4919, 4
    %v4944 = vrot.slane %v4920, 4
    %v4945 = vrot.slane %v4921, 4
    %v4946 = vrot.slane %v4922, 4
    %v4947 = vrot.slane %v4923, 4
    %v4948 = vrot.slane %v4924, 4
    %v4949 = vrot.slane %v4925, 4
    %v4950 = vrot.slane %v4926, 4
    %v4951 = vrot.slane %v4927, 4
    %v4952 = vrot.slane %v4928, 4
    %v4965 = vadd.f32 %v4797, %v4941
    %v4966 = vadd.f32 %v4798, %v4942
    %v4967 = vadd.f32 %v4799, %v4943
    %v4968 = vadd.f32 %v4800, %v4944
    %v4969 = vadd.f32 %v4801, %v4945
    %v4970 = vadd.f32 %v4802, %v4946
    %v4971 = vadd.f32 %v4803, %v4947
    %v4972 = vadd.f32 %v4804, %v4948
    %v4973 = vadd.f32 %v4805, %v4949
    %v4974 = vadd.f32 %v4806, %v4950
    %v4975 = vadd.f32 %v4807, %v4951
    %v4976 = vadd.f32 %v4808, %v4952
    %v4977 = vlaneseq
    %v4978 = vshrl.u32 %v4977, 7
    %v4979 = vsub.s32 5, %v4978
    %v4980 = vrot.slane %v4161, %v4979
    %v4981 = vlaneseq
    %v4982 = vshrl.u32 %v4981, 7
    %v4983 = vsub.s32 5, %v4982
    %v4984 = vrot.slane %v4163, %v4983
    %v4985 = vlaneseq
    %v4986 = vshrl.u32 %v4985, 7
    %v4987 = vsub.s32 5, %v4986
    %v4988 = vrot.slane %v4165, %v4987
    %v4989 = vlaneseq
    %v4990 = vshrl.u32 %v4989, 7
    %v4991 = vsub.s32 5, %v4990
    %v4992 = vrot.slane %v4167, %v4991
    %v4993 = vlaneseq
    %v4994 = vshrl.u32 %v4993, 7
    %v4995 = vsub.s32 5, %v4994
    %v4996 = vrot.slane %v4169, %v4995
    %v4997 = vlaneseq
    %v4998 = vshrl.u32 %v4997, 7
    %v4999 = vsub.s32 5, %v4998
    %v5000 = vrot.slane %v4171, %v4999
    %v5001 = vlaneseq
    %v5002 = vshrl.u32 %v5001, 7
    %v5003 = vsub.s32 5, %v5002
    %v5004 = vrot.slane %v4173, %v5003
    %v5005 = vlaneseq
    %v5006 = vshrl.u32 %v5005, 7
    %v5007 = vsub.s32 5, %v5006
    %v5008 = vrot.slane %v4175, %v5007
    %v5009 = vlaneseq
    %v5010 = vshrl.u32 %v5009, 7
    %v5011 = vsub.s32 5, %v5010
    %v5012 = vrot.slane %v4177, %v5011
    %v5013 = vlaneseq
    %v5014 = vshrl.u32 %v5013, 7
    %v5015 = vsub.s32 5, %v5014
    %v5016 = vrot.slane %v4179, %v5015
    %v5017 = vlaneseq
    %v5018 = vshrl.u32 %v5017, 7
    %v5019 = vsub.s32 5, %v5018
    %v5020 = vrot.slane %v4181, %v5019
    %v5021 = vlaneseq
    %v5022 = vshrl.u32 %v5021, 7
    %v5023 = vsub.s32 5, %v5022
    %v5024 = vrot.slane %v4183, %v5023
    %5037 = vset.pattern.permute.xlu0 0
    %5038 = vperm.xlu0 %5037, %v4980
    %v5039 = vpop.permute.xlu0 %5038
    %5040 = vset.pattern.permute.xlu0 0
    %5041 = vperm.xlu0 %5040, %v4984
    %v5042 = vpop.permute.xlu0 %5041
    %5043 = vset.pattern.permute.xlu0 0
    %5044 = vperm.xlu0 %5043, %v4988
    %v5045 = vpop.permute.xlu0 %5044
    %5046 = vset.pattern.permute.xlu0 0
    %5047 = vperm.xlu0 %5046, %v4992
    %v5048 = vpop.permute.xlu0 %5047
    %5049 = vset.pattern.permute.xlu0 0
    %5050 = vperm.xlu0 %5049, %v4996
    %v5051 = vpop.permute.xlu0 %5050
    %5052 = vset.pattern.permute.xlu0 0
    %5053 = vperm.xlu0 %5052, %v5000
    %v5054 = vpop.permute.xlu0 %5053
    %5055 = vset.pattern.permute.xlu0 0
    %5056 = vperm.xlu0 %5055, %v5004
    %v5057 = vpop.permute.xlu0 %5056
    %5058 = vset.pattern.permute.xlu0 0
    %5059 = vperm.xlu0 %5058, %v5008
    %v5060 = vpop.permute.xlu0 %5059
    %5061 = vset.pattern.permute.xlu0 0
    %5062 = vperm.xlu0 %5061, %v5012
    %v5063 = vpop.permute.xlu0 %5062
    %5064 = vset.pattern.permute.xlu0 0
    %5065 = vperm.xlu0 %5064, %v5016
    %v5066 = vpop.permute.xlu0 %5065
    %5067 = vset.pattern.permute.xlu0 0
    %5068 = vperm.xlu0 %5067, %v5020
    %v5069 = vpop.permute.xlu0 %5068
    %5070 = vset.pattern.permute.xlu0 0
    %5071 = vperm.xlu0 %5070, %v5024
    %v5072 = vpop.permute.xlu0 %5071
    %v5085 = vmul.f32 %v556, %v5039
    %v5086 = vmul.f32 %v558, %v5042
    %v5087 = vmul.f32 %v560, %v5045
    %v5088 = vmul.f32 %v562, %v5048
    %v5089 = vmul.f32 %v564, %v5051
    %v5090 = vmul.f32 %v566, %v5054
    %v5091 = vmul.f32 %v568, %v5057
    %v5092 = vmul.f32 %v570, %v5060
    %v5093 = vmul.f32 %v572, %v5063
    %v5094 = vmul.f32 %v574, %v5066
    %v5095 = vmul.f32 %v576, %v5069
    %v5096 = vmul.f32 %v578, %v5072
    %v5109 = vrot.slane %v5085, 5
    %v5110 = vrot.slane %v5086, 5
    %v5111 = vrot.slane %v5087, 5
    %v5112 = vrot.slane %v5088, 5
    %v5113 = vrot.slane %v5089, 5
    %v5114 = vrot.slane %v5090, 5
    %v5115 = vrot.slane %v5091, 5
    %v5116 = vrot.slane %v5092, 5
    %v5117 = vrot.slane %v5093, 5
    %v5118 = vrot.slane %v5094, 5
    %v5119 = vrot.slane %v5095, 5
    %v5120 = vrot.slane %v5096, 5
    %v5133 = vadd.f32 %v4965, %v5109
    %v5134 = vadd.f32 %v4966, %v5110
    %v5135 = vadd.f32 %v4967, %v5111
    %v5136 = vadd.f32 %v4968, %v5112
    %v5137 = vadd.f32 %v4969, %v5113
    %v5138 = vadd.f32 %v4970, %v5114
    %v5139 = vadd.f32 %v4971, %v5115
    %v5140 = vadd.f32 %v4972, %v5116
    %v5141 = vadd.f32 %v4973, %v5117
    %v5142 = vadd.f32 %v4974, %v5118
    %v5143 = vadd.f32 %v4975, %v5119
    %v5144 = vadd.f32 %v4976, %v5120
    %v5145 = vlaneseq
    %v5146 = vshrl.u32 %v5145, 7
    %v5147 = vsub.s32 6, %v5146
    %v5148 = vrot.slane %v4161, %v5147
    %v5149 = vlaneseq
    %v5150 = vshrl.u32 %v5149, 7
    %v5151 = vsub.s32 6, %v5150
    %v5152 = vrot.slane %v4163, %v5151
    %v5153 = vlaneseq
    %v5154 = vshrl.u32 %v5153, 7
    %v5155 = vsub.s32 6, %v5154
    %v5156 = vrot.slane %v4165, %v5155
    %v5157 = vlaneseq
    %v5158 = vshrl.u32 %v5157, 7
    %v5159 = vsub.s32 6, %v5158
    %v5160 = vrot.slane %v4167, %v5159
    %v5161 = vlaneseq
    %v5162 = vshrl.u32 %v5161, 7
    %v5163 = vsub.s32 6, %v5162
    %v5164 = vrot.slane %v4169, %v5163
    %v5165 = vlaneseq
    %v5166 = vshrl.u32 %v5165, 7
    %v5167 = vsub.s32 6, %v5166
    %v5168 = vrot.slane %v4171, %v5167
    %v5169 = vlaneseq
    %v5170 = vshrl.u32 %v5169, 7
    %v5171 = vsub.s32 6, %v5170
    %v5172 = vrot.slane %v4173, %v5171
    %v5173 = vlaneseq
    %v5174 = vshrl.u32 %v5173, 7
    %v5175 = vsub.s32 6, %v5174
    %v5176 = vrot.slane %v4175, %v5175
    %v5177 = vlaneseq
    %v5178 = vshrl.u32 %v5177, 7
    %v5179 = vsub.s32 6, %v5178
    %v5180 = vrot.slane %v4177, %v5179
    %v5181 = vlaneseq
    %v5182 = vshrl.u32 %v5181, 7
    %v5183 = vsub.s32 6, %v5182
    %v5184 = vrot.slane %v4179, %v5183
    %v5185 = vlaneseq
    %v5186 = vshrl.u32 %v5185, 7
    %v5187 = vsub.s32 6, %v5186
    %v5188 = vrot.slane %v4181, %v5187
    %v5189 = vlaneseq
    %v5190 = vshrl.u32 %v5189, 7
    %v5191 = vsub.s32 6, %v5190
    %v5192 = vrot.slane %v4183, %v5191
    %5205 = vset.pattern.permute.xlu0 0
    %5206 = vperm.xlu0 %5205, %v5148
    %v5207 = vpop.permute.xlu0 %5206
    %5208 = vset.pattern.permute.xlu0 0
    %5209 = vperm.xlu0 %5208, %v5152
    %v5210 = vpop.permute.xlu0 %5209
    %5211 = vset.pattern.permute.xlu0 0
    %5212 = vperm.xlu0 %5211, %v5156
    %v5213 = vpop.permute.xlu0 %5212
    %5214 = vset.pattern.permute.xlu0 0
    %5215 = vperm.xlu0 %5214, %v5160
    %v5216 = vpop.permute.xlu0 %5215
    %5217 = vset.pattern.permute.xlu0 0
    %5218 = vperm.xlu0 %5217, %v5164
    %v5219 = vpop.permute.xlu0 %5218
    %5220 = vset.pattern.permute.xlu0 0
    %5221 = vperm.xlu0 %5220, %v5168
    %v5222 = vpop.permute.xlu0 %5221
    %5223 = vset.pattern.permute.xlu0 0
    %5224 = vperm.xlu0 %5223, %v5172
    %v5225 = vpop.permute.xlu0 %5224
    %5226 = vset.pattern.permute.xlu0 0
    %5227 = vperm.xlu0 %5226, %v5176
    %v5228 = vpop.permute.xlu0 %5227
    %5229 = vset.pattern.permute.xlu0 0
    %5230 = vperm.xlu0 %5229, %v5180
    %v5231 = vpop.permute.xlu0 %5230
    %5232 = vset.pattern.permute.xlu0 0
    %5233 = vperm.xlu0 %5232, %v5184
    %v5234 = vpop.permute.xlu0 %5233
    %5235 = vset.pattern.permute.xlu0 0
    %5236 = vperm.xlu0 %5235, %v5188
    %v5237 = vpop.permute.xlu0 %5236
    %5238 = vset.pattern.permute.xlu0 0
    %5239 = vperm.xlu0 %5238, %v5192
    %v5240 = vpop.permute.xlu0 %5239
    %v5253 = vmul.f32 %v556, %v5207
    %v5254 = vmul.f32 %v558, %v5210
    %v5255 = vmul.f32 %v560, %v5213
    %v5256 = vmul.f32 %v562, %v5216
    %v5257 = vmul.f32 %v564, %v5219
    %v5258 = vmul.f32 %v566, %v5222
    %v5259 = vmul.f32 %v568, %v5225
    %v5260 = vmul.f32 %v570, %v5228
    %v5261 = vmul.f32 %v572, %v5231
    %v5262 = vmul.f32 %v574, %v5234
    %v5263 = vmul.f32 %v576, %v5237
    %v5264 = vmul.f32 %v578, %v5240
    %v5277 = vrot.slane %v5253, 6
    %v5278 = vrot.slane %v5254, 6
    %v5279 = vrot.slane %v5255, 6
    %v5280 = vrot.slane %v5256, 6
    %v5281 = vrot.slane %v5257, 6
    %v5282 = vrot.slane %v5258, 6
    %v5283 = vrot.slane %v5259, 6
    %v5284 = vrot.slane %v5260, 6
    %v5285 = vrot.slane %v5261, 6
    %v5286 = vrot.slane %v5262, 6
    %v5287 = vrot.slane %v5263, 6
    %v5288 = vrot.slane %v5264, 6
    %v5301 = vadd.f32 %v5133, %v5277
    %v5302 = vadd.f32 %v5134, %v5278
    %v5303 = vadd.f32 %v5135, %v5279
    %v5304 = vadd.f32 %v5136, %v5280
    %v5305 = vadd.f32 %v5137, %v5281
    %v5306 = vadd.f32 %v5138, %v5282
    %v5307 = vadd.f32 %v5139, %v5283
    %v5308 = vadd.f32 %v5140, %v5284
    %v5309 = vadd.f32 %v5141, %v5285
    %v5310 = vadd.f32 %v5142, %v5286
    %v5311 = vadd.f32 %v5143, %v5287
    %v5312 = vadd.f32 %v5144, %v5288
    %v5313 = vlaneseq
    %v5314 = vshrl.u32 %v5313, 7
    %v5315 = vsub.s32 7, %v5314
    %v5316 = vrot.slane %v4161, %v5315
    %v5317 = vlaneseq
    %v5318 = vshrl.u32 %v5317, 7
    %v5319 = vsub.s32 7, %v5318
    %v5320 = vrot.slane %v4163, %v5319
    %v5321 = vlaneseq
    %v5322 = vshrl.u32 %v5321, 7
    %v5323 = vsub.s32 7, %v5322
    %v5324 = vrot.slane %v4165, %v5323
    %v5325 = vlaneseq
    %v5326 = vshrl.u32 %v5325, 7
    %v5327 = vsub.s32 7, %v5326
    %v5328 = vrot.slane %v4167, %v5327
    %v5329 = vlaneseq
    %v5330 = vshrl.u32 %v5329, 7
    %v5331 = vsub.s32 7, %v5330
    %v5332 = vrot.slane %v4169, %v5331
    %v5333 = vlaneseq
    %v5334 = vshrl.u32 %v5333, 7
    %v5335 = vsub.s32 7, %v5334
    %v5336 = vrot.slane %v4171, %v5335
    %v5337 = vlaneseq
    %v5338 = vshrl.u32 %v5337, 7
    %v5339 = vsub.s32 7, %v5338
    %v5340 = vrot.slane %v4173, %v5339
    %v5341 = vlaneseq
    %v5342 = vshrl.u32 %v5341, 7
    %v5343 = vsub.s32 7, %v5342
    %v5344 = vrot.slane %v4175, %v5343
    %v5345 = vlaneseq
    %v5346 = vshrl.u32 %v5345, 7
    %v5347 = vsub.s32 7, %v5346
    %v5348 = vrot.slane %v4177, %v5347
    %v5349 = vlaneseq
    %v5350 = vshrl.u32 %v5349, 7
    %v5351 = vsub.s32 7, %v5350
    %v5352 = vrot.slane %v4179, %v5351
    %v5353 = vlaneseq
    %v5354 = vshrl.u32 %v5353, 7
    %v5355 = vsub.s32 7, %v5354
    %v5356 = vrot.slane %v4181, %v5355
    %v5357 = vlaneseq
    %v5358 = vshrl.u32 %v5357, 7
    %v5359 = vsub.s32 7, %v5358
    %v5360 = vrot.slane %v4183, %v5359
    %5373 = vset.pattern.permute.xlu0 0
    %5374 = vperm.xlu0 %5373, %v5316
    %v5375 = vpop.permute.xlu0 %5374
    %5376 = vset.pattern.permute.xlu0 0
    %5377 = vperm.xlu0 %5376, %v5320
    %v5378 = vpop.permute.xlu0 %5377
    %5379 = vset.pattern.permute.xlu0 0
    %5380 = vperm.xlu0 %5379, %v5324
    %v5381 = vpop.permute.xlu0 %5380
    %5382 = vset.pattern.permute.xlu0 0
    %5383 = vperm.xlu0 %5382, %v5328
    %v5384 = vpop.permute.xlu0 %5383
    %5385 = vset.pattern.permute.xlu0 0
    %5386 = vperm.xlu0 %5385, %v5332
    %v5387 = vpop.permute.xlu0 %5386
    %5388 = vset.pattern.permute.xlu0 0
    %5389 = vperm.xlu0 %5388, %v5336
    %v5390 = vpop.permute.xlu0 %5389
    %5391 = vset.pattern.permute.xlu0 0
    %5392 = vperm.xlu0 %5391, %v5340
    %v5393 = vpop.permute.xlu0 %5392
    %5394 = vset.pattern.permute.xlu0 0
    %5395 = vperm.xlu0 %5394, %v5344
    %v5396 = vpop.permute.xlu0 %5395
    %5397 = vset.pattern.permute.xlu0 0
    %5398 = vperm.xlu0 %5397, %v5348
    %v5399 = vpop.permute.xlu0 %5398
    %5400 = vset.pattern.permute.xlu0 0
    %5401 = vperm.xlu0 %5400, %v5352
    %v5402 = vpop.permute.xlu0 %5401
    %5403 = vset.pattern.permute.xlu0 0
    %5404 = vperm.xlu0 %5403, %v5356
    %v5405 = vpop.permute.xlu0 %5404
    %5406 = vset.pattern.permute.xlu0 0
    %5407 = vperm.xlu0 %5406, %v5360
    %v5408 = vpop.permute.xlu0 %5407
    %v5421 = vmul.f32 %v556, %v5375
    %v5422 = vmul.f32 %v558, %v5378
    %v5423 = vmul.f32 %v560, %v5381
    %v5424 = vmul.f32 %v562, %v5384
    %v5425 = vmul.f32 %v564, %v5387
    %v5426 = vmul.f32 %v566, %v5390
    %v5427 = vmul.f32 %v568, %v5393
    %v5428 = vmul.f32 %v570, %v5396
    %v5429 = vmul.f32 %v572, %v5399
    %v5430 = vmul.f32 %v574, %v5402
    %v5431 = vmul.f32 %v576, %v5405
    %v5432 = vmul.f32 %v578, %v5408
    %v5445 = vrot.slane %v5421, 7
    %v5446 = vrot.slane %v5422, 7
    %v5447 = vrot.slane %v5423, 7
    %v5448 = vrot.slane %v5424, 7
    %v5449 = vrot.slane %v5425, 7
    %v5450 = vrot.slane %v5426, 7
    %v5451 = vrot.slane %v5427, 7
    %v5452 = vrot.slane %v5428, 7
    %v5453 = vrot.slane %v5429, 7
    %v5454 = vrot.slane %v5430, 7
    %v5455 = vrot.slane %v5431, 7
    %v5456 = vrot.slane %v5432, 7
    %v5469 = vadd.f32 %v5301, %v5445
    %v5470 = vadd.f32 %v5302, %v5446
    %v5471 = vadd.f32 %v5303, %v5447
    %v5472 = vadd.f32 %v5304, %v5448
    %v5473 = vadd.f32 %v5305, %v5449
    %v5474 = vadd.f32 %v5306, %v5450
    %v5475 = vadd.f32 %v5307, %v5451
    %v5476 = vadd.f32 %v5308, %v5452
    %v5477 = vadd.f32 %v5309, %v5453
    %v5478 = vadd.f32 %v5310, %v5454
    %v5479 = vadd.f32 %v5311, %v5455
    %v5480 = vadd.f32 %v5312, %v5456
    %v5481 = vlaneseq
    %v5482 = vshrl.u32 %v5481, 7
    %v5483 = vsub.s32 0, %v5482
    %v5484 = vrot.slane %v4162, %v5483
    %v5485 = vlaneseq
    %v5486 = vshrl.u32 %v5485, 7
    %v5487 = vsub.s32 0, %v5486
    %v5488 = vrot.slane %v4164, %v5487
    %v5489 = vlaneseq
    %v5490 = vshrl.u32 %v5489, 7
    %v5491 = vsub.s32 0, %v5490
    %v5492 = vrot.slane %v4166, %v5491
    %v5493 = vlaneseq
    %v5494 = vshrl.u32 %v5493, 7
    %v5495 = vsub.s32 0, %v5494
    %v5496 = vrot.slane %v4168, %v5495
    %v5497 = vlaneseq
    %v5498 = vshrl.u32 %v5497, 7
    %v5499 = vsub.s32 0, %v5498
    %v5500 = vrot.slane %v4170, %v5499
    %v5501 = vlaneseq
    %v5502 = vshrl.u32 %v5501, 7
    %v5503 = vsub.s32 0, %v5502
    %v5504 = vrot.slane %v4172, %v5503
    %v5505 = vlaneseq
    %v5506 = vshrl.u32 %v5505, 7
    %v5507 = vsub.s32 0, %v5506
    %v5508 = vrot.slane %v4174, %v5507
    %v5509 = vlaneseq
    %v5510 = vshrl.u32 %v5509, 7
    %v5511 = vsub.s32 0, %v5510
    %v5512 = vrot.slane %v4176, %v5511
    %v5513 = vlaneseq
    %v5514 = vshrl.u32 %v5513, 7
    %v5515 = vsub.s32 0, %v5514
    %v5516 = vrot.slane %v4178, %v5515
    %v5517 = vlaneseq
    %v5518 = vshrl.u32 %v5517, 7
    %v5519 = vsub.s32 0, %v5518
    %v5520 = vrot.slane %v4180, %v5519
    %v5521 = vlaneseq
    %v5522 = vshrl.u32 %v5521, 7
    %v5523 = vsub.s32 0, %v5522
    %v5524 = vrot.slane %v4182, %v5523
    %v5525 = vlaneseq
    %v5526 = vshrl.u32 %v5525, 7
    %v5527 = vsub.s32 0, %v5526
    %v5528 = vrot.slane %v4184, %v5527
    %5541 = vset.pattern.permute.xlu0 0
    %5542 = vperm.xlu0 %5541, %v5484
    %v5543 = vpop.permute.xlu0 %5542
    %5544 = vset.pattern.permute.xlu0 0
    %5545 = vperm.xlu0 %5544, %v5488
    %v5546 = vpop.permute.xlu0 %5545
    %5547 = vset.pattern.permute.xlu0 0
    %5548 = vperm.xlu0 %5547, %v5492
    %v5549 = vpop.permute.xlu0 %5548
    %5550 = vset.pattern.permute.xlu0 0
    %5551 = vperm.xlu0 %5550, %v5496
    %v5552 = vpop.permute.xlu0 %5551
    %5553 = vset.pattern.permute.xlu0 0
    %5554 = vperm.xlu0 %5553, %v5500
    %v5555 = vpop.permute.xlu0 %5554
    %5556 = vset.pattern.permute.xlu0 0
    %5557 = vperm.xlu0 %5556, %v5504
    %v5558 = vpop.permute.xlu0 %5557
    %5559 = vset.pattern.permute.xlu0 0
    %5560 = vperm.xlu0 %5559, %v5508
    %v5561 = vpop.permute.xlu0 %5560
    %5562 = vset.pattern.permute.xlu0 0
    %5563 = vperm.xlu0 %5562, %v5512
    %v5564 = vpop.permute.xlu0 %5563
    %5565 = vset.pattern.permute.xlu0 0
    %5566 = vperm.xlu0 %5565, %v5516
    %v5567 = vpop.permute.xlu0 %5566
    %5568 = vset.pattern.permute.xlu0 0
    %5569 = vperm.xlu0 %5568, %v5520
    %v5570 = vpop.permute.xlu0 %5569
    %5571 = vset.pattern.permute.xlu0 0
    %5572 = vperm.xlu0 %5571, %v5524
    %v5573 = vpop.permute.xlu0 %5572
    %5574 = vset.pattern.permute.xlu0 0
    %5575 = vperm.xlu0 %5574, %v5528
    %v5576 = vpop.permute.xlu0 %5575
    %v5589 = vmul.f32 %v557, %v5543
    %v5590 = vmul.f32 %v559, %v5546
    %v5591 = vmul.f32 %v561, %v5549
    %v5592 = vmul.f32 %v563, %v5552
    %v5593 = vmul.f32 %v565, %v5555
    %v5594 = vmul.f32 %v567, %v5558
    %v5595 = vmul.f32 %v569, %v5561
    %v5596 = vmul.f32 %v571, %v5564
    %v5597 = vmul.f32 %v573, %v5567
    %v5598 = vmul.f32 %v575, %v5570
    %v5599 = vmul.f32 %v577, %v5573
    %v5600 = vmul.f32 %v579, %v5576
    %v5601 = vadd.f32 %v5469, %v5589
    %v5602 = vadd.f32 %v5470, %v5590
    %v5603 = vadd.f32 %v5471, %v5591
    %v5604 = vadd.f32 %v5472, %v5592
    %v5605 = vadd.f32 %v5473, %v5593
    %v5606 = vadd.f32 %v5474, %v5594
    %v5607 = vadd.f32 %v5475, %v5595
    %v5608 = vadd.f32 %v5476, %v5596
    %v5609 = vadd.f32 %v5477, %v5597
    %v5610 = vadd.f32 %v5478, %v5598
    %v5611 = vadd.f32 %v5479, %v5599
    %v5612 = vadd.f32 %v5480, %v5600
    %v5613 = vlaneseq
    %v5614 = vshrl.u32 %v5613, 7
    %v5615 = vsub.s32 1, %v5614
    %v5616 = vrot.slane %v4162, %v5615
    %v5617 = vlaneseq
    %v5618 = vshrl.u32 %v5617, 7
    %v5619 = vsub.s32 1, %v5618
    %v5620 = vrot.slane %v4164, %v5619
    %v5621 = vlaneseq
    %v5622 = vshrl.u32 %v5621, 7
    %v5623 = vsub.s32 1, %v5622
    %v5624 = vrot.slane %v4166, %v5623
    %v5625 = vlaneseq
    %v5626 = vshrl.u32 %v5625, 7
    %v5627 = vsub.s32 1, %v5626
    %v5628 = vrot.slane %v4168, %v5627
    %v5629 = vlaneseq
    %v5630 = vshrl.u32 %v5629, 7
    %v5631 = vsub.s32 1, %v5630
    %v5632 = vrot.slane %v4170, %v5631
    %v5633 = vlaneseq
    %v5634 = vshrl.u32 %v5633, 7
    %v5635 = vsub.s32 1, %v5634
    %v5636 = vrot.slane %v4172, %v5635
    %v5637 = vlaneseq
    %v5638 = vshrl.u32 %v5637, 7
    %v5639 = vsub.s32 1, %v5638
    %v5640 = vrot.slane %v4174, %v5639
    %v5641 = vlaneseq
    %v5642 = vshrl.u32 %v5641, 7
    %v5643 = vsub.s32 1, %v5642
    %v5644 = vrot.slane %v4176, %v5643
    %v5645 = vlaneseq
    %v5646 = vshrl.u32 %v5645, 7
    %v5647 = vsub.s32 1, %v5646
    %v5648 = vrot.slane %v4178, %v5647
    %v5649 = vlaneseq
    %v5650 = vshrl.u32 %v5649, 7
    %v5651 = vsub.s32 1, %v5650
    %v5652 = vrot.slane %v4180, %v5651
    %v5653 = vlaneseq
    %v5654 = vshrl.u32 %v5653, 7
    %v5655 = vsub.s32 1, %v5654
    %v5656 = vrot.slane %v4182, %v5655
    %v5657 = vlaneseq
    %v5658 = vshrl.u32 %v5657, 7
    %v5659 = vsub.s32 1, %v5658
    %v5660 = vrot.slane %v4184, %v5659
    %5673 = vset.pattern.permute.xlu0 0
    %5674 = vperm.xlu0 %5673, %v5616
    %v5675 = vpop.permute.xlu0 %5674
    %5676 = vset.pattern.permute.xlu0 0
    %5677 = vperm.xlu0 %5676, %v5620
    %v5678 = vpop.permute.xlu0 %5677
    %5679 = vset.pattern.permute.xlu0 0
    %5680 = vperm.xlu0 %5679, %v5624
    %v5681 = vpop.permute.xlu0 %5680
    %5682 = vset.pattern.permute.xlu0 0
    %5683 = vperm.xlu0 %5682, %v5628
    %v5684 = vpop.permute.xlu0 %5683
    %5685 = vset.pattern.permute.xlu0 0
    %5686 = vperm.xlu0 %5685, %v5632
    %v5687 = vpop.permute.xlu0 %5686
    %5688 = vset.pattern.permute.xlu0 0
    %5689 = vperm.xlu0 %5688, %v5636
    %v5690 = vpop.permute.xlu0 %5689
    %5691 = vset.pattern.permute.xlu0 0
    %5692 = vperm.xlu0 %5691, %v5640
    %v5693 = vpop.permute.xlu0 %5692
    %5694 = vset.pattern.permute.xlu0 0
    %5695 = vperm.xlu0 %5694, %v5644
    %v5696 = vpop.permute.xlu0 %5695
    %5697 = vset.pattern.permute.xlu0 0
    %5698 = vperm.xlu0 %5697, %v5648
    %v5699 = vpop.permute.xlu0 %5698
    %5700 = vset.pattern.permute.xlu0 0
    %5701 = vperm.xlu0 %5700, %v5652
    %v5702 = vpop.permute.xlu0 %5701
    %5703 = vset.pattern.permute.xlu0 0
    %5704 = vperm.xlu0 %5703, %v5656
    %v5705 = vpop.permute.xlu0 %5704
    %5706 = vset.pattern.permute.xlu0 0
    %5707 = vperm.xlu0 %5706, %v5660
    %v5708 = vpop.permute.xlu0 %5707
    %v5721 = vmul.f32 %v557, %v5675
    %v5722 = vmul.f32 %v559, %v5678
    %v5723 = vmul.f32 %v561, %v5681
    %v5724 = vmul.f32 %v563, %v5684
    %v5725 = vmul.f32 %v565, %v5687
    %v5726 = vmul.f32 %v567, %v5690
    %v5727 = vmul.f32 %v569, %v5693
    %v5728 = vmul.f32 %v571, %v5696
    %v5729 = vmul.f32 %v573, %v5699
    %v5730 = vmul.f32 %v575, %v5702
    %v5731 = vmul.f32 %v577, %v5705
    %v5732 = vmul.f32 %v579, %v5708
    %v5745 = vrot.slane %v5721, 1
    %v5746 = vrot.slane %v5722, 1
    %v5747 = vrot.slane %v5723, 1
    %v5748 = vrot.slane %v5724, 1
    %v5749 = vrot.slane %v5725, 1
    %v5750 = vrot.slane %v5726, 1
    %v5751 = vrot.slane %v5727, 1
    %v5752 = vrot.slane %v5728, 1
    %v5753 = vrot.slane %v5729, 1
    %v5754 = vrot.slane %v5730, 1
    %v5755 = vrot.slane %v5731, 1
    %v5756 = vrot.slane %v5732, 1
    %v5769 = vadd.f32 %v5601, %v5745
    %v5770 = vadd.f32 %v5602, %v5746
    %v5771 = vadd.f32 %v5603, %v5747
    %v5772 = vadd.f32 %v5604, %v5748
    %v5773 = vadd.f32 %v5605, %v5749
    %v5774 = vadd.f32 %v5606, %v5750
    %v5775 = vadd.f32 %v5607, %v5751
    %v5776 = vadd.f32 %v5608, %v5752
    %v5777 = vadd.f32 %v5609, %v5753
    %v5778 = vadd.f32 %v5610, %v5754
    %v5779 = vadd.f32 %v5611, %v5755
    %v5780 = vadd.f32 %v5612, %v5756
    %v5781 = vlaneseq
    %v5782 = vshrl.u32 %v5781, 7
    %v5783 = vsub.s32 2, %v5782
    %v5784 = vrot.slane %v4162, %v5783
    %v5785 = vlaneseq
    %v5786 = vshrl.u32 %v5785, 7
    %v5787 = vsub.s32 2, %v5786
    %v5788 = vrot.slane %v4164, %v5787
    %v5789 = vlaneseq
    %v5790 = vshrl.u32 %v5789, 7
    %v5791 = vsub.s32 2, %v5790
    %v5792 = vrot.slane %v4166, %v5791
    %v5793 = vlaneseq
    %v5794 = vshrl.u32 %v5793, 7
    %v5795 = vsub.s32 2, %v5794
    %v5796 = vrot.slane %v4168, %v5795
    %v5797 = vlaneseq
    %v5798 = vshrl.u32 %v5797, 7
    %v5799 = vsub.s32 2, %v5798
    %v5800 = vrot.slane %v4170, %v5799
    %v5801 = vlaneseq
    %v5802 = vshrl.u32 %v5801, 7
    %v5803 = vsub.s32 2, %v5802
    %v5804 = vrot.slane %v4172, %v5803
    %v5805 = vlaneseq
    %v5806 = vshrl.u32 %v5805, 7
    %v5807 = vsub.s32 2, %v5806
    %v5808 = vrot.slane %v4174, %v5807
    %v5809 = vlaneseq
    %v5810 = vshrl.u32 %v5809, 7
    %v5811 = vsub.s32 2, %v5810
    %v5812 = vrot.slane %v4176, %v5811
    %v5813 = vlaneseq
    %v5814 = vshrl.u32 %v5813, 7
    %v5815 = vsub.s32 2, %v5814
    %v5816 = vrot.slane %v4178, %v5815
    %v5817 = vlaneseq
    %v5818 = vshrl.u32 %v5817, 7
    %v5819 = vsub.s32 2, %v5818
    %v5820 = vrot.slane %v4180, %v5819
    %v5821 = vlaneseq
    %v5822 = vshrl.u32 %v5821, 7
    %v5823 = vsub.s32 2, %v5822
    %v5824 = vrot.slane %v4182, %v5823
    %v5825 = vlaneseq
    %v5826 = vshrl.u32 %v5825, 7
    %v5827 = vsub.s32 2, %v5826
    %v5828 = vrot.slane %v4184, %v5827
    %5841 = vset.pattern.permute.xlu0 0
    %5842 = vperm.xlu0 %5841, %v5784
    %v5843 = vpop.permute.xlu0 %5842
    %5844 = vset.pattern.permute.xlu0 0
    %5845 = vperm.xlu0 %5844, %v5788
    %v5846 = vpop.permute.xlu0 %5845
    %5847 = vset.pattern.permute.xlu0 0
    %5848 = vperm.xlu0 %5847, %v5792
    %v5849 = vpop.permute.xlu0 %5848
    %5850 = vset.pattern.permute.xlu0 0
    %5851 = vperm.xlu0 %5850, %v5796
    %v5852 = vpop.permute.xlu0 %5851
    %5853 = vset.pattern.permute.xlu0 0
    %5854 = vperm.xlu0 %5853, %v5800
    %v5855 = vpop.permute.xlu0 %5854
    %5856 = vset.pattern.permute.xlu0 0
    %5857 = vperm.xlu0 %5856, %v5804
    %v5858 = vpop.permute.xlu0 %5857
    %5859 = vset.pattern.permute.xlu0 0
    %5860 = vperm.xlu0 %5859, %v5808
    %v5861 = vpop.permute.xlu0 %5860
    %5862 = vset.pattern.permute.xlu0 0
    %5863 = vperm.xlu0 %5862, %v5812
    %v5864 = vpop.permute.xlu0 %5863
    %5865 = vset.pattern.permute.xlu0 0
    %5866 = vperm.xlu0 %5865, %v5816
    %v5867 = vpop.permute.xlu0 %5866
    %5868 = vset.pattern.permute.xlu0 0
    %5869 = vperm.xlu0 %5868, %v5820
    %v5870 = vpop.permute.xlu0 %5869
    %5871 = vset.pattern.permute.xlu0 0
    %5872 = vperm.xlu0 %5871, %v5824
    %v5873 = vpop.permute.xlu0 %5872
    %5874 = vset.pattern.permute.xlu0 0
    %5875 = vperm.xlu0 %5874, %v5828
    %v5876 = vpop.permute.xlu0 %5875
    %v5889 = vmul.f32 %v557, %v5843
    %v5890 = vmul.f32 %v559, %v5846
    %v5891 = vmul.f32 %v561, %v5849
    %v5892 = vmul.f32 %v563, %v5852
    %v5893 = vmul.f32 %v565, %v5855
    %v5894 = vmul.f32 %v567, %v5858
    %v5895 = vmul.f32 %v569, %v5861
    %v5896 = vmul.f32 %v571, %v5864
    %v5897 = vmul.f32 %v573, %v5867
    %v5898 = vmul.f32 %v575, %v5870
    %v5899 = vmul.f32 %v577, %v5873
    %v5900 = vmul.f32 %v579, %v5876
    %v5913 = vrot.slane %v5889, 2
    %v5914 = vrot.slane %v5890, 2
    %v5915 = vrot.slane %v5891, 2
    %v5916 = vrot.slane %v5892, 2
    %v5917 = vrot.slane %v5893, 2
    %v5918 = vrot.slane %v5894, 2
    %v5919 = vrot.slane %v5895, 2
    %v5920 = vrot.slane %v5896, 2
    %v5921 = vrot.slane %v5897, 2
    %v5922 = vrot.slane %v5898, 2
    %v5923 = vrot.slane %v5899, 2
    %v5924 = vrot.slane %v5900, 2
    %v5937 = vadd.f32 %v5769, %v5913
    %v5938 = vadd.f32 %v5770, %v5914
    %v5939 = vadd.f32 %v5771, %v5915
    %v5940 = vadd.f32 %v5772, %v5916
    %v5941 = vadd.f32 %v5773, %v5917
    %v5942 = vadd.f32 %v5774, %v5918
    %v5943 = vadd.f32 %v5775, %v5919
    %v5944 = vadd.f32 %v5776, %v5920
    %v5945 = vadd.f32 %v5777, %v5921
    %v5946 = vadd.f32 %v5778, %v5922
    %v5947 = vadd.f32 %v5779, %v5923
    %v5948 = vadd.f32 %v5780, %v5924
    %v5949 = vlaneseq
    %v5950 = vshrl.u32 %v5949, 7
    %v5951 = vsub.s32 3, %v5950
    %v5952 = vrot.slane %v4162, %v5951
    %v5953 = vlaneseq
    %v5954 = vshrl.u32 %v5953, 7
    %v5955 = vsub.s32 3, %v5954
    %v5956 = vrot.slane %v4164, %v5955
    %v5957 = vlaneseq
    %v5958 = vshrl.u32 %v5957, 7
    %v5959 = vsub.s32 3, %v5958
    %v5960 = vrot.slane %v4166, %v5959
    %v5961 = vlaneseq
    %v5962 = vshrl.u32 %v5961, 7
    %v5963 = vsub.s32 3, %v5962
    %v5964 = vrot.slane %v4168, %v5963
    %v5965 = vlaneseq
    %v5966 = vshrl.u32 %v5965, 7
    %v5967 = vsub.s32 3, %v5966
    %v5968 = vrot.slane %v4170, %v5967
    %v5969 = vlaneseq
    %v5970 = vshrl.u32 %v5969, 7
    %v5971 = vsub.s32 3, %v5970
    %v5972 = vrot.slane %v4172, %v5971
    %v5973 = vlaneseq
    %v5974 = vshrl.u32 %v5973, 7
    %v5975 = vsub.s32 3, %v5974
    %v5976 = vrot.slane %v4174, %v5975
    %v5977 = vlaneseq
    %v5978 = vshrl.u32 %v5977, 7
    %v5979 = vsub.s32 3, %v5978
    %v5980 = vrot.slane %v4176, %v5979
    %v5981 = vlaneseq
    %v5982 = vshrl.u32 %v5981, 7
    %v5983 = vsub.s32 3, %v5982
    %v5984 = vrot.slane %v4178, %v5983
    %v5985 = vlaneseq
    %v5986 = vshrl.u32 %v5985, 7
    %v5987 = vsub.s32 3, %v5986
    %v5988 = vrot.slane %v4180, %v5987
    %v5989 = vlaneseq
    %v5990 = vshrl.u32 %v5989, 7
    %v5991 = vsub.s32 3, %v5990
    %v5992 = vrot.slane %v4182, %v5991
    %v5993 = vlaneseq
    %v5994 = vshrl.u32 %v5993, 7
    %v5995 = vsub.s32 3, %v5994
    %v5996 = vrot.slane %v4184, %v5995
    %6009 = vset.pattern.permute.xlu0 0
    %6010 = vperm.xlu0 %6009, %v5952
    %v6011 = vpop.permute.xlu0 %6010
    %6012 = vset.pattern.permute.xlu0 0
    %6013 = vperm.xlu0 %6012, %v5956
    %v6014 = vpop.permute.xlu0 %6013
    %6015 = vset.pattern.permute.xlu0 0
    %6016 = vperm.xlu0 %6015, %v5960
    %v6017 = vpop.permute.xlu0 %6016
    %6018 = vset.pattern.permute.xlu0 0
    %6019 = vperm.xlu0 %6018, %v5964
    %v6020 = vpop.permute.xlu0 %6019
    %6021 = vset.pattern.permute.xlu0 0
    %6022 = vperm.xlu0 %6021, %v5968
    %v6023 = vpop.permute.xlu0 %6022
    %6024 = vset.pattern.permute.xlu0 0
    %6025 = vperm.xlu0 %6024, %v5972
    %v6026 = vpop.permute.xlu0 %6025
    %6027 = vset.pattern.permute.xlu0 0
    %6028 = vperm.xlu0 %6027, %v5976
    %v6029 = vpop.permute.xlu0 %6028
    %6030 = vset.pattern.permute.xlu0 0
    %6031 = vperm.xlu0 %6030, %v5980
    %v6032 = vpop.permute.xlu0 %6031
    %6033 = vset.pattern.permute.xlu0 0
    %6034 = vperm.xlu0 %6033, %v5984
    %v6035 = vpop.permute.xlu0 %6034
    %6036 = vset.pattern.permute.xlu0 0
    %6037 = vperm.xlu0 %6036, %v5988
    %v6038 = vpop.permute.xlu0 %6037
    %6039 = vset.pattern.permute.xlu0 0
    %6040 = vperm.xlu0 %6039, %v5992
    %v6041 = vpop.permute.xlu0 %6040
    %6042 = vset.pattern.permute.xlu0 0
    %6043 = vperm.xlu0 %6042, %v5996
    %v6044 = vpop.permute.xlu0 %6043
    %v6057 = vmul.f32 %v557, %v6011
    %v6058 = vmul.f32 %v559, %v6014
    %v6059 = vmul.f32 %v561, %v6017
    %v6060 = vmul.f32 %v563, %v6020
    %v6061 = vmul.f32 %v565, %v6023
    %v6062 = vmul.f32 %v567, %v6026
    %v6063 = vmul.f32 %v569, %v6029
    %v6064 = vmul.f32 %v571, %v6032
    %v6065 = vmul.f32 %v573, %v6035
    %v6066 = vmul.f32 %v575, %v6038
    %v6067 = vmul.f32 %v577, %v6041
    %v6068 = vmul.f32 %v579, %v6044
    %v6081 = vrot.slane %v6057, 3
    %v6082 = vrot.slane %v6058, 3
    %v6083 = vrot.slane %v6059, 3
    %v6084 = vrot.slane %v6060, 3
    %v6085 = vrot.slane %v6061, 3
    %v6086 = vrot.slane %v6062, 3
    %v6087 = vrot.slane %v6063, 3
    %v6088 = vrot.slane %v6064, 3
    %v6089 = vrot.slane %v6065, 3
    %v6090 = vrot.slane %v6066, 3
    %v6091 = vrot.slane %v6067, 3
    %v6092 = vrot.slane %v6068, 3
    %v6105 = vadd.f32 %v5937, %v6081
    %v6106 = vadd.f32 %v5938, %v6082
    %v6107 = vadd.f32 %v5939, %v6083
    %v6108 = vadd.f32 %v5940, %v6084
    %v6109 = vadd.f32 %v5941, %v6085
    %v6110 = vadd.f32 %v5942, %v6086
    %v6111 = vadd.f32 %v5943, %v6087
    %v6112 = vadd.f32 %v5944, %v6088
    %v6113 = vadd.f32 %v5945, %v6089
    %v6114 = vadd.f32 %v5946, %v6090
    %v6115 = vadd.f32 %v5947, %v6091
    %v6116 = vadd.f32 %v5948, %v6092
    %v6117 = vlaneseq
    %v6118 = vshrl.u32 %v6117, 7
    %v6119 = vsub.s32 4, %v6118
    %v6120 = vrot.slane %v4162, %v6119
    %v6121 = vlaneseq
    %v6122 = vshrl.u32 %v6121, 7
    %v6123 = vsub.s32 4, %v6122
    %v6124 = vrot.slane %v4164, %v6123
    %v6125 = vlaneseq
    %v6126 = vshrl.u32 %v6125, 7
    %v6127 = vsub.s32 4, %v6126
    %v6128 = vrot.slane %v4166, %v6127
    %v6129 = vlaneseq
    %v6130 = vshrl.u32 %v6129, 7
    %v6131 = vsub.s32 4, %v6130
    %v6132 = vrot.slane %v4168, %v6131
    %v6133 = vlaneseq
    %v6134 = vshrl.u32 %v6133, 7
    %v6135 = vsub.s32 4, %v6134
    %v6136 = vrot.slane %v4170, %v6135
    %v6137 = vlaneseq
    %v6138 = vshrl.u32 %v6137, 7
    %v6139 = vsub.s32 4, %v6138
    %v6140 = vrot.slane %v4172, %v6139
    %v6141 = vlaneseq
    %v6142 = vshrl.u32 %v6141, 7
    %v6143 = vsub.s32 4, %v6142
    %v6144 = vrot.slane %v4174, %v6143
    %v6145 = vlaneseq
    %v6146 = vshrl.u32 %v6145, 7
    %v6147 = vsub.s32 4, %v6146
    %v6148 = vrot.slane %v4176, %v6147
    %v6149 = vlaneseq
    %v6150 = vshrl.u32 %v6149, 7
    %v6151 = vsub.s32 4, %v6150
    %v6152 = vrot.slane %v4178, %v6151
    %v6153 = vlaneseq
    %v6154 = vshrl.u32 %v6153, 7
    %v6155 = vsub.s32 4, %v6154
    %v6156 = vrot.slane %v4180, %v6155
    %v6157 = vlaneseq
    %v6158 = vshrl.u32 %v6157, 7
    %v6159 = vsub.s32 4, %v6158
    %v6160 = vrot.slane %v4182, %v6159
    %v6161 = vlaneseq
    %v6162 = vshrl.u32 %v6161, 7
    %v6163 = vsub.s32 4, %v6162
    %v6164 = vrot.slane %v4184, %v6163
    %6177 = vset.pattern.permute.xlu0 0
    %6178 = vperm.xlu0 %6177, %v6120
    %v6179 = vpop.permute.xlu0 %6178
    %6180 = vset.pattern.permute.xlu0 0
    %6181 = vperm.xlu0 %6180, %v6124
    %v6182 = vpop.permute.xlu0 %6181
    %6183 = vset.pattern.permute.xlu0 0
    %6184 = vperm.xlu0 %6183, %v6128
    %v6185 = vpop.permute.xlu0 %6184
    %6186 = vset.pattern.permute.xlu0 0
    %6187 = vperm.xlu0 %6186, %v6132
    %v6188 = vpop.permute.xlu0 %6187
    %6189 = vset.pattern.permute.xlu0 0
    %6190 = vperm.xlu0 %6189, %v6136
    %v6191 = vpop.permute.xlu0 %6190
    %6192 = vset.pattern.permute.xlu0 0
    %6193 = vperm.xlu0 %6192, %v6140
    %v6194 = vpop.permute.xlu0 %6193
    %6195 = vset.pattern.permute.xlu0 0
    %6196 = vperm.xlu0 %6195, %v6144
    %v6197 = vpop.permute.xlu0 %6196
    %6198 = vset.pattern.permute.xlu0 0
    %6199 = vperm.xlu0 %6198, %v6148
    %v6200 = vpop.permute.xlu0 %6199
    %6201 = vset.pattern.permute.xlu0 0
    %6202 = vperm.xlu0 %6201, %v6152
    %v6203 = vpop.permute.xlu0 %6202
    %6204 = vset.pattern.permute.xlu0 0
    %6205 = vperm.xlu0 %6204, %v6156
    %v6206 = vpop.permute.xlu0 %6205
    %6207 = vset.pattern.permute.xlu0 0
    %6208 = vperm.xlu0 %6207, %v6160
    %v6209 = vpop.permute.xlu0 %6208
    %6210 = vset.pattern.permute.xlu0 0
    %6211 = vperm.xlu0 %6210, %v6164
    %v6212 = vpop.permute.xlu0 %6211
    %v6225 = vmul.f32 %v557, %v6179
    %v6226 = vmul.f32 %v559, %v6182
    %v6227 = vmul.f32 %v561, %v6185
    %v6228 = vmul.f32 %v563, %v6188
    %v6229 = vmul.f32 %v565, %v6191
    %v6230 = vmul.f32 %v567, %v6194
    %v6231 = vmul.f32 %v569, %v6197
    %v6232 = vmul.f32 %v571, %v6200
    %v6233 = vmul.f32 %v573, %v6203
    %v6234 = vmul.f32 %v575, %v6206
    %v6235 = vmul.f32 %v577, %v6209
    %v6236 = vmul.f32 %v579, %v6212
    %v6249 = vrot.slane %v6225, 4
    %v6250 = vrot.slane %v6226, 4
    %v6251 = vrot.slane %v6227, 4
    %v6252 = vrot.slane %v6228, 4
    %v6253 = vrot.slane %v6229, 4
    %v6254 = vrot.slane %v6230, 4
    %v6255 = vrot.slane %v6231, 4
    %v6256 = vrot.slane %v6232, 4
    %v6257 = vrot.slane %v6233, 4
    %v6258 = vrot.slane %v6234, 4
    %v6259 = vrot.slane %v6235, 4
    %v6260 = vrot.slane %v6236, 4
    %v6273 = vadd.f32 %v6105, %v6249
    %v6274 = vadd.f32 %v6106, %v6250
    %v6275 = vadd.f32 %v6107, %v6251
    %v6276 = vadd.f32 %v6108, %v6252
    %v6277 = vadd.f32 %v6109, %v6253
    %v6278 = vadd.f32 %v6110, %v6254
    %v6279 = vadd.f32 %v6111, %v6255
    %v6280 = vadd.f32 %v6112, %v6256
    %v6281 = vadd.f32 %v6113, %v6257
    %v6282 = vadd.f32 %v6114, %v6258
    %v6283 = vadd.f32 %v6115, %v6259
    %v6284 = vadd.f32 %v6116, %v6260
    %v6285 = vlaneseq
    %v6286 = vshrl.u32 %v6285, 7
    %v6287 = vsub.s32 5, %v6286
    %v6288 = vrot.slane %v4162, %v6287
    %v6289 = vlaneseq
    %v6290 = vshrl.u32 %v6289, 7
    %v6291 = vsub.s32 5, %v6290
    %v6292 = vrot.slane %v4164, %v6291
    %v6293 = vlaneseq
    %v6294 = vshrl.u32 %v6293, 7
    %v6295 = vsub.s32 5, %v6294
    %v6296 = vrot.slane %v4166, %v6295
    %v6297 = vlaneseq
    %v6298 = vshrl.u32 %v6297, 7
    %v6299 = vsub.s32 5, %v6298
    %v6300 = vrot.slane %v4168, %v6299
    %v6301 = vlaneseq
    %v6302 = vshrl.u32 %v6301, 7
    %v6303 = vsub.s32 5, %v6302
    %v6304 = vrot.slane %v4170, %v6303
    %v6305 = vlaneseq
    %v6306 = vshrl.u32 %v6305, 7
    %v6307 = vsub.s32 5, %v6306
    %v6308 = vrot.slane %v4172, %v6307
    %v6309 = vlaneseq
    %v6310 = vshrl.u32 %v6309, 7
    %v6311 = vsub.s32 5, %v6310
    %v6312 = vrot.slane %v4174, %v6311
    %v6313 = vlaneseq
    %v6314 = vshrl.u32 %v6313, 7
    %v6315 = vsub.s32 5, %v6314
    %v6316 = vrot.slane %v4176, %v6315
    %v6317 = vlaneseq
    %v6318 = vshrl.u32 %v6317, 7
    %v6319 = vsub.s32 5, %v6318
    %v6320 = vrot.slane %v4178, %v6319
    %v6321 = vlaneseq
    %v6322 = vshrl.u32 %v6321, 7
    %v6323 = vsub.s32 5, %v6322
    %v6324 = vrot.slane %v4180, %v6323
    %v6325 = vlaneseq
    %v6326 = vshrl.u32 %v6325, 7
    %v6327 = vsub.s32 5, %v6326
    %v6328 = vrot.slane %v4182, %v6327
    %v6329 = vlaneseq
    %v6330 = vshrl.u32 %v6329, 7
    %v6331 = vsub.s32 5, %v6330
    %v6332 = vrot.slane %v4184, %v6331
    %6345 = vset.pattern.permute.xlu0 0
    %6346 = vperm.xlu0 %6345, %v6288
    %v6347 = vpop.permute.xlu0 %6346
    %6348 = vset.pattern.permute.xlu0 0
    %6349 = vperm.xlu0 %6348, %v6292
    %v6350 = vpop.permute.xlu0 %6349
    %6351 = vset.pattern.permute.xlu0 0
    %6352 = vperm.xlu0 %6351, %v6296
    %v6353 = vpop.permute.xlu0 %6352
    %6354 = vset.pattern.permute.xlu0 0
    %6355 = vperm.xlu0 %6354, %v6300
    %v6356 = vpop.permute.xlu0 %6355
    %6357 = vset.pattern.permute.xlu0 0
    %6358 = vperm.xlu0 %6357, %v6304
    %v6359 = vpop.permute.xlu0 %6358
    %6360 = vset.pattern.permute.xlu0 0
    %6361 = vperm.xlu0 %6360, %v6308
    %v6362 = vpop.permute.xlu0 %6361
    %6363 = vset.pattern.permute.xlu0 0
    %6364 = vperm.xlu0 %6363, %v6312
    %v6365 = vpop.permute.xlu0 %6364
    %6366 = vset.pattern.permute.xlu0 0
    %6367 = vperm.xlu0 %6366, %v6316
    %v6368 = vpop.permute.xlu0 %6367
    %6369 = vset.pattern.permute.xlu0 0
    %6370 = vperm.xlu0 %6369, %v6320
    %v6371 = vpop.permute.xlu0 %6370
    %6372 = vset.pattern.permute.xlu0 0
    %6373 = vperm.xlu0 %6372, %v6324
    %v6374 = vpop.permute.xlu0 %6373
    %6375 = vset.pattern.permute.xlu0 0
    %6376 = vperm.xlu0 %6375, %v6328
    %v6377 = vpop.permute.xlu0 %6376
    %6378 = vset.pattern.permute.xlu0 0
    %6379 = vperm.xlu0 %6378, %v6332
    %v6380 = vpop.permute.xlu0 %6379
    %v6393 = vmul.f32 %v557, %v6347
    %v6394 = vmul.f32 %v559, %v6350
    %v6395 = vmul.f32 %v561, %v6353
    %v6396 = vmul.f32 %v563, %v6356
    %v6397 = vmul.f32 %v565, %v6359
    %v6398 = vmul.f32 %v567, %v6362
    %v6399 = vmul.f32 %v569, %v6365
    %v6400 = vmul.f32 %v571, %v6368
    %v6401 = vmul.f32 %v573, %v6371
    %v6402 = vmul.f32 %v575, %v6374
    %v6403 = vmul.f32 %v577, %v6377
    %v6404 = vmul.f32 %v579, %v6380
    %v6417 = vrot.slane %v6393, 5
    %v6418 = vrot.slane %v6394, 5
    %v6419 = vrot.slane %v6395, 5
    %v6420 = vrot.slane %v6396, 5
    %v6421 = vrot.slane %v6397, 5
    %v6422 = vrot.slane %v6398, 5
    %v6423 = vrot.slane %v6399, 5
    %v6424 = vrot.slane %v6400, 5
    %v6425 = vrot.slane %v6401, 5
    %v6426 = vrot.slane %v6402, 5
    %v6427 = vrot.slane %v6403, 5
    %v6428 = vrot.slane %v6404, 5
    %v6441 = vadd.f32 %v6273, %v6417
    %v6442 = vadd.f32 %v6274, %v6418
    %v6443 = vadd.f32 %v6275, %v6419
    %v6444 = vadd.f32 %v6276, %v6420
    %v6445 = vadd.f32 %v6277, %v6421
    %v6446 = vadd.f32 %v6278, %v6422
    %v6447 = vadd.f32 %v6279, %v6423
    %v6448 = vadd.f32 %v6280, %v6424
    %v6449 = vadd.f32 %v6281, %v6425
    %v6450 = vadd.f32 %v6282, %v6426
    %v6451 = vadd.f32 %v6283, %v6427
    %v6452 = vadd.f32 %v6284, %v6428
    %v6453 = vlaneseq
    %v6454 = vshrl.u32 %v6453, 7
    %v6455 = vsub.s32 6, %v6454
    %v6456 = vrot.slane %v4162, %v6455
    %v6457 = vlaneseq
    %v6458 = vshrl.u32 %v6457, 7
    %v6459 = vsub.s32 6, %v6458
    %v6460 = vrot.slane %v4164, %v6459
    %v6461 = vlaneseq
    %v6462 = vshrl.u32 %v6461, 7
    %v6463 = vsub.s32 6, %v6462
    %v6464 = vrot.slane %v4166, %v6463
    %v6465 = vlaneseq
    %v6466 = vshrl.u32 %v6465, 7
    %v6467 = vsub.s32 6, %v6466
    %v6468 = vrot.slane %v4168, %v6467
    %v6469 = vlaneseq
    %v6470 = vshrl.u32 %v6469, 7
    %v6471 = vsub.s32 6, %v6470
    %v6472 = vrot.slane %v4170, %v6471
    %v6473 = vlaneseq
    %v6474 = vshrl.u32 %v6473, 7
    %v6475 = vsub.s32 6, %v6474
    %v6476 = vrot.slane %v4172, %v6475
    %v6477 = vlaneseq
    %v6478 = vshrl.u32 %v6477, 7
    %v6479 = vsub.s32 6, %v6478
    %v6480 = vrot.slane %v4174, %v6479
    %v6481 = vlaneseq
    %v6482 = vshrl.u32 %v6481, 7
    %v6483 = vsub.s32 6, %v6482
    %v6484 = vrot.slane %v4176, %v6483
    %v6485 = vlaneseq
    %v6486 = vshrl.u32 %v6485, 7
    %v6487 = vsub.s32 6, %v6486
    %v6488 = vrot.slane %v4178, %v6487
    %v6489 = vlaneseq
    %v6490 = vshrl.u32 %v6489, 7
    %v6491 = vsub.s32 6, %v6490
    %v6492 = vrot.slane %v4180, %v6491
    %v6493 = vlaneseq
    %v6494 = vshrl.u32 %v6493, 7
    %v6495 = vsub.s32 6, %v6494
    %v6496 = vrot.slane %v4182, %v6495
    %v6497 = vlaneseq
    %v6498 = vshrl.u32 %v6497, 7
    %v6499 = vsub.s32 6, %v6498
    %v6500 = vrot.slane %v4184, %v6499
    %6513 = vset.pattern.permute.xlu0 0
    %6514 = vperm.xlu0 %6513, %v6456
    %v6515 = vpop.permute.xlu0 %6514
    %6516 = vset.pattern.permute.xlu0 0
    %6517 = vperm.xlu0 %6516, %v6460
    %v6518 = vpop.permute.xlu0 %6517
    %6519 = vset.pattern.permute.xlu0 0
    %6520 = vperm.xlu0 %6519, %v6464
    %v6521 = vpop.permute.xlu0 %6520
    %6522 = vset.pattern.permute.xlu0 0
    %6523 = vperm.xlu0 %6522, %v6468
    %v6524 = vpop.permute.xlu0 %6523
    %6525 = vset.pattern.permute.xlu0 0
    %6526 = vperm.xlu0 %6525, %v6472
    %v6527 = vpop.permute.xlu0 %6526
    %6528 = vset.pattern.permute.xlu0 0
    %6529 = vperm.xlu0 %6528, %v6476
    %v6530 = vpop.permute.xlu0 %6529
    %6531 = vset.pattern.permute.xlu0 0
    %6532 = vperm.xlu0 %6531, %v6480
    %v6533 = vpop.permute.xlu0 %6532
    %6534 = vset.pattern.permute.xlu0 0
    %6535 = vperm.xlu0 %6534, %v6484
    %v6536 = vpop.permute.xlu0 %6535
    %6537 = vset.pattern.permute.xlu0 0
    %6538 = vperm.xlu0 %6537, %v6488
    %v6539 = vpop.permute.xlu0 %6538
    %6540 = vset.pattern.permute.xlu0 0
    %6541 = vperm.xlu0 %6540, %v6492
    %v6542 = vpop.permute.xlu0 %6541
    %6543 = vset.pattern.permute.xlu0 0
    %6544 = vperm.xlu0 %6543, %v6496
    %v6545 = vpop.permute.xlu0 %6544
    %6546 = vset.pattern.permute.xlu0 0
    %6547 = vperm.xlu0 %6546, %v6500
    %v6548 = vpop.permute.xlu0 %6547
    %v6561 = vmul.f32 %v557, %v6515
    %v6562 = vmul.f32 %v559, %v6518
    %v6563 = vmul.f32 %v561, %v6521
    %v6564 = vmul.f32 %v563, %v6524
    %v6565 = vmul.f32 %v565, %v6527
    %v6566 = vmul.f32 %v567, %v6530
    %v6567 = vmul.f32 %v569, %v6533
    %v6568 = vmul.f32 %v571, %v6536
    %v6569 = vmul.f32 %v573, %v6539
    %v6570 = vmul.f32 %v575, %v6542
    %v6571 = vmul.f32 %v577, %v6545
    %v6572 = vmul.f32 %v579, %v6548
    %v6585 = vrot.slane %v6561, 6
    %v6586 = vrot.slane %v6562, 6
    %v6587 = vrot.slane %v6563, 6
    %v6588 = vrot.slane %v6564, 6
    %v6589 = vrot.slane %v6565, 6
    %v6590 = vrot.slane %v6566, 6
    %v6591 = vrot.slane %v6567, 6
    %v6592 = vrot.slane %v6568, 6
    %v6593 = vrot.slane %v6569, 6
    %v6594 = vrot.slane %v6570, 6
    %v6595 = vrot.slane %v6571, 6
    %v6596 = vrot.slane %v6572, 6
    %v6609 = vadd.f32 %v6441, %v6585
    %v6610 = vadd.f32 %v6442, %v6586
    %v6611 = vadd.f32 %v6443, %v6587
    %v6612 = vadd.f32 %v6444, %v6588
    %v6613 = vadd.f32 %v6445, %v6589
    %v6614 = vadd.f32 %v6446, %v6590
    %v6615 = vadd.f32 %v6447, %v6591
    %v6616 = vadd.f32 %v6448, %v6592
    %v6617 = vadd.f32 %v6449, %v6593
    %v6618 = vadd.f32 %v6450, %v6594
    %v6619 = vadd.f32 %v6451, %v6595
    %v6620 = vadd.f32 %v6452, %v6596
    %v6621 = vlaneseq
    %v6622 = vshrl.u32 %v6621, 7
    %v6623 = vsub.s32 7, %v6622
    %v6624 = vrot.slane %v4162, %v6623
    %v6625 = vlaneseq
    %v6626 = vshrl.u32 %v6625, 7
    %v6627 = vsub.s32 7, %v6626
    %v6628 = vrot.slane %v4164, %v6627
    %v6629 = vlaneseq
    %v6630 = vshrl.u32 %v6629, 7
    %v6631 = vsub.s32 7, %v6630
    %v6632 = vrot.slane %v4166, %v6631
    %v6633 = vlaneseq
    %v6634 = vshrl.u32 %v6633, 7
    %v6635 = vsub.s32 7, %v6634
    %v6636 = vrot.slane %v4168, %v6635
    %v6637 = vlaneseq
    %v6638 = vshrl.u32 %v6637, 7
    %v6639 = vsub.s32 7, %v6638
    %v6640 = vrot.slane %v4170, %v6639
    %v6641 = vlaneseq
    %v6642 = vshrl.u32 %v6641, 7
    %v6643 = vsub.s32 7, %v6642
    %v6644 = vrot.slane %v4172, %v6643
    %v6645 = vlaneseq
    %v6646 = vshrl.u32 %v6645, 7
    %v6647 = vsub.s32 7, %v6646
    %v6648 = vrot.slane %v4174, %v6647
    %v6649 = vlaneseq
    %v6650 = vshrl.u32 %v6649, 7
    %v6651 = vsub.s32 7, %v6650
    %v6652 = vrot.slane %v4176, %v6651
    %v6653 = vlaneseq
    %v6654 = vshrl.u32 %v6653, 7
    %v6655 = vsub.s32 7, %v6654
    %v6656 = vrot.slane %v4178, %v6655
    %v6657 = vlaneseq
    %v6658 = vshrl.u32 %v6657, 7
    %v6659 = vsub.s32 7, %v6658
    %v6660 = vrot.slane %v4180, %v6659
    %v6661 = vlaneseq
    %v6662 = vshrl.u32 %v6661, 7
    %v6663 = vsub.s32 7, %v6662
    %v6664 = vrot.slane %v4182, %v6663
    %v6665 = vlaneseq
    %v6666 = vshrl.u32 %v6665, 7
    %v6667 = vsub.s32 7, %v6666
    %v6668 = vrot.slane %v4184, %v6667
    %6681 = vset.pattern.permute.xlu0 0
    %6682 = vperm.xlu0 %6681, %v6624
    %v6683 = vpop.permute.xlu0 %6682
    %6684 = vset.pattern.permute.xlu0 0
    %6685 = vperm.xlu0 %6684, %v6628
    %v6686 = vpop.permute.xlu0 %6685
    %6687 = vset.pattern.permute.xlu0 0
    %6688 = vperm.xlu0 %6687, %v6632
    %v6689 = vpop.permute.xlu0 %6688
    %6690 = vset.pattern.permute.xlu0 0
    %6691 = vperm.xlu0 %6690, %v6636
    %v6692 = vpop.permute.xlu0 %6691
    %6693 = vset.pattern.permute.xlu0 0
    %6694 = vperm.xlu0 %6693, %v6640
    %v6695 = vpop.permute.xlu0 %6694
    %6696 = vset.pattern.permute.xlu0 0
    %6697 = vperm.xlu0 %6696, %v6644
    %v6698 = vpop.permute.xlu0 %6697
    %6699 = vset.pattern.permute.xlu0 0
    %6700 = vperm.xlu0 %6699, %v6648
    %v6701 = vpop.permute.xlu0 %6700
    %6702 = vset.pattern.permute.xlu0 0
    %6703 = vperm.xlu0 %6702, %v6652
    %v6704 = vpop.permute.xlu0 %6703
    %6705 = vset.pattern.permute.xlu0 0
    %6706 = vperm.xlu0 %6705, %v6656
    %v6707 = vpop.permute.xlu0 %6706
    %6708 = vset.pattern.permute.xlu0 0
    %6709 = vperm.xlu0 %6708, %v6660
    %v6710 = vpop.permute.xlu0 %6709
    %6711 = vset.pattern.permute.xlu0 0
    %6712 = vperm.xlu0 %6711, %v6664
    %v6713 = vpop.permute.xlu0 %6712
    %6714 = vset.pattern.permute.xlu0 0
    %6715 = vperm.xlu0 %6714, %v6668
    %v6716 = vpop.permute.xlu0 %6715
    %v6729 = vmul.f32 %v557, %v6683
    %v6730 = vmul.f32 %v559, %v6686
    %v6731 = vmul.f32 %v561, %v6689
    %v6732 = vmul.f32 %v563, %v6692
    %v6733 = vmul.f32 %v565, %v6695
    %v6734 = vmul.f32 %v567, %v6698
    %v6735 = vmul.f32 %v569, %v6701
    %v6736 = vmul.f32 %v571, %v6704
    %v6737 = vmul.f32 %v573, %v6707
    %v6738 = vmul.f32 %v575, %v6710
    %v6739 = vmul.f32 %v577, %v6713
    %v6740 = vmul.f32 %v579, %v6716
    %v6753 = vrot.slane %v6729, 7
    %v6754 = vrot.slane %v6730, 7
    %v6755 = vrot.slane %v6731, 7
    %v6756 = vrot.slane %v6732, 7
    %v6757 = vrot.slane %v6733, 7
    %v6758 = vrot.slane %v6734, 7
    %v6759 = vrot.slane %v6735, 7
    %v6760 = vrot.slane %v6736, 7
    %v6761 = vrot.slane %v6737, 7
    %v6762 = vrot.slane %v6738, 7
    %v6763 = vrot.slane %v6739, 7
    %v6764 = vrot.slane %v6740, 7
    %v6777 = vadd.f32 %v6609, %v6753
    %v6778 = vadd.f32 %v6610, %v6754
    %v6779 = vadd.f32 %v6611, %v6755
    %v6780 = vadd.f32 %v6612, %v6756
    %v6781 = vadd.f32 %v6613, %v6757
    %v6782 = vadd.f32 %v6614, %v6758
    %v6783 = vadd.f32 %v6615, %v6759
    %v6784 = vadd.f32 %v6616, %v6760
    %v6785 = vadd.f32 %v6617, %v6761
    %v6786 = vadd.f32 %v6618, %v6762
    %v6787 = vadd.f32 %v6619, %v6763
    %v6788 = vadd.f32 %v6620, %v6764
    %v6789 = vadd.f32 %v3567, %v6777
    %v6790 = vadd.f32 %v3568, %v6778
    %v6791 = vadd.f32 %v3569, %v6779
    %v6792 = vadd.f32 %v3570, %v6780
    %v6793 = vadd.f32 %v3571, %v6781
    %v6794 = vadd.f32 %v3572, %v6782
    %v6795 = vadd.f32 %v3573, %v6783
    %v6796 = vadd.f32 %v3574, %v6784
    %v6797 = vadd.f32 %v3575, %v6785
    %v6798 = vadd.f32 %v3576, %v6786
    %v6799 = vadd.f32 %v3577, %v6787
    %v6800 = vadd.f32 %v3578, %v6788
    %v6801 = vsel %vm3579, %v6789, -inf
    %v6802 = vsel %vm3579, %v6790, -inf
    %v6803 = vmax.f32 %v6801, %v6802
    %v6804 = vsel %vm3579, %v6791, -inf
    %v6805 = vmax.f32 %v6803, %v6804
    %v6806 = vsel %vm3579, %v6792, -inf
    %v6807 = vsel %vm3579, %v6793, -inf
    %v6808 = vmax.f32 %v6806, %v6807
    %v6809 = vsel %vm3579, %v6794, -inf
    %v6810 = vmax.f32 %v6808, %v6809
    %v6811 = vsel %vm3579, %v6795, -inf
    %v6812 = vsel %vm3579, %v6796, -inf
    %v6813 = vmax.f32 %v6811, %v6812
    %v6814 = vsel %vm3579, %v6797, -inf
    %v6815 = vmax.f32 %v6813, %v6814
    %v6816 = vsel %vm3579, %v6798, -inf
    %v6817 = vsel %vm3579, %v6799, -inf
    %v6818 = vmax.f32 %v6816, %v6817
    %v6819 = vsel %vm3579, %v6800, -inf
    %v6820 = vmax.f32 %v6818, %v6819
    %v6821 = vlaneseq
    %v6822 = vshrl.u32 %v6821, 7
    %v6823 = vsub.s32 0, %v6822
    %v6824 = vrot.slane %v6805, %v6823
    %v6825 = vlaneseq
    %v6826 = vshrl.u32 %v6825, 7
    %v6827 = vsub.s32 0, %v6826
    %v6828 = vrot.slane %v6810, %v6827
    %v6829 = vlaneseq
    %v6830 = vshrl.u32 %v6829, 7
    %v6831 = vsub.s32 0, %v6830
    %v6832 = vrot.slane %v6815, %v6831
    %v6833 = vlaneseq
    %v6834 = vshrl.u32 %v6833, 7
    %v6835 = vsub.s32 0, %v6834
    %v6836 = vrot.slane %v6820, %v6835
    %v6837 = vsub.f32 %v6789, %v6824
    %v6838 = vsub.f32 %v6790, %v6824
    %v6839 = vsub.f32 %v6791, %v6824
    %v6840 = vsub.f32 %v6792, %v6828
    %v6841 = vsub.f32 %v6793, %v6828
    %v6842 = vsub.f32 %v6794, %v6828
    %v6843 = vsub.f32 %v6795, %v6832
    %v6844 = vsub.f32 %v6796, %v6832
    %v6845 = vsub.f32 %v6797, %v6832
    %v6846 = vsub.f32 %v6798, %v6836
    %v6847 = vsub.f32 %v6799, %v6836
    %v6848 = vsub.f32 %v6800, %v6836
    %v6849 = vmul.f32 %v6837, 1.442695
    %v6850 = vpow.pop %v6849
    %v6851 = vmul.f32 %v6838, 1.442695
    %v6852 = vpow.pop %v6851
    %v6853 = vmul.f32 %v6839, 1.442695
    %v6854 = vpow.pop %v6853
    %v6855 = vmul.f32 %v6840, 1.442695
    %v6856 = vpow.pop %v6855
    %v6857 = vmul.f32 %v6841, 1.442695
    %v6858 = vpow.pop %v6857
    %v6859 = vmul.f32 %v6842, 1.442695
    %v6860 = vpow.pop %v6859
    %v6861 = vmul.f32 %v6843, 1.442695
    %v6862 = vpow.pop %v6861
    %v6863 = vmul.f32 %v6844, 1.442695
    %v6864 = vpow.pop %v6863
    %v6865 = vmul.f32 %v6845, 1.442695
    %v6866 = vpow.pop %v6865
    %v6867 = vmul.f32 %v6846, 1.442695
    %v6868 = vpow.pop %v6867
    %v6869 = vmul.f32 %v6847, 1.442695
    %v6870 = vpow.pop %v6869
    %v6871 = vmul.f32 %v6848, 1.442695
    %v6872 = vpow.pop %v6871
    %v6885 = vrot.slane %v6852, 7
    %v6886 = vsel %vm812, %v6885, %v6850
    %v6887 = vrot.slane %v6854, 6
    %v6888 = vsel %vm814, %v6887, %v6886
    %v6889 = vrot.slane %v6858, 7
    %v6890 = vsel %vm812, %v6889, %v6856
    %v6891 = vrot.slane %v6860, 6
    %v6892 = vsel %vm814, %v6891, %v6890
    %v6893 = vrot.slane %v6864, 7
    %v6894 = vsel %vm812, %v6893, %v6862
    %v6895 = vrot.slane %v6866, 6
    %v6896 = vsel %vm814, %v6895, %v6894
    %v6897 = vrot.slane %v6870, 7
    %v6898 = vsel %vm812, %v6897, %v6868
    %v6899 = vrot.slane %v6872, 6
    %v6900 = vsel %vm814, %v6899, %v6898
    %v6905 = vsel %vm3684, %v6888, 0.0
    %v6906 = vrot.slane %v6905, 4
    %v6907 = vadd.f32 %v6905, %v6906
    %v6908 = vrot.slane %v6907, 2
    %v6909 = vadd.f32 %v6907, %v6908
    %v6910 = vrot.slane %v6909, 1
    %v6911 = vadd.f32 %v6909, %v6910
    %v6912 = vsel %vm3684, %v6892, 0.0
    %v6913 = vrot.slane %v6912, 4
    %v6914 = vadd.f32 %v6912, %v6913
    %v6915 = vrot.slane %v6914, 2
    %v6916 = vadd.f32 %v6914, %v6915
    %v6917 = vrot.slane %v6916, 1
    %v6918 = vadd.f32 %v6916, %v6917
    %v6919 = vsel %vm3684, %v6896, 0.0
    %v6920 = vrot.slane %v6919, 4
    %v6921 = vadd.f32 %v6919, %v6920
    %v6922 = vrot.slane %v6921, 2
    %v6923 = vadd.f32 %v6921, %v6922
    %v6924 = vrot.slane %v6923, 1
    %v6925 = vadd.f32 %v6923, %v6924
    %v6926 = vsel %vm3684, %v6900, 0.0
    %v6927 = vrot.slane %v6926, 4
    %v6928 = vadd.f32 %v6926, %v6927
    %v6929 = vrot.slane %v6928, 2
    %v6930 = vadd.f32 %v6928, %v6929
    %v6931 = vrot.slane %v6930, 1
    %v6932 = vadd.f32 %v6930, %v6931
    %v6933 = vrcp.pop %v6911
    %v6934 = vmul.f32 1.0, %v6933
    %v6935 = vrcp.pop %v6918
    %v6936 = vmul.f32 1.0, %v6935
    %v6937 = vrcp.pop %v6925
    %v6938 = vmul.f32 1.0, %v6937
    %v6939 = vrcp.pop %v6932
    %v6940 = vmul.f32 1.0, %v6939
    %v6941 = vlaneseq
    %v6942 = vshrl.u32 %v6941, 7
    %v6943 = vsub.s32 0, %v6942
    %v6944 = vrot.slane %v6934, %v6943
    %v6945 = vlaneseq
    %v6946 = vshrl.u32 %v6945, 7
    %v6947 = vsub.s32 0, %v6946
    %v6948 = vrot.slane %v6936, %v6947
    %v6949 = vlaneseq
    %v6950 = vshrl.u32 %v6949, 7
    %v6951 = vsub.s32 0, %v6950
    %v6952 = vrot.slane %v6938, %v6951
    %v6953 = vlaneseq
    %v6954 = vshrl.u32 %v6953, 7
    %v6955 = vsub.s32 0, %v6954
    %v6956 = vrot.slane %v6940, %v6955
    %v6957 = vmul.f32 %v6850, %v6944
    %v6958 = vmul.f32 %v6852, %v6944
    %v6959 = vmul.f32 %v6854, %v6944
    %v6960 = vmul.f32 %v6856, %v6948
    %v6961 = vmul.f32 %v6858, %v6948
    %v6962 = vmul.f32 %v6860, %v6948
    %v6963 = vmul.f32 %v6862, %v6952
    %v6964 = vmul.f32 %v6864, %v6952
    %v6965 = vmul.f32 %v6866, %v6952
    %v6966 = vmul.f32 %v6868, %v6956
    %v6967 = vmul.f32 %v6870, %v6956
    %v6968 = vmul.f32 %v6872, %v6956
    %v6969 = vlaneseq
    %v6970 = vshrl.u32 %v6969, 7
    %v6971 = vsub.s32 0, %v6970
    %v6972 = vrot.slane %v6957, %v6971
    %v6973 = vlaneseq
    %v6974 = vshrl.u32 %v6973, 7
    %v6975 = vsub.s32 0, %v6974
    %v6976 = vrot.slane %v6958, %v6975
    %v6977 = vlaneseq
    %v6978 = vshrl.u32 %v6977, 7
    %v6979 = vsub.s32 0, %v6978
    %v6980 = vrot.slane %v6959, %v6979
    %v6981 = vlaneseq
    %v6982 = vshrl.u32 %v6981, 7
    %v6983 = vsub.s32 0, %v6982
    %v6984 = vrot.slane %v6960, %v6983
    %v6985 = vlaneseq
    %v6986 = vshrl.u32 %v6985, 7
    %v6987 = vsub.s32 0, %v6986
    %v6988 = vrot.slane %v6961, %v6987
    %v6989 = vlaneseq
    %v6990 = vshrl.u32 %v6989, 7
    %v6991 = vsub.s32 0, %v6990
    %v6992 = vrot.slane %v6962, %v6991
    %v6993 = vlaneseq
    %v6994 = vshrl.u32 %v6993, 7
    %v6995 = vsub.s32 0, %v6994
    %v6996 = vrot.slane %v6963, %v6995
    %v6997 = vlaneseq
    %v6998 = vshrl.u32 %v6997, 7
    %v6999 = vsub.s32 0, %v6998
    %v7000 = vrot.slane %v6964, %v6999
    %v7001 = vlaneseq
    %v7002 = vshrl.u32 %v7001, 7
    %v7003 = vsub.s32 0, %v7002
    %v7004 = vrot.slane %v6965, %v7003
    %v7005 = vlaneseq
    %v7006 = vshrl.u32 %v7005, 7
    %v7007 = vsub.s32 0, %v7006
    %v7008 = vrot.slane %v6966, %v7007
    %v7009 = vlaneseq
    %v7010 = vshrl.u32 %v7009, 7
    %v7011 = vsub.s32 0, %v7010
    %v7012 = vrot.slane %v6967, %v7011
    %v7013 = vlaneseq
    %v7014 = vshrl.u32 %v7013, 7
    %v7015 = vsub.s32 0, %v7014
    %v7016 = vrot.slane %v6968, %v7015
    %v7017 = vmul.f32 %v6972, %v556
    %v7018 = vmul.f32 %v6972, %v557
    %v7019 = vmul.f32 %v6976, %v558
    %v7020 = vmul.f32 %v6976, %v559
    %v7021 = vmul.f32 %v6980, %v560
    %v7022 = vmul.f32 %v6980, %v561
    %v7023 = vmul.f32 %v6984, %v562
    %v7024 = vmul.f32 %v6984, %v563
    %v7025 = vmul.f32 %v6988, %v564
    %v7026 = vmul.f32 %v6988, %v565
    %v7027 = vmul.f32 %v6992, %v566
    %v7028 = vmul.f32 %v6992, %v567
    %v7029 = vmul.f32 %v6996, %v568
    %v7030 = vmul.f32 %v6996, %v569
    %v7031 = vmul.f32 %v7000, %v570
    %v7032 = vmul.f32 %v7000, %v571
    %v7033 = vmul.f32 %v7004, %v572
    %v7034 = vmul.f32 %v7004, %v573
    %v7035 = vmul.f32 %v7008, %v574
    %v7036 = vmul.f32 %v7008, %v575
    %v7037 = vmul.f32 %v7012, %v576
    %v7038 = vmul.f32 %v7012, %v577
    %v7039 = vmul.f32 %v7016, %v578
    %v7040 = vmul.f32 %v7016, %v579
    %7041 = vadd.xlane.f32.xlu0 %v7017
    %v7042 = vpop.xlane.xlu0 %7041
    %7043 = vadd.xlane.f32.xlu0 %v7018
    %v7044 = vpop.xlane.xlu0 %7043
    %7045 = vadd.xlane.f32.xlu0 %v7019
    %v7046 = vpop.xlane.xlu0 %7045
    %7047 = vadd.xlane.f32.xlu0 %v7020
    %v7048 = vpop.xlane.xlu0 %7047
    %7049 = vadd.xlane.f32.xlu0 %v7021
    %v7050 = vpop.xlane.xlu0 %7049
    %7051 = vadd.xlane.f32.xlu0 %v7022
    %v7052 = vpop.xlane.xlu0 %7051
    %7053 = vadd.xlane.f32.xlu0 %v7023
    %v7054 = vpop.xlane.xlu0 %7053
    %7055 = vadd.xlane.f32.xlu0 %v7024
    %v7056 = vpop.xlane.xlu0 %7055
    %7057 = vadd.xlane.f32.xlu0 %v7025
    %v7058 = vpop.xlane.xlu0 %7057
    %7059 = vadd.xlane.f32.xlu0 %v7026
    %v7060 = vpop.xlane.xlu0 %7059
    %7061 = vadd.xlane.f32.xlu0 %v7027
    %v7062 = vpop.xlane.xlu0 %7061
    %7063 = vadd.xlane.f32.xlu0 %v7028
    %v7064 = vpop.xlane.xlu0 %7063
    %7065 = vadd.xlane.f32.xlu0 %v7029
    %v7066 = vpop.xlane.xlu0 %7065
    %7067 = vadd.xlane.f32.xlu0 %v7030
    %v7068 = vpop.xlane.xlu0 %7067
    %7069 = vadd.xlane.f32.xlu0 %v7031
    %v7070 = vpop.xlane.xlu0 %7069
    %7071 = vadd.xlane.f32.xlu0 %v7032
    %v7072 = vpop.xlane.xlu0 %7071
    %7073 = vadd.xlane.f32.xlu0 %v7033
    %v7074 = vpop.xlane.xlu0 %7073
    %7075 = vadd.xlane.f32.xlu0 %v7034
    %v7076 = vpop.xlane.xlu0 %7075
    %7077 = vadd.xlane.f32.xlu0 %v7035
    %v7078 = vpop.xlane.xlu0 %7077
    %7079 = vadd.xlane.f32.xlu0 %v7036
    %v7080 = vpop.xlane.xlu0 %7079
    %7081 = vadd.xlane.f32.xlu0 %v7037
    %v7082 = vpop.xlane.xlu0 %7081
    %7083 = vadd.xlane.f32.xlu0 %v7038
    %v7084 = vpop.xlane.xlu0 %7083
    %7085 = vadd.xlane.f32.xlu0 %v7039
    %v7086 = vpop.xlane.xlu0 %7085
    %7087 = vadd.xlane.f32.xlu0 %v7040
    %v7088 = vpop.xlane.xlu0 %7087
    %v7089 = vmul.f32 %v7042, %v7042
    %v7090 = vmul.f32 %v7044, %v7044
    %v7091 = vmul.f32 %v7046, %v7046
    %v7092 = vmul.f32 %v7048, %v7048
    %v7093 = vmul.f32 %v7050, %v7050
    %v7094 = vmul.f32 %v7052, %v7052
    %v7095 = vmul.f32 %v7054, %v7054
    %v7096 = vmul.f32 %v7056, %v7056
    %v7097 = vmul.f32 %v7058, %v7058
    %v7098 = vmul.f32 %v7060, %v7060
    %v7099 = vmul.f32 %v7062, %v7062
    %v7100 = vmul.f32 %v7064, %v7064
    %v7101 = vmul.f32 %v7066, %v7066
    %v7102 = vmul.f32 %v7068, %v7068
    %v7103 = vmul.f32 %v7070, %v7070
    %v7104 = vmul.f32 %v7072, %v7072
    %v7105 = vmul.f32 %v7074, %v7074
    %v7106 = vmul.f32 %v7076, %v7076
    %v7107 = vmul.f32 %v7078, %v7078
    %v7108 = vmul.f32 %v7080, %v7080
    %v7109 = vmul.f32 %v7082, %v7082
    %v7110 = vmul.f32 %v7084, %v7084
    %v7111 = vmul.f32 %v7086, %v7086
    %v7112 = vmul.f32 %v7088, %v7088
    %v7137 = vlaneseq
    %v7138 = vshrl.u32 %v7137, 7
    %v7139 = vsub.s32 %v701, %v7138
    %v7140 = vrot.slane %v7089, %v7139
    %v7141 = vlaneseq
    %v7142 = vshrl.u32 %v7141, 7
    %v7143 = vsub.s32 %v706, %v7142
    %v7144 = vrot.slane %v7090, %v7143
    %v7145 = vsel %vm711, %v7144, %v7140
    %v7146 = vlaneseq
    %v7147 = vshrl.u32 %v7146, 7
    %v7148 = vsub.s32 %v701, %v7147
    %v7149 = vrot.slane %v7091, %v7148
    %v7150 = vlaneseq
    %v7151 = vshrl.u32 %v7150, 7
    %v7152 = vsub.s32 %v706, %v7151
    %v7153 = vrot.slane %v7092, %v7152
    %v7154 = vsel %vm711, %v7153, %v7149
    %v7155 = vlaneseq
    %v7156 = vshrl.u32 %v7155, 7
    %v7157 = vsub.s32 %v701, %v7156
    %v7158 = vrot.slane %v7093, %v7157
    %v7159 = vlaneseq
    %v7160 = vshrl.u32 %v7159, 7
    %v7161 = vsub.s32 %v706, %v7160
    %v7162 = vrot.slane %v7094, %v7161
    %v7163 = vsel %vm711, %v7162, %v7158
    %v7164 = vlaneseq
    %v7165 = vshrl.u32 %v7164, 7
    %v7166 = vsub.s32 %v701, %v7165
    %v7167 = vrot.slane %v7095, %v7166
    %v7168 = vlaneseq
    %v7169 = vshrl.u32 %v7168, 7
    %v7170 = vsub.s32 %v706, %v7169
    %v7171 = vrot.slane %v7096, %v7170
    %v7172 = vsel %vm711, %v7171, %v7167
    %v7173 = vlaneseq
    %v7174 = vshrl.u32 %v7173, 7
    %v7175 = vsub.s32 %v701, %v7174
    %v7176 = vrot.slane %v7097, %v7175
    %v7177 = vlaneseq
    %v7178 = vshrl.u32 %v7177, 7
    %v7179 = vsub.s32 %v706, %v7178
    %v7180 = vrot.slane %v7098, %v7179
    %v7181 = vsel %vm711, %v7180, %v7176
    %v7182 = vlaneseq
    %v7183 = vshrl.u32 %v7182, 7
    %v7184 = vsub.s32 %v701, %v7183
    %v7185 = vrot.slane %v7099, %v7184
    %v7186 = vlaneseq
    %v7187 = vshrl.u32 %v7186, 7
    %v7188 = vsub.s32 %v706, %v7187
    %v7189 = vrot.slane %v7100, %v7188
    %v7190 = vsel %vm711, %v7189, %v7185
    %v7191 = vlaneseq
    %v7192 = vshrl.u32 %v7191, 7
    %v7193 = vsub.s32 %v701, %v7192
    %v7194 = vrot.slane %v7101, %v7193
    %v7195 = vlaneseq
    %v7196 = vshrl.u32 %v7195, 7
    %v7197 = vsub.s32 %v706, %v7196
    %v7198 = vrot.slane %v7102, %v7197
    %v7199 = vsel %vm711, %v7198, %v7194
    %v7200 = vlaneseq
    %v7201 = vshrl.u32 %v7200, 7
    %v7202 = vsub.s32 %v701, %v7201
    %v7203 = vrot.slane %v7103, %v7202
    %v7204 = vlaneseq
    %v7205 = vshrl.u32 %v7204, 7
    %v7206 = vsub.s32 %v706, %v7205
    %v7207 = vrot.slane %v7104, %v7206
    %v7208 = vsel %vm711, %v7207, %v7203
    %v7209 = vlaneseq
    %v7210 = vshrl.u32 %v7209, 7
    %v7211 = vsub.s32 %v701, %v7210
    %v7212 = vrot.slane %v7105, %v7211
    %v7213 = vlaneseq
    %v7214 = vshrl.u32 %v7213, 7
    %v7215 = vsub.s32 %v706, %v7214
    %v7216 = vrot.slane %v7106, %v7215
    %v7217 = vsel %vm711, %v7216, %v7212
    %v7218 = vlaneseq
    %v7219 = vshrl.u32 %v7218, 7
    %v7220 = vsub.s32 %v701, %v7219
    %v7221 = vrot.slane %v7107, %v7220
    %v7222 = vlaneseq
    %v7223 = vshrl.u32 %v7222, 7
    %v7224 = vsub.s32 %v706, %v7223
    %v7225 = vrot.slane %v7108, %v7224
    %v7226 = vsel %vm711, %v7225, %v7221
    %v7227 = vlaneseq
    %v7228 = vshrl.u32 %v7227, 7
    %v7229 = vsub.s32 %v701, %v7228
    %v7230 = vrot.slane %v7109, %v7229
    %v7231 = vlaneseq
    %v7232 = vshrl.u32 %v7231, 7
    %v7233 = vsub.s32 %v706, %v7232
    %v7234 = vrot.slane %v7110, %v7233
    %v7235 = vsel %vm711, %v7234, %v7230
    %v7236 = vlaneseq
    %v7237 = vshrl.u32 %v7236, 7
    %v7238 = vsub.s32 %v701, %v7237
    %v7239 = vrot.slane %v7111, %v7238
    %v7240 = vlaneseq
    %v7241 = vshrl.u32 %v7240, 7
    %v7242 = vsub.s32 %v706, %v7241
    %v7243 = vrot.slane %v7112, %v7242
    %v7244 = vsel %vm711, %v7243, %v7239
    %v7245 = vsel %vm812, %v7154, %v7145
    %v7246 = vsel %vm814, %v7163, %v7245
    %v7247 = vsel %vm812, %v7181, %v7172
    %v7248 = vsel %vm814, %v7190, %v7247
    %v7249 = vsel %vm812, %v7208, %v7199
    %v7250 = vsel %vm814, %v7217, %v7249
    %v7251 = vsel %vm812, %v7235, %v7226
    %v7252 = vsel %vm814, %v7244, %v7251
    %v7257 = vsel %vm826, %v7246, 0.0
    %7258 = vadd.xlane.f32.xlu0 %v7257
    %v7259 = vpop.xlane.xlu0 %7258
    %v7260 = vsel %vm826, %v7248, 0.0
    %7261 = vadd.xlane.f32.xlu0 %v7260
    %v7262 = vpop.xlane.xlu0 %7261
    %v7263 = vsel %vm826, %v7250, 0.0
    %7264 = vadd.xlane.f32.xlu0 %v7263
    %v7265 = vpop.xlane.xlu0 %7264
    %v7266 = vsel %vm826, %v7252, 0.0
    %7267 = vadd.xlane.f32.xlu0 %v7266
    %v7268 = vpop.xlane.xlu0 %7267
    %v7269 = vrsqrt.pop %v7259
    %v7270 = vmul.f32 %v7259, %v7269
    %vm7271 = vcmp.eq.f32.partialorder %v7259, inf
    %v7272 = vsel %vm7271, %v7259, %v7270
    %vm7273 = vcmp.eq.f32.partialorder %v7259, 0.0
    %v7274 = vand.u32 %v7259, 2147483648
    %v7275 = vsel %vm7273, %v7274, %v7272
    %v7276 = vrsqrt.pop %v7262
    %v7277 = vmul.f32 %v7262, %v7276
    %vm7278 = vcmp.eq.f32.partialorder %v7262, inf
    %v7279 = vsel %vm7278, %v7262, %v7277
    %vm7280 = vcmp.eq.f32.partialorder %v7262, 0.0
    %v7281 = vand.u32 %v7262, 2147483648
    %v7282 = vsel %vm7280, %v7281, %v7279
    %v7283 = vrsqrt.pop %v7265
    %v7284 = vmul.f32 %v7265, %v7283
    %vm7285 = vcmp.eq.f32.partialorder %v7265, inf
    %v7286 = vsel %vm7285, %v7265, %v7284
    %vm7287 = vcmp.eq.f32.partialorder %v7265, 0.0
    %v7288 = vand.u32 %v7265, 2147483648
    %v7289 = vsel %vm7287, %v7288, %v7286
    %v7290 = vrsqrt.pop %v7268
    %v7291 = vmul.f32 %v7268, %v7290
    %vm7292 = vcmp.eq.f32.partialorder %v7268, inf
    %v7293 = vsel %vm7292, %v7268, %v7291
    %vm7294 = vcmp.eq.f32.partialorder %v7268, 0.0
    %v7295 = vand.u32 %v7268, 2147483648
    %v7296 = vsel %vm7294, %v7295, %v7293
    %v7297 = vadd.f32 %v7259, 1.0
    %v7298 = vadd.f32 %v7262, 1.0
    %v7299 = vadd.f32 %v7265, 1.0
    %v7300 = vadd.f32 %v7268, 1.0
    %v7301 = vadd.f32 %v7275, 1e-08
    %v7302 = vadd.f32 %v7282, 1e-08
    %v7303 = vadd.f32 %v7289, 1e-08
    %v7304 = vadd.f32 %v7296, 1e-08
    %v7305 = vmul.f32 %v7297, %v7301
    %v7306 = vmul.f32 %v7298, %v7302
    %v7307 = vmul.f32 %v7299, %v7303
    %v7308 = vmul.f32 %v7300, %v7304
    %v7309 = vrcp.pop %v7305
    %v7310 = vmul.f32 %v7259, %v7309
    %v7311 = vrcp.pop %v7306
    %v7312 = vmul.f32 %v7262, %v7311
    %v7313 = vrcp.pop %v7307
    %v7314 = vmul.f32 %v7265, %v7313
    %v7315 = vrcp.pop %v7308
    %v7316 = vmul.f32 %v7268, %v7315
    %v7321 = vlaneseq
    %v7322 = vshrl.u32 %v7321, 7
    %v7323 = vsub.s32 0, %v7322
    %v7324 = vrot.slane %v7310, %v7323
    %v7325 = vlaneseq
    %v7326 = vshrl.u32 %v7325, 7
    %v7327 = vsub.s32 1, %v7326
    %v7328 = vrot.slane %v7310, %v7327
    %v7329 = vlaneseq
    %v7330 = vshrl.u32 %v7329, 7
    %v7331 = vsub.s32 2, %v7330
    %v7332 = vrot.slane %v7310, %v7331
    %v7333 = vlaneseq
    %v7334 = vshrl.u32 %v7333, 7
    %v7335 = vsub.s32 0, %v7334
    %v7336 = vrot.slane %v7312, %v7335
    %v7337 = vlaneseq
    %v7338 = vshrl.u32 %v7337, 7
    %v7339 = vsub.s32 1, %v7338
    %v7340 = vrot.slane %v7312, %v7339
    %v7341 = vlaneseq
    %v7342 = vshrl.u32 %v7341, 7
    %v7343 = vsub.s32 2, %v7342
    %v7344 = vrot.slane %v7312, %v7343
    %v7345 = vlaneseq
    %v7346 = vshrl.u32 %v7345, 7
    %v7347 = vsub.s32 0, %v7346
    %v7348 = vrot.slane %v7314, %v7347
    %v7349 = vlaneseq
    %v7350 = vshrl.u32 %v7349, 7
    %v7351 = vsub.s32 1, %v7350
    %v7352 = vrot.slane %v7314, %v7351
    %v7353 = vlaneseq
    %v7354 = vshrl.u32 %v7353, 7
    %v7355 = vsub.s32 2, %v7354
    %v7356 = vrot.slane %v7314, %v7355
    %v7357 = vlaneseq
    %v7358 = vshrl.u32 %v7357, 7
    %v7359 = vsub.s32 0, %v7358
    %v7360 = vrot.slane %v7316, %v7359
    %v7361 = vlaneseq
    %v7362 = vshrl.u32 %v7361, 7
    %v7363 = vsub.s32 1, %v7362
    %v7364 = vrot.slane %v7316, %v7363
    %v7365 = vlaneseq
    %v7366 = vshrl.u32 %v7365, 7
    %v7367 = vsub.s32 2, %v7366
    %v7368 = vrot.slane %v7316, %v7367
    %v7381 = vmul.f32 %v7042, %v7324
    %v7382 = vmul.f32 %v7044, %v7324
    %v7383 = vmul.f32 %v7046, %v7328
    %v7384 = vmul.f32 %v7048, %v7328
    %v7385 = vmul.f32 %v7050, %v7332
    %v7386 = vmul.f32 %v7052, %v7332
    %v7387 = vmul.f32 %v7054, %v7336
    %v7388 = vmul.f32 %v7056, %v7336
    %v7389 = vmul.f32 %v7058, %v7340
    %v7390 = vmul.f32 %v7060, %v7340
    %v7391 = vmul.f32 %v7062, %v7344
    %v7392 = vmul.f32 %v7064, %v7344
    %v7393 = vmul.f32 %v7066, %v7348
    %v7394 = vmul.f32 %v7068, %v7348
    %v7395 = vmul.f32 %v7070, %v7352
    %v7396 = vmul.f32 %v7072, %v7352
    %v7397 = vmul.f32 %v7074, %v7356
    %v7398 = vmul.f32 %v7076, %v7356
    %v7399 = vmul.f32 %v7078, %v7360
    %v7400 = vmul.f32 %v7080, %v7360
    %v7401 = vmul.f32 %v7082, %v7364
    %v7402 = vmul.f32 %v7084, %v7364
    %v7403 = vmul.f32 %v7086, %v7368
    %v7404 = vmul.f32 %v7088, %v7368
    %v7405 = vmul.f32 %v7381, %v7381
    %v7406 = vmul.f32 %v7382, %v7382
    %v7407 = vmul.f32 %v7383, %v7383
    %v7408 = vmul.f32 %v7384, %v7384
    %v7409 = vmul.f32 %v7385, %v7385
    %v7410 = vmul.f32 %v7386, %v7386
    %v7411 = vmul.f32 %v7387, %v7387
    %v7412 = vmul.f32 %v7388, %v7388
    %v7413 = vmul.f32 %v7389, %v7389
    %v7414 = vmul.f32 %v7390, %v7390
    %v7415 = vmul.f32 %v7391, %v7391
    %v7416 = vmul.f32 %v7392, %v7392
    %v7417 = vmul.f32 %v7393, %v7393
    %v7418 = vmul.f32 %v7394, %v7394
    %v7419 = vmul.f32 %v7395, %v7395
    %v7420 = vmul.f32 %v7396, %v7396
    %v7421 = vmul.f32 %v7397, %v7397
    %v7422 = vmul.f32 %v7398, %v7398
    %v7423 = vmul.f32 %v7399, %v7399
    %v7424 = vmul.f32 %v7400, %v7400
    %v7425 = vmul.f32 %v7401, %v7401
    %v7426 = vmul.f32 %v7402, %v7402
    %v7427 = vmul.f32 %v7403, %v7403
    %v7428 = vmul.f32 %v7404, %v7404
    %7453 = vset.pattern.permute.xlu0 0
    %7454 = vperm.xlu0 %7453, %v7405
    %v7455 = vpop.permute.xlu0 %7454
    %7456 = vset.pattern.permute.xlu0 0
    %7457 = vperm.xlu0 %7456, %v7406
    %v7458 = vpop.permute.xlu0 %7457
    %7459 = vset.pattern.permute.xlu0 0
    %7460 = vperm.xlu0 %7459, %v7407
    %v7461 = vpop.permute.xlu0 %7460
    %7462 = vset.pattern.permute.xlu0 0
    %7463 = vperm.xlu0 %7462, %v7408
    %v7464 = vpop.permute.xlu0 %7463
    %7465 = vset.pattern.permute.xlu0 0
    %7466 = vperm.xlu0 %7465, %v7409
    %v7467 = vpop.permute.xlu0 %7466
    %7468 = vset.pattern.permute.xlu0 0
    %7469 = vperm.xlu0 %7468, %v7410
    %v7470 = vpop.permute.xlu0 %7469
    %7471 = vset.pattern.permute.xlu0 0
    %7472 = vperm.xlu0 %7471, %v7411
    %v7473 = vpop.permute.xlu0 %7472
    %7474 = vset.pattern.permute.xlu0 0
    %7475 = vperm.xlu0 %7474, %v7412
    %v7476 = vpop.permute.xlu0 %7475
    %7477 = vset.pattern.permute.xlu0 0
    %7478 = vperm.xlu0 %7477, %v7413
    %v7479 = vpop.permute.xlu0 %7478
    %7480 = vset.pattern.permute.xlu0 0
    %7481 = vperm.xlu0 %7480, %v7414
    %v7482 = vpop.permute.xlu0 %7481
    %7483 = vset.pattern.permute.xlu0 0
    %7484 = vperm.xlu0 %7483, %v7415
    %v7485 = vpop.permute.xlu0 %7484
    %7486 = vset.pattern.permute.xlu0 0
    %7487 = vperm.xlu0 %7486, %v7416
    %v7488 = vpop.permute.xlu0 %7487
    %7489 = vset.pattern.permute.xlu0 0
    %7490 = vperm.xlu0 %7489, %v7417
    %v7491 = vpop.permute.xlu0 %7490
    %7492 = vset.pattern.permute.xlu0 0
    %7493 = vperm.xlu0 %7492, %v7418
    %v7494 = vpop.permute.xlu0 %7493
    %7495 = vset.pattern.permute.xlu0 0
    %7496 = vperm.xlu0 %7495, %v7419
    %v7497 = vpop.permute.xlu0 %7496
    %7498 = vset.pattern.permute.xlu0 0
    %7499 = vperm.xlu0 %7498, %v7420
    %v7500 = vpop.permute.xlu0 %7499
    %7501 = vset.pattern.permute.xlu0 0
    %7502 = vperm.xlu0 %7501, %v7421
    %v7503 = vpop.permute.xlu0 %7502
    %7504 = vset.pattern.permute.xlu0 0
    %7505 = vperm.xlu0 %7504, %v7422
    %v7506 = vpop.permute.xlu0 %7505
    %7507 = vset.pattern.permute.xlu0 0
    %7508 = vperm.xlu0 %7507, %v7423
    %v7509 = vpop.permute.xlu0 %7508
    %7510 = vset.pattern.permute.xlu0 0
    %7511 = vperm.xlu0 %7510, %v7424
    %v7512 = vpop.permute.xlu0 %7511
    %7513 = vset.pattern.permute.xlu0 0
    %7514 = vperm.xlu0 %7513, %v7425
    %v7515 = vpop.permute.xlu0 %7514
    %7516 = vset.pattern.permute.xlu0 0
    %7517 = vperm.xlu0 %7516, %v7426
    %v7518 = vpop.permute.xlu0 %7517
    %7519 = vset.pattern.permute.xlu0 0
    %7520 = vperm.xlu0 %7519, %v7427
    %v7521 = vpop.permute.xlu0 %7520
    %7522 = vset.pattern.permute.xlu0 0
    %7523 = vperm.xlu0 %7522, %v7428
    %v7524 = vpop.permute.xlu0 %7523
    %v7525 = vlaneseq
    %v7526 = vshrl.u32 %v7525, 7
    %v7527 = vsub.s32 %v701, %v7526
    %v7528 = vrot.slane %v7455, %v7527
    %v7529 = vlaneseq
    %v7530 = vshrl.u32 %v7529, 7
    %v7531 = vsub.s32 %v706, %v7530
    %v7532 = vrot.slane %v7458, %v7531
    %v7533 = vsel %vm711, %v7532, %v7528
    %v7534 = vlaneseq
    %v7535 = vshrl.u32 %v7534, 7
    %v7536 = vsub.s32 %v701, %v7535
    %v7537 = vrot.slane %v7461, %v7536
    %v7538 = vlaneseq
    %v7539 = vshrl.u32 %v7538, 7
    %v7540 = vsub.s32 %v706, %v7539
    %v7541 = vrot.slane %v7464, %v7540
    %v7542 = vsel %vm711, %v7541, %v7537
    %v7543 = vlaneseq
    %v7544 = vshrl.u32 %v7543, 7
    %v7545 = vsub.s32 %v701, %v7544
    %v7546 = vrot.slane %v7467, %v7545
    %v7547 = vlaneseq
    %v7548 = vshrl.u32 %v7547, 7
    %v7549 = vsub.s32 %v706, %v7548
    %v7550 = vrot.slane %v7470, %v7549
    %v7551 = vsel %vm711, %v7550, %v7546
    %v7552 = vlaneseq
    %v7553 = vshrl.u32 %v7552, 7
    %v7554 = vsub.s32 %v701, %v7553
    %v7555 = vrot.slane %v7473, %v7554
    %v7556 = vlaneseq
    %v7557 = vshrl.u32 %v7556, 7
    %v7558 = vsub.s32 %v706, %v7557
    %v7559 = vrot.slane %v7476, %v7558
    %v7560 = vsel %vm711, %v7559, %v7555
    %v7561 = vlaneseq
    %v7562 = vshrl.u32 %v7561, 7
    %v7563 = vsub.s32 %v701, %v7562
    %v7564 = vrot.slane %v7479, %v7563
    %v7565 = vlaneseq
    %v7566 = vshrl.u32 %v7565, 7
    %v7567 = vsub.s32 %v706, %v7566
    %v7568 = vrot.slane %v7482, %v7567
    %v7569 = vsel %vm711, %v7568, %v7564
    %v7570 = vlaneseq
    %v7571 = vshrl.u32 %v7570, 7
    %v7572 = vsub.s32 %v701, %v7571
    %v7573 = vrot.slane %v7485, %v7572
    %v7574 = vlaneseq
    %v7575 = vshrl.u32 %v7574, 7
    %v7576 = vsub.s32 %v706, %v7575
    %v7577 = vrot.slane %v7488, %v7576
    %v7578 = vsel %vm711, %v7577, %v7573
    %v7579 = vlaneseq
    %v7580 = vshrl.u32 %v7579, 7
    %v7581 = vsub.s32 %v701, %v7580
    %v7582 = vrot.slane %v7491, %v7581
    %v7583 = vlaneseq
    %v7584 = vshrl.u32 %v7583, 7
    %v7585 = vsub.s32 %v706, %v7584
    %v7586 = vrot.slane %v7494, %v7585
    %v7587 = vsel %vm711, %v7586, %v7582
    %v7588 = vlaneseq
    %v7589 = vshrl.u32 %v7588, 7
    %v7590 = vsub.s32 %v701, %v7589
    %v7591 = vrot.slane %v7497, %v7590
    %v7592 = vlaneseq
    %v7593 = vshrl.u32 %v7592, 7
    %v7594 = vsub.s32 %v706, %v7593
    %v7595 = vrot.slane %v7500, %v7594
    %v7596 = vsel %vm711, %v7595, %v7591
    %v7597 = vlaneseq
    %v7598 = vshrl.u32 %v7597, 7
    %v7599 = vsub.s32 %v701, %v7598
    %v7600 = vrot.slane %v7503, %v7599
    %v7601 = vlaneseq
    %v7602 = vshrl.u32 %v7601, 7
    %v7603 = vsub.s32 %v706, %v7602
    %v7604 = vrot.slane %v7506, %v7603
    %v7605 = vsel %vm711, %v7604, %v7600
    %v7606 = vlaneseq
    %v7607 = vshrl.u32 %v7606, 7
    %v7608 = vsub.s32 %v701, %v7607
    %v7609 = vrot.slane %v7509, %v7608
    %v7610 = vlaneseq
    %v7611 = vshrl.u32 %v7610, 7
    %v7612 = vsub.s32 %v706, %v7611
    %v7613 = vrot.slane %v7512, %v7612
    %v7614 = vsel %vm711, %v7613, %v7609
    %v7615 = vlaneseq
    %v7616 = vshrl.u32 %v7615, 7
    %v7617 = vsub.s32 %v701, %v7616
    %v7618 = vrot.slane %v7515, %v7617
    %v7619 = vlaneseq
    %v7620 = vshrl.u32 %v7619, 7
    %v7621 = vsub.s32 %v706, %v7620
    %v7622 = vrot.slane %v7518, %v7621
    %v7623 = vsel %vm711, %v7622, %v7618
    %v7624 = vlaneseq
    %v7625 = vshrl.u32 %v7624, 7
    %v7626 = vsub.s32 %v701, %v7625
    %v7627 = vrot.slane %v7521, %v7626
    %v7628 = vlaneseq
    %v7629 = vshrl.u32 %v7628, 7
    %v7630 = vsub.s32 %v706, %v7629
    %v7631 = vrot.slane %v7524, %v7630
    %v7632 = vsel %vm711, %v7631, %v7627
    %v7633 = vsel %vm812, %v7542, %v7533
    %v7634 = vsel %vm814, %v7551, %v7633
    %v7635 = vsel %vm812, %v7569, %v7560
    %v7636 = vsel %vm814, %v7578, %v7635
    %v7637 = vsel %vm812, %v7596, %v7587
    %v7638 = vsel %vm814, %v7605, %v7637
    %v7639 = vsel %vm812, %v7623, %v7614
    %v7640 = vsel %vm814, %v7632, %v7639
    %v7645 = vsel %vm826, %v7634, 0.0
    %7646 = vadd.xlane.f32.xlu0 %v7645
    %v7647 = vpop.xlane.xlu0 %7646
    %v7648 = vsel %vm826, %v7636, 0.0
    %7649 = vadd.xlane.f32.xlu0 %v7648
    %v7650 = vpop.xlane.xlu0 %7649
    %v7651 = vsel %vm826, %v7638, 0.0
    %7652 = vadd.xlane.f32.xlu0 %v7651
    %v7653 = vpop.xlane.xlu0 %7652
    %v7654 = vsel %vm826, %v7640, 0.0
    %7655 = vadd.xlane.f32.xlu0 %v7654
    %v7656 = vpop.xlane.xlu0 %7655
    %v7657 = vrsqrt.pop %v7647
    %v7658 = vmul.f32 %v7647, %v7657
    %vm7659 = vcmp.eq.f32.partialorder %v7647, inf
    %v7660 = vsel %vm7659, %v7647, %v7658
    %vm7661 = vcmp.eq.f32.partialorder %v7647, 0.0
    %v7662 = vand.u32 %v7647, 2147483648
    %v7663 = vsel %vm7661, %v7662, %v7660
    %v7664 = vrsqrt.pop %v7650
    %v7665 = vmul.f32 %v7650, %v7664
    %vm7666 = vcmp.eq.f32.partialorder %v7650, inf
    %v7667 = vsel %vm7666, %v7650, %v7665
    %vm7668 = vcmp.eq.f32.partialorder %v7650, 0.0
    %v7669 = vand.u32 %v7650, 2147483648
    %v7670 = vsel %vm7668, %v7669, %v7667
    %v7671 = vrsqrt.pop %v7653
    %v7672 = vmul.f32 %v7653, %v7671
    %vm7673 = vcmp.eq.f32.partialorder %v7653, inf
    %v7674 = vsel %vm7673, %v7653, %v7672
    %vm7675 = vcmp.eq.f32.partialorder %v7653, 0.0
    %v7676 = vand.u32 %v7653, 2147483648
    %v7677 = vsel %vm7675, %v7676, %v7674
    %v7678 = vrsqrt.pop %v7656
    %v7679 = vmul.f32 %v7656, %v7678
    %vm7680 = vcmp.eq.f32.partialorder %v7656, inf
    %v7681 = vsel %vm7680, %v7656, %v7679
    %vm7682 = vcmp.eq.f32.partialorder %v7656, 0.0
    %v7683 = vand.u32 %v7656, 2147483648
    %v7684 = vsel %vm7682, %v7683, %v7681
    %7709 = vset.pattern.permute.xlu0 0
    %7710 = vperm.xlu0 %7709, %v7381
    %v7711 = vpop.permute.xlu0 %7710
    %7712 = vset.pattern.permute.xlu0 0
    %7713 = vperm.xlu0 %7712, %v7382
    %v7714 = vpop.permute.xlu0 %7713
    %7715 = vset.pattern.permute.xlu0 0
    %7716 = vperm.xlu0 %7715, %v7383
    %v7717 = vpop.permute.xlu0 %7716
    %7718 = vset.pattern.permute.xlu0 0
    %7719 = vperm.xlu0 %7718, %v7384
    %v7720 = vpop.permute.xlu0 %7719
    %7721 = vset.pattern.permute.xlu0 0
    %7722 = vperm.xlu0 %7721, %v7385
    %v7723 = vpop.permute.xlu0 %7722
    %7724 = vset.pattern.permute.xlu0 0
    %7725 = vperm.xlu0 %7724, %v7386
    %v7726 = vpop.permute.xlu0 %7725
    %7727 = vset.pattern.permute.xlu0 0
    %7728 = vperm.xlu0 %7727, %v7387
    %v7729 = vpop.permute.xlu0 %7728
    %7730 = vset.pattern.permute.xlu0 0
    %7731 = vperm.xlu0 %7730, %v7388
    %v7732 = vpop.permute.xlu0 %7731
    %7733 = vset.pattern.permute.xlu0 0
    %7734 = vperm.xlu0 %7733, %v7389
    %v7735 = vpop.permute.xlu0 %7734
    %7736 = vset.pattern.permute.xlu0 0
    %7737 = vperm.xlu0 %7736, %v7390
    %v7738 = vpop.permute.xlu0 %7737
    %7739 = vset.pattern.permute.xlu0 0
    %7740 = vperm.xlu0 %7739, %v7391
    %v7741 = vpop.permute.xlu0 %7740
    %7742 = vset.pattern.permute.xlu0 0
    %7743 = vperm.xlu0 %7742, %v7392
    %v7744 = vpop.permute.xlu0 %7743
    %7745 = vset.pattern.permute.xlu0 0
    %7746 = vperm.xlu0 %7745, %v7393
    %v7747 = vpop.permute.xlu0 %7746
    %7748 = vset.pattern.permute.xlu0 0
    %7749 = vperm.xlu0 %7748, %v7394
    %v7750 = vpop.permute.xlu0 %7749
    %7751 = vset.pattern.permute.xlu0 0
    %7752 = vperm.xlu0 %7751, %v7395
    %v7753 = vpop.permute.xlu0 %7752
    %7754 = vset.pattern.permute.xlu0 0
    %7755 = vperm.xlu0 %7754, %v7396
    %v7756 = vpop.permute.xlu0 %7755
    %7757 = vset.pattern.permute.xlu0 0
    %7758 = vperm.xlu0 %7757, %v7397
    %v7759 = vpop.permute.xlu0 %7758
    %7760 = vset.pattern.permute.xlu0 0
    %7761 = vperm.xlu0 %7760, %v7398
    %v7762 = vpop.permute.xlu0 %7761
    %7763 = vset.pattern.permute.xlu0 0
    %7764 = vperm.xlu0 %7763, %v7399
    %v7765 = vpop.permute.xlu0 %7764
    %7766 = vset.pattern.permute.xlu0 0
    %7767 = vperm.xlu0 %7766, %v7400
    %v7768 = vpop.permute.xlu0 %7767
    %7769 = vset.pattern.permute.xlu0 0
    %7770 = vperm.xlu0 %7769, %v7401
    %v7771 = vpop.permute.xlu0 %7770
    %7772 = vset.pattern.permute.xlu0 0
    %7773 = vperm.xlu0 %7772, %v7402
    %v7774 = vpop.permute.xlu0 %7773
    %7775 = vset.pattern.permute.xlu0 0
    %7776 = vperm.xlu0 %7775, %v7403
    %v7777 = vpop.permute.xlu0 %7776
    %7778 = vset.pattern.permute.xlu0 0
    %7779 = vperm.xlu0 %7778, %v7404
    %v7780 = vpop.permute.xlu0 %7779
    %v7781 = vlaneseq
    %v7782 = vshrl.u32 %v7781, 7
    %v7783 = vsub.s32 %v701, %v7782
    %v7784 = vrot.slane %v7711, %v7783
    %v7785 = vlaneseq
    %v7786 = vshrl.u32 %v7785, 7
    %v7787 = vsub.s32 %v706, %v7786
    %v7788 = vrot.slane %v7714, %v7787
    %v7789 = vsel %vm711, %v7788, %v7784
    %v7790 = vlaneseq
    %v7791 = vshrl.u32 %v7790, 7
    %v7792 = vsub.s32 %v701, %v7791
    %v7793 = vrot.slane %v7717, %v7792
    %v7794 = vlaneseq
    %v7795 = vshrl.u32 %v7794, 7
    %v7796 = vsub.s32 %v706, %v7795
    %v7797 = vrot.slane %v7720, %v7796
    %v7798 = vsel %vm711, %v7797, %v7793
    %v7799 = vlaneseq
    %v7800 = vshrl.u32 %v7799, 7
    %v7801 = vsub.s32 %v701, %v7800
    %v7802 = vrot.slane %v7723, %v7801
    %v7803 = vlaneseq
    %v7804 = vshrl.u32 %v7803, 7
    %v7805 = vsub.s32 %v706, %v7804
    %v7806 = vrot.slane %v7726, %v7805
    %v7807 = vsel %vm711, %v7806, %v7802
    %v7808 = vlaneseq
    %v7809 = vshrl.u32 %v7808, 7
    %v7810 = vsub.s32 %v701, %v7809
    %v7811 = vrot.slane %v7729, %v7810
    %v7812 = vlaneseq
    %v7813 = vshrl.u32 %v7812, 7
    %v7814 = vsub.s32 %v706, %v7813
    %v7815 = vrot.slane %v7732, %v7814
    %v7816 = vsel %vm711, %v7815, %v7811
    %v7817 = vlaneseq
    %v7818 = vshrl.u32 %v7817, 7
    %v7819 = vsub.s32 %v701, %v7818
    %v7820 = vrot.slane %v7735, %v7819
    %v7821 = vlaneseq
    %v7822 = vshrl.u32 %v7821, 7
    %v7823 = vsub.s32 %v706, %v7822
    %v7824 = vrot.slane %v7738, %v7823
    %v7825 = vsel %vm711, %v7824, %v7820
    %v7826 = vlaneseq
    %v7827 = vshrl.u32 %v7826, 7
    %v7828 = vsub.s32 %v701, %v7827
    %v7829 = vrot.slane %v7741, %v7828
    %v7830 = vlaneseq
    %v7831 = vshrl.u32 %v7830, 7
    %v7832 = vsub.s32 %v706, %v7831
    %v7833 = vrot.slane %v7744, %v7832
    %v7834 = vsel %vm711, %v7833, %v7829
    %v7835 = vlaneseq
    %v7836 = vshrl.u32 %v7835, 7
    %v7837 = vsub.s32 %v701, %v7836
    %v7838 = vrot.slane %v7747, %v7837
    %v7839 = vlaneseq
    %v7840 = vshrl.u32 %v7839, 7
    %v7841 = vsub.s32 %v706, %v7840
    %v7842 = vrot.slane %v7750, %v7841
    %v7843 = vsel %vm711, %v7842, %v7838
    %v7844 = vlaneseq
    %v7845 = vshrl.u32 %v7844, 7
    %v7846 = vsub.s32 %v701, %v7845
    %v7847 = vrot.slane %v7753, %v7846
    %v7848 = vlaneseq
    %v7849 = vshrl.u32 %v7848, 7
    %v7850 = vsub.s32 %v706, %v7849
    %v7851 = vrot.slane %v7756, %v7850
    %v7852 = vsel %vm711, %v7851, %v7847
    %v7853 = vlaneseq
    %v7854 = vshrl.u32 %v7853, 7
    %v7855 = vsub.s32 %v701, %v7854
    %v7856 = vrot.slane %v7759, %v7855
    %v7857 = vlaneseq
    %v7858 = vshrl.u32 %v7857, 7
    %v7859 = vsub.s32 %v706, %v7858
    %v7860 = vrot.slane %v7762, %v7859
    %v7861 = vsel %vm711, %v7860, %v7856
    %v7862 = vlaneseq
    %v7863 = vshrl.u32 %v7862, 7
    %v7864 = vsub.s32 %v701, %v7863
    %v7865 = vrot.slane %v7765, %v7864
    %v7866 = vlaneseq
    %v7867 = vshrl.u32 %v7866, 7
    %v7868 = vsub.s32 %v706, %v7867
    %v7869 = vrot.slane %v7768, %v7868
    %v7870 = vsel %vm711, %v7869, %v7865
    %v7871 = vlaneseq
    %v7872 = vshrl.u32 %v7871, 7
    %v7873 = vsub.s32 %v701, %v7872
    %v7874 = vrot.slane %v7771, %v7873
    %v7875 = vlaneseq
    %v7876 = vshrl.u32 %v7875, 7
    %v7877 = vsub.s32 %v706, %v7876
    %v7878 = vrot.slane %v7774, %v7877
    %v7879 = vsel %vm711, %v7878, %v7874
    %v7880 = vlaneseq
    %v7881 = vshrl.u32 %v7880, 7
    %v7882 = vsub.s32 %v701, %v7881
    %v7883 = vrot.slane %v7777, %v7882
    %v7884 = vlaneseq
    %v7885 = vshrl.u32 %v7884, 7
    %v7886 = vsub.s32 %v706, %v7885
    %v7887 = vrot.slane %v7780, %v7886
    %v7888 = vsel %vm711, %v7887, %v7883
    %v7889 = vsel %vm812, %v7798, %v7789
    %v7890 = vsel %vm814, %v7807, %v7889
    %v7891 = vsel %vm812, %v7825, %v7816
    %v7892 = vsel %vm814, %v7834, %v7891
    %v7893 = vsel %vm812, %v7852, %v7843
    %v7894 = vsel %vm814, %v7861, %v7893
    %v7895 = vsel %vm812, %v7879, %v7870
    %v7896 = vsel %vm814, %v7888, %v7895
    %v7899 = vunpack.c.l.s4 1983009808
    %v7900 = vunpack.c.0.s8 %v7899
    %v7901 = vlaneseq
    %v7902 = vshrl.u32 %v7901, 7
    %v7903 = vsub.s32 %v7900, %v7902
    %v7904 = vrot.slane %v7890, %v7903
    %v7906 = vunpack.c.l.s4 1934713408
    %v7907 = vunpack.c.0.s8 %v7906
    %v7908 = vlaneseq
    %v7909 = vshrl.u32 %v7908, 7
    %v7910 = vsub.s32 %v7907, %v7909
    %v7911 = vrot.slane %v7904, %v7910
    %v7912 = vcombine.high %v7911, 0.0
    %v7913 = vcombine.high %v7904, 0.0
    %v7916 = vunpack.c.l.s4 1983009808
    %v7917 = vunpack.c.0.s8 %v7916
    %v7918 = vlaneseq
    %v7919 = vshrl.u32 %v7918, 7
    %v7920 = vsub.s32 %v7917, %v7919
    %v7921 = vrot.slane %v7892, %v7920
    %v7923 = vunpack.c.l.s4 1934713408
    %v7924 = vunpack.c.0.s8 %v7923
    %v7925 = vlaneseq
    %v7926 = vshrl.u32 %v7925, 7
    %v7927 = vsub.s32 %v7924, %v7926
    %v7928 = vrot.slane %v7921, %v7927
    %v7929 = vcombine.high %v7928, 0.0
    %v7930 = vcombine.high %v7921, 0.0
    %v7933 = vunpack.c.l.s4 1983009808
    %v7934 = vunpack.c.0.s8 %v7933
    %v7935 = vlaneseq
    %v7936 = vshrl.u32 %v7935, 7
    %v7937 = vsub.s32 %v7934, %v7936
    %v7938 = vrot.slane %v7894, %v7937
    %v7940 = vunpack.c.l.s4 1934713408
    %v7941 = vunpack.c.0.s8 %v7940
    %v7942 = vlaneseq
    %v7943 = vshrl.u32 %v7942, 7
    %v7944 = vsub.s32 %v7941, %v7943
    %v7945 = vrot.slane %v7938, %v7944
    %v7946 = vcombine.high %v7945, 0.0
    %v7947 = vcombine.high %v7938, 0.0
    %v7950 = vunpack.c.l.s4 1983009808
    %v7951 = vunpack.c.0.s8 %v7950
    %v7952 = vlaneseq
    %v7953 = vshrl.u32 %v7952, 7
    %v7954 = vsub.s32 %v7951, %v7953
    %v7955 = vrot.slane %v7896, %v7954
    %v7957 = vunpack.c.l.s4 1934713408
    %v7958 = vunpack.c.0.s8 %v7957
    %v7959 = vlaneseq
    %v7960 = vshrl.u32 %v7959, 7
    %v7961 = vsub.s32 %v7958, %v7960
    %v7962 = vrot.slane %v7955, %v7961
    %v7963 = vcombine.high %v7962, 0.0
    %v7964 = vcombine.high %v7955, 0.0
    %7969 = vrot.lane.b32.xlu0 %v7912, 16
    %v7970 = vpop.permute.xlu0 %7969
    %7971 = vrot.lane.b32.xlu0 %v7929, 16
    %v7972 = vpop.permute.xlu0 %7971
    %7973 = vrot.lane.b32.xlu0 %v7946, 16
    %v7974 = vpop.permute.xlu0 %7973
    %7975 = vrot.lane.b32.xlu0 %v7963, 16
    %v7976 = vpop.permute.xlu0 %7975
    %7985 = vrot.lane.b32.xlu0 %v7913, 32
    %v7986 = vpop.permute.xlu0 %7985
    %7987 = vrot.lane.b32.xlu0 %v7930, 32
    %v7988 = vpop.permute.xlu0 %7987
    %7989 = vrot.lane.b32.xlu0 %v7947, 32
    %v7990 = vpop.permute.xlu0 %7989
    %7991 = vrot.lane.b32.xlu0 %v7964, 32
    %v7992 = vpop.permute.xlu0 %7991
    %vm7997 = vcmask 130048
    %v7998 = vsel %vm7997, %v7911, %v7970
    %v7999 = vsel %vm7997, %v7928, %v7972
    %v8000 = vsel %vm7997, %v7945, %v7974
    %v8001 = vsel %vm7997, %v7962, %v7976
    %vm8002 = vcmask 261120
    %v8003 = vsel %vm8002, %v7998, %v7986
    %v8004 = vsel %vm8002, %v7999, %v7988
    %v8005 = vsel %vm8002, %v8000, %v7990
    %v8006 = vsel %vm8002, %v8001, %v7992
    %vm8007 = vcmask 385024
    %8008 = vst.msk [vmem:[#allocation7] sm:$0x1] %vm8007, %v8003
    %8009 = vst.msk [vmem:[#allocation7 + $0x1] sm:$0x1] %vm8007, %v8004
    %8010 = vst.msk [vmem:[#allocation7 + $0x2] sm:$0x1] %vm8007, %v8005
    %8011 = vst.msk [vmem:[#allocation7 + $0x3] sm:$0x1] %vm8007, %v8006
    %v8016 = vadd.s32 %v701, 4294967248
    %v8017 = vlaneseq
    %v8018 = vshrl.u32 %v8017, 7
    %v8019 = vsub.s32 %v8016, %v8018
    %v8020 = vrot.slane %v7663, %v8019
    %v8021 = vlaneseq
    %v8022 = vshrl.u32 %v8021, 7
    %v8023 = vsub.s32 %v8016, %v8022
    %v8024 = vrot.slane %v7670, %v8023
    %v8025 = vlaneseq
    %v8026 = vshrl.u32 %v8025, 7
    %v8027 = vsub.s32 %v8016, %v8026
    %v8028 = vrot.slane %v7677, %v8027
    %v8029 = vlaneseq
    %v8030 = vshrl.u32 %v8029, 7
    %v8031 = vsub.s32 %v8016, %v8030
    %v8032 = vrot.slane %v7684, %v8031
    %vm8037 = vcmask 409984
    %8038 = vst.msk [vmem:[#allocation7] sm:$0x1] %vm8037, %v8020
    %8039 = vst.msk [vmem:[#allocation7 + $0x1] sm:$0x1] %vm8037, %v8024
    %8040 = vst.msk [vmem:[#allocation7 + $0x2] sm:$0x1] %vm8037, %v8028
    %8041 = vst.msk [vmem:[#allocation7 + $0x3] sm:$0x1] %vm8037, %v8032
    // Predicated region
    $region18: #{tpu_custom_call.1} parent=1 // pred_check
      _
    $region19: #{tpu_custom_call.1} parent=1 // pred_check_branch
      %8043 = sbr.rel (0) target = $region21
    $region20: #{tpu_custom_call.1} parent=1 // pred_region
      %s8045 = ssub.s32 64, 64
      %8046 = vsyncadd [#allocation4], %s8045
      %s8047 = sshll.u32 [#allocation7], 4
      %s8048 = int_to_ptr.vmem [resolvable:$true] %s8047
      %8053 = dma.vmem_to_hbm [thread:$0]  %s8048, 64, %s2, [#allocation4], 16, 16, 1
    $region21: #{tpu_custom_call.1} parent=1 // pred_fallthru
      _
    // Predicated region
    $region22: #{tpu_custom_call.1} parent=1 // pred_check
      _
    $region23: #{tpu_custom_call.1} parent=1 // pred_check_branch
      %8055 = sbr.rel (0) target = $region25
    $region24: #{tpu_custom_call.1} parent=1 // pred_region
      %8056 = dma.done [#allocation4], 64
    $region25: #{tpu_custom_call.1} parent=1 // pred_fallthru
      _
    %8057 = vsyncpa [#allocation3], 1
    %8058 = vsyncpa [#allocation6], 1
    %8059 = vsyncpa [#allocation4], 1

</llo_original>
